<compile_context>
chip_gen: v7x
topology: tpu7x:2x2x1
jax: 0.10.0
libtpu: 0.0.40
codegen_flags: <defaults>
</compile_context>

<pallas_src>
import functools
import math

import jax
import jax.numpy as jnp
from jax.experimental import pallas as pl
from jax.experimental.pallas import tpu as pltpu

_WIN = 11          # Gaussian window size
_SIGMA = 1.5       # Gaussian sigma
_R = _WIN // 2     # halo radius (= F.conv2d padding)
_C1 = 0.01 ** 2    # (k1 * data_range)**2, data_range = 1.0
_C2 = 0.03 ** 2    # (k2 * data_range)**2


def _gauss_weights():
    g = [math.exp(-((i - _R) ** 2) / (2.0 * _SIGMA ** 2)) for i in range(_WIN)]
    s = sum(g)
    return tuple(v / s for v in g)


_G = _gauss_weights()   # static Python floats -> baked into the kernel as constants


def _ssim_kernel(pred_ref, tgt_ref, out_ref, *, h, w):
    """Per-channel sum(ssim_map) for a block of `bc` zero-padded channel images.

    pred_ref / tgt_ref blocks are zero-padded to (bc, h + 2r, w + 2r), so the
    separable blur below reproduces F.conv2d(img, window, padding=r) exactly.
    """
    xp = pred_ref[...].astype(jnp.float32)   # (bc, h + 2r, w + 2r)
    yp = tgt_ref[...].astype(jnp.float32)

    def blur(zp):
        # Vertical (sublane) pass: (bc, h+2r, w+2r) -> (bc, h, w+2r).
        # Gaussian symmetry G[p] == G[WIN-1-p]: pair the shifted adds, 6 muls/pass.
        acc = _G[_R] * zp[:, _R:_R + h, :]
        for p in range(_R):
            acc = acc + _G[p] * (zp[:, p:p + h, :]
                                 + zp[:, _WIN - 1 - p:_WIN - 1 - p + h, :])
        # Horizontal (lane) pass: (bc, h, w+2r) -> (bc, h, w).
        out = _G[_R] * acc[:, :, _R:_R + w]
        for q in range(_R):
            out = out + _G[q] * (acc[:, :, q:q + w]
                                 + acc[:, :, _WIN - 1 - q:_WIN - 1 - q + w])
        return out

    mu1 = blur(xp)
    mu2 = blur(yp)
    mu1_sq = mu1 * mu1
    mu2_sq = mu2 * mu2
    mu1_mu2 = mu1 * mu2
    sigma1_sq = blur(xp * xp) - mu1_sq
    sigma2_sq = blur(yp * yp) - mu2_sq
    sigma12 = blur(xp * yp) - mu1_mu2

    num = (2.0 * mu1_mu2 + _C1) * (2.0 * sigma12 + _C2)
    den = (mu1_sq + mu2_sq + _C1) * (sigma1_sq + sigma2_sq + _C2)
    ssim_map = num / den                                    # (bc, h, w)

    # Per-channel sums (lets the wrapper drop padded channels exactly).
    s = jnp.sum(ssim_map, axis=2, keepdims=True)            # (bc, h, 1)
    s = jnp.sum(s, axis=1, keepdims=True)                   # (bc, 1, 1)
    # Lane-dense per-channel partial sums (wrapper takes [:, 0, 0]).
    out_ref[...] = jnp.broadcast_to(s, out_ref.shape).astype(out_ref.dtype)


def _pick_bc(b, hp, wp):
    """Channels per grid step, sized so blocks + f32 temporaries fit VMEM easily."""
    hp_r = ((hp + 7) // 8) * 8
    wp_r = ((wp + 127) // 128) * 128
    per_chan = hp_r * wp_r * 4            # one f32 padded channel tile, bytes
    budget = 8 * 1024 * 1024              # conservative vs every scoped-VMEM default
    # ~2 inputs x 2 pipeline buffers + ~12 live f32 temporaries inside the kernel.
    bc = budget // (16 * per_chan)
    return int(max(1, min(b, bc)))


@functools.partial(jax.jit, static_argnames=("loss_weight", "reduction"))
def ssim_loss_pallas(pred, target, weight=None, loss_weight=1.0, reduction="mean"):
    """Pallas TPU forward pass of basicsr's SSIMLoss."""
    if reduction not in ("none", "mean", "sum"):
        raise ValueError(
            f"Unsupported reduction mode: {reduction}. "
            f"Supported ones are: ['none', 'mean', 'sum']")
    # Faithful to the reference forward: `weight` and `reduction` are accepted
    # but not applied (forward always returns loss_weight * (1 - ssim)).
    del weight, reduction

    n, c, h, w = pred.shape
    b = n * c
    hp, wp = h + 2 * _R, w + 2 * _R

    bc = _pick_bc(b, hp, wp)
    nblk = -(-b // bc)
    b_pad = nblk * bc

    # Flatten (N, C) -> B (free reshape), halo zero-pad (== F.conv2d padding=5),
    # and pad the channel axis up to a multiple of bc (dropped after the kernel).
    pad = ((0, b_pad - b), (_R, _R), (_R, _R))
    pred_p = jnp.pad(pred.reshape(b, h, w), pad)
    tgt_p = jnp.pad(target.reshape(b, h, w), pad)

    kernel = functools.partial(_ssim_kernel, h=h, w=w)
    partials = pl.pallas_call(
        kernel,
        out_shape=jax.ShapeDtypeStruct((b_pad, 1, 128), jnp.float32),
        grid=(nblk,),
        in_specs=[
            pl.BlockSpec((bc, hp, wp), lambda i: (i, 0, 0)),
            pl.BlockSpec((bc, hp, wp), lambda i: (i, 0, 0)),
        ],
        out_specs=pl.BlockSpec((bc, 1, 128), lambda i: (i, 0, 0)),
        compiler_params=pltpu.CompilerParams(
            dimension_semantics=("parallel",),
        ),
    )(pred_p, tgt_p)

    ssim_mean = jnp.sum(partials[:b, 0, 0]) / jnp.float32(b * h * w)
    loss = jnp.float32(loss_weight) * (1.0 - ssim_mean)
    return loss.astype(pred.dtype)


def _ssim_loss_ref(pred, target, loss_weight=1.0):
    """Plain-JAX reference: loss_weight * (1 - ssim(pred, target))."""
    x = pred.astype(jnp.float32)
    y = target.astype(jnp.float32)
    _, _, h, w = x.shape
    g = jnp.asarray(_G, dtype=jnp.float32)

    def blur(z):  # depthwise 11x11 Gaussian, zero padding (== F.conv2d(padding=5))
        zp = jnp.pad(z, ((0, 0), (0, 0), (_R, _R), (_R, _R)))
        tmp = sum(g[p] * zp[:, :, p:p + h, :] for p in range(_WIN))
        return sum(g[q] * tmp[:, :, :, q:q + w] for q in range(_WIN))

    mu1, mu2 = blur(x), blur(y)
    mu1_sq, mu2_sq, mu1_mu2 = mu1 * mu1, mu2 * mu2, mu1 * mu2
    s1 = blur(x * x) - mu1_sq
    s2 = blur(y * y) - mu2_sq
    s12 = blur(x * y) - mu1_mu2
    ssim_map = ((2.0 * mu1_mu2 + _C1) * (2.0 * s12 + _C2)) / \
               ((mu1_sq + mu2_sq + _C1) * (s1 + s2 + _C2))
    return loss_weight * (1.0 - jnp.mean(ssim_map))


if __name__ == "__main__":
    key = jax.random.PRNGKey(0)
    k1, k2 = jax.random.split(key)

    N, C, H, W = 2, 4, 16, 16
    pred = jax.random.uniform(k1, (N, C, H, W), dtype=jnp.float32)
    target = jax.random.uniform(k2, (N, C, H, W), dtype=jnp.float32)

    # Default configuration: loss_weight=1.0, reduction='mean'.
    loss = ssim_loss_pallas(pred, target, loss_weight=1.0, reduction="mean")
    jax.block_until_ready(loss)

    ref = _ssim_loss_ref(pred, target, loss_weight=1.0)
    assert jnp.allclose(loss, ref, rtol=1e-4, atol=1e-4), (float(loss), float(ref))

    # Non-default loss_weight (reduction is ignored by the reference forward).
    loss_w = ssim_loss_pallas(pred, target, loss_weight=0.5, reduction="sum")
    jax.block_until_ready(loss_w)
    ref_w = _ssim_loss_ref(pred, target, loss_weight=0.5)
    assert jnp.allclose(loss_w, ref_w, rtol=1e-4, atol=1e-4), (float(loss_w), float(ref_w))

    print("KERNEL_OK")
</pallas_src>

<mosaic_0001>
module attributes {stable_mosaic.version = 11 : i64} {
  func.func @_ssim_kernel(%arg0: i32, %arg1: memref<8x26x26xf32, #tpu.memory_space<vmem>>, %arg2: memref<8x26x26xf32, #tpu.memory_space<vmem>>, %arg3: memref<8x1x128xf32, #tpu.memory_space<vmem>>) attributes {dimension_semantics = [#tpu.dimension_semantics<parallel>], iteration_bounds = array<i64: 1>, scalar_prefetch = 0 : i64, scratch_operands = 0 : i64, tpu.core_type = #tpu.core_type<tc>, window_params = [{transform_indices = @transform_0, window_bounds = array<i64: 8, 26, 26>}, {transform_indices = @transform_1, window_bounds = array<i64: 8, 26, 26>}, {transform_indices = @transform_2, window_bounds = array<i64: 8, 1, 128>}]} {
    %c0 = arith.constant 0 : index
    %c0_0 = arith.constant 0 : index
    %c0_1 = arith.constant 0 : index
    %0 = vector.load %arg1[%c0, %c0_0, %c0_1] : memref<8x26x26xf32, #tpu.memory_space<vmem>>, vector<8x26x26xf32>
    %c0_2 = arith.constant 0 : index
    %c0_3 = arith.constant 0 : index
    %c0_4 = arith.constant 0 : index
    %1 = vector.load %arg2[%c0_2, %c0_3, %c0_4] : memref<8x26x26xf32, #tpu.memory_space<vmem>>, vector<8x26x26xf32>
    %2 = vector.extract_strided_slice %0 {offsets = [0, 5, 0], sizes = [8, 16, 26], strides = [1, 1, 1]} : vector<8x26x26xf32> to vector<8x16x26xf32>
    %cst = arith.constant 0.266011715 : f32
    %3 = vector.broadcast %cst : f32 to vector<8x16x26xf32>
    %4 = arith.mulf %3, %2 : vector<8x16x26xf32>
    %5 = vector.extract_strided_slice %0 {offsets = [0, 0, 0], sizes = [8, 16, 26], strides = [1, 1, 1]} : vector<8x26x26xf32> to vector<8x16x26xf32>
    %6 = vector.extract_strided_slice %0 {offsets = [0, 10, 0], sizes = [8, 16, 26], strides = [1, 1, 1]} : vector<8x26x26xf32> to vector<8x16x26xf32>
    %7 = arith.addf %5, %6 : vector<8x16x26xf32>
    %cst_5 = arith.constant 0.00102838012 : f32
    %8 = vector.broadcast %cst_5 : f32 to vector<8x16x26xf32>
    %9 = arith.mulf %8, %7 : vector<8x16x26xf32>
    %10 = arith.addf %4, %9 : vector<8x16x26xf32>
    %11 = vector.extract_strided_slice %0 {offsets = [0, 1, 0], sizes = [8, 16, 26], strides = [1, 1, 1]} : vector<8x26x26xf32> to vector<8x16x26xf32>
    %12 = vector.extract_strided_slice %0 {offsets = [0, 9, 0], sizes = [8, 16, 26], strides = [1, 1, 1]} : vector<8x26x26xf32> to vector<8x16x26xf32>
    %13 = arith.addf %11, %12 : vector<8x16x26xf32>
    %cst_6 = arith.constant 0.00759875821 : f32
    %14 = vector.broadcast %cst_6 : f32 to vector<8x16x26xf32>
    %15 = arith.mulf %14, %13 : vector<8x16x26xf32>
    %16 = arith.addf %10, %15 : vector<8x16x26xf32>
    %17 = vector.extract_strided_slice %0 {offsets = [0, 2, 0], sizes = [8, 16, 26], strides = [1, 1, 1]} : vector<8x26x26xf32> to vector<8x16x26xf32>
    %18 = vector.extract_strided_slice %0 {offsets = [0, 8, 0], sizes = [8, 16, 26], strides = [1, 1, 1]} : vector<8x26x26xf32> to vector<8x16x26xf32>
    %19 = arith.addf %17, %18 : vector<8x16x26xf32>
    %cst_7 = arith.constant 0.0360007733 : f32
    %20 = vector.broadcast %cst_7 : f32 to vector<8x16x26xf32>
    %21 = arith.mulf %20, %19 : vector<8x16x26xf32>
    %22 = arith.addf %16, %21 : vector<8x16x26xf32>
    %23 = vector.extract_strided_slice %0 {offsets = [0, 3, 0], sizes = [8, 16, 26], strides = [1, 1, 1]} : vector<8x26x26xf32> to vector<8x16x26xf32>
    %24 = vector.extract_strided_slice %0 {offsets = [0, 7, 0], sizes = [8, 16, 26], strides = [1, 1, 1]} : vector<8x26x26xf32> to vector<8x16x26xf32>
    %25 = arith.addf %23, %24 : vector<8x16x26xf32>
    %cst_8 = arith.constant 0.109360687 : f32
    %26 = vector.broadcast %cst_8 : f32 to vector<8x16x26xf32>
    %27 = arith.mulf %26, %25 : vector<8x16x26xf32>
    %28 = arith.addf %22, %27 : vector<8x16x26xf32>
    %29 = vector.extract_strided_slice %0 {offsets = [0, 4, 0], sizes = [8, 16, 26], strides = [1, 1, 1]} : vector<8x26x26xf32> to vector<8x16x26xf32>
    %30 = vector.extract_strided_slice %0 {offsets = [0, 6, 0], sizes = [8, 16, 26], strides = [1, 1, 1]} : vector<8x26x26xf32> to vector<8x16x26xf32>
    %31 = arith.addf %29, %30 : vector<8x16x26xf32>
    %cst_9 = arith.constant 0.213005543 : f32
    %32 = vector.broadcast %cst_9 : f32 to vector<8x16x26xf32>
    %33 = arith.mulf %32, %31 : vector<8x16x26xf32>
    %34 = arith.addf %28, %33 : vector<8x16x26xf32>
    %35 = vector.extract_strided_slice %34 {offsets = [0, 0, 5], sizes = [8, 16, 16], strides = [1, 1, 1]} : vector<8x16x26xf32> to vector<8x16x16xf32>
    %cst_10 = arith.constant 0.266011715 : f32
    %36 = vector.broadcast %cst_10 : f32 to vector<8x16x16xf32>
    %37 = arith.mulf %36, %35 : vector<8x16x16xf32>
    %38 = vector.extract_strided_slice %34 {offsets = [0, 0, 0], sizes = [8, 16, 16], strides = [1, 1, 1]} : vector<8x16x26xf32> to vector<8x16x16xf32>
    %39 = vector.extract_strided_slice %34 {offsets = [0, 0, 10], sizes = [8, 16, 16], strides = [1, 1, 1]} : vector<8x16x26xf32> to vector<8x16x16xf32>
    %40 = arith.addf %38, %39 : vector<8x16x16xf32>
    %cst_11 = arith.constant 0.00102838012 : f32
    %41 = vector.broadcast %cst_11 : f32 to vector<8x16x16xf32>
    %42 = arith.mulf %41, %40 : vector<8x16x16xf32>
    %43 = arith.addf %37, %42 : vector<8x16x16xf32>
    %44 = vector.extract_strided_slice %34 {offsets = [0, 0, 1], sizes = [8, 16, 16], strides = [1, 1, 1]} : vector<8x16x26xf32> to vector<8x16x16xf32>
    %45 = vector.extract_strided_slice %34 {offsets = [0, 0, 9], sizes = [8, 16, 16], strides = [1, 1, 1]} : vector<8x16x26xf32> to vector<8x16x16xf32>
    %46 = arith.addf %44, %45 : vector<8x16x16xf32>
    %cst_12 = arith.constant 0.00759875821 : f32
    %47 = vector.broadcast %cst_12 : f32 to vector<8x16x16xf32>
    %48 = arith.mulf %47, %46 : vector<8x16x16xf32>
    %49 = arith.addf %43, %48 : vector<8x16x16xf32>
    %50 = vector.extract_strided_slice %34 {offsets = [0, 0, 2], sizes = [8, 16, 16], strides = [1, 1, 1]} : vector<8x16x26xf32> to vector<8x16x16xf32>
    %51 = vector.extract_strided_slice %34 {offsets = [0, 0, 8], sizes = [8, 16, 16], strides = [1, 1, 1]} : vector<8x16x26xf32> to vector<8x16x16xf32>
    %52 = arith.addf %50, %51 : vector<8x16x16xf32>
    %cst_13 = arith.constant 0.0360007733 : f32
    %53 = vector.broadcast %cst_13 : f32 to vector<8x16x16xf32>
    %54 = arith.mulf %53, %52 : vector<8x16x16xf32>
    %55 = arith.addf %49, %54 : vector<8x16x16xf32>
    %56 = vector.extract_strided_slice %34 {offsets = [0, 0, 3], sizes = [8, 16, 16], strides = [1, 1, 1]} : vector<8x16x26xf32> to vector<8x16x16xf32>
    %57 = vector.extract_strided_slice %34 {offsets = [0, 0, 7], sizes = [8, 16, 16], strides = [1, 1, 1]} : vector<8x16x26xf32> to vector<8x16x16xf32>
    %58 = arith.addf %56, %57 : vector<8x16x16xf32>
    %cst_14 = arith.constant 0.109360687 : f32
    %59 = vector.broadcast %cst_14 : f32 to vector<8x16x16xf32>
    %60 = arith.mulf %59, %58 : vector<8x16x16xf32>
    %61 = arith.addf %55, %60 : vector<8x16x16xf32>
    %62 = vector.extract_strided_slice %34 {offsets = [0, 0, 4], sizes = [8, 16, 16], strides = [1, 1, 1]} : vector<8x16x26xf32> to vector<8x16x16xf32>
    %63 = vector.extract_strided_slice %34 {offsets = [0, 0, 6], sizes = [8, 16, 16], strides = [1, 1, 1]} : vector<8x16x26xf32> to vector<8x16x16xf32>
    %64 = arith.addf %62, %63 : vector<8x16x16xf32>
    %cst_15 = arith.constant 0.213005543 : f32
    %65 = vector.broadcast %cst_15 : f32 to vector<8x16x16xf32>
    %66 = arith.mulf %65, %64 : vector<8x16x16xf32>
    %67 = arith.addf %61, %66 : vector<8x16x16xf32>
    %68 = vector.extract_strided_slice %1 {offsets = [0, 5, 0], sizes = [8, 16, 26], strides = [1, 1, 1]} : vector<8x26x26xf32> to vector<8x16x26xf32>
    %cst_16 = arith.constant 0.266011715 : f32
    %69 = vector.broadcast %cst_16 : f32 to vector<8x16x26xf32>
    %70 = arith.mulf %69, %68 : vector<8x16x26xf32>
    %71 = vector.extract_strided_slice %1 {offsets = [0, 0, 0], sizes = [8, 16, 26], strides = [1, 1, 1]} : vector<8x26x26xf32> to vector<8x16x26xf32>
    %72 = vector.extract_strided_slice %1 {offsets = [0, 10, 0], sizes = [8, 16, 26], strides = [1, 1, 1]} : vector<8x26x26xf32> to vector<8x16x26xf32>
    %73 = arith.addf %71, %72 : vector<8x16x26xf32>
    %cst_17 = arith.constant 0.00102838012 : f32
    %74 = vector.broadcast %cst_17 : f32 to vector<8x16x26xf32>
    %75 = arith.mulf %74, %73 : vector<8x16x26xf32>
    %76 = arith.addf %70, %75 : vector<8x16x26xf32>
    %77 = vector.extract_strided_slice %1 {offsets = [0, 1, 0], sizes = [8, 16, 26], strides = [1, 1, 1]} : vector<8x26x26xf32> to vector<8x16x26xf32>
    %78 = vector.extract_strided_slice %1 {offsets = [0, 9, 0], sizes = [8, 16, 26], strides = [1, 1, 1]} : vector<8x26x26xf32> to vector<8x16x26xf32>
    %79 = arith.addf %77, %78 : vector<8x16x26xf32>
    %cst_18 = arith.constant 0.00759875821 : f32
    %80 = vector.broadcast %cst_18 : f32 to vector<8x16x26xf32>
    %81 = arith.mulf %80, %79 : vector<8x16x26xf32>
    %82 = arith.addf %76, %81 : vector<8x16x26xf32>
    %83 = vector.extract_strided_slice %1 {offsets = [0, 2, 0], sizes = [8, 16, 26], strides = [1, 1, 1]} : vector<8x26x26xf32> to vector<8x16x26xf32>
    %84 = vector.extract_strided_slice %1 {offsets = [0, 8, 0], sizes = [8, 16, 26], strides = [1, 1, 1]} : vector<8x26x26xf32> to vector<8x16x26xf32>
    %85 = arith.addf %83, %84 : vector<8x16x26xf32>
    %cst_19 = arith.constant 0.0360007733 : f32
    %86 = vector.broadcast %cst_19 : f32 to vector<8x16x26xf32>
    %87 = arith.mulf %86, %85 : vector<8x16x26xf32>
    %88 = arith.addf %82, %87 : vector<8x16x26xf32>
    %89 = vector.extract_strided_slice %1 {offsets = [0, 3, 0], sizes = [8, 16, 26], strides = [1, 1, 1]} : vector<8x26x26xf32> to vector<8x16x26xf32>
    %90 = vector.extract_strided_slice %1 {offsets = [0, 7, 0], sizes = [8, 16, 26], strides = [1, 1, 1]} : vector<8x26x26xf32> to vector<8x16x26xf32>
    %91 = arith.addf %89, %90 : vector<8x16x26xf32>
    %cst_20 = arith.constant 0.109360687 : f32
    %92 = vector.broadcast %cst_20 : f32 to vector<8x16x26xf32>
    %93 = arith.mulf %92, %91 : vector<8x16x26xf32>
    %94 = arith.addf %88, %93 : vector<8x16x26xf32>
    %95 = vector.extract_strided_slice %1 {offsets = [0, 4, 0], sizes = [8, 16, 26], strides = [1, 1, 1]} : vector<8x26x26xf32> to vector<8x16x26xf32>
    %96 = vector.extract_strided_slice %1 {offsets = [0, 6, 0], sizes = [8, 16, 26], strides = [1, 1, 1]} : vector<8x26x26xf32> to vector<8x16x26xf32>
    %97 = arith.addf %95, %96 : vector<8x16x26xf32>
    %cst_21 = arith.constant 0.213005543 : f32
    %98 = vector.broadcast %cst_21 : f32 to vector<8x16x26xf32>
    %99 = arith.mulf %98, %97 : vector<8x16x26xf32>
    %100 = arith.addf %94, %99 : vector<8x16x26xf32>
    %101 = vector.extract_strided_slice %100 {offsets = [0, 0, 5], sizes = [8, 16, 16], strides = [1, 1, 1]} : vector<8x16x26xf32> to vector<8x16x16xf32>
    %cst_22 = arith.constant 0.266011715 : f32
    %102 = vector.broadcast %cst_22 : f32 to vector<8x16x16xf32>
    %103 = arith.mulf %102, %101 : vector<8x16x16xf32>
    %104 = vector.extract_strided_slice %100 {offsets = [0, 0, 0], sizes = [8, 16, 16], strides = [1, 1, 1]} : vector<8x16x26xf32> to vector<8x16x16xf32>
    %105 = vector.extract_strided_slice %100 {offsets = [0, 0, 10], sizes = [8, 16, 16], strides = [1, 1, 1]} : vector<8x16x26xf32> to vector<8x16x16xf32>
    %106 = arith.addf %104, %105 : vector<8x16x16xf32>
    %cst_23 = arith.constant 0.00102838012 : f32
    %107 = vector.broadcast %cst_23 : f32 to vector<8x16x16xf32>
    %108 = arith.mulf %107, %106 : vector<8x16x16xf32>
    %109 = arith.addf %103, %108 : vector<8x16x16xf32>
    %110 = vector.extract_strided_slice %100 {offsets = [0, 0, 1], sizes = [8, 16, 16], strides = [1, 1, 1]} : vector<8x16x26xf32> to vector<8x16x16xf32>
    %111 = vector.extract_strided_slice %100 {offsets = [0, 0, 9], sizes = [8, 16, 16], strides = [1, 1, 1]} : vector<8x16x26xf32> to vector<8x16x16xf32>
    %112 = arith.addf %110, %111 : vector<8x16x16xf32>
    %cst_24 = arith.constant 0.00759875821 : f32
    %113 = vector.broadcast %cst_24 : f32 to vector<8x16x16xf32>
    %114 = arith.mulf %113, %112 : vector<8x16x16xf32>
    %115 = arith.addf %109, %114 : vector<8x16x16xf32>
    %116 = vector.extract_strided_slice %100 {offsets = [0, 0, 2], sizes = [8, 16, 16], strides = [1, 1, 1]} : vector<8x16x26xf32> to vector<8x16x16xf32>
    %117 = vector.extract_strided_slice %100 {offsets = [0, 0, 8], sizes = [8, 16, 16], strides = [1, 1, 1]} : vector<8x16x26xf32> to vector<8x16x16xf32>
    %118 = arith.addf %116, %117 : vector<8x16x16xf32>
    %cst_25 = arith.constant 0.0360007733 : f32
    %119 = vector.broadcast %cst_25 : f32 to vector<8x16x16xf32>
    %120 = arith.mulf %119, %118 : vector<8x16x16xf32>
    %121 = arith.addf %115, %120 : vector<8x16x16xf32>
    %122 = vector.extract_strided_slice %100 {offsets = [0, 0, 3], sizes = [8, 16, 16], strides = [1, 1, 1]} : vector<8x16x26xf32> to vector<8x16x16xf32>
    %123 = vector.extract_strided_slice %100 {offsets = [0, 0, 7], sizes = [8, 16, 16], strides = [1, 1, 1]} : vector<8x16x26xf32> to vector<8x16x16xf32>
    %124 = arith.addf %122, %123 : vector<8x16x16xf32>
    %cst_26 = arith.constant 0.109360687 : f32
    %125 = vector.broadcast %cst_26 : f32 to vector<8x16x16xf32>
    %126 = arith.mulf %125, %124 : vector<8x16x16xf32>
    %127 = arith.addf %121, %126 : vector<8x16x16xf32>
    %128 = vector.extract_strided_slice %100 {offsets = [0, 0, 4], sizes = [8, 16, 16], strides = [1, 1, 1]} : vector<8x16x26xf32> to vector<8x16x16xf32>
    %129 = vector.extract_strided_slice %100 {offsets = [0, 0, 6], sizes = [8, 16, 16], strides = [1, 1, 1]} : vector<8x16x26xf32> to vector<8x16x16xf32>
    %130 = arith.addf %128, %129 : vector<8x16x16xf32>
    %cst_27 = arith.constant 0.213005543 : f32
    %131 = vector.broadcast %cst_27 : f32 to vector<8x16x16xf32>
    %132 = arith.mulf %131, %130 : vector<8x16x16xf32>
    %133 = arith.addf %127, %132 : vector<8x16x16xf32>
    %134 = arith.mulf %67, %67 : vector<8x16x16xf32>
    %135 = arith.mulf %133, %133 : vector<8x16x16xf32>
    %136 = arith.mulf %67, %133 : vector<8x16x16xf32>
    %137 = arith.mulf %0, %0 : vector<8x26x26xf32>
    %138 = vector.extract_strided_slice %137 {offsets = [0, 5, 0], sizes = [8, 16, 26], strides = [1, 1, 1]} : vector<8x26x26xf32> to vector<8x16x26xf32>
    %cst_28 = arith.constant 0.266011715 : f32
    %139 = vector.broadcast %cst_28 : f32 to vector<8x16x26xf32>
    %140 = arith.mulf %139, %138 : vector<8x16x26xf32>
    %141 = vector.extract_strided_slice %137 {offsets = [0, 0, 0], sizes = [8, 16, 26], strides = [1, 1, 1]} : vector<8x26x26xf32> to vector<8x16x26xf32>
    %142 = vector.extract_strided_slice %137 {offsets = [0, 10, 0], sizes = [8, 16, 26], strides = [1, 1, 1]} : vector<8x26x26xf32> to vector<8x16x26xf32>
    %143 = arith.addf %141, %142 : vector<8x16x26xf32>
    %cst_29 = arith.constant 0.00102838012 : f32
    %144 = vector.broadcast %cst_29 : f32 to vector<8x16x26xf32>
    %145 = arith.mulf %144, %143 : vector<8x16x26xf32>
    %146 = arith.addf %140, %145 : vector<8x16x26xf32>
    %147 = vector.extract_strided_slice %137 {offsets = [0, 1, 0], sizes = [8, 16, 26], strides = [1, 1, 1]} : vector<8x26x26xf32> to vector<8x16x26xf32>
    %148 = vector.extract_strided_slice %137 {offsets = [0, 9, 0], sizes = [8, 16, 26], strides = [1, 1, 1]} : vector<8x26x26xf32> to vector<8x16x26xf32>
    %149 = arith.addf %147, %148 : vector<8x16x26xf32>
    %cst_30 = arith.constant 0.00759875821 : f32
    %150 = vector.broadcast %cst_30 : f32 to vector<8x16x26xf32>
    %151 = arith.mulf %150, %149 : vector<8x16x26xf32>
    %152 = arith.addf %146, %151 : vector<8x16x26xf32>
    %153 = vector.extract_strided_slice %137 {offsets = [0, 2, 0], sizes = [8, 16, 26], strides = [1, 1, 1]} : vector<8x26x26xf32> to vector<8x16x26xf32>
    %154 = vector.extract_strided_slice %137 {offsets = [0, 8, 0], sizes = [8, 16, 26], strides = [1, 1, 1]} : vector<8x26x26xf32> to vector<8x16x26xf32>
    %155 = arith.addf %153, %154 : vector<8x16x26xf32>
    %cst_31 = arith.constant 0.0360007733 : f32
    %156 = vector.broadcast %cst_31 : f32 to vector<8x16x26xf32>
    %157 = arith.mulf %156, %155 : vector<8x16x26xf32>
    %158 = arith.addf %152, %157 : vector<8x16x26xf32>
    %159 = vector.extract_strided_slice %137 {offsets = [0, 3, 0], sizes = [8, 16, 26], strides = [1, 1, 1]} : vector<8x26x26xf32> to vector<8x16x26xf32>
    %160 = vector.extract_strided_slice %137 {offsets = [0, 7, 0], sizes = [8, 16, 26], strides = [1, 1, 1]} : vector<8x26x26xf32> to vector<8x16x26xf32>
    %161 = arith.addf %159, %160 : vector<8x16x26xf32>
    %cst_32 = arith.constant 0.109360687 : f32
    %162 = vector.broadcast %cst_32 : f32 to vector<8x16x26xf32>
    %163 = arith.mulf %162, %161 : vector<8x16x26xf32>
    %164 = arith.addf %158, %163 : vector<8x16x26xf32>
    %165 = vector.extract_strided_slice %137 {offsets = [0, 4, 0], sizes = [8, 16, 26], strides = [1, 1, 1]} : vector<8x26x26xf32> to vector<8x16x26xf32>
    %166 = vector.extract_strided_slice %137 {offsets = [0, 6, 0], sizes = [8, 16, 26], strides = [1, 1, 1]} : vector<8x26x26xf32> to vector<8x16x26xf32>
    %167 = arith.addf %165, %166 : vector<8x16x26xf32>
    %cst_33 = arith.constant 0.213005543 : f32
    %168 = vector.broadcast %cst_33 : f32 to vector<8x16x26xf32>
    %169 = arith.mulf %168, %167 : vector<8x16x26xf32>
    %170 = arith.addf %164, %169 : vector<8x16x26xf32>
    %171 = vector.extract_strided_slice %170 {offsets = [0, 0, 5], sizes = [8, 16, 16], strides = [1, 1, 1]} : vector<8x16x26xf32> to vector<8x16x16xf32>
    %cst_34 = arith.constant 0.266011715 : f32
    %172 = vector.broadcast %cst_34 : f32 to vector<8x16x16xf32>
    %173 = arith.mulf %172, %171 : vector<8x16x16xf32>
    %174 = vector.extract_strided_slice %170 {offsets = [0, 0, 0], sizes = [8, 16, 16], strides = [1, 1, 1]} : vector<8x16x26xf32> to vector<8x16x16xf32>
    %175 = vector.extract_strided_slice %170 {offsets = [0, 0, 10], sizes = [8, 16, 16], strides = [1, 1, 1]} : vector<8x16x26xf32> to vector<8x16x16xf32>
    %176 = arith.addf %174, %175 : vector<8x16x16xf32>
    %cst_35 = arith.constant 0.00102838012 : f32
    %177 = vector.broadcast %cst_35 : f32 to vector<8x16x16xf32>
    %178 = arith.mulf %177, %176 : vector<8x16x16xf32>
    %179 = arith.addf %173, %178 : vector<8x16x16xf32>
    %180 = vector.extract_strided_slice %170 {offsets = [0, 0, 1], sizes = [8, 16, 16], strides = [1, 1, 1]} : vector<8x16x26xf32> to vector<8x16x16xf32>
    %181 = vector.extract_strided_slice %170 {offsets = [0, 0, 9], sizes = [8, 16, 16], strides = [1, 1, 1]} : vector<8x16x26xf32> to vector<8x16x16xf32>
    %182 = arith.addf %180, %181 : vector<8x16x16xf32>
    %cst_36 = arith.constant 0.00759875821 : f32
    %183 = vector.broadcast %cst_36 : f32 to vector<8x16x16xf32>
    %184 = arith.mulf %183, %182 : vector<8x16x16xf32>
    %185 = arith.addf %179, %184 : vector<8x16x16xf32>
    %186 = vector.extract_strided_slice %170 {offsets = [0, 0, 2], sizes = [8, 16, 16], strides = [1, 1, 1]} : vector<8x16x26xf32> to vector<8x16x16xf32>
    %187 = vector.extract_strided_slice %170 {offsets = [0, 0, 8], sizes = [8, 16, 16], strides = [1, 1, 1]} : vector<8x16x26xf32> to vector<8x16x16xf32>
    %188 = arith.addf %186, %187 : vector<8x16x16xf32>
    %cst_37 = arith.constant 0.0360007733 : f32
    %189 = vector.broadcast %cst_37 : f32 to vector<8x16x16xf32>
    %190 = arith.mulf %189, %188 : vector<8x16x16xf32>
    %191 = arith.addf %185, %190 : vector<8x16x16xf32>
    %192 = vector.extract_strided_slice %170 {offsets = [0, 0, 3], sizes = [8, 16, 16], strides = [1, 1, 1]} : vector<8x16x26xf32> to vector<8x16x16xf32>
    %193 = vector.extract_strided_slice %170 {offsets = [0, 0, 7], sizes = [8, 16, 16], strides = [1, 1, 1]} : vector<8x16x26xf32> to vector<8x16x16xf32>
    %194 = arith.addf %192, %193 : vector<8x16x16xf32>
    %cst_38 = arith.constant 0.109360687 : f32
    %195 = vector.broadcast %cst_38 : f32 to vector<8x16x16xf32>
    %196 = arith.mulf %195, %194 : vector<8x16x16xf32>
    %197 = arith.addf %191, %196 : vector<8x16x16xf32>
    %198 = vector.extract_strided_slice %170 {offsets = [0, 0, 4], sizes = [8, 16, 16], strides = [1, 1, 1]} : vector<8x16x26xf32> to vector<8x16x16xf32>
    %199 = vector.extract_strided_slice %170 {offsets = [0, 0, 6], sizes = [8, 16, 16], strides = [1, 1, 1]} : vector<8x16x26xf32> to vector<8x16x16xf32>
    %200 = arith.addf %198, %199 : vector<8x16x16xf32>
    %cst_39 = arith.constant 0.213005543 : f32
    %201 = vector.broadcast %cst_39 : f32 to vector<8x16x16xf32>
    %202 = arith.mulf %201, %200 : vector<8x16x16xf32>
    %203 = arith.addf %197, %202 : vector<8x16x16xf32>
    %204 = arith.subf %203, %134 : vector<8x16x16xf32>
    %205 = arith.mulf %1, %1 : vector<8x26x26xf32>
    %206 = vector.extract_strided_slice %205 {offsets = [0, 5, 0], sizes = [8, 16, 26], strides = [1, 1, 1]} : vector<8x26x26xf32> to vector<8x16x26xf32>
    %cst_40 = arith.constant 0.266011715 : f32
    %207 = vector.broadcast %cst_40 : f32 to vector<8x16x26xf32>
    %208 = arith.mulf %207, %206 : vector<8x16x26xf32>
    %209 = vector.extract_strided_slice %205 {offsets = [0, 0, 0], sizes = [8, 16, 26], strides = [1, 1, 1]} : vector<8x26x26xf32> to vector<8x16x26xf32>
    %210 = vector.extract_strided_slice %205 {offsets = [0, 10, 0], sizes = [8, 16, 26], strides = [1, 1, 1]} : vector<8x26x26xf32> to vector<8x16x26xf32>
    %211 = arith.addf %209, %210 : vector<8x16x26xf32>
    %cst_41 = arith.constant 0.00102838012 : f32
    %212 = vector.broadcast %cst_41 : f32 to vector<8x16x26xf32>
    %213 = arith.mulf %212, %211 : vector<8x16x26xf32>
    %214 = arith.addf %208, %213 : vector<8x16x26xf32>
    %215 = vector.extract_strided_slice %205 {offsets = [0, 1, 0], sizes = [8, 16, 26], strides = [1, 1, 1]} : vector<8x26x26xf32> to vector<8x16x26xf32>
    %216 = vector.extract_strided_slice %205 {offsets = [0, 9, 0], sizes = [8, 16, 26], strides = [1, 1, 1]} : vector<8x26x26xf32> to vector<8x16x26xf32>
    %217 = arith.addf %215, %216 : vector<8x16x26xf32>
    %cst_42 = arith.constant 0.00759875821 : f32
    %218 = vector.broadcast %cst_42 : f32 to vector<8x16x26xf32>
    %219 = arith.mulf %218, %217 : vector<8x16x26xf32>
    %220 = arith.addf %214, %219 : vector<8x16x26xf32>
    %221 = vector.extract_strided_slice %205 {offsets = [0, 2, 0], sizes = [8, 16, 26], strides = [1, 1, 1]} : vector<8x26x26xf32> to vector<8x16x26xf32>
    %222 = vector.extract_strided_slice %205 {offsets = [0, 8, 0], sizes = [8, 16, 26], strides = [1, 1, 1]} : vector<8x26x26xf32> to vector<8x16x26xf32>
    %223 = arith.addf %221, %222 : vector<8x16x26xf32>
    %cst_43 = arith.constant 0.0360007733 : f32
    %224 = vector.broadcast %cst_43 : f32 to vector<8x16x26xf32>
    %225 = arith.mulf %224, %223 : vector<8x16x26xf32>
    %226 = arith.addf %220, %225 : vector<8x16x26xf32>
    %227 = vector.extract_strided_slice %205 {offsets = [0, 3, 0], sizes = [8, 16, 26], strides = [1, 1, 1]} : vector<8x26x26xf32> to vector<8x16x26xf32>
    %228 = vector.extract_strided_slice %205 {offsets = [0, 7, 0], sizes = [8, 16, 26], strides = [1, 1, 1]} : vector<8x26x26xf32> to vector<8x16x26xf32>
    %229 = arith.addf %227, %228 : vector<8x16x26xf32>
    %cst_44 = arith.constant 0.109360687 : f32
    %230 = vector.broadcast %cst_44 : f32 to vector<8x16x26xf32>
    %231 = arith.mulf %230, %229 : vector<8x16x26xf32>
    %232 = arith.addf %226, %231 : vector<8x16x26xf32>
    %233 = vector.extract_strided_slice %205 {offsets = [0, 4, 0], sizes = [8, 16, 26], strides = [1, 1, 1]} : vector<8x26x26xf32> to vector<8x16x26xf32>
    %234 = vector.extract_strided_slice %205 {offsets = [0, 6, 0], sizes = [8, 16, 26], strides = [1, 1, 1]} : vector<8x26x26xf32> to vector<8x16x26xf32>
    %235 = arith.addf %233, %234 : vector<8x16x26xf32>
    %cst_45 = arith.constant 0.213005543 : f32
    %236 = vector.broadcast %cst_45 : f32 to vector<8x16x26xf32>
    %237 = arith.mulf %236, %235 : vector<8x16x26xf32>
    %238 = arith.addf %232, %237 : vector<8x16x26xf32>
    %239 = vector.extract_strided_slice %238 {offsets = [0, 0, 5], sizes = [8, 16, 16], strides = [1, 1, 1]} : vector<8x16x26xf32> to vector<8x16x16xf32>
    %cst_46 = arith.constant 0.266011715 : f32
    %240 = vector.broadcast %cst_46 : f32 to vector<8x16x16xf32>
    %241 = arith.mulf %240, %239 : vector<8x16x16xf32>
    %242 = vector.extract_strided_slice %238 {offsets = [0, 0, 0], sizes = [8, 16, 16], strides = [1, 1, 1]} : vector<8x16x26xf32> to vector<8x16x16xf32>
    %243 = vector.extract_strided_slice %238 {offsets = [0, 0, 10], sizes = [8, 16, 16], strides = [1, 1, 1]} : vector<8x16x26xf32> to vector<8x16x16xf32>
    %244 = arith.addf %242, %243 : vector<8x16x16xf32>
    %cst_47 = arith.constant 0.00102838012 : f32
    %245 = vector.broadcast %cst_47 : f32 to vector<8x16x16xf32>
    %246 = arith.mulf %245, %244 : vector<8x16x16xf32>
    %247 = arith.addf %241, %246 : vector<8x16x16xf32>
    %248 = vector.extract_strided_slice %238 {offsets = [0, 0, 1], sizes = [8, 16, 16], strides = [1, 1, 1]} : vector<8x16x26xf32> to vector<8x16x16xf32>
    %249 = vector.extract_strided_slice %238 {offsets = [0, 0, 9], sizes = [8, 16, 16], strides = [1, 1, 1]} : vector<8x16x26xf32> to vector<8x16x16xf32>
    %250 = arith.addf %248, %249 : vector<8x16x16xf32>
    %cst_48 = arith.constant 0.00759875821 : f32
    %251 = vector.broadcast %cst_48 : f32 to vector<8x16x16xf32>
    %252 = arith.mulf %251, %250 : vector<8x16x16xf32>
    %253 = arith.addf %247, %252 : vector<8x16x16xf32>
    %254 = vector.extract_strided_slice %238 {offsets = [0, 0, 2], sizes = [8, 16, 16], strides = [1, 1, 1]} : vector<8x16x26xf32> to vector<8x16x16xf32>
    %255 = vector.extract_strided_slice %238 {offsets = [0, 0, 8], sizes = [8, 16, 16], strides = [1, 1, 1]} : vector<8x16x26xf32> to vector<8x16x16xf32>
    %256 = arith.addf %254, %255 : vector<8x16x16xf32>
    %cst_49 = arith.constant 0.0360007733 : f32
    %257 = vector.broadcast %cst_49 : f32 to vector<8x16x16xf32>
    %258 = arith.mulf %257, %256 : vector<8x16x16xf32>
    %259 = arith.addf %253, %258 : vector<8x16x16xf32>
    %260 = vector.extract_strided_slice %238 {offsets = [0, 0, 3], sizes = [8, 16, 16], strides = [1, 1, 1]} : vector<8x16x26xf32> to vector<8x16x16xf32>
    %261 = vector.extract_strided_slice %238 {offsets = [0, 0, 7], sizes = [8, 16, 16], strides = [1, 1, 1]} : vector<8x16x26xf32> to vector<8x16x16xf32>
    %262 = arith.addf %260, %261 : vector<8x16x16xf32>
    %cst_50 = arith.constant 0.109360687 : f32
    %263 = vector.broadcast %cst_50 : f32 to vector<8x16x16xf32>
    %264 = arith.mulf %263, %262 : vector<8x16x16xf32>
    %265 = arith.addf %259, %264 : vector<8x16x16xf32>
    %266 = vector.extract_strided_slice %238 {offsets = [0, 0, 4], sizes = [8, 16, 16], strides = [1, 1, 1]} : vector<8x16x26xf32> to vector<8x16x16xf32>
    %267 = vector.extract_strided_slice %238 {offsets = [0, 0, 6], sizes = [8, 16, 16], strides = [1, 1, 1]} : vector<8x16x26xf32> to vector<8x16x16xf32>
    %268 = arith.addf %266, %267 : vector<8x16x16xf32>
    %cst_51 = arith.constant 0.213005543 : f32
    %269 = vector.broadcast %cst_51 : f32 to vector<8x16x16xf32>
    %270 = arith.mulf %269, %268 : vector<8x16x16xf32>
    %271 = arith.addf %265, %270 : vector<8x16x16xf32>
    %272 = arith.subf %271, %135 : vector<8x16x16xf32>
    %273 = arith.mulf %0, %1 : vector<8x26x26xf32>
    %274 = vector.extract_strided_slice %273 {offsets = [0, 5, 0], sizes = [8, 16, 26], strides = [1, 1, 1]} : vector<8x26x26xf32> to vector<8x16x26xf32>
    %cst_52 = arith.constant 0.266011715 : f32
    %275 = vector.broadcast %cst_52 : f32 to vector<8x16x26xf32>
    %276 = arith.mulf %275, %274 : vector<8x16x26xf32>
    %277 = vector.extract_strided_slice %273 {offsets = [0, 0, 0], sizes = [8, 16, 26], strides = [1, 1, 1]} : vector<8x26x26xf32> to vector<8x16x26xf32>
    %278 = vector.extract_strided_slice %273 {offsets = [0, 10, 0], sizes = [8, 16, 26], strides = [1, 1, 1]} : vector<8x26x26xf32> to vector<8x16x26xf32>
    %279 = arith.addf %277, %278 : vector<8x16x26xf32>
    %cst_53 = arith.constant 0.00102838012 : f32
    %280 = vector.broadcast %cst_53 : f32 to vector<8x16x26xf32>
    %281 = arith.mulf %280, %279 : vector<8x16x26xf32>
    %282 = arith.addf %276, %281 : vector<8x16x26xf32>
    %283 = vector.extract_strided_slice %273 {offsets = [0, 1, 0], sizes = [8, 16, 26], strides = [1, 1, 1]} : vector<8x26x26xf32> to vector<8x16x26xf32>
    %284 = vector.extract_strided_slice %273 {offsets = [0, 9, 0], sizes = [8, 16, 26], strides = [1, 1, 1]} : vector<8x26x26xf32> to vector<8x16x26xf32>
    %285 = arith.addf %283, %284 : vector<8x16x26xf32>
    %cst_54 = arith.constant 0.00759875821 : f32
    %286 = vector.broadcast %cst_54 : f32 to vector<8x16x26xf32>
    %287 = arith.mulf %286, %285 : vector<8x16x26xf32>
    %288 = arith.addf %282, %287 : vector<8x16x26xf32>
    %289 = vector.extract_strided_slice %273 {offsets = [0, 2, 0], sizes = [8, 16, 26], strides = [1, 1, 1]} : vector<8x26x26xf32> to vector<8x16x26xf32>
    %290 = vector.extract_strided_slice %273 {offsets = [0, 8, 0], sizes = [8, 16, 26], strides = [1, 1, 1]} : vector<8x26x26xf32> to vector<8x16x26xf32>
    %291 = arith.addf %289, %290 : vector<8x16x26xf32>
    %cst_55 = arith.constant 0.0360007733 : f32
    %292 = vector.broadcast %cst_55 : f32 to vector<8x16x26xf32>
    %293 = arith.mulf %292, %291 : vector<8x16x26xf32>
    %294 = arith.addf %288, %293 : vector<8x16x26xf32>
    %295 = vector.extract_strided_slice %273 {offsets = [0, 3, 0], sizes = [8, 16, 26], strides = [1, 1, 1]} : vector<8x26x26xf32> to vector<8x16x26xf32>
    %296 = vector.extract_strided_slice %273 {offsets = [0, 7, 0], sizes = [8, 16, 26], strides = [1, 1, 1]} : vector<8x26x26xf32> to vector<8x16x26xf32>
    %297 = arith.addf %295, %296 : vector<8x16x26xf32>
    %cst_56 = arith.constant 0.109360687 : f32
    %298 = vector.broadcast %cst_56 : f32 to vector<8x16x26xf32>
    %299 = arith.mulf %298, %297 : vector<8x16x26xf32>
    %300 = arith.addf %294, %299 : vector<8x16x26xf32>
    %301 = vector.extract_strided_slice %273 {offsets = [0, 4, 0], sizes = [8, 16, 26], strides = [1, 1, 1]} : vector<8x26x26xf32> to vector<8x16x26xf32>
    %302 = vector.extract_strided_slice %273 {offsets = [0, 6, 0], sizes = [8, 16, 26], strides = [1, 1, 1]} : vector<8x26x26xf32> to vector<8x16x26xf32>
    %303 = arith.addf %301, %302 : vector<8x16x26xf32>
    %cst_57 = arith.constant 0.213005543 : f32
    %304 = vector.broadcast %cst_57 : f32 to vector<8x16x26xf32>
    %305 = arith.mulf %304, %303 : vector<8x16x26xf32>
    %306 = arith.addf %300, %305 : vector<8x16x26xf32>
    %307 = vector.extract_strided_slice %306 {offsets = [0, 0, 5], sizes = [8, 16, 16], strides = [1, 1, 1]} : vector<8x16x26xf32> to vector<8x16x16xf32>
    %cst_58 = arith.constant 0.266011715 : f32
    %308 = vector.broadcast %cst_58 : f32 to vector<8x16x16xf32>
    %309 = arith.mulf %308, %307 : vector<8x16x16xf32>
    %310 = vector.extract_strided_slice %306 {offsets = [0, 0, 0], sizes = [8, 16, 16], strides = [1, 1, 1]} : vector<8x16x26xf32> to vector<8x16x16xf32>
    %311 = vector.extract_strided_slice %306 {offsets = [0, 0, 10], sizes = [8, 16, 16], strides = [1, 1, 1]} : vector<8x16x26xf32> to vector<8x16x16xf32>
    %312 = arith.addf %310, %311 : vector<8x16x16xf32>
    %cst_59 = arith.constant 0.00102838012 : f32
    %313 = vector.broadcast %cst_59 : f32 to vector<8x16x16xf32>
    %314 = arith.mulf %313, %312 : vector<8x16x16xf32>
    %315 = arith.addf %309, %314 : vector<8x16x16xf32>
    %316 = vector.extract_strided_slice %306 {offsets = [0, 0, 1], sizes = [8, 16, 16], strides = [1, 1, 1]} : vector<8x16x26xf32> to vector<8x16x16xf32>
    %317 = vector.extract_strided_slice %306 {offsets = [0, 0, 9], sizes = [8, 16, 16], strides = [1, 1, 1]} : vector<8x16x26xf32> to vector<8x16x16xf32>
    %318 = arith.addf %316, %317 : vector<8x16x16xf32>
    %cst_60 = arith.constant 0.00759875821 : f32
    %319 = vector.broadcast %cst_60 : f32 to vector<8x16x16xf32>
    %320 = arith.mulf %319, %318 : vector<8x16x16xf32>
    %321 = arith.addf %315, %320 : vector<8x16x16xf32>
    %322 = vector.extract_strided_slice %306 {offsets = [0, 0, 2], sizes = [8, 16, 16], strides = [1, 1, 1]} : vector<8x16x26xf32> to vector<8x16x16xf32>
    %323 = vector.extract_strided_slice %306 {offsets = [0, 0, 8], sizes = [8, 16, 16], strides = [1, 1, 1]} : vector<8x16x26xf32> to vector<8x16x16xf32>
    %324 = arith.addf %322, %323 : vector<8x16x16xf32>
    %cst_61 = arith.constant 0.0360007733 : f32
    %325 = vector.broadcast %cst_61 : f32 to vector<8x16x16xf32>
    %326 = arith.mulf %325, %324 : vector<8x16x16xf32>
    %327 = arith.addf %321, %326 : vector<8x16x16xf32>
    %328 = vector.extract_strided_slice %306 {offsets = [0, 0, 3], sizes = [8, 16, 16], strides = [1, 1, 1]} : vector<8x16x26xf32> to vector<8x16x16xf32>
    %329 = vector.extract_strided_slice %306 {offsets = [0, 0, 7], sizes = [8, 16, 16], strides = [1, 1, 1]} : vector<8x16x26xf32> to vector<8x16x16xf32>
    %330 = arith.addf %328, %329 : vector<8x16x16xf32>
    %cst_62 = arith.constant 0.109360687 : f32
    %331 = vector.broadcast %cst_62 : f32 to vector<8x16x16xf32>
    %332 = arith.mulf %331, %330 : vector<8x16x16xf32>
    %333 = arith.addf %327, %332 : vector<8x16x16xf32>
    %334 = vector.extract_strided_slice %306 {offsets = [0, 0, 4], sizes = [8, 16, 16], strides = [1, 1, 1]} : vector<8x16x26xf32> to vector<8x16x16xf32>
    %335 = vector.extract_strided_slice %306 {offsets = [0, 0, 6], sizes = [8, 16, 16], strides = [1, 1, 1]} : vector<8x16x26xf32> to vector<8x16x16xf32>
    %336 = arith.addf %334, %335 : vector<8x16x16xf32>
    %cst_63 = arith.constant 0.213005543 : f32
    %337 = vector.broadcast %cst_63 : f32 to vector<8x16x16xf32>
    %338 = arith.mulf %337, %336 : vector<8x16x16xf32>
    %339 = arith.addf %333, %338 : vector<8x16x16xf32>
    %340 = arith.subf %339, %136 : vector<8x16x16xf32>
    %cst_64 = arith.constant 2.000000e+00 : f32
    %341 = vector.broadcast %cst_64 : f32 to vector<8x16x16xf32>
    %342 = arith.mulf %341, %136 : vector<8x16x16xf32>
    %cst_65 = arith.constant 9.99999974E-5 : f32
    %343 = vector.broadcast %cst_65 : f32 to vector<8x16x16xf32>
    %344 = arith.addf %342, %343 : vector<8x16x16xf32>
    %cst_66 = arith.constant 2.000000e+00 : f32
    %345 = vector.broadcast %cst_66 : f32 to vector<8x16x16xf32>
    %346 = arith.mulf %345, %340 : vector<8x16x16xf32>
    %cst_67 = arith.constant 8.99999984E-4 : f32
    %347 = vector.broadcast %cst_67 : f32 to vector<8x16x16xf32>
    %348 = arith.addf %346, %347 : vector<8x16x16xf32>
    %349 = arith.mulf %344, %348 : vector<8x16x16xf32>
    %350 = arith.addf %134, %135 : vector<8x16x16xf32>
    %cst_68 = arith.constant 9.99999974E-5 : f32
    %351 = vector.broadcast %cst_68 : f32 to vector<8x16x16xf32>
    %352 = arith.addf %350, %351 : vector<8x16x16xf32>
    %353 = arith.addf %204, %272 : vector<8x16x16xf32>
    %cst_69 = arith.constant 8.99999984E-4 : f32
    %354 = vector.broadcast %cst_69 : f32 to vector<8x16x16xf32>
    %355 = arith.addf %353, %354 : vector<8x16x16xf32>
    %356 = arith.mulf %352, %355 : vector<8x16x16xf32>
    %357 = arith.divf %349, %356 : vector<8x16x16xf32>
    %cst_70 = arith.constant dense<0.000000e+00> : vector<8x16xf32>
    %358 = vector.multi_reduction <add>, %357, %cst_70 [2] : vector<8x16x16xf32> to vector<8x16xf32>
    %359 = vector.shape_cast %358 : vector<8x16xf32> to vector<8x16x1xf32>
    %cst_71 = arith.constant dense<0.000000e+00> : vector<8x1xf32>
    %360 = vector.multi_reduction <add>, %359, %cst_71 [1] : vector<8x16x1xf32> to vector<8x1xf32>
    %361 = vector.shape_cast %360 : vector<8x1xf32> to vector<8x1x1xf32>
    %362 = vector.shape_cast %361 : vector<8x1x1xf32> to vector<8x1x1xf32>
    %363 = vector.broadcast %362 : vector<8x1x1xf32> to vector<8x1x128xf32>
    %c0_72 = arith.constant 0 : index
    %c0_73 = arith.constant 0 : index
    %c0_74 = arith.constant 0 : index
    %364 = vector.load %arg3[%c0_72, %c0_73, %c0_74] : memref<8x1x128xf32, #tpu.memory_space<vmem>>, vector<8x1x128xf32>
    tpu.vector_store %arg3[%c0_72, %c0_73, %c0_74], %363 {strides = array<i32>} : memref<8x1x128xf32, #tpu.memory_space<vmem>>, vector<8x1x128xf32>,
    return
  }
  func.func @transform_0(%arg0: i32) -> (i32, i32, i32) {
    %c0_i32 = arith.constant 0 : i32
    %c0_i32_0 = arith.constant 0 : i32
    %c0_i32_1 = arith.constant 0 : i32
    return %arg0, %c0_i32, %c0_i32_0 : i32, i32, i32
  }
  func.func @transform_1(%arg0: i32) -> (i32, i32, i32) {
    %c0_i32 = arith.constant 0 : i32
    %c0_i32_0 = arith.constant 0 : i32
    %c0_i32_1 = arith.constant 0 : i32
    return %arg0, %c0_i32, %c0_i32_0 : i32, i32, i32
  }
  func.func @transform_2(%arg0: i32) -> (i32, i32, i32) {
    %c0_i32 = arith.constant 0 : i32
    %c0_i32_0 = arith.constant 0 : i32
    %c0_i32_1 = arith.constant 0 : i32
    return %arg0, %c0_i32, %c0_i32_0 : i32, i32, i32
  }
}

</mosaic_0001>

<llo_original>
// kernel: ssim_loss_pallas.1
$region0: #{ssim_loss_pallas.1}
  #allocation0 [shape = 'u32[]', space=smem, size = 0x4, offset = 0x4, fixed_abs, tag = 'smem constant byte address 0x4 - core index']
  #allocation1 [shape = 'u32[144,128]{1,0:T(1,128)}', space=vmem, size = 0x12000, scoped, tag = 'internal scratch']
  %s0 = inlined_call_operand.vmem [shape: f32[8,26,26], index: 0, kind: input, shape index: {}]
  %s1 = inlined_call_operand.vmem [shape: f32[8,26,26], index: 1, kind: input, shape index: {}]
  %s2 = inlined_call_operand.vmem [shape: f32[8,1,128], index: 2, kind: output, shape index: {}]
  %s3 = sld [smem:[#allocation0]]
  $region18: #{ssim_loss_pallas.1} parent=0
    _
  %s5 = ssub.s32 1, %s3
  %s6 = scalar_select 0, %s5, %s3
  // Predicated region
  $region2: #{ssim_loss_pallas.1} parent=0 // pred_check
    _
  $region3: #{ssim_loss_pallas.1} parent=0 // pred_check_branch
    %8 = sbr.rel (0) target = $region5
  $region4: #{ssim_loss_pallas.1} parent=0 // pred_region
    _
  $region5: #{ssim_loss_pallas.1} parent=0 // pred_fallthru
    _
  // Predicated region
  $region6: #{ssim_loss_pallas.1} parent=0 // pred_check
    _
  $region7: #{ssim_loss_pallas.1} parent=0 // pred_check_branch
    %10 = sbr.rel (0) target = $region9
  $region8: #{ssim_loss_pallas.1} parent=0 // pred_region
    _
  $region9: #{ssim_loss_pallas.1} parent=0 // pred_fallthru
    _
  %v11 = vld [vmem:[%s0] sm:$0xff]
  %v12 = vld [vmem:[%s0 + $0x8] sm:$0xff]
  %v13 = vld [vmem:[%s0 + $0x10] sm:$0xff]
  %v14 = vld [vmem:[%s0 + $0x18] sm:$0x3]
  %v15 = vld [vmem:[%s0 + $0x20] sm:$0xff]
  %v16 = vld [vmem:[%s0 + $0x28] sm:$0xff]
  %v17 = vld [vmem:[%s0 + $0x30] sm:$0xff]
  %v18 = vld [vmem:[%s0 + $0x38] sm:$0x3]
  %v19 = vld [vmem:[%s0 + $0x40] sm:$0xff]
  %v20 = vld [vmem:[%s0 + $0x48] sm:$0xff]
  %v21 = vld [vmem:[%s0 + $0x50] sm:$0xff]
  %v22 = vld [vmem:[%s0 + $0x58] sm:$0x3]
  %v23 = vld [vmem:[%s0 + $0x60] sm:$0xff]
  %v24 = vld [vmem:[%s0 + $0x68] sm:$0xff]
  %v25 = vld [vmem:[%s0 + $0x70] sm:$0xff]
  %v26 = vld [vmem:[%s0 + $0x78] sm:$0x3]
  %v27 = vld [vmem:[%s0 + $0x80] sm:$0xff]
  %v28 = vld [vmem:[%s0 + $0x88] sm:$0xff]
  %v29 = vld [vmem:[%s0 + $0x90] sm:$0xff]
  %v30 = vld [vmem:[%s0 + $0x98] sm:$0x3]
  %v31 = vld [vmem:[%s0 + $0xa0] sm:$0xff]
  %v32 = vld [vmem:[%s0 + $0xa8] sm:$0xff]
  %v33 = vld [vmem:[%s0 + $0xb0] sm:$0xff]
  %v34 = vld [vmem:[%s0 + $0xb8] sm:$0x3]
  %v35 = vld [vmem:[%s0 + $0xc0] sm:$0xff]
  %v36 = vld [vmem:[%s0 + $0xc8] sm:$0xff]
  %v37 = vld [vmem:[%s0 + $0xd0] sm:$0xff]
  %v38 = vld [vmem:[%s0 + $0xd8] sm:$0x3]
  %v39 = vld [vmem:[%s0 + $0xe0] sm:$0xff]
  %v40 = vld [vmem:[%s0 + $0xe8] sm:$0xff]
  %v41 = vld [vmem:[%s0 + $0xf0] sm:$0xff]
  %v42 = vld [vmem:[%s0 + $0xf8] sm:$0x3]
  %v43 = vld [vmem:[%s1] sm:$0xff]
  %v44 = vld [vmem:[%s1 + $0x8] sm:$0xff]
  %v45 = vld [vmem:[%s1 + $0x10] sm:$0xff]
  %v46 = vld [vmem:[%s1 + $0x18] sm:$0x3]
  %v47 = vld [vmem:[%s1 + $0x20] sm:$0xff]
  %v48 = vld [vmem:[%s1 + $0x28] sm:$0xff]
  %v49 = vld [vmem:[%s1 + $0x30] sm:$0xff]
  %v50 = vld [vmem:[%s1 + $0x38] sm:$0x3]
  %v51 = vld [vmem:[%s1 + $0x40] sm:$0xff]
  %v52 = vld [vmem:[%s1 + $0x48] sm:$0xff]
  %v53 = vld [vmem:[%s1 + $0x50] sm:$0xff]
  %v54 = vld [vmem:[%s1 + $0x58] sm:$0x3]
  %v55 = vld [vmem:[%s1 + $0x60] sm:$0xff]
  %v56 = vld [vmem:[%s1 + $0x68] sm:$0xff]
  %v57 = vld [vmem:[%s1 + $0x70] sm:$0xff]
  %v58 = vld [vmem:[%s1 + $0x78] sm:$0x3]
  %v59 = vld [vmem:[%s1 + $0x80] sm:$0xff]
  %v60 = vld [vmem:[%s1 + $0x88] sm:$0xff]
  %v61 = vld [vmem:[%s1 + $0x90] sm:$0xff]
  %v62 = vld [vmem:[%s1 + $0x98] sm:$0x3]
  %v63 = vld [vmem:[%s1 + $0xa0] sm:$0xff]
  %v64 = vld [vmem:[%s1 + $0xa8] sm:$0xff]
  %v65 = vld [vmem:[%s1 + $0xb0] sm:$0xff]
  %v66 = vld [vmem:[%s1 + $0xb8] sm:$0x3]
  %v67 = vld [vmem:[%s1 + $0xc0] sm:$0xff]
  %v68 = vld [vmem:[%s1 + $0xc8] sm:$0xff]
  %v69 = vld [vmem:[%s1 + $0xd0] sm:$0xff]
  %v70 = vld [vmem:[%s1 + $0xd8] sm:$0x3]
  %v71 = vld [vmem:[%s1 + $0xe0] sm:$0xff]
  %v72 = vld [vmem:[%s1 + $0xe8] sm:$0xff]
  %v73 = vld [vmem:[%s1 + $0xf0] sm:$0xff]
  %v74 = vld [vmem:[%s1 + $0xf8] sm:$0x3]
  %v75 = vmul.f32 %v11, 0.26601171
  %v76 = vmul.f32 %v12, 0.26601171
  %v77 = vmul.f32 %v13, 0.26601171
  %v78 = vmul.f32 %v15, 0.26601171
  %v79 = vmul.f32 %v16, 0.26601171
  %v80 = vmul.f32 %v17, 0.26601171
  %v81 = vmul.f32 %v19, 0.26601171
  %v82 = vmul.f32 %v20, 0.26601171
  %v83 = vmul.f32 %v21, 0.26601171
  %v84 = vmul.f32 %v23, 0.26601171
  %v85 = vmul.f32 %v24, 0.26601171
  %v86 = vmul.f32 %v25, 0.26601171
  %v87 = vmul.f32 %v27, 0.26601171
  %v88 = vmul.f32 %v28, 0.26601171
  %v89 = vmul.f32 %v29, 0.26601171
  %v90 = vmul.f32 %v31, 0.26601171
  %v91 = vmul.f32 %v32, 0.26601171
  %v92 = vmul.f32 %v33, 0.26601171
  %v93 = vmul.f32 %v35, 0.26601171
  %v94 = vmul.f32 %v36, 0.26601171
  %v95 = vmul.f32 %v37, 0.26601171
  %v96 = vmul.f32 %v39, 0.26601171
  %v97 = vmul.f32 %v40, 0.26601171
  %v98 = vmul.f32 %v41, 0.26601171
  %vm123 = vcmask 1045504
  %v124 = vrot.slane %v12, 2
  %v125 = vrot.slane %v13, 2
  %v126 = vsel %vm123, %v124, %v125
  %v127 = vrot.slane %v14, 2
  %v128 = vsel %vm123, %v125, %v127
  %v129 = vrot.slane %v16, 2
  %v130 = vrot.slane %v17, 2
  %v131 = vsel %vm123, %v129, %v130
  %v132 = vrot.slane %v18, 2
  %v133 = vsel %vm123, %v130, %v132
  %v134 = vrot.slane %v20, 2
  %v135 = vrot.slane %v21, 2
  %v136 = vsel %vm123, %v134, %v135
  %v137 = vrot.slane %v22, 2
  %v138 = vsel %vm123, %v135, %v137
  %v139 = vrot.slane %v24, 2
  %v140 = vrot.slane %v25, 2
  %v141 = vsel %vm123, %v139, %v140
  %v142 = vrot.slane %v26, 2
  %v143 = vsel %vm123, %v140, %v142
  %v144 = vrot.slane %v28, 2
  %v145 = vrot.slane %v29, 2
  %v146 = vsel %vm123, %v144, %v145
  %v147 = vrot.slane %v30, 2
  %v148 = vsel %vm123, %v145, %v147
  %v149 = vrot.slane %v32, 2
  %v150 = vrot.slane %v33, 2
  %v151 = vsel %vm123, %v149, %v150
  %v152 = vrot.slane %v34, 2
  %v153 = vsel %vm123, %v150, %v152
  %v154 = vrot.slane %v36, 2
  %v155 = vrot.slane %v37, 2
  %v156 = vsel %vm123, %v154, %v155
  %v157 = vrot.slane %v38, 2
  %v158 = vsel %vm123, %v155, %v157
  %v159 = vrot.slane %v40, 2
  %v160 = vrot.slane %v41, 2
  %v161 = vsel %vm123, %v159, %v160
  %v162 = vrot.slane %v42, 2
  %v163 = vsel %vm123, %v160, %v162
  %v180 = vadd.f32 %v11, %v126
  %v181 = vadd.f32 %v12, %v128
  %v182 = vadd.f32 %v15, %v131
  %v183 = vadd.f32 %v16, %v133
  %v184 = vadd.f32 %v19, %v136
  %v185 = vadd.f32 %v20, %v138
  %v186 = vadd.f32 %v23, %v141
  %v187 = vadd.f32 %v24, %v143
  %v188 = vadd.f32 %v27, %v146
  %v189 = vadd.f32 %v28, %v148
  %v190 = vadd.f32 %v31, %v151
  %v191 = vadd.f32 %v32, %v153
  %v192 = vadd.f32 %v35, %v156
  %v193 = vadd.f32 %v36, %v158
  %v194 = vadd.f32 %v39, %v161
  %v195 = vadd.f32 %v40, %v163
  %v196 = vmul.f32 %v180, 0.0010283801
  %v197 = vmul.f32 %v181, 0.0010283801
  %v198 = vmul.f32 %v182, 0.0010283801
  %v199 = vmul.f32 %v183, 0.0010283801
  %v200 = vmul.f32 %v184, 0.0010283801
  %v201 = vmul.f32 %v185, 0.0010283801
  %v202 = vmul.f32 %v186, 0.0010283801
  %v203 = vmul.f32 %v187, 0.0010283801
  %v204 = vmul.f32 %v188, 0.0010283801
  %v205 = vmul.f32 %v189, 0.0010283801
  %v206 = vmul.f32 %v190, 0.0010283801
  %v207 = vmul.f32 %v191, 0.0010283801
  %v208 = vmul.f32 %v192, 0.0010283801
  %v209 = vmul.f32 %v193, 0.0010283801
  %v210 = vmul.f32 %v194, 0.0010283801
  %v211 = vmul.f32 %v195, 0.0010283801
  %vm228 = vcmask 1044480
  %v229 = vrot.slane %v196, 3
  %v230 = vrot.slane %v197, 3
  %v231 = vsel %vm228, %v229, %v230
  %v232 = vrot.slane %v198, 3
  %v233 = vrot.slane %v199, 3
  %v234 = vsel %vm228, %v232, %v233
  %v235 = vrot.slane %v200, 3
  %v236 = vrot.slane %v201, 3
  %v237 = vsel %vm228, %v235, %v236
  %v238 = vrot.slane %v202, 3
  %v239 = vrot.slane %v203, 3
  %v240 = vsel %vm228, %v238, %v239
  %v241 = vrot.slane %v204, 3
  %v242 = vrot.slane %v205, 3
  %v243 = vsel %vm228, %v241, %v242
  %v244 = vrot.slane %v206, 3
  %v245 = vrot.slane %v207, 3
  %v246 = vsel %vm228, %v244, %v245
  %v247 = vrot.slane %v208, 3
  %v248 = vrot.slane %v209, 3
  %v249 = vsel %vm228, %v247, %v248
  %v250 = vrot.slane %v210, 3
  %v251 = vrot.slane %v211, 3
  %v252 = vsel %vm228, %v250, %v251
  %v277 = vadd.f32 %v75, %v229
  %v278 = vadd.f32 %v76, %v231
  %v279 = vadd.f32 %v77, %v230
  %v280 = vadd.f32 %v78, %v232
  %v281 = vadd.f32 %v79, %v234
  %v282 = vadd.f32 %v80, %v233
  %v283 = vadd.f32 %v81, %v235
  %v284 = vadd.f32 %v82, %v237
  %v285 = vadd.f32 %v83, %v236
  %v286 = vadd.f32 %v84, %v238
  %v287 = vadd.f32 %v85, %v240
  %v288 = vadd.f32 %v86, %v239
  %v289 = vadd.f32 %v87, %v241
  %v290 = vadd.f32 %v88, %v243
  %v291 = vadd.f32 %v89, %v242
  %v292 = vadd.f32 %v90, %v244
  %v293 = vadd.f32 %v91, %v246
  %v294 = vadd.f32 %v92, %v245
  %v295 = vadd.f32 %v93, %v247
  %v296 = vadd.f32 %v94, %v249
  %v297 = vadd.f32 %v95, %v248
  %v298 = vadd.f32 %v96, %v250
  %v299 = vadd.f32 %v97, %v252
  %v300 = vadd.f32 %v98, %v251
  %v301 = vadd.f32 %v11, %v12
  %v302 = vadd.f32 %v12, %v13
  %v303 = vadd.f32 %v13, %v14
  %v304 = vadd.f32 %v15, %v16
  %v305 = vadd.f32 %v16, %v17
  %v306 = vadd.f32 %v17, %v18
  %v307 = vadd.f32 %v19, %v20
  %v308 = vadd.f32 %v20, %v21
  %v309 = vadd.f32 %v21, %v22
  %v310 = vadd.f32 %v23, %v24
  %v311 = vadd.f32 %v24, %v25
  %v312 = vadd.f32 %v25, %v26
  %v313 = vadd.f32 %v27, %v28
  %v314 = vadd.f32 %v28, %v29
  %v315 = vadd.f32 %v29, %v30
  %v316 = vadd.f32 %v31, %v32
  %v317 = vadd.f32 %v32, %v33
  %v318 = vadd.f32 %v33, %v34
  %v319 = vadd.f32 %v35, %v36
  %v320 = vadd.f32 %v36, %v37
  %v321 = vadd.f32 %v37, %v38
  %v322 = vadd.f32 %v39, %v40
  %v323 = vadd.f32 %v40, %v41
  %v324 = vadd.f32 %v41, %v42
  %v325 = vmul.f32 %v301, 0.007598758
  %v326 = vmul.f32 %v302, 0.007598758
  %v327 = vmul.f32 %v303, 0.007598758
  %v328 = vmul.f32 %v304, 0.007598758
  %v329 = vmul.f32 %v305, 0.007598758
  %v330 = vmul.f32 %v306, 0.007598758
  %v331 = vmul.f32 %v307, 0.007598758
  %v332 = vmul.f32 %v308, 0.007598758
  %v333 = vmul.f32 %v309, 0.007598758
  %v334 = vmul.f32 %v310, 0.007598758
  %v335 = vmul.f32 %v311, 0.007598758
  %v336 = vmul.f32 %v312, 0.007598758
  %v337 = vmul.f32 %v313, 0.007598758
  %v338 = vmul.f32 %v314, 0.007598758
  %v339 = vmul.f32 %v315, 0.007598758
  %v340 = vmul.f32 %v316, 0.007598758
  %v341 = vmul.f32 %v317, 0.007598758
  %v342 = vmul.f32 %v318, 0.007598758
  %v343 = vmul.f32 %v319, 0.007598758
  %v344 = vmul.f32 %v320, 0.007598758
  %v345 = vmul.f32 %v321, 0.007598758
  %v346 = vmul.f32 %v322, 0.007598758
  %v347 = vmul.f32 %v323, 0.007598758
  %v348 = vmul.f32 %v324, 0.007598758
  %vm373 = vcmask 1043456
  %v374 = vrot.slane %v325, 4
  %v375 = vrot.slane %v326, 4
  %v376 = vsel %vm373, %v374, %v375
  %v377 = vrot.slane %v327, 4
  %v378 = vsel %vm373, %v375, %v377
  %v379 = vrot.slane %v328, 4
  %v380 = vrot.slane %v329, 4
  %v381 = vsel %vm373, %v379, %v380
  %v382 = vrot.slane %v330, 4
  %v383 = vsel %vm373, %v380, %v382
  %v384 = vrot.slane %v331, 4
  %v385 = vrot.slane %v332, 4
  %v386 = vsel %vm373, %v384, %v385
  %v387 = vrot.slane %v333, 4
  %v388 = vsel %vm373, %v385, %v387
  %v389 = vrot.slane %v334, 4
  %v390 = vrot.slane %v335, 4
  %v391 = vsel %vm373, %v389, %v390
  %v392 = vrot.slane %v336, 4
  %v393 = vsel %vm373, %v390, %v392
  %v394 = vrot.slane %v337, 4
  %v395 = vrot.slane %v338, 4
  %v396 = vsel %vm373, %v394, %v395
  %v397 = vrot.slane %v339, 4
  %v398 = vsel %vm373, %v395, %v397
  %v399 = vrot.slane %v340, 4
  %v400 = vrot.slane %v341, 4
  %v401 = vsel %vm373, %v399, %v400
  %v402 = vrot.slane %v342, 4
  %v403 = vsel %vm373, %v400, %v402
  %v404 = vrot.slane %v343, 4
  %v405 = vrot.slane %v344, 4
  %v406 = vsel %vm373, %v404, %v405
  %v407 = vrot.slane %v345, 4
  %v408 = vsel %vm373, %v405, %v407
  %v409 = vrot.slane %v346, 4
  %v410 = vrot.slane %v347, 4
  %v411 = vsel %vm373, %v409, %v410
  %v412 = vrot.slane %v348, 4
  %v413 = vsel %vm373, %v410, %v412
  %v438 = vadd.f32 %v277, %v374
  %v439 = vadd.f32 %v278, %v376
  %v440 = vadd.f32 %v279, %v378
  %v441 = vadd.f32 %v280, %v379
  %v442 = vadd.f32 %v281, %v381
  %v443 = vadd.f32 %v282, %v383
  %v444 = vadd.f32 %v283, %v384
  %v445 = vadd.f32 %v284, %v386
  %v446 = vadd.f32 %v285, %v388
  %v447 = vadd.f32 %v286, %v389
  %v448 = vadd.f32 %v287, %v391
  %v449 = vadd.f32 %v288, %v393
  %v450 = vadd.f32 %v289, %v394
  %v451 = vadd.f32 %v290, %v396
  %v452 = vadd.f32 %v291, %v398
  %v453 = vadd.f32 %v292, %v399
  %v454 = vadd.f32 %v293, %v401
  %v455 = vadd.f32 %v294, %v403
  %v456 = vadd.f32 %v295, %v404
  %v457 = vadd.f32 %v296, %v406
  %v458 = vadd.f32 %v297, %v408
  %v459 = vadd.f32 %v298, %v409
  %v460 = vadd.f32 %v299, %v411
  %v461 = vadd.f32 %v300, %v413
  %vm462 = vcmask 1041408
  %v463 = vrot.slane %v12, 6
  %v464 = vrot.slane %v13, 6
  %v465 = vsel %vm462, %v463, %v464
  %v466 = vrot.slane %v16, 6
  %v467 = vrot.slane %v17, 6
  %v468 = vsel %vm462, %v466, %v467
  %v469 = vrot.slane %v20, 6
  %v470 = vrot.slane %v21, 6
  %v471 = vsel %vm462, %v469, %v470
  %v472 = vrot.slane %v24, 6
  %v473 = vrot.slane %v25, 6
  %v474 = vsel %vm462, %v472, %v473
  %v475 = vrot.slane %v28, 6
  %v476 = vrot.slane %v29, 6
  %v477 = vsel %vm462, %v475, %v476
  %v478 = vrot.slane %v32, 6
  %v479 = vrot.slane %v33, 6
  %v480 = vsel %vm462, %v478, %v479
  %v481 = vrot.slane %v36, 6
  %v482 = vrot.slane %v37, 6
  %v483 = vsel %vm462, %v481, %v482
  %v484 = vrot.slane %v40, 6
  %v485 = vrot.slane %v41, 6
  %v486 = vsel %vm462, %v484, %v485
  %v511 = vadd.f32 %v11, %v463
  %v512 = vadd.f32 %v12, %v465
  %v513 = vadd.f32 %v13, %v464
  %v514 = vadd.f32 %v15, %v466
  %v515 = vadd.f32 %v16, %v468
  %v516 = vadd.f32 %v17, %v467
  %v517 = vadd.f32 %v19, %v469
  %v518 = vadd.f32 %v20, %v471
  %v519 = vadd.f32 %v21, %v470
  %v520 = vadd.f32 %v23, %v472
  %v521 = vadd.f32 %v24, %v474
  %v522 = vadd.f32 %v25, %v473
  %v523 = vadd.f32 %v27, %v475
  %v524 = vadd.f32 %v28, %v477
  %v525 = vadd.f32 %v29, %v476
  %v526 = vadd.f32 %v31, %v478
  %v527 = vadd.f32 %v32, %v480
  %v528 = vadd.f32 %v33, %v479
  %v529 = vadd.f32 %v35, %v481
  %v530 = vadd.f32 %v36, %v483
  %v531 = vadd.f32 %v37, %v482
  %v532 = vadd.f32 %v39, %v484
  %v533 = vadd.f32 %v40, %v486
  %v534 = vadd.f32 %v41, %v485
  %v535 = vmul.f32 %v511, 0.036000773
  %v536 = vmul.f32 %v512, 0.036000773
  %v537 = vmul.f32 %v513, 0.036000773
  %v538 = vmul.f32 %v514, 0.036000773
  %v539 = vmul.f32 %v515, 0.036000773
  %v540 = vmul.f32 %v516, 0.036000773
  %v541 = vmul.f32 %v517, 0.036000773
  %v542 = vmul.f32 %v518, 0.036000773
  %v543 = vmul.f32 %v519, 0.036000773
  %v544 = vmul.f32 %v520, 0.036000773
  %v545 = vmul.f32 %v521, 0.036000773
  %v546 = vmul.f32 %v522, 0.036000773
  %v547 = vmul.f32 %v523, 0.036000773
  %v548 = vmul.f32 %v524, 0.036000773
  %v549 = vmul.f32 %v525, 0.036000773
  %v550 = vmul.f32 %v526, 0.036000773
  %v551 = vmul.f32 %v527, 0.036000773
  %v552 = vmul.f32 %v528, 0.036000773
  %v553 = vmul.f32 %v529, 0.036000773
  %v554 = vmul.f32 %v530, 0.036000773
  %v555 = vmul.f32 %v531, 0.036000773
  %v556 = vmul.f32 %v532, 0.036000773
  %v557 = vmul.f32 %v533, 0.036000773
  %v558 = vmul.f32 %v534, 0.036000773
  %vm583 = vcmask 1042432
  %v584 = vrot.slane %v535, 5
  %v585 = vrot.slane %v536, 5
  %v586 = vsel %vm583, %v584, %v585
  %v587 = vrot.slane %v537, 5
  %v588 = vsel %vm583, %v585, %v587
  %v589 = vrot.slane %v538, 5
  %v590 = vrot.slane %v539, 5
  %v591 = vsel %vm583, %v589, %v590
  %v592 = vrot.slane %v540, 5
  %v593 = vsel %vm583, %v590, %v592
  %v594 = vrot.slane %v541, 5
  %v595 = vrot.slane %v542, 5
  %v596 = vsel %vm583, %v594, %v595
  %v597 = vrot.slane %v543, 5
  %v598 = vsel %vm583, %v595, %v597
  %v599 = vrot.slane %v544, 5
  %v600 = vrot.slane %v545, 5
  %v601 = vsel %vm583, %v599, %v600
  %v602 = vrot.slane %v546, 5
  %v603 = vsel %vm583, %v600, %v602
  %v604 = vrot.slane %v547, 5
  %v605 = vrot.slane %v548, 5
  %v606 = vsel %vm583, %v604, %v605
  %v607 = vrot.slane %v549, 5
  %v608 = vsel %vm583, %v605, %v607
  %v609 = vrot.slane %v550, 5
  %v610 = vrot.slane %v551, 5
  %v611 = vsel %vm583, %v609, %v610
  %v612 = vrot.slane %v552, 5
  %v613 = vsel %vm583, %v610, %v612
  %v614 = vrot.slane %v553, 5
  %v615 = vrot.slane %v554, 5
  %v616 = vsel %vm583, %v614, %v615
  %v617 = vrot.slane %v555, 5
  %v618 = vsel %vm583, %v615, %v617
  %v619 = vrot.slane %v556, 5
  %v620 = vrot.slane %v557, 5
  %v621 = vsel %vm583, %v619, %v620
  %v622 = vrot.slane %v558, 5
  %v623 = vsel %vm583, %v620, %v622
  %v648 = vadd.f32 %v438, %v584
  %v649 = vadd.f32 %v439, %v586
  %v650 = vadd.f32 %v440, %v588
  %v651 = vadd.f32 %v441, %v589
  %v652 = vadd.f32 %v442, %v591
  %v653 = vadd.f32 %v443, %v593
  %v654 = vadd.f32 %v444, %v594
  %v655 = vadd.f32 %v445, %v596
  %v656 = vadd.f32 %v446, %v598
  %v657 = vadd.f32 %v447, %v599
  %v658 = vadd.f32 %v448, %v601
  %v659 = vadd.f32 %v449, %v603
  %v660 = vadd.f32 %v450, %v604
  %v661 = vadd.f32 %v451, %v606
  %v662 = vadd.f32 %v452, %v608
  %v663 = vadd.f32 %v453, %v609
  %v664 = vadd.f32 %v454, %v611
  %v665 = vadd.f32 %v455, %v613
  %v666 = vadd.f32 %v456, %v614
  %v667 = vadd.f32 %v457, %v616
  %v668 = vadd.f32 %v458, %v618
  %v669 = vadd.f32 %v459, %v619
  %v670 = vadd.f32 %v460, %v621
  %v671 = vadd.f32 %v461, %v623
  %v680 = vrot.slane %v11, 4
  %v681 = vrot.slane %v12, 4
  %v682 = vsel %vm373, %v680, %v681
  %v683 = vrot.slane %v13, 4
  %v684 = vsel %vm373, %v681, %v683
  %v685 = vrot.slane %v15, 4
  %v686 = vrot.slane %v16, 4
  %v687 = vsel %vm373, %v685, %v686
  %v688 = vrot.slane %v17, 4
  %v689 = vsel %vm373, %v686, %v688
  %v690 = vrot.slane %v19, 4
  %v691 = vrot.slane %v20, 4
  %v692 = vsel %vm373, %v690, %v691
  %v693 = vrot.slane %v21, 4
  %v694 = vsel %vm373, %v691, %v693
  %v695 = vrot.slane %v23, 4
  %v696 = vrot.slane %v24, 4
  %v697 = vsel %vm373, %v695, %v696
  %v698 = vrot.slane %v25, 4
  %v699 = vsel %vm373, %v696, %v698
  %v700 = vrot.slane %v27, 4
  %v701 = vrot.slane %v28, 4
  %v702 = vsel %vm373, %v700, %v701
  %v703 = vrot.slane %v29, 4
  %v704 = vsel %vm373, %v701, %v703
  %v705 = vrot.slane %v31, 4
  %v706 = vrot.slane %v32, 4
  %v707 = vsel %vm373, %v705, %v706
  %v708 = vrot.slane %v33, 4
  %v709 = vsel %vm373, %v706, %v708
  %v710 = vrot.slane %v35, 4
  %v711 = vrot.slane %v36, 4
  %v712 = vsel %vm373, %v710, %v711
  %v713 = vrot.slane %v37, 4
  %v714 = vsel %vm373, %v711, %v713
  %v715 = vrot.slane %v39, 4
  %v716 = vrot.slane %v40, 4
  %v717 = vsel %vm373, %v715, %v716
  %v718 = vrot.slane %v41, 4
  %v719 = vsel %vm373, %v716, %v718
  %v744 = vadd.f32 %v11, %v682
  %v745 = vadd.f32 %v12, %v684
  %v746 = vadd.f32 %v13, %v683
  %v747 = vadd.f32 %v15, %v687
  %v748 = vadd.f32 %v16, %v689
  %v749 = vadd.f32 %v17, %v688
  %v750 = vadd.f32 %v19, %v692
  %v751 = vadd.f32 %v20, %v694
  %v752 = vadd.f32 %v21, %v693
  %v753 = vadd.f32 %v23, %v697
  %v754 = vadd.f32 %v24, %v699
  %v755 = vadd.f32 %v25, %v698
  %v756 = vadd.f32 %v27, %v702
  %v757 = vadd.f32 %v28, %v704
  %v758 = vadd.f32 %v29, %v703
  %v759 = vadd.f32 %v31, %v707
  %v760 = vadd.f32 %v32, %v709
  %v761 = vadd.f32 %v33, %v708
  %v762 = vadd.f32 %v35, %v712
  %v763 = vadd.f32 %v36, %v714
  %v764 = vadd.f32 %v37, %v713
  %v765 = vadd.f32 %v39, %v717
  %v766 = vadd.f32 %v40, %v719
  %v767 = vadd.f32 %v41, %v718
  %v768 = vmul.f32 %v744, 0.10936069
  %v769 = vmul.f32 %v745, 0.10936069
  %v770 = vmul.f32 %v746, 0.10936069
  %v771 = vmul.f32 %v747, 0.10936069
  %v772 = vmul.f32 %v748, 0.10936069
  %v773 = vmul.f32 %v749, 0.10936069
  %v774 = vmul.f32 %v750, 0.10936069
  %v775 = vmul.f32 %v751, 0.10936069
  %v776 = vmul.f32 %v752, 0.10936069
  %v777 = vmul.f32 %v753, 0.10936069
  %v778 = vmul.f32 %v754, 0.10936069
  %v779 = vmul.f32 %v755, 0.10936069
  %v780 = vmul.f32 %v756, 0.10936069
  %v781 = vmul.f32 %v757, 0.10936069
  %v782 = vmul.f32 %v758, 0.10936069
  %v783 = vmul.f32 %v759, 0.10936069
  %v784 = vmul.f32 %v760, 0.10936069
  %v785 = vmul.f32 %v761, 0.10936069
  %v786 = vmul.f32 %v762, 0.10936069
  %v787 = vmul.f32 %v763, 0.10936069
  %v788 = vmul.f32 %v764, 0.10936069
  %v789 = vmul.f32 %v765, 0.10936069
  %v790 = vmul.f32 %v766, 0.10936069
  %v791 = vmul.f32 %v767, 0.10936069
  %v816 = vrot.slane %v768, 6
  %v817 = vrot.slane %v769, 6
  %v818 = vsel %vm462, %v816, %v817
  %v819 = vrot.slane %v770, 6
  %v820 = vsel %vm462, %v817, %v819
  %v821 = vrot.slane %v771, 6
  %v822 = vrot.slane %v772, 6
  %v823 = vsel %vm462, %v821, %v822
  %v824 = vrot.slane %v773, 6
  %v825 = vsel %vm462, %v822, %v824
  %v826 = vrot.slane %v774, 6
  %v827 = vrot.slane %v775, 6
  %v828 = vsel %vm462, %v826, %v827
  %v829 = vrot.slane %v776, 6
  %v830 = vsel %vm462, %v827, %v829
  %v831 = vrot.slane %v777, 6
  %v832 = vrot.slane %v778, 6
  %v833 = vsel %vm462, %v831, %v832
  %v834 = vrot.slane %v779, 6
  %v835 = vsel %vm462, %v832, %v834
  %v836 = vrot.slane %v780, 6
  %v837 = vrot.slane %v781, 6
  %v838 = vsel %vm462, %v836, %v837
  %v839 = vrot.slane %v782, 6
  %v840 = vsel %vm462, %v837, %v839
  %v841 = vrot.slane %v783, 6
  %v842 = vrot.slane %v784, 6
  %v843 = vsel %vm462, %v841, %v842
  %v844 = vrot.slane %v785, 6
  %v845 = vsel %vm462, %v842, %v844
  %v846 = vrot.slane %v786, 6
  %v847 = vrot.slane %v787, 6
  %v848 = vsel %vm462, %v846, %v847
  %v849 = vrot.slane %v788, 6
  %v850 = vsel %vm462, %v847, %v849
  %v851 = vrot.slane %v789, 6
  %v852 = vrot.slane %v790, 6
  %v853 = vsel %vm462, %v851, %v852
  %v854 = vrot.slane %v791, 6
  %v855 = vsel %vm462, %v852, %v854
  %v880 = vadd.f32 %v648, %v816
  %v881 = vadd.f32 %v649, %v818
  %v882 = vadd.f32 %v650, %v820
  %v883 = vadd.f32 %v651, %v821
  %v884 = vadd.f32 %v652, %v823
  %v885 = vadd.f32 %v653, %v825
  %v886 = vadd.f32 %v654, %v826
  %v887 = vadd.f32 %v655, %v828
  %v888 = vadd.f32 %v656, %v830
  %v889 = vadd.f32 %v657, %v831
  %v890 = vadd.f32 %v658, %v833
  %v891 = vadd.f32 %v659, %v835
  %v892 = vadd.f32 %v660, %v836
  %v893 = vadd.f32 %v661, %v838
  %v894 = vadd.f32 %v662, %v840
  %v895 = vadd.f32 %v663, %v841
  %v896 = vadd.f32 %v664, %v843
  %v897 = vadd.f32 %v665, %v845
  %v898 = vadd.f32 %v666, %v846
  %v899 = vadd.f32 %v667, %v848
  %v900 = vadd.f32 %v668, %v850
  %v901 = vadd.f32 %v669, %v851
  %v902 = vadd.f32 %v670, %v853
  %v903 = vadd.f32 %v671, %v855
  %v904 = vrot.slane %v11, 2
  %v905 = vsel %vm123, %v904, %v124
  %v906 = vrot.slane %v15, 2
  %v907 = vsel %vm123, %v906, %v129
  %v908 = vrot.slane %v19, 2
  %v909 = vsel %vm123, %v908, %v134
  %v910 = vrot.slane %v23, 2
  %v911 = vsel %vm123, %v910, %v139
  %v912 = vrot.slane %v27, 2
  %v913 = vsel %vm123, %v912, %v144
  %v914 = vrot.slane %v31, 2
  %v915 = vsel %vm123, %v914, %v149
  %v916 = vrot.slane %v35, 2
  %v917 = vsel %vm123, %v916, %v154
  %v918 = vrot.slane %v39, 2
  %v919 = vsel %vm123, %v918, %v159
  %v936 = vadd.f32 %v11, %v905
  %v937 = vadd.f32 %v12, %v126
  %v938 = vadd.f32 %v13, %v125
  %v939 = vadd.f32 %v15, %v907
  %v940 = vadd.f32 %v16, %v131
  %v941 = vadd.f32 %v17, %v130
  %v942 = vadd.f32 %v19, %v909
  %v943 = vadd.f32 %v20, %v136
  %v944 = vadd.f32 %v21, %v135
  %v945 = vadd.f32 %v23, %v911
  %v946 = vadd.f32 %v24, %v141
  %v947 = vadd.f32 %v25, %v140
  %v948 = vadd.f32 %v27, %v913
  %v949 = vadd.f32 %v28, %v146
  %v950 = vadd.f32 %v29, %v145
  %v951 = vadd.f32 %v31, %v915
  %v952 = vadd.f32 %v32, %v151
  %v953 = vadd.f32 %v33, %v150
  %v954 = vadd.f32 %v35, %v917
  %v955 = vadd.f32 %v36, %v156
  %v956 = vadd.f32 %v37, %v155
  %v957 = vadd.f32 %v39, %v919
  %v958 = vadd.f32 %v40, %v161
  %v959 = vadd.f32 %v41, %v160
  %v960 = vmul.f32 %v936, 0.21300554
  %v961 = vmul.f32 %v937, 0.21300554
  %v962 = vmul.f32 %v938, 0.21300554
  %v963 = vmul.f32 %v939, 0.21300554
  %v964 = vmul.f32 %v940, 0.21300554
  %v965 = vmul.f32 %v941, 0.21300554
  %v966 = vmul.f32 %v942, 0.21300554
  %v967 = vmul.f32 %v943, 0.21300554
  %v968 = vmul.f32 %v944, 0.21300554
  %v969 = vmul.f32 %v945, 0.21300554
  %v970 = vmul.f32 %v946, 0.21300554
  %v971 = vmul.f32 %v947, 0.21300554
  %v972 = vmul.f32 %v948, 0.21300554
  %v973 = vmul.f32 %v949, 0.21300554
  %v974 = vmul.f32 %v950, 0.21300554
  %v975 = vmul.f32 %v951, 0.21300554
  %v976 = vmul.f32 %v952, 0.21300554
  %v977 = vmul.f32 %v953, 0.21300554
  %v978 = vmul.f32 %v954, 0.21300554
  %v979 = vmul.f32 %v955, 0.21300554
  %v980 = vmul.f32 %v956, 0.21300554
  %v981 = vmul.f32 %v957, 0.21300554
  %v982 = vmul.f32 %v958, 0.21300554
  %v983 = vmul.f32 %v959, 0.21300554
  %vm1008 = vcmask 1040384
  %v1009 = vrot.slane %v960, 7
  %v1010 = vrot.slane %v961, 7
  %v1011 = vsel %vm1008, %v1009, %v1010
  %v1012 = vrot.slane %v962, 7
  %v1013 = vsel %vm1008, %v1010, %v1012
  %v1014 = vrot.slane %v963, 7
  %v1015 = vrot.slane %v964, 7
  %v1016 = vsel %vm1008, %v1014, %v1015
  %v1017 = vrot.slane %v965, 7
  %v1018 = vsel %vm1008, %v1015, %v1017
  %v1019 = vrot.slane %v966, 7
  %v1020 = vrot.slane %v967, 7
  %v1021 = vsel %vm1008, %v1019, %v1020
  %v1022 = vrot.slane %v968, 7
  %v1023 = vsel %vm1008, %v1020, %v1022
  %v1024 = vrot.slane %v969, 7
  %v1025 = vrot.slane %v970, 7
  %v1026 = vsel %vm1008, %v1024, %v1025
  %v1027 = vrot.slane %v971, 7
  %v1028 = vsel %vm1008, %v1025, %v1027
  %v1029 = vrot.slane %v972, 7
  %v1030 = vrot.slane %v973, 7
  %v1031 = vsel %vm1008, %v1029, %v1030
  %v1032 = vrot.slane %v974, 7
  %v1033 = vsel %vm1008, %v1030, %v1032
  %v1034 = vrot.slane %v975, 7
  %v1035 = vrot.slane %v976, 7
  %v1036 = vsel %vm1008, %v1034, %v1035
  %v1037 = vrot.slane %v977, 7
  %v1038 = vsel %vm1008, %v1035, %v1037
  %v1039 = vrot.slane %v978, 7
  %v1040 = vrot.slane %v979, 7
  %v1041 = vsel %vm1008, %v1039, %v1040
  %v1042 = vrot.slane %v980, 7
  %v1043 = vsel %vm1008, %v1040, %v1042
  %v1044 = vrot.slane %v981, 7
  %v1045 = vrot.slane %v982, 7
  %v1046 = vsel %vm1008, %v1044, %v1045
  %v1047 = vrot.slane %v983, 7
  %v1048 = vsel %vm1008, %v1045, %v1047
  %v1073 = vadd.f32 %v880, %v1009
  %v1074 = vadd.f32 %v881, %v1011
  %v1075 = vadd.f32 %v882, %v1013
  %v1076 = vadd.f32 %v883, %v1014
  %v1077 = vadd.f32 %v884, %v1016
  %v1078 = vadd.f32 %v885, %v1018
  %v1079 = vadd.f32 %v886, %v1019
  %v1080 = vadd.f32 %v887, %v1021
  %v1081 = vadd.f32 %v888, %v1023
  %v1082 = vadd.f32 %v889, %v1024
  %v1083 = vadd.f32 %v890, %v1026
  %v1084 = vadd.f32 %v891, %v1028
  %v1085 = vadd.f32 %v892, %v1029
  %v1086 = vadd.f32 %v893, %v1031
  %v1087 = vadd.f32 %v894, %v1033
  %v1088 = vadd.f32 %v895, %v1034
  %v1089 = vadd.f32 %v896, %v1036
  %v1090 = vadd.f32 %v897, %v1038
  %v1091 = vadd.f32 %v898, %v1039
  %v1092 = vadd.f32 %v899, %v1041
  %v1093 = vadd.f32 %v900, %v1043
  %v1094 = vadd.f32 %v901, %v1044
  %v1095 = vadd.f32 %v902, %v1046
  %v1096 = vadd.f32 %v903, %v1048
  %v1097 = vmul.f32 %v1073, 0.26601171
  %v1098 = vmul.f32 %v1074, 0.26601171
  %v1099 = vmul.f32 %v1075, 0.26601171
  %v1100 = vmul.f32 %v1076, 0.26601171
  %v1101 = vmul.f32 %v1077, 0.26601171
  %v1102 = vmul.f32 %v1078, 0.26601171
  %v1103 = vmul.f32 %v1079, 0.26601171
  %v1104 = vmul.f32 %v1080, 0.26601171
  %v1105 = vmul.f32 %v1081, 0.26601171
  %v1106 = vmul.f32 %v1082, 0.26601171
  %v1107 = vmul.f32 %v1083, 0.26601171
  %v1108 = vmul.f32 %v1084, 0.26601171
  %v1109 = vmul.f32 %v1085, 0.26601171
  %v1110 = vmul.f32 %v1086, 0.26601171
  %v1111 = vmul.f32 %v1087, 0.26601171
  %v1112 = vmul.f32 %v1088, 0.26601171
  %v1113 = vmul.f32 %v1089, 0.26601171
  %v1114 = vmul.f32 %v1090, 0.26601171
  %v1115 = vmul.f32 %v1091, 0.26601171
  %v1116 = vmul.f32 %v1092, 0.26601171
  %v1117 = vmul.f32 %v1093, 0.26601171
  %v1118 = vmul.f32 %v1094, 0.26601171
  %v1119 = vmul.f32 %v1095, 0.26601171
  %v1120 = vmul.f32 %v1096, 0.26601171
  %1145 = vrot.lane.b32.xlu0 %v1073, 118
  %v1146 = vpop.permute.xlu0 %1145
  %1147 = vrot.lane.b32.xlu0 %v1074, 118
  %v1148 = vpop.permute.xlu0 %1147
  %1149 = vrot.lane.b32.xlu0 %v1075, 118
  %v1150 = vpop.permute.xlu0 %1149
  %1151 = vrot.lane.b32.xlu0 %v1076, 118
  %v1152 = vpop.permute.xlu0 %1151
  %1153 = vrot.lane.b32.xlu0 %v1077, 118
  %v1154 = vpop.permute.xlu0 %1153
  %1155 = vrot.lane.b32.xlu0 %v1078, 118
  %v1156 = vpop.permute.xlu0 %1155
  %1157 = vrot.lane.b32.xlu0 %v1079, 118
  %v1158 = vpop.permute.xlu0 %1157
  %1159 = vrot.lane.b32.xlu0 %v1080, 118
  %v1160 = vpop.permute.xlu0 %1159
  %1161 = vrot.lane.b32.xlu0 %v1081, 118
  %v1162 = vpop.permute.xlu0 %1161
  %1163 = vrot.lane.b32.xlu0 %v1082, 118
  %v1164 = vpop.permute.xlu0 %1163
  %1165 = vrot.lane.b32.xlu0 %v1083, 118
  %v1166 = vpop.permute.xlu0 %1165
  %1167 = vrot.lane.b32.xlu0 %v1084, 118
  %v1168 = vpop.permute.xlu0 %1167
  %1169 = vrot.lane.b32.xlu0 %v1085, 118
  %v1170 = vpop.permute.xlu0 %1169
  %1171 = vrot.lane.b32.xlu0 %v1086, 118
  %v1172 = vpop.permute.xlu0 %1171
  %1173 = vrot.lane.b32.xlu0 %v1087, 118
  %v1174 = vpop.permute.xlu0 %1173
  %1175 = vrot.lane.b32.xlu0 %v1088, 118
  %v1176 = vpop.permute.xlu0 %1175
  %1177 = vrot.lane.b32.xlu0 %v1089, 118
  %v1178 = vpop.permute.xlu0 %1177
  %1179 = vrot.lane.b32.xlu0 %v1090, 118
  %v1180 = vpop.permute.xlu0 %1179
  %1181 = vrot.lane.b32.xlu0 %v1091, 118
  %v1182 = vpop.permute.xlu0 %1181
  %1183 = vrot.lane.b32.xlu0 %v1092, 118
  %v1184 = vpop.permute.xlu0 %1183
  %1185 = vrot.lane.b32.xlu0 %v1093, 118
  %v1186 = vpop.permute.xlu0 %1185
  %1187 = vrot.lane.b32.xlu0 %v1094, 118
  %v1188 = vpop.permute.xlu0 %1187
  %1189 = vrot.lane.b32.xlu0 %v1095, 118
  %v1190 = vpop.permute.xlu0 %1189
  %1191 = vrot.lane.b32.xlu0 %v1096, 118
  %v1192 = vpop.permute.xlu0 %1191
  %v1217 = vadd.f32 %v1073, %v1146
  %v1218 = vadd.f32 %v1074, %v1148
  %v1219 = vadd.f32 %v1075, %v1150
  %v1220 = vadd.f32 %v1076, %v1152
  %v1221 = vadd.f32 %v1077, %v1154
  %v1222 = vadd.f32 %v1078, %v1156
  %v1223 = vadd.f32 %v1079, %v1158
  %v1224 = vadd.f32 %v1080, %v1160
  %v1225 = vadd.f32 %v1081, %v1162
  %v1226 = vadd.f32 %v1082, %v1164
  %v1227 = vadd.f32 %v1083, %v1166
  %v1228 = vadd.f32 %v1084, %v1168
  %v1229 = vadd.f32 %v1085, %v1170
  %v1230 = vadd.f32 %v1086, %v1172
  %v1231 = vadd.f32 %v1087, %v1174
  %v1232 = vadd.f32 %v1088, %v1176
  %v1233 = vadd.f32 %v1089, %v1178
  %v1234 = vadd.f32 %v1090, %v1180
  %v1235 = vadd.f32 %v1091, %v1182
  %v1236 = vadd.f32 %v1092, %v1184
  %v1237 = vadd.f32 %v1093, %v1186
  %v1238 = vadd.f32 %v1094, %v1188
  %v1239 = vadd.f32 %v1095, %v1190
  %v1240 = vadd.f32 %v1096, %v1192
  %v1241 = vmul.f32 %v1217, 0.0010283801
  %v1242 = vmul.f32 %v1218, 0.0010283801
  %v1243 = vmul.f32 %v1219, 0.0010283801
  %v1244 = vmul.f32 %v1220, 0.0010283801
  %v1245 = vmul.f32 %v1221, 0.0010283801
  %v1246 = vmul.f32 %v1222, 0.0010283801
  %v1247 = vmul.f32 %v1223, 0.0010283801
  %v1248 = vmul.f32 %v1224, 0.0010283801
  %v1249 = vmul.f32 %v1225, 0.0010283801
  %v1250 = vmul.f32 %v1226, 0.0010283801
  %v1251 = vmul.f32 %v1227, 0.0010283801
  %v1252 = vmul.f32 %v1228, 0.0010283801
  %v1253 = vmul.f32 %v1229, 0.0010283801
  %v1254 = vmul.f32 %v1230, 0.0010283801
  %v1255 = vmul.f32 %v1231, 0.0010283801
  %v1256 = vmul.f32 %v1232, 0.0010283801
  %v1257 = vmul.f32 %v1233, 0.0010283801
  %v1258 = vmul.f32 %v1234, 0.0010283801
  %v1259 = vmul.f32 %v1235, 0.0010283801
  %v1260 = vmul.f32 %v1236, 0.0010283801
  %v1261 = vmul.f32 %v1237, 0.0010283801
  %v1262 = vmul.f32 %v1238, 0.0010283801
  %v1263 = vmul.f32 %v1239, 0.0010283801
  %v1264 = vmul.f32 %v1240, 0.0010283801
  %1289 = vrot.lane.b32.xlu0 %v1241, 5
  %v1290 = vpop.permute.xlu0 %1289
  %1291 = vrot.lane.b32.xlu0 %v1242, 5
  %v1292 = vpop.permute.xlu0 %1291
  %1293 = vrot.lane.b32.xlu0 %v1243, 5
  %v1294 = vpop.permute.xlu0 %1293
  %1295 = vrot.lane.b32.xlu0 %v1244, 5
  %v1296 = vpop.permute.xlu0 %1295
  %1297 = vrot.lane.b32.xlu0 %v1245, 5
  %v1298 = vpop.permute.xlu0 %1297
  %1299 = vrot.lane.b32.xlu0 %v1246, 5
  %v1300 = vpop.permute.xlu0 %1299
  %1301 = vrot.lane.b32.xlu0 %v1247, 5
  %v1302 = vpop.permute.xlu0 %1301
  %1303 = vrot.lane.b32.xlu0 %v1248, 5
  %v1304 = vpop.permute.xlu0 %1303
  %1305 = vrot.lane.b32.xlu0 %v1249, 5
  %v1306 = vpop.permute.xlu0 %1305
  %1307 = vrot.lane.b32.xlu0 %v1250, 5
  %v1308 = vpop.permute.xlu0 %1307
  %1309 = vrot.lane.b32.xlu0 %v1251, 5
  %v1310 = vpop.permute.xlu0 %1309
  %1311 = vrot.lane.b32.xlu0 %v1252, 5
  %v1312 = vpop.permute.xlu0 %1311
  %1313 = vrot.lane.b32.xlu0 %v1253, 5
  %v1314 = vpop.permute.xlu0 %1313
  %1315 = vrot.lane.b32.xlu0 %v1254, 5
  %v1316 = vpop.permute.xlu0 %1315
  %1317 = vrot.lane.b32.xlu0 %v1255, 5
  %v1318 = vpop.permute.xlu0 %1317
  %1319 = vrot.lane.b32.xlu0 %v1256, 5
  %v1320 = vpop.permute.xlu0 %1319
  %1321 = vrot.lane.b32.xlu0 %v1257, 5
  %v1322 = vpop.permute.xlu0 %1321
  %1323 = vrot.lane.b32.xlu0 %v1258, 5
  %v1324 = vpop.permute.xlu0 %1323
  %1325 = vrot.lane.b32.xlu0 %v1259, 5
  %v1326 = vpop.permute.xlu0 %1325
  %1327 = vrot.lane.b32.xlu0 %v1260, 5
  %v1328 = vpop.permute.xlu0 %1327
  %1329 = vrot.lane.b32.xlu0 %v1261, 5
  %v1330 = vpop.permute.xlu0 %1329
  %1331 = vrot.lane.b32.xlu0 %v1262, 5
  %v1332 = vpop.permute.xlu0 %1331
  %1333 = vrot.lane.b32.xlu0 %v1263, 5
  %v1334 = vpop.permute.xlu0 %1333
  %1335 = vrot.lane.b32.xlu0 %v1264, 5
  %v1336 = vpop.permute.xlu0 %1335
  %v1361 = vadd.f32 %v1097, %v1290
  %v1362 = vadd.f32 %v1098, %v1292
  %v1363 = vadd.f32 %v1099, %v1294
  %v1364 = vadd.f32 %v1100, %v1296
  %v1365 = vadd.f32 %v1101, %v1298
  %v1366 = vadd.f32 %v1102, %v1300
  %v1367 = vadd.f32 %v1103, %v1302
  %v1368 = vadd.f32 %v1104, %v1304
  %v1369 = vadd.f32 %v1105, %v1306
  %v1370 = vadd.f32 %v1106, %v1308
  %v1371 = vadd.f32 %v1107, %v1310
  %v1372 = vadd.f32 %v1108, %v1312
  %v1373 = vadd.f32 %v1109, %v1314
  %v1374 = vadd.f32 %v1110, %v1316
  %v1375 = vadd.f32 %v1111, %v1318
  %v1376 = vadd.f32 %v1112, %v1320
  %v1377 = vadd.f32 %v1113, %v1322
  %v1378 = vadd.f32 %v1114, %v1324
  %v1379 = vadd.f32 %v1115, %v1326
  %v1380 = vadd.f32 %v1116, %v1328
  %v1381 = vadd.f32 %v1117, %v1330
  %v1382 = vadd.f32 %v1118, %v1332
  %v1383 = vadd.f32 %v1119, %v1334
  %v1384 = vadd.f32 %v1120, %v1336
  %1385 = vrot.lane.b32.xlu0 %v1073, 120
  %v1386 = vpop.permute.xlu0 %1385
  %1387 = vrot.lane.b32.xlu0 %v1074, 120
  %v1388 = vpop.permute.xlu0 %1387
  %1389 = vrot.lane.b32.xlu0 %v1075, 120
  %v1390 = vpop.permute.xlu0 %1389
  %1391 = vrot.lane.b32.xlu0 %v1076, 120
  %v1392 = vpop.permute.xlu0 %1391
  %1393 = vrot.lane.b32.xlu0 %v1077, 120
  %v1394 = vpop.permute.xlu0 %1393
  %1395 = vrot.lane.b32.xlu0 %v1078, 120
  %v1396 = vpop.permute.xlu0 %1395
  %1397 = vrot.lane.b32.xlu0 %v1079, 120
  %v1398 = vpop.permute.xlu0 %1397
  %1399 = vrot.lane.b32.xlu0 %v1080, 120
  %v1400 = vpop.permute.xlu0 %1399
  %1401 = vrot.lane.b32.xlu0 %v1081, 120
  %v1402 = vpop.permute.xlu0 %1401
  %1403 = vrot.lane.b32.xlu0 %v1082, 120
  %v1404 = vpop.permute.xlu0 %1403
  %1405 = vrot.lane.b32.xlu0 %v1083, 120
  %v1406 = vpop.permute.xlu0 %1405
  %1407 = vrot.lane.b32.xlu0 %v1084, 120
  %v1408 = vpop.permute.xlu0 %1407
  %1409 = vrot.lane.b32.xlu0 %v1085, 120
  %v1410 = vpop.permute.xlu0 %1409
  %1411 = vrot.lane.b32.xlu0 %v1086, 120
  %v1412 = vpop.permute.xlu0 %1411
  %1413 = vrot.lane.b32.xlu0 %v1087, 120
  %v1414 = vpop.permute.xlu0 %1413
  %1415 = vrot.lane.b32.xlu0 %v1088, 120
  %v1416 = vpop.permute.xlu0 %1415
  %1417 = vrot.lane.b32.xlu0 %v1089, 120
  %v1418 = vpop.permute.xlu0 %1417
  %1419 = vrot.lane.b32.xlu0 %v1090, 120
  %v1420 = vpop.permute.xlu0 %1419
  %1421 = vrot.lane.b32.xlu0 %v1091, 120
  %v1422 = vpop.permute.xlu0 %1421
  %1423 = vrot.lane.b32.xlu0 %v1092, 120
  %v1424 = vpop.permute.xlu0 %1423
  %1425 = vrot.lane.b32.xlu0 %v1093, 120
  %v1426 = vpop.permute.xlu0 %1425
  %1427 = vrot.lane.b32.xlu0 %v1094, 120
  %v1428 = vpop.permute.xlu0 %1427
  %1429 = vrot.lane.b32.xlu0 %v1095, 120
  %v1430 = vpop.permute.xlu0 %1429
  %1431 = vrot.lane.b32.xlu0 %v1096, 120
  %v1432 = vpop.permute.xlu0 %1431
  %v1457 = vadd.f32 %v1073, %v1386
  %v1458 = vadd.f32 %v1074, %v1388
  %v1459 = vadd.f32 %v1075, %v1390
  %v1460 = vadd.f32 %v1076, %v1392
  %v1461 = vadd.f32 %v1077, %v1394
  %v1462 = vadd.f32 %v1078, %v1396
  %v1463 = vadd.f32 %v1079, %v1398
  %v1464 = vadd.f32 %v1080, %v1400
  %v1465 = vadd.f32 %v1081, %v1402
  %v1466 = vadd.f32 %v1082, %v1404
  %v1467 = vadd.f32 %v1083, %v1406
  %v1468 = vadd.f32 %v1084, %v1408
  %v1469 = vadd.f32 %v1085, %v1410
  %v1470 = vadd.f32 %v1086, %v1412
  %v1471 = vadd.f32 %v1087, %v1414
  %v1472 = vadd.f32 %v1088, %v1416
  %v1473 = vadd.f32 %v1089, %v1418
  %v1474 = vadd.f32 %v1090, %v1420
  %v1475 = vadd.f32 %v1091, %v1422
  %v1476 = vadd.f32 %v1092, %v1424
  %v1477 = vadd.f32 %v1093, %v1426
  %v1478 = vadd.f32 %v1094, %v1428
  %v1479 = vadd.f32 %v1095, %v1430
  %v1480 = vadd.f32 %v1096, %v1432
  %v1481 = vmul.f32 %v1457, 0.007598758
  %v1482 = vmul.f32 %v1458, 0.007598758
  %v1483 = vmul.f32 %v1459, 0.007598758
  %v1484 = vmul.f32 %v1460, 0.007598758
  %v1485 = vmul.f32 %v1461, 0.007598758
  %v1486 = vmul.f32 %v1462, 0.007598758
  %v1487 = vmul.f32 %v1463, 0.007598758
  %v1488 = vmul.f32 %v1464, 0.007598758
  %v1489 = vmul.f32 %v1465, 0.007598758
  %v1490 = vmul.f32 %v1466, 0.007598758
  %v1491 = vmul.f32 %v1467, 0.007598758
  %v1492 = vmul.f32 %v1468, 0.007598758
  %v1493 = vmul.f32 %v1469, 0.007598758
  %v1494 = vmul.f32 %v1470, 0.007598758
  %v1495 = vmul.f32 %v1471, 0.007598758
  %v1496 = vmul.f32 %v1472, 0.007598758
  %v1497 = vmul.f32 %v1473, 0.007598758
  %v1498 = vmul.f32 %v1474, 0.007598758
  %v1499 = vmul.f32 %v1475, 0.007598758
  %v1500 = vmul.f32 %v1476, 0.007598758
  %v1501 = vmul.f32 %v1477, 0.007598758
  %v1502 = vmul.f32 %v1478, 0.007598758
  %v1503 = vmul.f32 %v1479, 0.007598758
  %v1504 = vmul.f32 %v1480, 0.007598758
  %1529 = vrot.lane.b32.xlu0 %v1481, 4
  %v1530 = vpop.permute.xlu0 %1529
  %1531 = vrot.lane.b32.xlu0 %v1482, 4
  %v1532 = vpop.permute.xlu0 %1531
  %1533 = vrot.lane.b32.xlu0 %v1483, 4
  %v1534 = vpop.permute.xlu0 %1533
  %1535 = vrot.lane.b32.xlu0 %v1484, 4
  %v1536 = vpop.permute.xlu0 %1535
  %1537 = vrot.lane.b32.xlu0 %v1485, 4
  %v1538 = vpop.permute.xlu0 %1537
  %1539 = vrot.lane.b32.xlu0 %v1486, 4
  %v1540 = vpop.permute.xlu0 %1539
  %1541 = vrot.lane.b32.xlu0 %v1487, 4
  %v1542 = vpop.permute.xlu0 %1541
  %1543 = vrot.lane.b32.xlu0 %v1488, 4
  %v1544 = vpop.permute.xlu0 %1543
  %1545 = vrot.lane.b32.xlu0 %v1489, 4
  %v1546 = vpop.permute.xlu0 %1545
  %1547 = vrot.lane.b32.xlu0 %v1490, 4
  %v1548 = vpop.permute.xlu0 %1547
  %1549 = vrot.lane.b32.xlu0 %v1491, 4
  %v1550 = vpop.permute.xlu0 %1549
  %1551 = vrot.lane.b32.xlu0 %v1492, 4
  %v1552 = vpop.permute.xlu0 %1551
  %1553 = vrot.lane.b32.xlu0 %v1493, 4
  %v1554 = vpop.permute.xlu0 %1553
  %1555 = vrot.lane.b32.xlu0 %v1494, 4
  %v1556 = vpop.permute.xlu0 %1555
  %1557 = vrot.lane.b32.xlu0 %v1495, 4
  %v1558 = vpop.permute.xlu0 %1557
  %1559 = vrot.lane.b32.xlu0 %v1496, 4
  %v1560 = vpop.permute.xlu0 %1559
  %1561 = vrot.lane.b32.xlu0 %v1497, 4
  %v1562 = vpop.permute.xlu0 %1561
  %1563 = vrot.lane.b32.xlu0 %v1498, 4
  %v1564 = vpop.permute.xlu0 %1563
  %1565 = vrot.lane.b32.xlu0 %v1499, 4
  %v1566 = vpop.permute.xlu0 %1565
  %1567 = vrot.lane.b32.xlu0 %v1500, 4
  %v1568 = vpop.permute.xlu0 %1567
  %1569 = vrot.lane.b32.xlu0 %v1501, 4
  %v1570 = vpop.permute.xlu0 %1569
  %1571 = vrot.lane.b32.xlu0 %v1502, 4
  %v1572 = vpop.permute.xlu0 %1571
  %1573 = vrot.lane.b32.xlu0 %v1503, 4
  %v1574 = vpop.permute.xlu0 %1573
  %1575 = vrot.lane.b32.xlu0 %v1504, 4
  %v1576 = vpop.permute.xlu0 %1575
  %v1601 = vadd.f32 %v1361, %v1530
  %v1602 = vadd.f32 %v1362, %v1532
  %v1603 = vadd.f32 %v1363, %v1534
  %v1604 = vadd.f32 %v1364, %v1536
  %v1605 = vadd.f32 %v1365, %v1538
  %v1606 = vadd.f32 %v1366, %v1540
  %v1607 = vadd.f32 %v1367, %v1542
  %v1608 = vadd.f32 %v1368, %v1544
  %v1609 = vadd.f32 %v1369, %v1546
  %v1610 = vadd.f32 %v1370, %v1548
  %v1611 = vadd.f32 %v1371, %v1550
  %v1612 = vadd.f32 %v1372, %v1552
  %v1613 = vadd.f32 %v1373, %v1554
  %v1614 = vadd.f32 %v1374, %v1556
  %v1615 = vadd.f32 %v1375, %v1558
  %v1616 = vadd.f32 %v1376, %v1560
  %v1617 = vadd.f32 %v1377, %v1562
  %v1618 = vadd.f32 %v1378, %v1564
  %v1619 = vadd.f32 %v1379, %v1566
  %v1620 = vadd.f32 %v1380, %v1568
  %v1621 = vadd.f32 %v1381, %v1570
  %v1622 = vadd.f32 %v1382, %v1572
  %v1623 = vadd.f32 %v1383, %v1574
  %v1624 = vadd.f32 %v1384, %v1576
  %1625 = vrot.lane.b32.xlu0 %v1073, 122
  %v1626 = vpop.permute.xlu0 %1625
  %1627 = vrot.lane.b32.xlu0 %v1074, 122
  %v1628 = vpop.permute.xlu0 %1627
  %1629 = vrot.lane.b32.xlu0 %v1075, 122
  %v1630 = vpop.permute.xlu0 %1629
  %1631 = vrot.lane.b32.xlu0 %v1076, 122
  %v1632 = vpop.permute.xlu0 %1631
  %1633 = vrot.lane.b32.xlu0 %v1077, 122
  %v1634 = vpop.permute.xlu0 %1633
  %1635 = vrot.lane.b32.xlu0 %v1078, 122
  %v1636 = vpop.permute.xlu0 %1635
  %1637 = vrot.lane.b32.xlu0 %v1079, 122
  %v1638 = vpop.permute.xlu0 %1637
  %1639 = vrot.lane.b32.xlu0 %v1080, 122
  %v1640 = vpop.permute.xlu0 %1639
  %1641 = vrot.lane.b32.xlu0 %v1081, 122
  %v1642 = vpop.permute.xlu0 %1641
  %1643 = vrot.lane.b32.xlu0 %v1082, 122
  %v1644 = vpop.permute.xlu0 %1643
  %1645 = vrot.lane.b32.xlu0 %v1083, 122
  %v1646 = vpop.permute.xlu0 %1645
  %1647 = vrot.lane.b32.xlu0 %v1084, 122
  %v1648 = vpop.permute.xlu0 %1647
  %1649 = vrot.lane.b32.xlu0 %v1085, 122
  %v1650 = vpop.permute.xlu0 %1649
  %1651 = vrot.lane.b32.xlu0 %v1086, 122
  %v1652 = vpop.permute.xlu0 %1651
  %1653 = vrot.lane.b32.xlu0 %v1087, 122
  %v1654 = vpop.permute.xlu0 %1653
  %1655 = vrot.lane.b32.xlu0 %v1088, 122
  %v1656 = vpop.permute.xlu0 %1655
  %1657 = vrot.lane.b32.xlu0 %v1089, 122
  %v1658 = vpop.permute.xlu0 %1657
  %1659 = vrot.lane.b32.xlu0 %v1090, 122
  %v1660 = vpop.permute.xlu0 %1659
  %1661 = vrot.lane.b32.xlu0 %v1091, 122
  %v1662 = vpop.permute.xlu0 %1661
  %1663 = vrot.lane.b32.xlu0 %v1092, 122
  %v1664 = vpop.permute.xlu0 %1663
  %1665 = vrot.lane.b32.xlu0 %v1093, 122
  %v1666 = vpop.permute.xlu0 %1665
  %1667 = vrot.lane.b32.xlu0 %v1094, 122
  %v1668 = vpop.permute.xlu0 %1667
  %1669 = vrot.lane.b32.xlu0 %v1095, 122
  %v1670 = vpop.permute.xlu0 %1669
  %1671 = vrot.lane.b32.xlu0 %v1096, 122
  %v1672 = vpop.permute.xlu0 %1671
  %v1697 = vadd.f32 %v1073, %v1626
  %v1698 = vadd.f32 %v1074, %v1628
  %v1699 = vadd.f32 %v1075, %v1630
  %v1700 = vadd.f32 %v1076, %v1632
  %v1701 = vadd.f32 %v1077, %v1634
  %v1702 = vadd.f32 %v1078, %v1636
  %v1703 = vadd.f32 %v1079, %v1638
  %v1704 = vadd.f32 %v1080, %v1640
  %v1705 = vadd.f32 %v1081, %v1642
  %v1706 = vadd.f32 %v1082, %v1644
  %v1707 = vadd.f32 %v1083, %v1646
  %v1708 = vadd.f32 %v1084, %v1648
  %v1709 = vadd.f32 %v1085, %v1650
  %v1710 = vadd.f32 %v1086, %v1652
  %v1711 = vadd.f32 %v1087, %v1654
  %v1712 = vadd.f32 %v1088, %v1656
  %v1713 = vadd.f32 %v1089, %v1658
  %v1714 = vadd.f32 %v1090, %v1660
  %v1715 = vadd.f32 %v1091, %v1662
  %v1716 = vadd.f32 %v1092, %v1664
  %v1717 = vadd.f32 %v1093, %v1666
  %v1718 = vadd.f32 %v1094, %v1668
  %v1719 = vadd.f32 %v1095, %v1670
  %v1720 = vadd.f32 %v1096, %v1672
  %v1721 = vmul.f32 %v1697, 0.036000773
  %v1722 = vmul.f32 %v1698, 0.036000773
  %v1723 = vmul.f32 %v1699, 0.036000773
  %v1724 = vmul.f32 %v1700, 0.036000773
  %v1725 = vmul.f32 %v1701, 0.036000773
  %v1726 = vmul.f32 %v1702, 0.036000773
  %v1727 = vmul.f32 %v1703, 0.036000773
  %v1728 = vmul.f32 %v1704, 0.036000773
  %v1729 = vmul.f32 %v1705, 0.036000773
  %v1730 = vmul.f32 %v1706, 0.036000773
  %v1731 = vmul.f32 %v1707, 0.036000773
  %v1732 = vmul.f32 %v1708, 0.036000773
  %v1733 = vmul.f32 %v1709, 0.036000773
  %v1734 = vmul.f32 %v1710, 0.036000773
  %v1735 = vmul.f32 %v1711, 0.036000773
  %v1736 = vmul.f32 %v1712, 0.036000773
  %v1737 = vmul.f32 %v1713, 0.036000773
  %v1738 = vmul.f32 %v1714, 0.036000773
  %v1739 = vmul.f32 %v1715, 0.036000773
  %v1740 = vmul.f32 %v1716, 0.036000773
  %v1741 = vmul.f32 %v1717, 0.036000773
  %v1742 = vmul.f32 %v1718, 0.036000773
  %v1743 = vmul.f32 %v1719, 0.036000773
  %v1744 = vmul.f32 %v1720, 0.036000773
  %1769 = vrot.lane.b32.xlu0 %v1721, 3
  %v1770 = vpop.permute.xlu0 %1769
  %1771 = vrot.lane.b32.xlu0 %v1722, 3
  %v1772 = vpop.permute.xlu0 %1771
  %1773 = vrot.lane.b32.xlu0 %v1723, 3
  %v1774 = vpop.permute.xlu0 %1773
  %1775 = vrot.lane.b32.xlu0 %v1724, 3
  %v1776 = vpop.permute.xlu0 %1775
  %1777 = vrot.lane.b32.xlu0 %v1725, 3
  %v1778 = vpop.permute.xlu0 %1777
  %1779 = vrot.lane.b32.xlu0 %v1726, 3
  %v1780 = vpop.permute.xlu0 %1779
  %1781 = vrot.lane.b32.xlu0 %v1727, 3
  %v1782 = vpop.permute.xlu0 %1781
  %1783 = vrot.lane.b32.xlu0 %v1728, 3
  %v1784 = vpop.permute.xlu0 %1783
  %1785 = vrot.lane.b32.xlu0 %v1729, 3
  %v1786 = vpop.permute.xlu0 %1785
  %1787 = vrot.lane.b32.xlu0 %v1730, 3
  %v1788 = vpop.permute.xlu0 %1787
  %1789 = vrot.lane.b32.xlu0 %v1731, 3
  %v1790 = vpop.permute.xlu0 %1789
  %1791 = vrot.lane.b32.xlu0 %v1732, 3
  %v1792 = vpop.permute.xlu0 %1791
  %1793 = vrot.lane.b32.xlu0 %v1733, 3
  %v1794 = vpop.permute.xlu0 %1793
  %1795 = vrot.lane.b32.xlu0 %v1734, 3
  %v1796 = vpop.permute.xlu0 %1795
  %1797 = vrot.lane.b32.xlu0 %v1735, 3
  %v1798 = vpop.permute.xlu0 %1797
  %1799 = vrot.lane.b32.xlu0 %v1736, 3
  %v1800 = vpop.permute.xlu0 %1799
  %1801 = vrot.lane.b32.xlu0 %v1737, 3
  %v1802 = vpop.permute.xlu0 %1801
  %1803 = vrot.lane.b32.xlu0 %v1738, 3
  %v1804 = vpop.permute.xlu0 %1803
  %1805 = vrot.lane.b32.xlu0 %v1739, 3
  %v1806 = vpop.permute.xlu0 %1805
  %1807 = vrot.lane.b32.xlu0 %v1740, 3
  %v1808 = vpop.permute.xlu0 %1807
  %1809 = vrot.lane.b32.xlu0 %v1741, 3
  %v1810 = vpop.permute.xlu0 %1809
  %1811 = vrot.lane.b32.xlu0 %v1742, 3
  %v1812 = vpop.permute.xlu0 %1811
  %1813 = vrot.lane.b32.xlu0 %v1743, 3
  %v1814 = vpop.permute.xlu0 %1813
  %1815 = vrot.lane.b32.xlu0 %v1744, 3
  %v1816 = vpop.permute.xlu0 %1815
  %v1841 = vadd.f32 %v1601, %v1770
  %v1842 = vadd.f32 %v1602, %v1772
  %v1843 = vadd.f32 %v1603, %v1774
  %v1844 = vadd.f32 %v1604, %v1776
  %v1845 = vadd.f32 %v1605, %v1778
  %v1846 = vadd.f32 %v1606, %v1780
  %v1847 = vadd.f32 %v1607, %v1782
  %v1848 = vadd.f32 %v1608, %v1784
  %v1849 = vadd.f32 %v1609, %v1786
  %v1850 = vadd.f32 %v1610, %v1788
  %v1851 = vadd.f32 %v1611, %v1790
  %v1852 = vadd.f32 %v1612, %v1792
  %v1853 = vadd.f32 %v1613, %v1794
  %v1854 = vadd.f32 %v1614, %v1796
  %v1855 = vadd.f32 %v1615, %v1798
  %v1856 = vadd.f32 %v1616, %v1800
  %v1857 = vadd.f32 %v1617, %v1802
  %v1858 = vadd.f32 %v1618, %v1804
  %v1859 = vadd.f32 %v1619, %v1806
  %v1860 = vadd.f32 %v1620, %v1808
  %v1861 = vadd.f32 %v1621, %v1810
  %v1862 = vadd.f32 %v1622, %v1812
  %v1863 = vadd.f32 %v1623, %v1814
  %v1864 = vadd.f32 %v1624, %v1816
  %1865 = vrot.lane.b32.xlu0 %v1073, 124
  %v1866 = vpop.permute.xlu0 %1865
  %1867 = vrot.lane.b32.xlu0 %v1074, 124
  %v1868 = vpop.permute.xlu0 %1867
  %1869 = vrot.lane.b32.xlu0 %v1075, 124
  %v1870 = vpop.permute.xlu0 %1869
  %1871 = vrot.lane.b32.xlu0 %v1076, 124
  %v1872 = vpop.permute.xlu0 %1871
  %1873 = vrot.lane.b32.xlu0 %v1077, 124
  %v1874 = vpop.permute.xlu0 %1873
  %1875 = vrot.lane.b32.xlu0 %v1078, 124
  %v1876 = vpop.permute.xlu0 %1875
  %1877 = vrot.lane.b32.xlu0 %v1079, 124
  %v1878 = vpop.permute.xlu0 %1877
  %1879 = vrot.lane.b32.xlu0 %v1080, 124
  %v1880 = vpop.permute.xlu0 %1879
  %1881 = vrot.lane.b32.xlu0 %v1081, 124
  %v1882 = vpop.permute.xlu0 %1881
  %1883 = vrot.lane.b32.xlu0 %v1082, 124
  %v1884 = vpop.permute.xlu0 %1883
  %1885 = vrot.lane.b32.xlu0 %v1083, 124
  %v1886 = vpop.permute.xlu0 %1885
  %1887 = vrot.lane.b32.xlu0 %v1084, 124
  %v1888 = vpop.permute.xlu0 %1887
  %1889 = vrot.lane.b32.xlu0 %v1085, 124
  %v1890 = vpop.permute.xlu0 %1889
  %1891 = vrot.lane.b32.xlu0 %v1086, 124
  %v1892 = vpop.permute.xlu0 %1891
  %1893 = vrot.lane.b32.xlu0 %v1087, 124
  %v1894 = vpop.permute.xlu0 %1893
  %1895 = vrot.lane.b32.xlu0 %v1088, 124
  %v1896 = vpop.permute.xlu0 %1895
  %1897 = vrot.lane.b32.xlu0 %v1089, 124
  %v1898 = vpop.permute.xlu0 %1897
  %1899 = vrot.lane.b32.xlu0 %v1090, 124
  %v1900 = vpop.permute.xlu0 %1899
  %1901 = vrot.lane.b32.xlu0 %v1091, 124
  %v1902 = vpop.permute.xlu0 %1901
  %1903 = vrot.lane.b32.xlu0 %v1092, 124
  %v1904 = vpop.permute.xlu0 %1903
  %1905 = vrot.lane.b32.xlu0 %v1093, 124
  %v1906 = vpop.permute.xlu0 %1905
  %1907 = vrot.lane.b32.xlu0 %v1094, 124
  %v1908 = vpop.permute.xlu0 %1907
  %1909 = vrot.lane.b32.xlu0 %v1095, 124
  %v1910 = vpop.permute.xlu0 %1909
  %1911 = vrot.lane.b32.xlu0 %v1096, 124
  %v1912 = vpop.permute.xlu0 %1911
  %v1937 = vadd.f32 %v1073, %v1866
  %v1938 = vadd.f32 %v1074, %v1868
  %v1939 = vadd.f32 %v1075, %v1870
  %v1940 = vadd.f32 %v1076, %v1872
  %v1941 = vadd.f32 %v1077, %v1874
  %v1942 = vadd.f32 %v1078, %v1876
  %v1943 = vadd.f32 %v1079, %v1878
  %v1944 = vadd.f32 %v1080, %v1880
  %v1945 = vadd.f32 %v1081, %v1882
  %v1946 = vadd.f32 %v1082, %v1884
  %v1947 = vadd.f32 %v1083, %v1886
  %v1948 = vadd.f32 %v1084, %v1888
  %v1949 = vadd.f32 %v1085, %v1890
  %v1950 = vadd.f32 %v1086, %v1892
  %v1951 = vadd.f32 %v1087, %v1894
  %v1952 = vadd.f32 %v1088, %v1896
  %v1953 = vadd.f32 %v1089, %v1898
  %v1954 = vadd.f32 %v1090, %v1900
  %v1955 = vadd.f32 %v1091, %v1902
  %v1956 = vadd.f32 %v1092, %v1904
  %v1957 = vadd.f32 %v1093, %v1906
  %v1958 = vadd.f32 %v1094, %v1908
  %v1959 = vadd.f32 %v1095, %v1910
  %v1960 = vadd.f32 %v1096, %v1912
  %v1961 = vmul.f32 %v1937, 0.10936069
  %v1962 = vmul.f32 %v1938, 0.10936069
  %v1963 = vmul.f32 %v1939, 0.10936069
  %v1964 = vmul.f32 %v1940, 0.10936069
  %v1965 = vmul.f32 %v1941, 0.10936069
  %v1966 = vmul.f32 %v1942, 0.10936069
  %v1967 = vmul.f32 %v1943, 0.10936069
  %v1968 = vmul.f32 %v1944, 0.10936069
  %v1969 = vmul.f32 %v1945, 0.10936069
  %v1970 = vmul.f32 %v1946, 0.10936069
  %v1971 = vmul.f32 %v1947, 0.10936069
  %v1972 = vmul.f32 %v1948, 0.10936069
  %v1973 = vmul.f32 %v1949, 0.10936069
  %v1974 = vmul.f32 %v1950, 0.10936069
  %v1975 = vmul.f32 %v1951, 0.10936069
  %v1976 = vmul.f32 %v1952, 0.10936069
  %v1977 = vmul.f32 %v1953, 0.10936069
  %v1978 = vmul.f32 %v1954, 0.10936069
  %v1979 = vmul.f32 %v1955, 0.10936069
  %v1980 = vmul.f32 %v1956, 0.10936069
  %v1981 = vmul.f32 %v1957, 0.10936069
  %v1982 = vmul.f32 %v1958, 0.10936069
  %v1983 = vmul.f32 %v1959, 0.10936069
  %v1984 = vmul.f32 %v1960, 0.10936069
  %2009 = vrot.lane.b32.xlu0 %v1961, 2
  %v2010 = vpop.permute.xlu0 %2009
  %2011 = vrot.lane.b32.xlu0 %v1962, 2
  %v2012 = vpop.permute.xlu0 %2011
  %2013 = vrot.lane.b32.xlu0 %v1963, 2
  %v2014 = vpop.permute.xlu0 %2013
  %2015 = vrot.lane.b32.xlu0 %v1964, 2
  %v2016 = vpop.permute.xlu0 %2015
  %2017 = vrot.lane.b32.xlu0 %v1965, 2
  %v2018 = vpop.permute.xlu0 %2017
  %2019 = vrot.lane.b32.xlu0 %v1966, 2
  %v2020 = vpop.permute.xlu0 %2019
  %2021 = vrot.lane.b32.xlu0 %v1967, 2
  %v2022 = vpop.permute.xlu0 %2021
  %2023 = vrot.lane.b32.xlu0 %v1968, 2
  %v2024 = vpop.permute.xlu0 %2023
  %2025 = vrot.lane.b32.xlu0 %v1969, 2
  %v2026 = vpop.permute.xlu0 %2025
  %2027 = vrot.lane.b32.xlu0 %v1970, 2
  %v2028 = vpop.permute.xlu0 %2027
  %2029 = vrot.lane.b32.xlu0 %v1971, 2
  %v2030 = vpop.permute.xlu0 %2029
  %2031 = vrot.lane.b32.xlu0 %v1972, 2
  %v2032 = vpop.permute.xlu0 %2031
  %2033 = vrot.lane.b32.xlu0 %v1973, 2
  %v2034 = vpop.permute.xlu0 %2033
  %2035 = vrot.lane.b32.xlu0 %v1974, 2
  %v2036 = vpop.permute.xlu0 %2035
  %2037 = vrot.lane.b32.xlu0 %v1975, 2
  %v2038 = vpop.permute.xlu0 %2037
  %2039 = vrot.lane.b32.xlu0 %v1976, 2
  %v2040 = vpop.permute.xlu0 %2039
  %2041 = vrot.lane.b32.xlu0 %v1977, 2
  %v2042 = vpop.permute.xlu0 %2041
  %2043 = vrot.lane.b32.xlu0 %v1978, 2
  %v2044 = vpop.permute.xlu0 %2043
  %2045 = vrot.lane.b32.xlu0 %v1979, 2
  %v2046 = vpop.permute.xlu0 %2045
  %2047 = vrot.lane.b32.xlu0 %v1980, 2
  %v2048 = vpop.permute.xlu0 %2047
  %2049 = vrot.lane.b32.xlu0 %v1981, 2
  %v2050 = vpop.permute.xlu0 %2049
  %2051 = vrot.lane.b32.xlu0 %v1982, 2
  %v2052 = vpop.permute.xlu0 %2051
  %2053 = vrot.lane.b32.xlu0 %v1983, 2
  %v2054 = vpop.permute.xlu0 %2053
  %2055 = vrot.lane.b32.xlu0 %v1984, 2
  %v2056 = vpop.permute.xlu0 %2055
  %v2081 = vadd.f32 %v1841, %v2010
  %v2082 = vadd.f32 %v1842, %v2012
  %v2083 = vadd.f32 %v1843, %v2014
  %v2084 = vadd.f32 %v1844, %v2016
  %v2085 = vadd.f32 %v1845, %v2018
  %v2086 = vadd.f32 %v1846, %v2020
  %v2087 = vadd.f32 %v1847, %v2022
  %v2088 = vadd.f32 %v1848, %v2024
  %v2089 = vadd.f32 %v1849, %v2026
  %v2090 = vadd.f32 %v1850, %v2028
  %v2091 = vadd.f32 %v1851, %v2030
  %v2092 = vadd.f32 %v1852, %v2032
  %v2093 = vadd.f32 %v1853, %v2034
  %v2094 = vadd.f32 %v1854, %v2036
  %v2095 = vadd.f32 %v1855, %v2038
  %v2096 = vadd.f32 %v1856, %v2040
  %v2097 = vadd.f32 %v1857, %v2042
  %v2098 = vadd.f32 %v1858, %v2044
  %v2099 = vadd.f32 %v1859, %v2046
  %v2100 = vadd.f32 %v1860, %v2048
  %v2101 = vadd.f32 %v1861, %v2050
  %v2102 = vadd.f32 %v1862, %v2052
  %v2103 = vadd.f32 %v1863, %v2054
  %v2104 = vadd.f32 %v1864, %v2056
  %2105 = vrot.lane.b32.xlu0 %v1073, 126
  %v2106 = vpop.permute.xlu0 %2105
  %2107 = vrot.lane.b32.xlu0 %v1074, 126
  %v2108 = vpop.permute.xlu0 %2107
  %2109 = vrot.lane.b32.xlu0 %v1075, 126
  %v2110 = vpop.permute.xlu0 %2109
  %2111 = vrot.lane.b32.xlu0 %v1076, 126
  %v2112 = vpop.permute.xlu0 %2111
  %2113 = vrot.lane.b32.xlu0 %v1077, 126
  %v2114 = vpop.permute.xlu0 %2113
  %2115 = vrot.lane.b32.xlu0 %v1078, 126
  %v2116 = vpop.permute.xlu0 %2115
  %2117 = vrot.lane.b32.xlu0 %v1079, 126
  %v2118 = vpop.permute.xlu0 %2117
  %2119 = vrot.lane.b32.xlu0 %v1080, 126
  %v2120 = vpop.permute.xlu0 %2119
  %2121 = vrot.lane.b32.xlu0 %v1081, 126
  %v2122 = vpop.permute.xlu0 %2121
  %2123 = vrot.lane.b32.xlu0 %v1082, 126
  %v2124 = vpop.permute.xlu0 %2123
  %2125 = vrot.lane.b32.xlu0 %v1083, 126
  %v2126 = vpop.permute.xlu0 %2125
  %2127 = vrot.lane.b32.xlu0 %v1084, 126
  %v2128 = vpop.permute.xlu0 %2127
  %2129 = vrot.lane.b32.xlu0 %v1085, 126
  %v2130 = vpop.permute.xlu0 %2129
  %2131 = vrot.lane.b32.xlu0 %v1086, 126
  %v2132 = vpop.permute.xlu0 %2131
  %2133 = vrot.lane.b32.xlu0 %v1087, 126
  %v2134 = vpop.permute.xlu0 %2133
  %2135 = vrot.lane.b32.xlu0 %v1088, 126
  %v2136 = vpop.permute.xlu0 %2135
  %2137 = vrot.lane.b32.xlu0 %v1089, 126
  %v2138 = vpop.permute.xlu0 %2137
  %2139 = vrot.lane.b32.xlu0 %v1090, 126
  %v2140 = vpop.permute.xlu0 %2139
  %2141 = vrot.lane.b32.xlu0 %v1091, 126
  %v2142 = vpop.permute.xlu0 %2141
  %2143 = vrot.lane.b32.xlu0 %v1092, 126
  %v2144 = vpop.permute.xlu0 %2143
  %2145 = vrot.lane.b32.xlu0 %v1093, 126
  %v2146 = vpop.permute.xlu0 %2145
  %2147 = vrot.lane.b32.xlu0 %v1094, 126
  %v2148 = vpop.permute.xlu0 %2147
  %2149 = vrot.lane.b32.xlu0 %v1095, 126
  %v2150 = vpop.permute.xlu0 %2149
  %2151 = vrot.lane.b32.xlu0 %v1096, 126
  %v2152 = vpop.permute.xlu0 %2151
  %v2177 = vadd.f32 %v1073, %v2106
  %v2178 = vadd.f32 %v1074, %v2108
  %v2179 = vadd.f32 %v1075, %v2110
  %v2180 = vadd.f32 %v1076, %v2112
  %v2181 = vadd.f32 %v1077, %v2114
  %v2182 = vadd.f32 %v1078, %v2116
  %v2183 = vadd.f32 %v1079, %v2118
  %v2184 = vadd.f32 %v1080, %v2120
  %v2185 = vadd.f32 %v1081, %v2122
  %v2186 = vadd.f32 %v1082, %v2124
  %v2187 = vadd.f32 %v1083, %v2126
  %v2188 = vadd.f32 %v1084, %v2128
  %v2189 = vadd.f32 %v1085, %v2130
  %v2190 = vadd.f32 %v1086, %v2132
  %v2191 = vadd.f32 %v1087, %v2134
  %v2192 = vadd.f32 %v1088, %v2136
  %v2193 = vadd.f32 %v1089, %v2138
  %v2194 = vadd.f32 %v1090, %v2140
  %v2195 = vadd.f32 %v1091, %v2142
  %v2196 = vadd.f32 %v1092, %v2144
  %v2197 = vadd.f32 %v1093, %v2146
  %v2198 = vadd.f32 %v1094, %v2148
  %v2199 = vadd.f32 %v1095, %v2150
  %v2200 = vadd.f32 %v1096, %v2152
  %v2201 = vmul.f32 %v2177, 0.21300554
  %v2202 = vmul.f32 %v2178, 0.21300554
  %v2203 = vmul.f32 %v2179, 0.21300554
  %v2204 = vmul.f32 %v2180, 0.21300554
  %v2205 = vmul.f32 %v2181, 0.21300554
  %v2206 = vmul.f32 %v2182, 0.21300554
  %v2207 = vmul.f32 %v2183, 0.21300554
  %v2208 = vmul.f32 %v2184, 0.21300554
  %v2209 = vmul.f32 %v2185, 0.21300554
  %v2210 = vmul.f32 %v2186, 0.21300554
  %v2211 = vmul.f32 %v2187, 0.21300554
  %v2212 = vmul.f32 %v2188, 0.21300554
  %v2213 = vmul.f32 %v2189, 0.21300554
  %v2214 = vmul.f32 %v2190, 0.21300554
  %v2215 = vmul.f32 %v2191, 0.21300554
  %v2216 = vmul.f32 %v2192, 0.21300554
  %v2217 = vmul.f32 %v2193, 0.21300554
  %v2218 = vmul.f32 %v2194, 0.21300554
  %v2219 = vmul.f32 %v2195, 0.21300554
  %v2220 = vmul.f32 %v2196, 0.21300554
  %v2221 = vmul.f32 %v2197, 0.21300554
  %v2222 = vmul.f32 %v2198, 0.21300554
  %v2223 = vmul.f32 %v2199, 0.21300554
  %v2224 = vmul.f32 %v2200, 0.21300554
  %2249 = vrot.lane.b32.xlu0 %v2201, 1
  %v2250 = vpop.permute.xlu0 %2249
  %2251 = vrot.lane.b32.xlu0 %v2202, 1
  %v2252 = vpop.permute.xlu0 %2251
  %2253 = vrot.lane.b32.xlu0 %v2203, 1
  %v2254 = vpop.permute.xlu0 %2253
  %2255 = vrot.lane.b32.xlu0 %v2204, 1
  %v2256 = vpop.permute.xlu0 %2255
  %2257 = vrot.lane.b32.xlu0 %v2205, 1
  %v2258 = vpop.permute.xlu0 %2257
  %2259 = vrot.lane.b32.xlu0 %v2206, 1
  %v2260 = vpop.permute.xlu0 %2259
  %2261 = vrot.lane.b32.xlu0 %v2207, 1
  %v2262 = vpop.permute.xlu0 %2261
  %2263 = vrot.lane.b32.xlu0 %v2208, 1
  %v2264 = vpop.permute.xlu0 %2263
  %2265 = vrot.lane.b32.xlu0 %v2209, 1
  %v2266 = vpop.permute.xlu0 %2265
  %2267 = vrot.lane.b32.xlu0 %v2210, 1
  %v2268 = vpop.permute.xlu0 %2267
  %2269 = vrot.lane.b32.xlu0 %v2211, 1
  %v2270 = vpop.permute.xlu0 %2269
  %2271 = vrot.lane.b32.xlu0 %v2212, 1
  %v2272 = vpop.permute.xlu0 %2271
  %2273 = vrot.lane.b32.xlu0 %v2213, 1
  %v2274 = vpop.permute.xlu0 %2273
  %2275 = vrot.lane.b32.xlu0 %v2214, 1
  %v2276 = vpop.permute.xlu0 %2275
  %2277 = vrot.lane.b32.xlu0 %v2215, 1
  %v2278 = vpop.permute.xlu0 %2277
  %2279 = vrot.lane.b32.xlu0 %v2216, 1
  %v2280 = vpop.permute.xlu0 %2279
  %2281 = vrot.lane.b32.xlu0 %v2217, 1
  %v2282 = vpop.permute.xlu0 %2281
  %2283 = vrot.lane.b32.xlu0 %v2218, 1
  %v2284 = vpop.permute.xlu0 %2283
  %2285 = vrot.lane.b32.xlu0 %v2219, 1
  %v2286 = vpop.permute.xlu0 %2285
  %2287 = vrot.lane.b32.xlu0 %v2220, 1
  %v2288 = vpop.permute.xlu0 %2287
  %2289 = vrot.lane.b32.xlu0 %v2221, 1
  %v2290 = vpop.permute.xlu0 %2289
  %2291 = vrot.lane.b32.xlu0 %v2222, 1
  %v2292 = vpop.permute.xlu0 %2291
  %2293 = vrot.lane.b32.xlu0 %v2223, 1
  %v2294 = vpop.permute.xlu0 %2293
  %2295 = vrot.lane.b32.xlu0 %v2224, 1
  %v2296 = vpop.permute.xlu0 %2295
  %v2321 = vadd.f32 %v2081, %v2250
  %v2322 = vadd.f32 %v2082, %v2252
  %v2323 = vadd.f32 %v2083, %v2254
  %v2324 = vadd.f32 %v2084, %v2256
  %v2325 = vadd.f32 %v2085, %v2258
  %v2326 = vadd.f32 %v2086, %v2260
  %v2327 = vadd.f32 %v2087, %v2262
  %v2328 = vadd.f32 %v2088, %v2264
  %v2329 = vadd.f32 %v2089, %v2266
  %v2330 = vadd.f32 %v2090, %v2268
  %v2331 = vadd.f32 %v2091, %v2270
  %v2332 = vadd.f32 %v2092, %v2272
  %v2333 = vadd.f32 %v2093, %v2274
  %v2334 = vadd.f32 %v2094, %v2276
  %v2335 = vadd.f32 %v2095, %v2278
  %v2336 = vadd.f32 %v2096, %v2280
  %v2337 = vadd.f32 %v2097, %v2282
  %v2338 = vadd.f32 %v2098, %v2284
  %v2339 = vadd.f32 %v2099, %v2286
  %v2340 = vadd.f32 %v2100, %v2288
  %v2341 = vadd.f32 %v2101, %v2290
  %v2342 = vadd.f32 %v2102, %v2292
  %v2343 = vadd.f32 %v2103, %v2294
  %v2344 = vadd.f32 %v2104, %v2296
  %v2345 = vmul.f32 %v43, 0.26601171
  %v2346 = vmul.f32 %v44, 0.26601171
  %v2347 = vmul.f32 %v45, 0.26601171
  %v2348 = vmul.f32 %v47, 0.26601171
  %v2349 = vmul.f32 %v48, 0.26601171
  %v2350 = vmul.f32 %v49, 0.26601171
  %v2351 = vmul.f32 %v51, 0.26601171
  %v2352 = vmul.f32 %v52, 0.26601171
  %v2353 = vmul.f32 %v53, 0.26601171
  %v2354 = vmul.f32 %v55, 0.26601171
  %v2355 = vmul.f32 %v56, 0.26601171
  %v2356 = vmul.f32 %v57, 0.26601171
  %v2357 = vmul.f32 %v59, 0.26601171
  %v2358 = vmul.f32 %v60, 0.26601171
  %v2359 = vmul.f32 %v61, 0.26601171
  %v2360 = vmul.f32 %v63, 0.26601171
  %v2361 = vmul.f32 %v64, 0.26601171
  %v2362 = vmul.f32 %v65, 0.26601171
  %v2363 = vmul.f32 %v67, 0.26601171
  %v2364 = vmul.f32 %v68, 0.26601171
  %v2365 = vmul.f32 %v69, 0.26601171
  %v2366 = vmul.f32 %v71, 0.26601171
  %v2367 = vmul.f32 %v72, 0.26601171
  %v2368 = vmul.f32 %v73, 0.26601171
  %v2393 = vrot.slane %v44, 2
  %v2394 = vrot.slane %v45, 2
  %v2395 = vsel %vm123, %v2393, %v2394
  %v2396 = vrot.slane %v46, 2
  %v2397 = vsel %vm123, %v2394, %v2396
  %v2398 = vrot.slane %v48, 2
  %v2399 = vrot.slane %v49, 2
  %v2400 = vsel %vm123, %v2398, %v2399
  %v2401 = vrot.slane %v50, 2
  %v2402 = vsel %vm123, %v2399, %v2401
  %v2403 = vrot.slane %v52, 2
  %v2404 = vrot.slane %v53, 2
  %v2405 = vsel %vm123, %v2403, %v2404
  %v2406 = vrot.slane %v54, 2
  %v2407 = vsel %vm123, %v2404, %v2406
  %v2408 = vrot.slane %v56, 2
  %v2409 = vrot.slane %v57, 2
  %v2410 = vsel %vm123, %v2408, %v2409
  %v2411 = vrot.slane %v58, 2
  %v2412 = vsel %vm123, %v2409, %v2411
  %v2413 = vrot.slane %v60, 2
  %v2414 = vrot.slane %v61, 2
  %v2415 = vsel %vm123, %v2413, %v2414
  %v2416 = vrot.slane %v62, 2
  %v2417 = vsel %vm123, %v2414, %v2416
  %v2418 = vrot.slane %v64, 2
  %v2419 = vrot.slane %v65, 2
  %v2420 = vsel %vm123, %v2418, %v2419
  %v2421 = vrot.slane %v66, 2
  %v2422 = vsel %vm123, %v2419, %v2421
  %v2423 = vrot.slane %v68, 2
  %v2424 = vrot.slane %v69, 2
  %v2425 = vsel %vm123, %v2423, %v2424
  %v2426 = vrot.slane %v70, 2
  %v2427 = vsel %vm123, %v2424, %v2426
  %v2428 = vrot.slane %v72, 2
  %v2429 = vrot.slane %v73, 2
  %v2430 = vsel %vm123, %v2428, %v2429
  %v2431 = vrot.slane %v74, 2
  %v2432 = vsel %vm123, %v2429, %v2431
  %v2449 = vadd.f32 %v43, %v2395
  %v2450 = vadd.f32 %v44, %v2397
  %v2451 = vadd.f32 %v47, %v2400
  %v2452 = vadd.f32 %v48, %v2402
  %v2453 = vadd.f32 %v51, %v2405
  %v2454 = vadd.f32 %v52, %v2407
  %v2455 = vadd.f32 %v55, %v2410
  %v2456 = vadd.f32 %v56, %v2412
  %v2457 = vadd.f32 %v59, %v2415
  %v2458 = vadd.f32 %v60, %v2417
  %v2459 = vadd.f32 %v63, %v2420
  %v2460 = vadd.f32 %v64, %v2422
  %v2461 = vadd.f32 %v67, %v2425
  %v2462 = vadd.f32 %v68, %v2427
  %v2463 = vadd.f32 %v71, %v2430
  %v2464 = vadd.f32 %v72, %v2432
  %v2465 = vmul.f32 %v2449, 0.0010283801
  %v2466 = vmul.f32 %v2450, 0.0010283801
  %v2467 = vmul.f32 %v2451, 0.0010283801
  %v2468 = vmul.f32 %v2452, 0.0010283801
  %v2469 = vmul.f32 %v2453, 0.0010283801
  %v2470 = vmul.f32 %v2454, 0.0010283801
  %v2471 = vmul.f32 %v2455, 0.0010283801
  %v2472 = vmul.f32 %v2456, 0.0010283801
  %v2473 = vmul.f32 %v2457, 0.0010283801
  %v2474 = vmul.f32 %v2458, 0.0010283801
  %v2475 = vmul.f32 %v2459, 0.0010283801
  %v2476 = vmul.f32 %v2460, 0.0010283801
  %v2477 = vmul.f32 %v2461, 0.0010283801
  %v2478 = vmul.f32 %v2462, 0.0010283801
  %v2479 = vmul.f32 %v2463, 0.0010283801
  %v2480 = vmul.f32 %v2464, 0.0010283801
  %v2497 = vrot.slane %v2465, 3
  %v2498 = vrot.slane %v2466, 3
  %v2499 = vsel %vm228, %v2497, %v2498
  %v2500 = vrot.slane %v2467, 3
  %v2501 = vrot.slane %v2468, 3
  %v2502 = vsel %vm228, %v2500, %v2501
  %v2503 = vrot.slane %v2469, 3
  %v2504 = vrot.slane %v2470, 3
  %v2505 = vsel %vm228, %v2503, %v2504
  %v2506 = vrot.slane %v2471, 3
  %v2507 = vrot.slane %v2472, 3
  %v2508 = vsel %vm228, %v2506, %v2507
  %v2509 = vrot.slane %v2473, 3
  %v2510 = vrot.slane %v2474, 3
  %v2511 = vsel %vm228, %v2509, %v2510
  %v2512 = vrot.slane %v2475, 3
  %v2513 = vrot.slane %v2476, 3
  %v2514 = vsel %vm228, %v2512, %v2513
  %v2515 = vrot.slane %v2477, 3
  %v2516 = vrot.slane %v2478, 3
  %v2517 = vsel %vm228, %v2515, %v2516
  %v2518 = vrot.slane %v2479, 3
  %v2519 = vrot.slane %v2480, 3
  %v2520 = vsel %vm228, %v2518, %v2519
  %v2545 = vadd.f32 %v2345, %v2497
  %v2546 = vadd.f32 %v2346, %v2499
  %v2547 = vadd.f32 %v2347, %v2498
  %v2548 = vadd.f32 %v2348, %v2500
  %v2549 = vadd.f32 %v2349, %v2502
  %v2550 = vadd.f32 %v2350, %v2501
  %v2551 = vadd.f32 %v2351, %v2503
  %v2552 = vadd.f32 %v2352, %v2505
  %v2553 = vadd.f32 %v2353, %v2504
  %v2554 = vadd.f32 %v2354, %v2506
  %v2555 = vadd.f32 %v2355, %v2508
  %v2556 = vadd.f32 %v2356, %v2507
  %v2557 = vadd.f32 %v2357, %v2509
  %v2558 = vadd.f32 %v2358, %v2511
  %v2559 = vadd.f32 %v2359, %v2510
  %v2560 = vadd.f32 %v2360, %v2512
  %v2561 = vadd.f32 %v2361, %v2514
  %v2562 = vadd.f32 %v2362, %v2513
  %v2563 = vadd.f32 %v2363, %v2515
  %v2564 = vadd.f32 %v2364, %v2517
  %v2565 = vadd.f32 %v2365, %v2516
  %v2566 = vadd.f32 %v2366, %v2518
  %v2567 = vadd.f32 %v2367, %v2520
  %v2568 = vadd.f32 %v2368, %v2519
  %v2569 = vadd.f32 %v43, %v44
  %v2570 = vadd.f32 %v44, %v45
  %v2571 = vadd.f32 %v45, %v46
  %v2572 = vadd.f32 %v47, %v48
  %v2573 = vadd.f32 %v48, %v49
  %v2574 = vadd.f32 %v49, %v50
  %v2575 = vadd.f32 %v51, %v52
  %v2576 = vadd.f32 %v52, %v53
  %v2577 = vadd.f32 %v53, %v54
  %v2578 = vadd.f32 %v55, %v56
  %v2579 = vadd.f32 %v56, %v57
  %v2580 = vadd.f32 %v57, %v58
  %v2581 = vadd.f32 %v59, %v60
  %v2582 = vadd.f32 %v60, %v61
  %v2583 = vadd.f32 %v61, %v62
  %v2584 = vadd.f32 %v63, %v64
  %v2585 = vadd.f32 %v64, %v65
  %v2586 = vadd.f32 %v65, %v66
  %v2587 = vadd.f32 %v67, %v68
  %v2588 = vadd.f32 %v68, %v69
  %v2589 = vadd.f32 %v69, %v70
  %v2590 = vadd.f32 %v71, %v72
  %v2591 = vadd.f32 %v72, %v73
  %v2592 = vadd.f32 %v73, %v74
  %v2593 = vmul.f32 %v2569, 0.007598758
  %v2594 = vmul.f32 %v2570, 0.007598758
  %v2595 = vmul.f32 %v2571, 0.007598758
  %v2596 = vmul.f32 %v2572, 0.007598758
  %v2597 = vmul.f32 %v2573, 0.007598758
  %v2598 = vmul.f32 %v2574, 0.007598758
  %v2599 = vmul.f32 %v2575, 0.007598758
  %v2600 = vmul.f32 %v2576, 0.007598758
  %v2601 = vmul.f32 %v2577, 0.007598758
  %v2602 = vmul.f32 %v2578, 0.007598758
  %v2603 = vmul.f32 %v2579, 0.007598758
  %v2604 = vmul.f32 %v2580, 0.007598758
  %v2605 = vmul.f32 %v2581, 0.007598758
  %v2606 = vmul.f32 %v2582, 0.007598758
  %v2607 = vmul.f32 %v2583, 0.007598758
  %v2608 = vmul.f32 %v2584, 0.007598758
  %v2609 = vmul.f32 %v2585, 0.007598758
  %v2610 = vmul.f32 %v2586, 0.007598758
  %v2611 = vmul.f32 %v2587, 0.007598758
  %v2612 = vmul.f32 %v2588, 0.007598758
  %v2613 = vmul.f32 %v2589, 0.007598758
  %v2614 = vmul.f32 %v2590, 0.007598758
  %v2615 = vmul.f32 %v2591, 0.007598758
  %v2616 = vmul.f32 %v2592, 0.007598758
  %v2641 = vrot.slane %v2593, 4
  %v2642 = vrot.slane %v2594, 4
  %v2643 = vsel %vm373, %v2641, %v2642
  %v2644 = vrot.slane %v2595, 4
  %v2645 = vsel %vm373, %v2642, %v2644
  %v2646 = vrot.slane %v2596, 4
  %v2647 = vrot.slane %v2597, 4
  %v2648 = vsel %vm373, %v2646, %v2647
  %v2649 = vrot.slane %v2598, 4
  %v2650 = vsel %vm373, %v2647, %v2649
  %v2651 = vrot.slane %v2599, 4
  %v2652 = vrot.slane %v2600, 4
  %v2653 = vsel %vm373, %v2651, %v2652
  %v2654 = vrot.slane %v2601, 4
  %v2655 = vsel %vm373, %v2652, %v2654
  %v2656 = vrot.slane %v2602, 4
  %v2657 = vrot.slane %v2603, 4
  %v2658 = vsel %vm373, %v2656, %v2657
  %v2659 = vrot.slane %v2604, 4
  %v2660 = vsel %vm373, %v2657, %v2659
  %v2661 = vrot.slane %v2605, 4
  %v2662 = vrot.slane %v2606, 4
  %v2663 = vsel %vm373, %v2661, %v2662
  %v2664 = vrot.slane %v2607, 4
  %v2665 = vsel %vm373, %v2662, %v2664
  %v2666 = vrot.slane %v2608, 4
  %v2667 = vrot.slane %v2609, 4
  %v2668 = vsel %vm373, %v2666, %v2667
  %v2669 = vrot.slane %v2610, 4
  %v2670 = vsel %vm373, %v2667, %v2669
  %v2671 = vrot.slane %v2611, 4
  %v2672 = vrot.slane %v2612, 4
  %v2673 = vsel %vm373, %v2671, %v2672
  %v2674 = vrot.slane %v2613, 4
  %v2675 = vsel %vm373, %v2672, %v2674
  %v2676 = vrot.slane %v2614, 4
  %v2677 = vrot.slane %v2615, 4
  %v2678 = vsel %vm373, %v2676, %v2677
  %v2679 = vrot.slane %v2616, 4
  %v2680 = vsel %vm373, %v2677, %v2679
  %v2705 = vadd.f32 %v2545, %v2641
  %v2706 = vadd.f32 %v2546, %v2643
  %v2707 = vadd.f32 %v2547, %v2645
  %v2708 = vadd.f32 %v2548, %v2646
  %v2709 = vadd.f32 %v2549, %v2648
  %v2710 = vadd.f32 %v2550, %v2650
  %v2711 = vadd.f32 %v2551, %v2651
  %v2712 = vadd.f32 %v2552, %v2653
  %v2713 = vadd.f32 %v2553, %v2655
  %v2714 = vadd.f32 %v2554, %v2656
  %v2715 = vadd.f32 %v2555, %v2658
  %v2716 = vadd.f32 %v2556, %v2660
  %v2717 = vadd.f32 %v2557, %v2661
  %v2718 = vadd.f32 %v2558, %v2663
  %v2719 = vadd.f32 %v2559, %v2665
  %v2720 = vadd.f32 %v2560, %v2666
  %v2721 = vadd.f32 %v2561, %v2668
  %v2722 = vadd.f32 %v2562, %v2670
  %v2723 = vadd.f32 %v2563, %v2671
  %v2724 = vadd.f32 %v2564, %v2673
  %v2725 = vadd.f32 %v2565, %v2675
  %v2726 = vadd.f32 %v2566, %v2676
  %v2727 = vadd.f32 %v2567, %v2678
  %v2728 = vadd.f32 %v2568, %v2680
  %v2729 = vrot.slane %v44, 6
  %v2730 = vrot.slane %v45, 6
  %v2731 = vsel %vm462, %v2729, %v2730
  %v2732 = vrot.slane %v48, 6
  %v2733 = vrot.slane %v49, 6
  %v2734 = vsel %vm462, %v2732, %v2733
  %v2735 = vrot.slane %v52, 6
  %v2736 = vrot.slane %v53, 6
  %v2737 = vsel %vm462, %v2735, %v2736
  %v2738 = vrot.slane %v56, 6
  %v2739 = vrot.slane %v57, 6
  %v2740 = vsel %vm462, %v2738, %v2739
  %v2741 = vrot.slane %v60, 6
  %v2742 = vrot.slane %v61, 6
  %v2743 = vsel %vm462, %v2741, %v2742
  %v2744 = vrot.slane %v64, 6
  %v2745 = vrot.slane %v65, 6
  %v2746 = vsel %vm462, %v2744, %v2745
  %v2747 = vrot.slane %v68, 6
  %v2748 = vrot.slane %v69, 6
  %v2749 = vsel %vm462, %v2747, %v2748
  %v2750 = vrot.slane %v72, 6
  %v2751 = vrot.slane %v73, 6
  %v2752 = vsel %vm462, %v2750, %v2751
  %v2777 = vadd.f32 %v43, %v2729
  %v2778 = vadd.f32 %v44, %v2731
  %v2779 = vadd.f32 %v45, %v2730
  %v2780 = vadd.f32 %v47, %v2732
  %v2781 = vadd.f32 %v48, %v2734
  %v2782 = vadd.f32 %v49, %v2733
  %v2783 = vadd.f32 %v51, %v2735
  %v2784 = vadd.f32 %v52, %v2737
  %v2785 = vadd.f32 %v53, %v2736
  %v2786 = vadd.f32 %v55, %v2738
  %v2787 = vadd.f32 %v56, %v2740
  %v2788 = vadd.f32 %v57, %v2739
  %v2789 = vadd.f32 %v59, %v2741
  %v2790 = vadd.f32 %v60, %v2743
  %v2791 = vadd.f32 %v61, %v2742
  %v2792 = vadd.f32 %v63, %v2744
  %v2793 = vadd.f32 %v64, %v2746
  %v2794 = vadd.f32 %v65, %v2745
  %v2795 = vadd.f32 %v67, %v2747
  %v2796 = vadd.f32 %v68, %v2749
  %v2797 = vadd.f32 %v69, %v2748
  %v2798 = vadd.f32 %v71, %v2750
  %v2799 = vadd.f32 %v72, %v2752
  %v2800 = vadd.f32 %v73, %v2751
  %v2801 = vmul.f32 %v2777, 0.036000773
  %v2802 = vmul.f32 %v2778, 0.036000773
  %v2803 = vmul.f32 %v2779, 0.036000773
  %v2804 = vmul.f32 %v2780, 0.036000773
  %v2805 = vmul.f32 %v2781, 0.036000773
  %v2806 = vmul.f32 %v2782, 0.036000773
  %v2807 = vmul.f32 %v2783, 0.036000773
  %v2808 = vmul.f32 %v2784, 0.036000773
  %v2809 = vmul.f32 %v2785, 0.036000773
  %v2810 = vmul.f32 %v2786, 0.036000773
  %v2811 = vmul.f32 %v2787, 0.036000773
  %v2812 = vmul.f32 %v2788, 0.036000773
  %v2813 = vmul.f32 %v2789, 0.036000773
  %v2814 = vmul.f32 %v2790, 0.036000773
  %v2815 = vmul.f32 %v2791, 0.036000773
  %v2816 = vmul.f32 %v2792, 0.036000773
  %v2817 = vmul.f32 %v2793, 0.036000773
  %v2818 = vmul.f32 %v2794, 0.036000773
  %v2819 = vmul.f32 %v2795, 0.036000773
  %v2820 = vmul.f32 %v2796, 0.036000773
  %v2821 = vmul.f32 %v2797, 0.036000773
  %v2822 = vmul.f32 %v2798, 0.036000773
  %v2823 = vmul.f32 %v2799, 0.036000773
  %v2824 = vmul.f32 %v2800, 0.036000773
  %v2849 = vrot.slane %v2801, 5
  %v2850 = vrot.slane %v2802, 5
  %v2851 = vsel %vm583, %v2849, %v2850
  %v2852 = vrot.slane %v2803, 5
  %v2853 = vsel %vm583, %v2850, %v2852
  %v2854 = vrot.slane %v2804, 5
  %v2855 = vrot.slane %v2805, 5
  %v2856 = vsel %vm583, %v2854, %v2855
  %v2857 = vrot.slane %v2806, 5
  %v2858 = vsel %vm583, %v2855, %v2857
  %v2859 = vrot.slane %v2807, 5
  %v2860 = vrot.slane %v2808, 5
  %v2861 = vsel %vm583, %v2859, %v2860
  %v2862 = vrot.slane %v2809, 5
  %v2863 = vsel %vm583, %v2860, %v2862
  %v2864 = vrot.slane %v2810, 5
  %v2865 = vrot.slane %v2811, 5
  %v2866 = vsel %vm583, %v2864, %v2865
  %v2867 = vrot.slane %v2812, 5
  %v2868 = vsel %vm583, %v2865, %v2867
  %v2869 = vrot.slane %v2813, 5
  %v2870 = vrot.slane %v2814, 5
  %v2871 = vsel %vm583, %v2869, %v2870
  %v2872 = vrot.slane %v2815, 5
  %v2873 = vsel %vm583, %v2870, %v2872
  %v2874 = vrot.slane %v2816, 5
  %v2875 = vrot.slane %v2817, 5
  %v2876 = vsel %vm583, %v2874, %v2875
  %v2877 = vrot.slane %v2818, 5
  %v2878 = vsel %vm583, %v2875, %v2877
  %v2879 = vrot.slane %v2819, 5
  %v2880 = vrot.slane %v2820, 5
  %v2881 = vsel %vm583, %v2879, %v2880
  %v2882 = vrot.slane %v2821, 5
  %v2883 = vsel %vm583, %v2880, %v2882
  %v2884 = vrot.slane %v2822, 5
  %v2885 = vrot.slane %v2823, 5
  %v2886 = vsel %vm583, %v2884, %v2885
  %v2887 = vrot.slane %v2824, 5
  %v2888 = vsel %vm583, %v2885, %v2887
  %v2913 = vadd.f32 %v2705, %v2849
  %v2914 = vadd.f32 %v2706, %v2851
  %v2915 = vadd.f32 %v2707, %v2853
  %v2916 = vadd.f32 %v2708, %v2854
  %v2917 = vadd.f32 %v2709, %v2856
  %v2918 = vadd.f32 %v2710, %v2858
  %v2919 = vadd.f32 %v2711, %v2859
  %v2920 = vadd.f32 %v2712, %v2861
  %v2921 = vadd.f32 %v2713, %v2863
  %v2922 = vadd.f32 %v2714, %v2864
  %v2923 = vadd.f32 %v2715, %v2866
  %v2924 = vadd.f32 %v2716, %v2868
  %v2925 = vadd.f32 %v2717, %v2869
  %v2926 = vadd.f32 %v2718, %v2871
  %v2927 = vadd.f32 %v2719, %v2873
  %v2928 = vadd.f32 %v2720, %v2874
  %v2929 = vadd.f32 %v2721, %v2876
  %v2930 = vadd.f32 %v2722, %v2878
  %v2931 = vadd.f32 %v2723, %v2879
  %v2932 = vadd.f32 %v2724, %v2881
  %v2933 = vadd.f32 %v2725, %v2883
  %v2934 = vadd.f32 %v2726, %v2884
  %v2935 = vadd.f32 %v2727, %v2886
  %v2936 = vadd.f32 %v2728, %v2888
  %v2945 = vrot.slane %v43, 4
  %v2946 = vrot.slane %v44, 4
  %v2947 = vsel %vm373, %v2945, %v2946
  %v2948 = vrot.slane %v45, 4
  %v2949 = vsel %vm373, %v2946, %v2948
  %v2950 = vrot.slane %v47, 4
  %v2951 = vrot.slane %v48, 4
  %v2952 = vsel %vm373, %v2950, %v2951
  %v2953 = vrot.slane %v49, 4
  %v2954 = vsel %vm373, %v2951, %v2953
  %v2955 = vrot.slane %v51, 4
  %v2956 = vrot.slane %v52, 4
  %v2957 = vsel %vm373, %v2955, %v2956
  %v2958 = vrot.slane %v53, 4
  %v2959 = vsel %vm373, %v2956, %v2958
  %v2960 = vrot.slane %v55, 4
  %v2961 = vrot.slane %v56, 4
  %v2962 = vsel %vm373, %v2960, %v2961
  %v2963 = vrot.slane %v57, 4
  %v2964 = vsel %vm373, %v2961, %v2963
  %v2965 = vrot.slane %v59, 4
  %v2966 = vrot.slane %v60, 4
  %v2967 = vsel %vm373, %v2965, %v2966
  %v2968 = vrot.slane %v61, 4
  %v2969 = vsel %vm373, %v2966, %v2968
  %v2970 = vrot.slane %v63, 4
  %v2971 = vrot.slane %v64, 4
  %v2972 = vsel %vm373, %v2970, %v2971
  %v2973 = vrot.slane %v65, 4
  %v2974 = vsel %vm373, %v2971, %v2973
  %v2975 = vrot.slane %v67, 4
  %v2976 = vrot.slane %v68, 4
  %v2977 = vsel %vm373, %v2975, %v2976
  %v2978 = vrot.slane %v69, 4
  %v2979 = vsel %vm373, %v2976, %v2978
  %v2980 = vrot.slane %v71, 4
  %v2981 = vrot.slane %v72, 4
  %v2982 = vsel %vm373, %v2980, %v2981
  %v2983 = vrot.slane %v73, 4
  %v2984 = vsel %vm373, %v2981, %v2983
  %v3009 = vadd.f32 %v43, %v2947
  %v3010 = vadd.f32 %v44, %v2949
  %v3011 = vadd.f32 %v45, %v2948
  %v3012 = vadd.f32 %v47, %v2952
  %v3013 = vadd.f32 %v48, %v2954
  %v3014 = vadd.f32 %v49, %v2953
  %v3015 = vadd.f32 %v51, %v2957
  %v3016 = vadd.f32 %v52, %v2959
  %v3017 = vadd.f32 %v53, %v2958
  %v3018 = vadd.f32 %v55, %v2962
  %v3019 = vadd.f32 %v56, %v2964
  %v3020 = vadd.f32 %v57, %v2963
  %v3021 = vadd.f32 %v59, %v2967
  %v3022 = vadd.f32 %v60, %v2969
  %v3023 = vadd.f32 %v61, %v2968
  %v3024 = vadd.f32 %v63, %v2972
  %v3025 = vadd.f32 %v64, %v2974
  %v3026 = vadd.f32 %v65, %v2973
  %v3027 = vadd.f32 %v67, %v2977
  %v3028 = vadd.f32 %v68, %v2979
  %v3029 = vadd.f32 %v69, %v2978
  %v3030 = vadd.f32 %v71, %v2982
  %v3031 = vadd.f32 %v72, %v2984
  %v3032 = vadd.f32 %v73, %v2983
  %v3033 = vmul.f32 %v3009, 0.10936069
  %v3034 = vmul.f32 %v3010, 0.10936069
  %v3035 = vmul.f32 %v3011, 0.10936069
  %v3036 = vmul.f32 %v3012, 0.10936069
  %v3037 = vmul.f32 %v3013, 0.10936069
  %v3038 = vmul.f32 %v3014, 0.10936069
  %v3039 = vmul.f32 %v3015, 0.10936069
  %v3040 = vmul.f32 %v3016, 0.10936069
  %v3041 = vmul.f32 %v3017, 0.10936069
  %v3042 = vmul.f32 %v3018, 0.10936069
  %v3043 = vmul.f32 %v3019, 0.10936069
  %v3044 = vmul.f32 %v3020, 0.10936069
  %v3045 = vmul.f32 %v3021, 0.10936069
  %v3046 = vmul.f32 %v3022, 0.10936069
  %v3047 = vmul.f32 %v3023, 0.10936069
  %v3048 = vmul.f32 %v3024, 0.10936069
  %v3049 = vmul.f32 %v3025, 0.10936069
  %v3050 = vmul.f32 %v3026, 0.10936069
  %v3051 = vmul.f32 %v3027, 0.10936069
  %v3052 = vmul.f32 %v3028, 0.10936069
  %v3053 = vmul.f32 %v3029, 0.10936069
  %v3054 = vmul.f32 %v3030, 0.10936069
  %v3055 = vmul.f32 %v3031, 0.10936069
  %v3056 = vmul.f32 %v3032, 0.10936069
  %v3081 = vrot.slane %v3033, 6
  %v3082 = vrot.slane %v3034, 6
  %v3083 = vsel %vm462, %v3081, %v3082
  %v3084 = vrot.slane %v3035, 6
  %v3085 = vsel %vm462, %v3082, %v3084
  %v3086 = vrot.slane %v3036, 6
  %v3087 = vrot.slane %v3037, 6
  %v3088 = vsel %vm462, %v3086, %v3087
  %v3089 = vrot.slane %v3038, 6
  %v3090 = vsel %vm462, %v3087, %v3089
  %v3091 = vrot.slane %v3039, 6
  %v3092 = vrot.slane %v3040, 6
  %v3093 = vsel %vm462, %v3091, %v3092
  %v3094 = vrot.slane %v3041, 6
  %v3095 = vsel %vm462, %v3092, %v3094
  %v3096 = vrot.slane %v3042, 6
  %v3097 = vrot.slane %v3043, 6
  %v3098 = vsel %vm462, %v3096, %v3097
  %v3099 = vrot.slane %v3044, 6
  %v3100 = vsel %vm462, %v3097, %v3099
  %v3101 = vrot.slane %v3045, 6
  %v3102 = vrot.slane %v3046, 6
  %v3103 = vsel %vm462, %v3101, %v3102
  %v3104 = vrot.slane %v3047, 6
  %v3105 = vsel %vm462, %v3102, %v3104
  %v3106 = vrot.slane %v3048, 6
  %v3107 = vrot.slane %v3049, 6
  %v3108 = vsel %vm462, %v3106, %v3107
  %v3109 = vrot.slane %v3050, 6
  %v3110 = vsel %vm462, %v3107, %v3109
  %v3111 = vrot.slane %v3051, 6
  %v3112 = vrot.slane %v3052, 6
  %v3113 = vsel %vm462, %v3111, %v3112
  %v3114 = vrot.slane %v3053, 6
  %v3115 = vsel %vm462, %v3112, %v3114
  %v3116 = vrot.slane %v3054, 6
  %v3117 = vrot.slane %v3055, 6
  %v3118 = vsel %vm462, %v3116, %v3117
  %v3119 = vrot.slane %v3056, 6
  %v3120 = vsel %vm462, %v3117, %v3119
  %v3145 = vadd.f32 %v2913, %v3081
  %v3146 = vadd.f32 %v2914, %v3083
  %v3147 = vadd.f32 %v2915, %v3085
  %v3148 = vadd.f32 %v2916, %v3086
  %v3149 = vadd.f32 %v2917, %v3088
  %v3150 = vadd.f32 %v2918, %v3090
  %v3151 = vadd.f32 %v2919, %v3091
  %v3152 = vadd.f32 %v2920, %v3093
  %v3153 = vadd.f32 %v2921, %v3095
  %v3154 = vadd.f32 %v2922, %v3096
  %v3155 = vadd.f32 %v2923, %v3098
  %v3156 = vadd.f32 %v2924, %v3100
  %v3157 = vadd.f32 %v2925, %v3101
  %v3158 = vadd.f32 %v2926, %v3103
  %v3159 = vadd.f32 %v2927, %v3105
  %v3160 = vadd.f32 %v2928, %v3106
  %v3161 = vadd.f32 %v2929, %v3108
  %v3162 = vadd.f32 %v2930, %v3110
  %v3163 = vadd.f32 %v2931, %v3111
  %v3164 = vadd.f32 %v2932, %v3113
  %v3165 = vadd.f32 %v2933, %v3115
  %v3166 = vadd.f32 %v2934, %v3116
  %v3167 = vadd.f32 %v2935, %v3118
  %v3168 = vadd.f32 %v2936, %v3120
  %v3169 = vrot.slane %v43, 2
  %v3170 = vsel %vm123, %v3169, %v2393
  %v3171 = vrot.slane %v47, 2
  %v3172 = vsel %vm123, %v3171, %v2398
  %v3173 = vrot.slane %v51, 2
  %v3174 = vsel %vm123, %v3173, %v2403
  %v3175 = vrot.slane %v55, 2
  %v3176 = vsel %vm123, %v3175, %v2408
  %v3177 = vrot.slane %v59, 2
  %v3178 = vsel %vm123, %v3177, %v2413
  %v3179 = vrot.slane %v63, 2
  %v3180 = vsel %vm123, %v3179, %v2418
  %v3181 = vrot.slane %v67, 2
  %v3182 = vsel %vm123, %v3181, %v2423
  %v3183 = vrot.slane %v71, 2
  %v3184 = vsel %vm123, %v3183, %v2428
  %v3201 = vadd.f32 %v43, %v3170
  %v3202 = vadd.f32 %v44, %v2395
  %v3203 = vadd.f32 %v45, %v2394
  %v3204 = vadd.f32 %v47, %v3172
  %v3205 = vadd.f32 %v48, %v2400
  %v3206 = vadd.f32 %v49, %v2399
  %v3207 = vadd.f32 %v51, %v3174
  %v3208 = vadd.f32 %v52, %v2405
  %v3209 = vadd.f32 %v53, %v2404
  %v3210 = vadd.f32 %v55, %v3176
  %v3211 = vadd.f32 %v56, %v2410
  %v3212 = vadd.f32 %v57, %v2409
  %v3213 = vadd.f32 %v59, %v3178
  %v3214 = vadd.f32 %v60, %v2415
  %v3215 = vadd.f32 %v61, %v2414
  %v3216 = vadd.f32 %v63, %v3180
  %v3217 = vadd.f32 %v64, %v2420
  %v3218 = vadd.f32 %v65, %v2419
  %v3219 = vadd.f32 %v67, %v3182
  %v3220 = vadd.f32 %v68, %v2425
  %v3221 = vadd.f32 %v69, %v2424
  %v3222 = vadd.f32 %v71, %v3184
  %v3223 = vadd.f32 %v72, %v2430
  %v3224 = vadd.f32 %v73, %v2429
  %v3225 = vmul.f32 %v3201, 0.21300554
  %v3226 = vmul.f32 %v3202, 0.21300554
  %v3227 = vmul.f32 %v3203, 0.21300554
  %v3228 = vmul.f32 %v3204, 0.21300554
  %v3229 = vmul.f32 %v3205, 0.21300554
  %v3230 = vmul.f32 %v3206, 0.21300554
  %v3231 = vmul.f32 %v3207, 0.21300554
  %v3232 = vmul.f32 %v3208, 0.21300554
  %v3233 = vmul.f32 %v3209, 0.21300554
  %v3234 = vmul.f32 %v3210, 0.21300554
  %v3235 = vmul.f32 %v3211, 0.21300554
  %v3236 = vmul.f32 %v3212, 0.21300554
  %v3237 = vmul.f32 %v3213, 0.21300554
  %v3238 = vmul.f32 %v3214, 0.21300554
  %v3239 = vmul.f32 %v3215, 0.21300554
  %v3240 = vmul.f32 %v3216, 0.21300554
  %v3241 = vmul.f32 %v3217, 0.21300554
  %v3242 = vmul.f32 %v3218, 0.21300554
  %v3243 = vmul.f32 %v3219, 0.21300554
  %v3244 = vmul.f32 %v3220, 0.21300554
  %v3245 = vmul.f32 %v3221, 0.21300554
  %v3246 = vmul.f32 %v3222, 0.21300554
  %v3247 = vmul.f32 %v3223, 0.21300554
  %v3248 = vmul.f32 %v3224, 0.21300554
  %v3273 = vrot.slane %v3225, 7
  %v3274 = vrot.slane %v3226, 7
  %v3275 = vsel %vm1008, %v3273, %v3274
  %v3276 = vrot.slane %v3227, 7
  %v3277 = vsel %vm1008, %v3274, %v3276
  %v3278 = vrot.slane %v3228, 7
  %v3279 = vrot.slane %v3229, 7
  %v3280 = vsel %vm1008, %v3278, %v3279
  %v3281 = vrot.slane %v3230, 7
  %v3282 = vsel %vm1008, %v3279, %v3281
  %v3283 = vrot.slane %v3231, 7
  %v3284 = vrot.slane %v3232, 7
  %v3285 = vsel %vm1008, %v3283, %v3284
  %v3286 = vrot.slane %v3233, 7
  %v3287 = vsel %vm1008, %v3284, %v3286
  %v3288 = vrot.slane %v3234, 7
  %v3289 = vrot.slane %v3235, 7
  %v3290 = vsel %vm1008, %v3288, %v3289
  %v3291 = vrot.slane %v3236, 7
  %v3292 = vsel %vm1008, %v3289, %v3291
  %v3293 = vrot.slane %v3237, 7
  %v3294 = vrot.slane %v3238, 7
  %v3295 = vsel %vm1008, %v3293, %v3294
  %v3296 = vrot.slane %v3239, 7
  %v3297 = vsel %vm1008, %v3294, %v3296
  %v3298 = vrot.slane %v3240, 7
  %v3299 = vrot.slane %v3241, 7
  %v3300 = vsel %vm1008, %v3298, %v3299
  %v3301 = vrot.slane %v3242, 7
  %v3302 = vsel %vm1008, %v3299, %v3301
  %v3303 = vrot.slane %v3243, 7
  %v3304 = vrot.slane %v3244, 7
  %v3305 = vsel %vm1008, %v3303, %v3304
  %v3306 = vrot.slane %v3245, 7
  %v3307 = vsel %vm1008, %v3304, %v3306
  %v3308 = vrot.slane %v3246, 7
  %v3309 = vrot.slane %v3247, 7
  %v3310 = vsel %vm1008, %v3308, %v3309
  %v3311 = vrot.slane %v3248, 7
  %v3312 = vsel %vm1008, %v3309, %v3311
  %v3337 = vadd.f32 %v3145, %v3273
  %v3338 = vadd.f32 %v3146, %v3275
  %v3339 = vadd.f32 %v3147, %v3277
  %v3340 = vadd.f32 %v3148, %v3278
  %v3341 = vadd.f32 %v3149, %v3280
  %v3342 = vadd.f32 %v3150, %v3282
  %v3343 = vadd.f32 %v3151, %v3283
  %v3344 = vadd.f32 %v3152, %v3285
  %v3345 = vadd.f32 %v3153, %v3287
  %v3346 = vadd.f32 %v3154, %v3288
  %v3347 = vadd.f32 %v3155, %v3290
  %v3348 = vadd.f32 %v3156, %v3292
  %v3349 = vadd.f32 %v3157, %v3293
  %v3350 = vadd.f32 %v3158, %v3295
  %v3351 = vadd.f32 %v3159, %v3297
  %v3352 = vadd.f32 %v3160, %v3298
  %v3353 = vadd.f32 %v3161, %v3300
  %v3354 = vadd.f32 %v3162, %v3302
  %v3355 = vadd.f32 %v3163, %v3303
  %v3356 = vadd.f32 %v3164, %v3305
  %v3357 = vadd.f32 %v3165, %v3307
  %v3358 = vadd.f32 %v3166, %v3308
  %v3359 = vadd.f32 %v3167, %v3310
  %v3360 = vadd.f32 %v3168, %v3312
  %v3361 = vmul.f32 %v3337, 0.26601171
  %v3362 = vmul.f32 %v3338, 0.26601171
  %v3363 = vmul.f32 %v3339, 0.26601171
  %v3364 = vmul.f32 %v3340, 0.26601171
  %v3365 = vmul.f32 %v3341, 0.26601171
  %v3366 = vmul.f32 %v3342, 0.26601171
  %v3367 = vmul.f32 %v3343, 0.26601171
  %v3368 = vmul.f32 %v3344, 0.26601171
  %v3369 = vmul.f32 %v3345, 0.26601171
  %v3370 = vmul.f32 %v3346, 0.26601171
  %v3371 = vmul.f32 %v3347, 0.26601171
  %v3372 = vmul.f32 %v3348, 0.26601171
  %v3373 = vmul.f32 %v3349, 0.26601171
  %v3374 = vmul.f32 %v3350, 0.26601171
  %v3375 = vmul.f32 %v3351, 0.26601171
  %v3376 = vmul.f32 %v3352, 0.26601171
  %v3377 = vmul.f32 %v3353, 0.26601171
  %v3378 = vmul.f32 %v3354, 0.26601171
  %v3379 = vmul.f32 %v3355, 0.26601171
  %v3380 = vmul.f32 %v3356, 0.26601171
  %v3381 = vmul.f32 %v3357, 0.26601171
  %v3382 = vmul.f32 %v3358, 0.26601171
  %v3383 = vmul.f32 %v3359, 0.26601171
  %v3384 = vmul.f32 %v3360, 0.26601171
  %3409 = vrot.lane.b32.xlu0 %v3337, 118
  %v3410 = vpop.permute.xlu0 %3409
  %3411 = vrot.lane.b32.xlu0 %v3338, 118
  %v3412 = vpop.permute.xlu0 %3411
  %3413 = vrot.lane.b32.xlu0 %v3339, 118
  %v3414 = vpop.permute.xlu0 %3413
  %3415 = vrot.lane.b32.xlu0 %v3340, 118
  %v3416 = vpop.permute.xlu0 %3415
  %3417 = vrot.lane.b32.xlu0 %v3341, 118
  %v3418 = vpop.permute.xlu0 %3417
  %3419 = vrot.lane.b32.xlu0 %v3342, 118
  %v3420 = vpop.permute.xlu0 %3419
  %3421 = vrot.lane.b32.xlu0 %v3343, 118
  %v3422 = vpop.permute.xlu0 %3421
  %3423 = vrot.lane.b32.xlu0 %v3344, 118
  %v3424 = vpop.permute.xlu0 %3423
  %3425 = vrot.lane.b32.xlu0 %v3345, 118
  %v3426 = vpop.permute.xlu0 %3425
  %3427 = vrot.lane.b32.xlu0 %v3346, 118
  %v3428 = vpop.permute.xlu0 %3427
  %3429 = vrot.lane.b32.xlu0 %v3347, 118
  %v3430 = vpop.permute.xlu0 %3429
  %3431 = vrot.lane.b32.xlu0 %v3348, 118
  %v3432 = vpop.permute.xlu0 %3431
  %3433 = vrot.lane.b32.xlu0 %v3349, 118
  %v3434 = vpop.permute.xlu0 %3433
  %3435 = vrot.lane.b32.xlu0 %v3350, 118
  %v3436 = vpop.permute.xlu0 %3435
  %3437 = vrot.lane.b32.xlu0 %v3351, 118
  %v3438 = vpop.permute.xlu0 %3437
  %3439 = vrot.lane.b32.xlu0 %v3352, 118
  %v3440 = vpop.permute.xlu0 %3439
  %3441 = vrot.lane.b32.xlu0 %v3353, 118
  %v3442 = vpop.permute.xlu0 %3441
  %3443 = vrot.lane.b32.xlu0 %v3354, 118
  %v3444 = vpop.permute.xlu0 %3443
  %3445 = vrot.lane.b32.xlu0 %v3355, 118
  %v3446 = vpop.permute.xlu0 %3445
  %3447 = vrot.lane.b32.xlu0 %v3356, 118
  %v3448 = vpop.permute.xlu0 %3447
  %3449 = vrot.lane.b32.xlu0 %v3357, 118
  %v3450 = vpop.permute.xlu0 %3449
  %3451 = vrot.lane.b32.xlu0 %v3358, 118
  %v3452 = vpop.permute.xlu0 %3451
  %3453 = vrot.lane.b32.xlu0 %v3359, 118
  %v3454 = vpop.permute.xlu0 %3453
  %3455 = vrot.lane.b32.xlu0 %v3360, 118
  %v3456 = vpop.permute.xlu0 %3455
  %v3481 = vadd.f32 %v3337, %v3410
  %v3482 = vadd.f32 %v3338, %v3412
  %v3483 = vadd.f32 %v3339, %v3414
  %v3484 = vadd.f32 %v3340, %v3416
  %v3485 = vadd.f32 %v3341, %v3418
  %v3486 = vadd.f32 %v3342, %v3420
  %v3487 = vadd.f32 %v3343, %v3422
  %v3488 = vadd.f32 %v3344, %v3424
  %v3489 = vadd.f32 %v3345, %v3426
  %v3490 = vadd.f32 %v3346, %v3428
  %v3491 = vadd.f32 %v3347, %v3430
  %v3492 = vadd.f32 %v3348, %v3432
  %v3493 = vadd.f32 %v3349, %v3434
  %v3494 = vadd.f32 %v3350, %v3436
  %v3495 = vadd.f32 %v3351, %v3438
  %v3496 = vadd.f32 %v3352, %v3440
  %v3497 = vadd.f32 %v3353, %v3442
  %v3498 = vadd.f32 %v3354, %v3444
  %v3499 = vadd.f32 %v3355, %v3446
  %v3500 = vadd.f32 %v3356, %v3448
  %v3501 = vadd.f32 %v3357, %v3450
  %v3502 = vadd.f32 %v3358, %v3452
  %v3503 = vadd.f32 %v3359, %v3454
  %v3504 = vadd.f32 %v3360, %v3456
  %v3505 = vmul.f32 %v3481, 0.0010283801
  %v3506 = vmul.f32 %v3482, 0.0010283801
  %v3507 = vmul.f32 %v3483, 0.0010283801
  %v3508 = vmul.f32 %v3484, 0.0010283801
  %v3509 = vmul.f32 %v3485, 0.0010283801
  %v3510 = vmul.f32 %v3486, 0.0010283801
  %v3511 = vmul.f32 %v3487, 0.0010283801
  %v3512 = vmul.f32 %v3488, 0.0010283801
  %v3513 = vmul.f32 %v3489, 0.0010283801
  %v3514 = vmul.f32 %v3490, 0.0010283801
  %v3515 = vmul.f32 %v3491, 0.0010283801
  %v3516 = vmul.f32 %v3492, 0.0010283801
  %v3517 = vmul.f32 %v3493, 0.0010283801
  %v3518 = vmul.f32 %v3494, 0.0010283801
  %v3519 = vmul.f32 %v3495, 0.0010283801
  %v3520 = vmul.f32 %v3496, 0.0010283801
  %v3521 = vmul.f32 %v3497, 0.0010283801
  %v3522 = vmul.f32 %v3498, 0.0010283801
  %v3523 = vmul.f32 %v3499, 0.0010283801
  %v3524 = vmul.f32 %v3500, 0.0010283801
  %v3525 = vmul.f32 %v3501, 0.0010283801
  %v3526 = vmul.f32 %v3502, 0.0010283801
  %v3527 = vmul.f32 %v3503, 0.0010283801
  %v3528 = vmul.f32 %v3504, 0.0010283801
  %3553 = vrot.lane.b32.xlu0 %v3505, 5
  %v3554 = vpop.permute.xlu0 %3553
  %3555 = vrot.lane.b32.xlu0 %v3506, 5
  %v3556 = vpop.permute.xlu0 %3555
  %3557 = vrot.lane.b32.xlu0 %v3507, 5
  %v3558 = vpop.permute.xlu0 %3557
  %3559 = vrot.lane.b32.xlu0 %v3508, 5
  %v3560 = vpop.permute.xlu0 %3559
  %3561 = vrot.lane.b32.xlu0 %v3509, 5
  %v3562 = vpop.permute.xlu0 %3561
  %3563 = vrot.lane.b32.xlu0 %v3510, 5
  %v3564 = vpop.permute.xlu0 %3563
  %3565 = vrot.lane.b32.xlu0 %v3511, 5
  %v3566 = vpop.permute.xlu0 %3565
  %3567 = vrot.lane.b32.xlu0 %v3512, 5
  %v3568 = vpop.permute.xlu0 %3567
  %3569 = vrot.lane.b32.xlu0 %v3513, 5
  %v3570 = vpop.permute.xlu0 %3569
  %3571 = vrot.lane.b32.xlu0 %v3514, 5
  %v3572 = vpop.permute.xlu0 %3571
  %3573 = vrot.lane.b32.xlu0 %v3515, 5
  %v3574 = vpop.permute.xlu0 %3573
  %3575 = vrot.lane.b32.xlu0 %v3516, 5
  %v3576 = vpop.permute.xlu0 %3575
  %3577 = vrot.lane.b32.xlu0 %v3517, 5
  %v3578 = vpop.permute.xlu0 %3577
  %3579 = vrot.lane.b32.xlu0 %v3518, 5
  %v3580 = vpop.permute.xlu0 %3579
  %3581 = vrot.lane.b32.xlu0 %v3519, 5
  %v3582 = vpop.permute.xlu0 %3581
  %3583 = vrot.lane.b32.xlu0 %v3520, 5
  %v3584 = vpop.permute.xlu0 %3583
  %3585 = vrot.lane.b32.xlu0 %v3521, 5
  %v3586 = vpop.permute.xlu0 %3585
  %3587 = vrot.lane.b32.xlu0 %v3522, 5
  %v3588 = vpop.permute.xlu0 %3587
  %3589 = vrot.lane.b32.xlu0 %v3523, 5
  %v3590 = vpop.permute.xlu0 %3589
  %3591 = vrot.lane.b32.xlu0 %v3524, 5
  %v3592 = vpop.permute.xlu0 %3591
  %3593 = vrot.lane.b32.xlu0 %v3525, 5
  %v3594 = vpop.permute.xlu0 %3593
  %3595 = vrot.lane.b32.xlu0 %v3526, 5
  %v3596 = vpop.permute.xlu0 %3595
  %3597 = vrot.lane.b32.xlu0 %v3527, 5
  %v3598 = vpop.permute.xlu0 %3597
  %3599 = vrot.lane.b32.xlu0 %v3528, 5
  %v3600 = vpop.permute.xlu0 %3599
  %v3625 = vadd.f32 %v3361, %v3554
  %v3626 = vadd.f32 %v3362, %v3556
  %v3627 = vadd.f32 %v3363, %v3558
  %v3628 = vadd.f32 %v3364, %v3560
  %v3629 = vadd.f32 %v3365, %v3562
  %v3630 = vadd.f32 %v3366, %v3564
  %v3631 = vadd.f32 %v3367, %v3566
  %v3632 = vadd.f32 %v3368, %v3568
  %v3633 = vadd.f32 %v3369, %v3570
  %v3634 = vadd.f32 %v3370, %v3572
  %v3635 = vadd.f32 %v3371, %v3574
  %v3636 = vadd.f32 %v3372, %v3576
  %v3637 = vadd.f32 %v3373, %v3578
  %v3638 = vadd.f32 %v3374, %v3580
  %v3639 = vadd.f32 %v3375, %v3582
  %v3640 = vadd.f32 %v3376, %v3584
  %v3641 = vadd.f32 %v3377, %v3586
  %v3642 = vadd.f32 %v3378, %v3588
  %v3643 = vadd.f32 %v3379, %v3590
  %v3644 = vadd.f32 %v3380, %v3592
  %v3645 = vadd.f32 %v3381, %v3594
  %v3646 = vadd.f32 %v3382, %v3596
  %v3647 = vadd.f32 %v3383, %v3598
  %v3648 = vadd.f32 %v3384, %v3600
  %3649 = vrot.lane.b32.xlu0 %v3337, 120
  %v3650 = vpop.permute.xlu0 %3649
  %3651 = vrot.lane.b32.xlu0 %v3338, 120
  %v3652 = vpop.permute.xlu0 %3651
  %3653 = vrot.lane.b32.xlu0 %v3339, 120
  %v3654 = vpop.permute.xlu0 %3653
  %3655 = vrot.lane.b32.xlu0 %v3340, 120
  %v3656 = vpop.permute.xlu0 %3655
  %3657 = vrot.lane.b32.xlu0 %v3341, 120
  %v3658 = vpop.permute.xlu0 %3657
  %3659 = vrot.lane.b32.xlu0 %v3342, 120
  %v3660 = vpop.permute.xlu0 %3659
  %3661 = vrot.lane.b32.xlu0 %v3343, 120
  %v3662 = vpop.permute.xlu0 %3661
  %3663 = vrot.lane.b32.xlu0 %v3344, 120
  %v3664 = vpop.permute.xlu0 %3663
  %3665 = vrot.lane.b32.xlu0 %v3345, 120
  %v3666 = vpop.permute.xlu0 %3665
  %3667 = vrot.lane.b32.xlu0 %v3346, 120
  %v3668 = vpop.permute.xlu0 %3667
  %3669 = vrot.lane.b32.xlu0 %v3347, 120
  %v3670 = vpop.permute.xlu0 %3669
  %3671 = vrot.lane.b32.xlu0 %v3348, 120
  %v3672 = vpop.permute.xlu0 %3671
  %3673 = vrot.lane.b32.xlu0 %v3349, 120
  %v3674 = vpop.permute.xlu0 %3673
  %3675 = vrot.lane.b32.xlu0 %v3350, 120
  %v3676 = vpop.permute.xlu0 %3675
  %3677 = vrot.lane.b32.xlu0 %v3351, 120
  %v3678 = vpop.permute.xlu0 %3677
  %3679 = vrot.lane.b32.xlu0 %v3352, 120
  %v3680 = vpop.permute.xlu0 %3679
  %3681 = vrot.lane.b32.xlu0 %v3353, 120
  %v3682 = vpop.permute.xlu0 %3681
  %3683 = vrot.lane.b32.xlu0 %v3354, 120
  %v3684 = vpop.permute.xlu0 %3683
  %3685 = vrot.lane.b32.xlu0 %v3355, 120
  %v3686 = vpop.permute.xlu0 %3685
  %3687 = vrot.lane.b32.xlu0 %v3356, 120
  %v3688 = vpop.permute.xlu0 %3687
  %3689 = vrot.lane.b32.xlu0 %v3357, 120
  %v3690 = vpop.permute.xlu0 %3689
  %3691 = vrot.lane.b32.xlu0 %v3358, 120
  %v3692 = vpop.permute.xlu0 %3691
  %3693 = vrot.lane.b32.xlu0 %v3359, 120
  %v3694 = vpop.permute.xlu0 %3693
  %3695 = vrot.lane.b32.xlu0 %v3360, 120
  %v3696 = vpop.permute.xlu0 %3695
  %v3721 = vadd.f32 %v3337, %v3650
  %v3722 = vadd.f32 %v3338, %v3652
  %v3723 = vadd.f32 %v3339, %v3654
  %v3724 = vadd.f32 %v3340, %v3656
  %v3725 = vadd.f32 %v3341, %v3658
  %v3726 = vadd.f32 %v3342, %v3660
  %v3727 = vadd.f32 %v3343, %v3662
  %v3728 = vadd.f32 %v3344, %v3664
  %v3729 = vadd.f32 %v3345, %v3666
  %v3730 = vadd.f32 %v3346, %v3668
  %v3731 = vadd.f32 %v3347, %v3670
  %v3732 = vadd.f32 %v3348, %v3672
  %v3733 = vadd.f32 %v3349, %v3674
  %v3734 = vadd.f32 %v3350, %v3676
  %v3735 = vadd.f32 %v3351, %v3678
  %v3736 = vadd.f32 %v3352, %v3680
  %v3737 = vadd.f32 %v3353, %v3682
  %v3738 = vadd.f32 %v3354, %v3684
  %v3739 = vadd.f32 %v3355, %v3686
  %v3740 = vadd.f32 %v3356, %v3688
  %v3741 = vadd.f32 %v3357, %v3690
  %v3742 = vadd.f32 %v3358, %v3692
  %v3743 = vadd.f32 %v3359, %v3694
  %v3744 = vadd.f32 %v3360, %v3696
  %v3745 = vmul.f32 %v3721, 0.007598758
  %v3746 = vmul.f32 %v3722, 0.007598758
  %v3747 = vmul.f32 %v3723, 0.007598758
  %v3748 = vmul.f32 %v3724, 0.007598758
  %v3749 = vmul.f32 %v3725, 0.007598758
  %v3750 = vmul.f32 %v3726, 0.007598758
  %v3751 = vmul.f32 %v3727, 0.007598758
  %v3752 = vmul.f32 %v3728, 0.007598758
  %v3753 = vmul.f32 %v3729, 0.007598758
  %v3754 = vmul.f32 %v3730, 0.007598758
  %v3755 = vmul.f32 %v3731, 0.007598758
  %v3756 = vmul.f32 %v3732, 0.007598758
  %v3757 = vmul.f32 %v3733, 0.007598758
  %v3758 = vmul.f32 %v3734, 0.007598758
  %v3759 = vmul.f32 %v3735, 0.007598758
  %v3760 = vmul.f32 %v3736, 0.007598758
  %v3761 = vmul.f32 %v3737, 0.007598758
  %v3762 = vmul.f32 %v3738, 0.007598758
  %v3763 = vmul.f32 %v3739, 0.007598758
  %v3764 = vmul.f32 %v3740, 0.007598758
  %v3765 = vmul.f32 %v3741, 0.007598758
  %v3766 = vmul.f32 %v3742, 0.007598758
  %v3767 = vmul.f32 %v3743, 0.007598758
  %v3768 = vmul.f32 %v3744, 0.007598758
  %3793 = vrot.lane.b32.xlu0 %v3745, 4
  %v3794 = vpop.permute.xlu0 %3793
  %3795 = vrot.lane.b32.xlu0 %v3746, 4
  %v3796 = vpop.permute.xlu0 %3795
  %3797 = vrot.lane.b32.xlu0 %v3747, 4
  %v3798 = vpop.permute.xlu0 %3797
  %3799 = vrot.lane.b32.xlu0 %v3748, 4
  %v3800 = vpop.permute.xlu0 %3799
  %3801 = vrot.lane.b32.xlu0 %v3749, 4
  %v3802 = vpop.permute.xlu0 %3801
  %3803 = vrot.lane.b32.xlu0 %v3750, 4
  %v3804 = vpop.permute.xlu0 %3803
  %3805 = vrot.lane.b32.xlu0 %v3751, 4
  %v3806 = vpop.permute.xlu0 %3805
  %3807 = vrot.lane.b32.xlu0 %v3752, 4
  %v3808 = vpop.permute.xlu0 %3807
  %3809 = vrot.lane.b32.xlu0 %v3753, 4
  %v3810 = vpop.permute.xlu0 %3809
  %3811 = vrot.lane.b32.xlu0 %v3754, 4
  %v3812 = vpop.permute.xlu0 %3811
  %3813 = vrot.lane.b32.xlu0 %v3755, 4
  %v3814 = vpop.permute.xlu0 %3813
  %3815 = vrot.lane.b32.xlu0 %v3756, 4
  %v3816 = vpop.permute.xlu0 %3815
  %3817 = vrot.lane.b32.xlu0 %v3757, 4
  %v3818 = vpop.permute.xlu0 %3817
  %3819 = vrot.lane.b32.xlu0 %v3758, 4
  %v3820 = vpop.permute.xlu0 %3819
  %3821 = vrot.lane.b32.xlu0 %v3759, 4
  %v3822 = vpop.permute.xlu0 %3821
  %3823 = vrot.lane.b32.xlu0 %v3760, 4
  %v3824 = vpop.permute.xlu0 %3823
  %3825 = vrot.lane.b32.xlu0 %v3761, 4
  %v3826 = vpop.permute.xlu0 %3825
  %3827 = vrot.lane.b32.xlu0 %v3762, 4
  %v3828 = vpop.permute.xlu0 %3827
  %3829 = vrot.lane.b32.xlu0 %v3763, 4
  %v3830 = vpop.permute.xlu0 %3829
  %3831 = vrot.lane.b32.xlu0 %v3764, 4
  %v3832 = vpop.permute.xlu0 %3831
  %3833 = vrot.lane.b32.xlu0 %v3765, 4
  %v3834 = vpop.permute.xlu0 %3833
  %3835 = vrot.lane.b32.xlu0 %v3766, 4
  %v3836 = vpop.permute.xlu0 %3835
  %3837 = vrot.lane.b32.xlu0 %v3767, 4
  %v3838 = vpop.permute.xlu0 %3837
  %3839 = vrot.lane.b32.xlu0 %v3768, 4
  %v3840 = vpop.permute.xlu0 %3839
  %v3865 = vadd.f32 %v3625, %v3794
  %v3866 = vadd.f32 %v3626, %v3796
  %v3867 = vadd.f32 %v3627, %v3798
  %v3868 = vadd.f32 %v3628, %v3800
  %v3869 = vadd.f32 %v3629, %v3802
  %v3870 = vadd.f32 %v3630, %v3804
  %v3871 = vadd.f32 %v3631, %v3806
  %v3872 = vadd.f32 %v3632, %v3808
  %v3873 = vadd.f32 %v3633, %v3810
  %v3874 = vadd.f32 %v3634, %v3812
  %v3875 = vadd.f32 %v3635, %v3814
  %v3876 = vadd.f32 %v3636, %v3816
  %v3877 = vadd.f32 %v3637, %v3818
  %v3878 = vadd.f32 %v3638, %v3820
  %v3879 = vadd.f32 %v3639, %v3822
  %v3880 = vadd.f32 %v3640, %v3824
  %v3881 = vadd.f32 %v3641, %v3826
  %v3882 = vadd.f32 %v3642, %v3828
  %v3883 = vadd.f32 %v3643, %v3830
  %v3884 = vadd.f32 %v3644, %v3832
  %v3885 = vadd.f32 %v3645, %v3834
  %v3886 = vadd.f32 %v3646, %v3836
  %v3887 = vadd.f32 %v3647, %v3838
  %v3888 = vadd.f32 %v3648, %v3840
  %3889 = vrot.lane.b32.xlu0 %v3337, 122
  %v3890 = vpop.permute.xlu0 %3889
  %3891 = vrot.lane.b32.xlu0 %v3338, 122
  %v3892 = vpop.permute.xlu0 %3891
  %3893 = vrot.lane.b32.xlu0 %v3339, 122
  %v3894 = vpop.permute.xlu0 %3893
  %3895 = vrot.lane.b32.xlu0 %v3340, 122
  %v3896 = vpop.permute.xlu0 %3895
  %3897 = vrot.lane.b32.xlu0 %v3341, 122
  %v3898 = vpop.permute.xlu0 %3897
  %3899 = vrot.lane.b32.xlu0 %v3342, 122
  %v3900 = vpop.permute.xlu0 %3899
  %3901 = vrot.lane.b32.xlu0 %v3343, 122
  %v3902 = vpop.permute.xlu0 %3901
  %3903 = vrot.lane.b32.xlu0 %v3344, 122
  %v3904 = vpop.permute.xlu0 %3903
  %3905 = vrot.lane.b32.xlu0 %v3345, 122
  %v3906 = vpop.permute.xlu0 %3905
  %3907 = vrot.lane.b32.xlu0 %v3346, 122
  %v3908 = vpop.permute.xlu0 %3907
  %3909 = vrot.lane.b32.xlu0 %v3347, 122
  %v3910 = vpop.permute.xlu0 %3909
  %3911 = vrot.lane.b32.xlu0 %v3348, 122
  %v3912 = vpop.permute.xlu0 %3911
  %3913 = vrot.lane.b32.xlu0 %v3349, 122
  %v3914 = vpop.permute.xlu0 %3913
  %3915 = vrot.lane.b32.xlu0 %v3350, 122
  %v3916 = vpop.permute.xlu0 %3915
  %3917 = vrot.lane.b32.xlu0 %v3351, 122
  %v3918 = vpop.permute.xlu0 %3917
  %3919 = vrot.lane.b32.xlu0 %v3352, 122
  %v3920 = vpop.permute.xlu0 %3919
  %3921 = vrot.lane.b32.xlu0 %v3353, 122
  %v3922 = vpop.permute.xlu0 %3921
  %3923 = vrot.lane.b32.xlu0 %v3354, 122
  %v3924 = vpop.permute.xlu0 %3923
  %3925 = vrot.lane.b32.xlu0 %v3355, 122
  %v3926 = vpop.permute.xlu0 %3925
  %3927 = vrot.lane.b32.xlu0 %v3356, 122
  %v3928 = vpop.permute.xlu0 %3927
  %3929 = vrot.lane.b32.xlu0 %v3357, 122
  %v3930 = vpop.permute.xlu0 %3929
  %3931 = vrot.lane.b32.xlu0 %v3358, 122
  %v3932 = vpop.permute.xlu0 %3931
  %3933 = vrot.lane.b32.xlu0 %v3359, 122
  %v3934 = vpop.permute.xlu0 %3933
  %3935 = vrot.lane.b32.xlu0 %v3360, 122
  %v3936 = vpop.permute.xlu0 %3935
  %v3961 = vadd.f32 %v3337, %v3890
  %v3962 = vadd.f32 %v3338, %v3892
  %v3963 = vadd.f32 %v3339, %v3894
  %v3964 = vadd.f32 %v3340, %v3896
  %v3965 = vadd.f32 %v3341, %v3898
  %v3966 = vadd.f32 %v3342, %v3900
  %v3967 = vadd.f32 %v3343, %v3902
  %v3968 = vadd.f32 %v3344, %v3904
  %v3969 = vadd.f32 %v3345, %v3906
  %v3970 = vadd.f32 %v3346, %v3908
  %v3971 = vadd.f32 %v3347, %v3910
  %v3972 = vadd.f32 %v3348, %v3912
  %v3973 = vadd.f32 %v3349, %v3914
  %v3974 = vadd.f32 %v3350, %v3916
  %v3975 = vadd.f32 %v3351, %v3918
  %v3976 = vadd.f32 %v3352, %v3920
  %v3977 = vadd.f32 %v3353, %v3922
  %v3978 = vadd.f32 %v3354, %v3924
  %v3979 = vadd.f32 %v3355, %v3926
  %v3980 = vadd.f32 %v3356, %v3928
  %v3981 = vadd.f32 %v3357, %v3930
  %v3982 = vadd.f32 %v3358, %v3932
  %v3983 = vadd.f32 %v3359, %v3934
  %v3984 = vadd.f32 %v3360, %v3936
  %v3985 = vmul.f32 %v3961, 0.036000773
  %v3986 = vmul.f32 %v3962, 0.036000773
  %v3987 = vmul.f32 %v3963, 0.036000773
  %v3988 = vmul.f32 %v3964, 0.036000773
  %v3989 = vmul.f32 %v3965, 0.036000773
  %v3990 = vmul.f32 %v3966, 0.036000773
  %v3991 = vmul.f32 %v3967, 0.036000773
  %v3992 = vmul.f32 %v3968, 0.036000773
  %v3993 = vmul.f32 %v3969, 0.036000773
  %v3994 = vmul.f32 %v3970, 0.036000773
  %v3995 = vmul.f32 %v3971, 0.036000773
  %v3996 = vmul.f32 %v3972, 0.036000773
  %v3997 = vmul.f32 %v3973, 0.036000773
  %v3998 = vmul.f32 %v3974, 0.036000773
  %v3999 = vmul.f32 %v3975, 0.036000773
  %v4000 = vmul.f32 %v3976, 0.036000773
  %v4001 = vmul.f32 %v3977, 0.036000773
  %v4002 = vmul.f32 %v3978, 0.036000773
  %v4003 = vmul.f32 %v3979, 0.036000773
  %v4004 = vmul.f32 %v3980, 0.036000773
  %v4005 = vmul.f32 %v3981, 0.036000773
  %v4006 = vmul.f32 %v3982, 0.036000773
  %v4007 = vmul.f32 %v3983, 0.036000773
  %v4008 = vmul.f32 %v3984, 0.036000773
  %4033 = vrot.lane.b32.xlu0 %v3985, 3
  %v4034 = vpop.permute.xlu0 %4033
  %4035 = vrot.lane.b32.xlu0 %v3986, 3
  %v4036 = vpop.permute.xlu0 %4035
  %4037 = vrot.lane.b32.xlu0 %v3987, 3
  %v4038 = vpop.permute.xlu0 %4037
  %4039 = vrot.lane.b32.xlu0 %v3988, 3
  %v4040 = vpop.permute.xlu0 %4039
  %4041 = vrot.lane.b32.xlu0 %v3989, 3
  %v4042 = vpop.permute.xlu0 %4041
  %4043 = vrot.lane.b32.xlu0 %v3990, 3
  %v4044 = vpop.permute.xlu0 %4043
  %4045 = vrot.lane.b32.xlu0 %v3991, 3
  %v4046 = vpop.permute.xlu0 %4045
  %4047 = vrot.lane.b32.xlu0 %v3992, 3
  %v4048 = vpop.permute.xlu0 %4047
  %4049 = vrot.lane.b32.xlu0 %v3993, 3
  %v4050 = vpop.permute.xlu0 %4049
  %4051 = vrot.lane.b32.xlu0 %v3994, 3
  %v4052 = vpop.permute.xlu0 %4051
  %4053 = vrot.lane.b32.xlu0 %v3995, 3
  %v4054 = vpop.permute.xlu0 %4053
  %4055 = vrot.lane.b32.xlu0 %v3996, 3
  %v4056 = vpop.permute.xlu0 %4055
  %4057 = vrot.lane.b32.xlu0 %v3997, 3
  %v4058 = vpop.permute.xlu0 %4057
  %4059 = vrot.lane.b32.xlu0 %v3998, 3
  %v4060 = vpop.permute.xlu0 %4059
  %4061 = vrot.lane.b32.xlu0 %v3999, 3
  %v4062 = vpop.permute.xlu0 %4061
  %4063 = vrot.lane.b32.xlu0 %v4000, 3
  %v4064 = vpop.permute.xlu0 %4063
  %4065 = vrot.lane.b32.xlu0 %v4001, 3
  %v4066 = vpop.permute.xlu0 %4065
  %4067 = vrot.lane.b32.xlu0 %v4002, 3
  %v4068 = vpop.permute.xlu0 %4067
  %4069 = vrot.lane.b32.xlu0 %v4003, 3
  %v4070 = vpop.permute.xlu0 %4069
  %4071 = vrot.lane.b32.xlu0 %v4004, 3
  %v4072 = vpop.permute.xlu0 %4071
  %4073 = vrot.lane.b32.xlu0 %v4005, 3
  %v4074 = vpop.permute.xlu0 %4073
  %4075 = vrot.lane.b32.xlu0 %v4006, 3
  %v4076 = vpop.permute.xlu0 %4075
  %4077 = vrot.lane.b32.xlu0 %v4007, 3
  %v4078 = vpop.permute.xlu0 %4077
  %4079 = vrot.lane.b32.xlu0 %v4008, 3
  %v4080 = vpop.permute.xlu0 %4079
  %v4105 = vadd.f32 %v3865, %v4034
  %v4106 = vadd.f32 %v3866, %v4036
  %v4107 = vadd.f32 %v3867, %v4038
  %v4108 = vadd.f32 %v3868, %v4040
  %v4109 = vadd.f32 %v3869, %v4042
  %v4110 = vadd.f32 %v3870, %v4044
  %v4111 = vadd.f32 %v3871, %v4046
  %v4112 = vadd.f32 %v3872, %v4048
  %v4113 = vadd.f32 %v3873, %v4050
  %v4114 = vadd.f32 %v3874, %v4052
  %v4115 = vadd.f32 %v3875, %v4054
  %v4116 = vadd.f32 %v3876, %v4056
  %v4117 = vadd.f32 %v3877, %v4058
  %v4118 = vadd.f32 %v3878, %v4060
  %v4119 = vadd.f32 %v3879, %v4062
  %v4120 = vadd.f32 %v3880, %v4064
  %v4121 = vadd.f32 %v3881, %v4066
  %v4122 = vadd.f32 %v3882, %v4068
  %v4123 = vadd.f32 %v3883, %v4070
  %v4124 = vadd.f32 %v3884, %v4072
  %v4125 = vadd.f32 %v3885, %v4074
  %v4126 = vadd.f32 %v3886, %v4076
  %v4127 = vadd.f32 %v3887, %v4078
  %v4128 = vadd.f32 %v3888, %v4080
  %4129 = vrot.lane.b32.xlu0 %v3337, 124
  %v4130 = vpop.permute.xlu0 %4129
  %4131 = vrot.lane.b32.xlu0 %v3338, 124
  %v4132 = vpop.permute.xlu0 %4131
  %4133 = vrot.lane.b32.xlu0 %v3339, 124
  %v4134 = vpop.permute.xlu0 %4133
  %4135 = vrot.lane.b32.xlu0 %v3340, 124
  %v4136 = vpop.permute.xlu0 %4135
  %4137 = vrot.lane.b32.xlu0 %v3341, 124
  %v4138 = vpop.permute.xlu0 %4137
  %4139 = vrot.lane.b32.xlu0 %v3342, 124
  %v4140 = vpop.permute.xlu0 %4139
  %4141 = vrot.lane.b32.xlu0 %v3343, 124
  %v4142 = vpop.permute.xlu0 %4141
  %4143 = vrot.lane.b32.xlu0 %v3344, 124
  %v4144 = vpop.permute.xlu0 %4143
  %4145 = vrot.lane.b32.xlu0 %v3345, 124
  %v4146 = vpop.permute.xlu0 %4145
  %4147 = vrot.lane.b32.xlu0 %v3346, 124
  %v4148 = vpop.permute.xlu0 %4147
  %4149 = vrot.lane.b32.xlu0 %v3347, 124
  %v4150 = vpop.permute.xlu0 %4149
  %4151 = vrot.lane.b32.xlu0 %v3348, 124
  %v4152 = vpop.permute.xlu0 %4151
  %4153 = vrot.lane.b32.xlu0 %v3349, 124
  %v4154 = vpop.permute.xlu0 %4153
  %4155 = vrot.lane.b32.xlu0 %v3350, 124
  %v4156 = vpop.permute.xlu0 %4155
  %4157 = vrot.lane.b32.xlu0 %v3351, 124
  %v4158 = vpop.permute.xlu0 %4157
  %4159 = vrot.lane.b32.xlu0 %v3352, 124
  %v4160 = vpop.permute.xlu0 %4159
  %4161 = vrot.lane.b32.xlu0 %v3353, 124
  %v4162 = vpop.permute.xlu0 %4161
  %4163 = vrot.lane.b32.xlu0 %v3354, 124
  %v4164 = vpop.permute.xlu0 %4163
  %4165 = vrot.lane.b32.xlu0 %v3355, 124
  %v4166 = vpop.permute.xlu0 %4165
  %4167 = vrot.lane.b32.xlu0 %v3356, 124
  %v4168 = vpop.permute.xlu0 %4167
  %4169 = vrot.lane.b32.xlu0 %v3357, 124
  %v4170 = vpop.permute.xlu0 %4169
  %4171 = vrot.lane.b32.xlu0 %v3358, 124
  %v4172 = vpop.permute.xlu0 %4171
  %4173 = vrot.lane.b32.xlu0 %v3359, 124
  %v4174 = vpop.permute.xlu0 %4173
  %4175 = vrot.lane.b32.xlu0 %v3360, 124
  %v4176 = vpop.permute.xlu0 %4175
  %v4201 = vadd.f32 %v3337, %v4130
  %v4202 = vadd.f32 %v3338, %v4132
  %v4203 = vadd.f32 %v3339, %v4134
  %v4204 = vadd.f32 %v3340, %v4136
  %v4205 = vadd.f32 %v3341, %v4138
  %v4206 = vadd.f32 %v3342, %v4140
  %v4207 = vadd.f32 %v3343, %v4142
  %v4208 = vadd.f32 %v3344, %v4144
  %v4209 = vadd.f32 %v3345, %v4146
  %v4210 = vadd.f32 %v3346, %v4148
  %v4211 = vadd.f32 %v3347, %v4150
  %v4212 = vadd.f32 %v3348, %v4152
  %v4213 = vadd.f32 %v3349, %v4154
  %v4214 = vadd.f32 %v3350, %v4156
  %v4215 = vadd.f32 %v3351, %v4158
  %v4216 = vadd.f32 %v3352, %v4160
  %v4217 = vadd.f32 %v3353, %v4162
  %v4218 = vadd.f32 %v3354, %v4164
  %v4219 = vadd.f32 %v3355, %v4166
  %v4220 = vadd.f32 %v3356, %v4168
  %v4221 = vadd.f32 %v3357, %v4170
  %v4222 = vadd.f32 %v3358, %v4172
  %v4223 = vadd.f32 %v3359, %v4174
  %v4224 = vadd.f32 %v3360, %v4176
  %v4225 = vmul.f32 %v4201, 0.10936069
  %v4226 = vmul.f32 %v4202, 0.10936069
  %v4227 = vmul.f32 %v4203, 0.10936069
  %v4228 = vmul.f32 %v4204, 0.10936069
  %v4229 = vmul.f32 %v4205, 0.10936069
  %v4230 = vmul.f32 %v4206, 0.10936069
  %v4231 = vmul.f32 %v4207, 0.10936069
  %v4232 = vmul.f32 %v4208, 0.10936069
  %v4233 = vmul.f32 %v4209, 0.10936069
  %v4234 = vmul.f32 %v4210, 0.10936069
  %v4235 = vmul.f32 %v4211, 0.10936069
  %v4236 = vmul.f32 %v4212, 0.10936069
  %v4237 = vmul.f32 %v4213, 0.10936069
  %v4238 = vmul.f32 %v4214, 0.10936069
  %v4239 = vmul.f32 %v4215, 0.10936069
  %v4240 = vmul.f32 %v4216, 0.10936069
  %v4241 = vmul.f32 %v4217, 0.10936069
  %v4242 = vmul.f32 %v4218, 0.10936069
  %v4243 = vmul.f32 %v4219, 0.10936069
  %v4244 = vmul.f32 %v4220, 0.10936069
  %v4245 = vmul.f32 %v4221, 0.10936069
  %v4246 = vmul.f32 %v4222, 0.10936069
  %v4247 = vmul.f32 %v4223, 0.10936069
  %v4248 = vmul.f32 %v4224, 0.10936069
  %4273 = vrot.lane.b32.xlu0 %v4225, 2
  %v4274 = vpop.permute.xlu0 %4273
  %4275 = vrot.lane.b32.xlu0 %v4226, 2
  %v4276 = vpop.permute.xlu0 %4275
  %4277 = vrot.lane.b32.xlu0 %v4227, 2
  %v4278 = vpop.permute.xlu0 %4277
  %4279 = vrot.lane.b32.xlu0 %v4228, 2
  %v4280 = vpop.permute.xlu0 %4279
  %4281 = vrot.lane.b32.xlu0 %v4229, 2
  %v4282 = vpop.permute.xlu0 %4281
  %4283 = vrot.lane.b32.xlu0 %v4230, 2
  %v4284 = vpop.permute.xlu0 %4283
  %4285 = vrot.lane.b32.xlu0 %v4231, 2
  %v4286 = vpop.permute.xlu0 %4285
  %4287 = vrot.lane.b32.xlu0 %v4232, 2
  %v4288 = vpop.permute.xlu0 %4287
  %4289 = vrot.lane.b32.xlu0 %v4233, 2
  %v4290 = vpop.permute.xlu0 %4289
  %4291 = vrot.lane.b32.xlu0 %v4234, 2
  %v4292 = vpop.permute.xlu0 %4291
  %4293 = vrot.lane.b32.xlu0 %v4235, 2
  %v4294 = vpop.permute.xlu0 %4293
  %4295 = vrot.lane.b32.xlu0 %v4236, 2
  %v4296 = vpop.permute.xlu0 %4295
  %4297 = vrot.lane.b32.xlu0 %v4237, 2
  %v4298 = vpop.permute.xlu0 %4297
  %4299 = vrot.lane.b32.xlu0 %v4238, 2
  %v4300 = vpop.permute.xlu0 %4299
  %4301 = vrot.lane.b32.xlu0 %v4239, 2
  %v4302 = vpop.permute.xlu0 %4301
  %4303 = vrot.lane.b32.xlu0 %v4240, 2
  %v4304 = vpop.permute.xlu0 %4303
  %4305 = vrot.lane.b32.xlu0 %v4241, 2
  %v4306 = vpop.permute.xlu0 %4305
  %4307 = vrot.lane.b32.xlu0 %v4242, 2
  %v4308 = vpop.permute.xlu0 %4307
  %4309 = vrot.lane.b32.xlu0 %v4243, 2
  %v4310 = vpop.permute.xlu0 %4309
  %4311 = vrot.lane.b32.xlu0 %v4244, 2
  %v4312 = vpop.permute.xlu0 %4311
  %4313 = vrot.lane.b32.xlu0 %v4245, 2
  %v4314 = vpop.permute.xlu0 %4313
  %4315 = vrot.lane.b32.xlu0 %v4246, 2
  %v4316 = vpop.permute.xlu0 %4315
  %4317 = vrot.lane.b32.xlu0 %v4247, 2
  %v4318 = vpop.permute.xlu0 %4317
  %4319 = vrot.lane.b32.xlu0 %v4248, 2
  %v4320 = vpop.permute.xlu0 %4319
  %v4345 = vadd.f32 %v4105, %v4274
  %v4346 = vadd.f32 %v4106, %v4276
  %v4347 = vadd.f32 %v4107, %v4278
  %v4348 = vadd.f32 %v4108, %v4280
  %v4349 = vadd.f32 %v4109, %v4282
  %v4350 = vadd.f32 %v4110, %v4284
  %v4351 = vadd.f32 %v4111, %v4286
  %v4352 = vadd.f32 %v4112, %v4288
  %v4353 = vadd.f32 %v4113, %v4290
  %v4354 = vadd.f32 %v4114, %v4292
  %v4355 = vadd.f32 %v4115, %v4294
  %v4356 = vadd.f32 %v4116, %v4296
  %v4357 = vadd.f32 %v4117, %v4298
  %v4358 = vadd.f32 %v4118, %v4300
  %v4359 = vadd.f32 %v4119, %v4302
  %v4360 = vadd.f32 %v4120, %v4304
  %v4361 = vadd.f32 %v4121, %v4306
  %v4362 = vadd.f32 %v4122, %v4308
  %v4363 = vadd.f32 %v4123, %v4310
  %v4364 = vadd.f32 %v4124, %v4312
  %v4365 = vadd.f32 %v4125, %v4314
  %v4366 = vadd.f32 %v4126, %v4316
  %v4367 = vadd.f32 %v4127, %v4318
  %v4368 = vadd.f32 %v4128, %v4320
  %4369 = vrot.lane.b32.xlu0 %v3337, 126
  %v4370 = vpop.permute.xlu0 %4369
  %4371 = vrot.lane.b32.xlu0 %v3338, 126
  %v4372 = vpop.permute.xlu0 %4371
  %4373 = vrot.lane.b32.xlu0 %v3339, 126
  %v4374 = vpop.permute.xlu0 %4373
  %4375 = vrot.lane.b32.xlu0 %v3340, 126
  %v4376 = vpop.permute.xlu0 %4375
  %4377 = vrot.lane.b32.xlu0 %v3341, 126
  %v4378 = vpop.permute.xlu0 %4377
  %4379 = vrot.lane.b32.xlu0 %v3342, 126
  %v4380 = vpop.permute.xlu0 %4379
  %4381 = vrot.lane.b32.xlu0 %v3343, 126
  %v4382 = vpop.permute.xlu0 %4381
  %4383 = vrot.lane.b32.xlu0 %v3344, 126
  %v4384 = vpop.permute.xlu0 %4383
  %4385 = vrot.lane.b32.xlu0 %v3345, 126
  %v4386 = vpop.permute.xlu0 %4385
  %4387 = vrot.lane.b32.xlu0 %v3346, 126
  %v4388 = vpop.permute.xlu0 %4387
  %4389 = vrot.lane.b32.xlu0 %v3347, 126
  %v4390 = vpop.permute.xlu0 %4389
  %4391 = vrot.lane.b32.xlu0 %v3348, 126
  %v4392 = vpop.permute.xlu0 %4391
  %4393 = vrot.lane.b32.xlu0 %v3349, 126
  %v4394 = vpop.permute.xlu0 %4393
  %4395 = vrot.lane.b32.xlu0 %v3350, 126
  %v4396 = vpop.permute.xlu0 %4395
  %4397 = vrot.lane.b32.xlu0 %v3351, 126
  %v4398 = vpop.permute.xlu0 %4397
  %4399 = vrot.lane.b32.xlu0 %v3352, 126
  %v4400 = vpop.permute.xlu0 %4399
  %4401 = vrot.lane.b32.xlu0 %v3353, 126
  %v4402 = vpop.permute.xlu0 %4401
  %4403 = vrot.lane.b32.xlu0 %v3354, 126
  %v4404 = vpop.permute.xlu0 %4403
  %4405 = vrot.lane.b32.xlu0 %v3355, 126
  %v4406 = vpop.permute.xlu0 %4405
  %4407 = vrot.lane.b32.xlu0 %v3356, 126
  %v4408 = vpop.permute.xlu0 %4407
  %4409 = vrot.lane.b32.xlu0 %v3357, 126
  %v4410 = vpop.permute.xlu0 %4409
  %4411 = vrot.lane.b32.xlu0 %v3358, 126
  %v4412 = vpop.permute.xlu0 %4411
  %4413 = vrot.lane.b32.xlu0 %v3359, 126
  %v4414 = vpop.permute.xlu0 %4413
  %4415 = vrot.lane.b32.xlu0 %v3360, 126
  %v4416 = vpop.permute.xlu0 %4415
  %v4441 = vadd.f32 %v3337, %v4370
  %v4442 = vadd.f32 %v3338, %v4372
  %v4443 = vadd.f32 %v3339, %v4374
  %v4444 = vadd.f32 %v3340, %v4376
  %v4445 = vadd.f32 %v3341, %v4378
  %v4446 = vadd.f32 %v3342, %v4380
  %v4447 = vadd.f32 %v3343, %v4382
  %v4448 = vadd.f32 %v3344, %v4384
  %v4449 = vadd.f32 %v3345, %v4386
  %v4450 = vadd.f32 %v3346, %v4388
  %v4451 = vadd.f32 %v3347, %v4390
  %v4452 = vadd.f32 %v3348, %v4392
  %v4453 = vadd.f32 %v3349, %v4394
  %v4454 = vadd.f32 %v3350, %v4396
  %v4455 = vadd.f32 %v3351, %v4398
  %v4456 = vadd.f32 %v3352, %v4400
  %v4457 = vadd.f32 %v3353, %v4402
  %v4458 = vadd.f32 %v3354, %v4404
  %v4459 = vadd.f32 %v3355, %v4406
  %v4460 = vadd.f32 %v3356, %v4408
  %v4461 = vadd.f32 %v3357, %v4410
  %v4462 = vadd.f32 %v3358, %v4412
  %v4463 = vadd.f32 %v3359, %v4414
  %v4464 = vadd.f32 %v3360, %v4416
  %v4465 = vmul.f32 %v4441, 0.21300554
  %v4466 = vmul.f32 %v4442, 0.21300554
  %v4467 = vmul.f32 %v4443, 0.21300554
  %v4468 = vmul.f32 %v4444, 0.21300554
  %v4469 = vmul.f32 %v4445, 0.21300554
  %v4470 = vmul.f32 %v4446, 0.21300554
  %v4471 = vmul.f32 %v4447, 0.21300554
  %v4472 = vmul.f32 %v4448, 0.21300554
  %v4473 = vmul.f32 %v4449, 0.21300554
  %v4474 = vmul.f32 %v4450, 0.21300554
  %v4475 = vmul.f32 %v4451, 0.21300554
  %v4476 = vmul.f32 %v4452, 0.21300554
  %v4477 = vmul.f32 %v4453, 0.21300554
  %v4478 = vmul.f32 %v4454, 0.21300554
  %v4479 = vmul.f32 %v4455, 0.21300554
  %v4480 = vmul.f32 %v4456, 0.21300554
  %v4481 = vmul.f32 %v4457, 0.21300554
  %v4482 = vmul.f32 %v4458, 0.21300554
  %v4483 = vmul.f32 %v4459, 0.21300554
  %v4484 = vmul.f32 %v4460, 0.21300554
  %v4485 = vmul.f32 %v4461, 0.21300554
  %v4486 = vmul.f32 %v4462, 0.21300554
  %v4487 = vmul.f32 %v4463, 0.21300554
  %v4488 = vmul.f32 %v4464, 0.21300554
  %4513 = vrot.lane.b32.xlu0 %v4465, 1
  %v4514 = vpop.permute.xlu0 %4513
  %4515 = vrot.lane.b32.xlu0 %v4466, 1
  %v4516 = vpop.permute.xlu0 %4515
  %4517 = vrot.lane.b32.xlu0 %v4467, 1
  %v4518 = vpop.permute.xlu0 %4517
  %4519 = vrot.lane.b32.xlu0 %v4468, 1
  %v4520 = vpop.permute.xlu0 %4519
  %4521 = vrot.lane.b32.xlu0 %v4469, 1
  %v4522 = vpop.permute.xlu0 %4521
  %4523 = vrot.lane.b32.xlu0 %v4470, 1
  %v4524 = vpop.permute.xlu0 %4523
  %4525 = vrot.lane.b32.xlu0 %v4471, 1
  %v4526 = vpop.permute.xlu0 %4525
  %4527 = vrot.lane.b32.xlu0 %v4472, 1
  %v4528 = vpop.permute.xlu0 %4527
  %4529 = vrot.lane.b32.xlu0 %v4473, 1
  %v4530 = vpop.permute.xlu0 %4529
  %4531 = vrot.lane.b32.xlu0 %v4474, 1
  %v4532 = vpop.permute.xlu0 %4531
  %4533 = vrot.lane.b32.xlu0 %v4475, 1
  %v4534 = vpop.permute.xlu0 %4533
  %4535 = vrot.lane.b32.xlu0 %v4476, 1
  %v4536 = vpop.permute.xlu0 %4535
  %4537 = vrot.lane.b32.xlu0 %v4477, 1
  %v4538 = vpop.permute.xlu0 %4537
  %4539 = vrot.lane.b32.xlu0 %v4478, 1
  %v4540 = vpop.permute.xlu0 %4539
  %4541 = vrot.lane.b32.xlu0 %v4479, 1
  %v4542 = vpop.permute.xlu0 %4541
  %4543 = vrot.lane.b32.xlu0 %v4480, 1
  %v4544 = vpop.permute.xlu0 %4543
  %4545 = vrot.lane.b32.xlu0 %v4481, 1
  %v4546 = vpop.permute.xlu0 %4545
  %4547 = vrot.lane.b32.xlu0 %v4482, 1
  %v4548 = vpop.permute.xlu0 %4547
  %4549 = vrot.lane.b32.xlu0 %v4483, 1
  %v4550 = vpop.permute.xlu0 %4549
  %4551 = vrot.lane.b32.xlu0 %v4484, 1
  %v4552 = vpop.permute.xlu0 %4551
  %4553 = vrot.lane.b32.xlu0 %v4485, 1
  %v4554 = vpop.permute.xlu0 %4553
  %4555 = vrot.lane.b32.xlu0 %v4486, 1
  %v4556 = vpop.permute.xlu0 %4555
  %4557 = vrot.lane.b32.xlu0 %v4487, 1
  %v4558 = vpop.permute.xlu0 %4557
  %4559 = vrot.lane.b32.xlu0 %v4488, 1
  %v4560 = vpop.permute.xlu0 %4559
  %v4585 = vadd.f32 %v4345, %v4514
  %v4586 = vadd.f32 %v4346, %v4516
  %v4587 = vadd.f32 %v4347, %v4518
  %v4588 = vadd.f32 %v4348, %v4520
  %v4589 = vadd.f32 %v4349, %v4522
  %v4590 = vadd.f32 %v4350, %v4524
  %v4591 = vadd.f32 %v4351, %v4526
  %v4592 = vadd.f32 %v4352, %v4528
  %v4593 = vadd.f32 %v4353, %v4530
  %v4594 = vadd.f32 %v4354, %v4532
  %v4595 = vadd.f32 %v4355, %v4534
  %v4596 = vadd.f32 %v4356, %v4536
  %v4597 = vadd.f32 %v4357, %v4538
  %v4598 = vadd.f32 %v4358, %v4540
  %v4599 = vadd.f32 %v4359, %v4542
  %v4600 = vadd.f32 %v4360, %v4544
  %v4601 = vadd.f32 %v4361, %v4546
  %v4602 = vadd.f32 %v4362, %v4548
  %v4603 = vadd.f32 %v4363, %v4550
  %v4604 = vadd.f32 %v4364, %v4552
  %v4605 = vadd.f32 %v4365, %v4554
  %v4606 = vadd.f32 %v4366, %v4556
  %v4607 = vadd.f32 %v4367, %v4558
  %v4608 = vadd.f32 %v4368, %v4560
  %v4609 = vmul.f32 %v2321, %v2321
  %v4610 = vmul.f32 %v2322, %v2322
  %v4611 = vmul.f32 %v2323, %v2323
  %v4612 = vmul.f32 %v2324, %v2324
  %v4613 = vmul.f32 %v2325, %v2325
  %v4614 = vmul.f32 %v2326, %v2326
  %v4615 = vmul.f32 %v2327, %v2327
  %v4616 = vmul.f32 %v2328, %v2328
  %v4617 = vmul.f32 %v2329, %v2329
  %v4618 = vmul.f32 %v2330, %v2330
  %v4619 = vmul.f32 %v2331, %v2331
  %v4620 = vmul.f32 %v2332, %v2332
  %v4621 = vmul.f32 %v2333, %v2333
  %v4622 = vmul.f32 %v2334, %v2334
  %v4623 = vmul.f32 %v2335, %v2335
  %v4624 = vmul.f32 %v2336, %v2336
  %v4625 = vmul.f32 %v2337, %v2337
  %v4626 = vmul.f32 %v2338, %v2338
  %v4627 = vmul.f32 %v2339, %v2339
  %v4628 = vmul.f32 %v2340, %v2340
  %v4629 = vmul.f32 %v2341, %v2341
  %v4630 = vmul.f32 %v2342, %v2342
  %v4631 = vmul.f32 %v2343, %v2343
  %v4632 = vmul.f32 %v2344, %v2344
  %v4633 = vmul.f32 %v4585, %v4585
  %v4634 = vmul.f32 %v4586, %v4586
  %v4635 = vmul.f32 %v4587, %v4587
  %v4636 = vmul.f32 %v4588, %v4588
  %v4637 = vmul.f32 %v4589, %v4589
  %v4638 = vmul.f32 %v4590, %v4590
  %v4639 = vmul.f32 %v4591, %v4591
  %v4640 = vmul.f32 %v4592, %v4592
  %v4641 = vmul.f32 %v4593, %v4593
  %v4642 = vmul.f32 %v4594, %v4594
  %v4643 = vmul.f32 %v4595, %v4595
  %v4644 = vmul.f32 %v4596, %v4596
  %v4645 = vmul.f32 %v4597, %v4597
  %v4646 = vmul.f32 %v4598, %v4598
  %v4647 = vmul.f32 %v4599, %v4599
  %v4648 = vmul.f32 %v4600, %v4600
  %v4649 = vmul.f32 %v4601, %v4601
  %v4650 = vmul.f32 %v4602, %v4602
  %v4651 = vmul.f32 %v4603, %v4603
  %v4652 = vmul.f32 %v4604, %v4604
  %v4653 = vmul.f32 %v4605, %v4605
  %v4654 = vmul.f32 %v4606, %v4606
  %v4655 = vmul.f32 %v4607, %v4607
  %v4656 = vmul.f32 %v4608, %v4608
  %v4657 = vmul.f32 %v2321, %v4585
  %v4658 = vmul.f32 %v2322, %v4586
  %v4659 = vmul.f32 %v2323, %v4587
  %v4660 = vmul.f32 %v2324, %v4588
  %v4661 = vmul.f32 %v2325, %v4589
  %v4662 = vmul.f32 %v2326, %v4590
  %v4663 = vmul.f32 %v2327, %v4591
  %v4664 = vmul.f32 %v2328, %v4592
  %v4665 = vmul.f32 %v2329, %v4593
  %v4666 = vmul.f32 %v2330, %v4594
  %v4667 = vmul.f32 %v2331, %v4595
  %v4668 = vmul.f32 %v2332, %v4596
  %v4669 = vmul.f32 %v2333, %v4597
  %v4670 = vmul.f32 %v2334, %v4598
  %v4671 = vmul.f32 %v2335, %v4599
  %v4672 = vmul.f32 %v2336, %v4600
  %v4673 = vmul.f32 %v2337, %v4601
  %v4674 = vmul.f32 %v2338, %v4602
  %v4675 = vmul.f32 %v2339, %v4603
  %v4676 = vmul.f32 %v2340, %v4604
  %v4677 = vmul.f32 %v2341, %v4605
  %v4678 = vmul.f32 %v2342, %v4606
  %v4679 = vmul.f32 %v2343, %v4607
  %v4680 = vmul.f32 %v2344, %v4608
  %v4681 = vmul.f32 %v11, %v11
  %v4682 = vmul.f32 %v12, %v12
  %v4683 = vmul.f32 %v13, %v13
  %v4684 = vmul.f32 %v14, %v14
  %v4685 = vmul.f32 %v15, %v15
  %v4686 = vmul.f32 %v16, %v16
  %v4687 = vmul.f32 %v17, %v17
  %v4688 = vmul.f32 %v18, %v18
  %v4689 = vmul.f32 %v19, %v19
  %v4690 = vmul.f32 %v20, %v20
  %v4691 = vmul.f32 %v21, %v21
  %v4692 = vmul.f32 %v22, %v22
  %v4693 = vmul.f32 %v23, %v23
  %v4694 = vmul.f32 %v24, %v24
  %v4695 = vmul.f32 %v25, %v25
  %v4696 = vmul.f32 %v26, %v26
  %v4697 = vmul.f32 %v27, %v27
  %v4698 = vmul.f32 %v28, %v28
  %v4699 = vmul.f32 %v29, %v29
  %v4700 = vmul.f32 %v30, %v30
  %v4701 = vmul.f32 %v31, %v31
  %v4702 = vmul.f32 %v32, %v32
  %v4703 = vmul.f32 %v33, %v33
  %v4704 = vmul.f32 %v34, %v34
  %v4705 = vmul.f32 %v35, %v35
  %v4706 = vmul.f32 %v36, %v36
  %v4707 = vmul.f32 %v37, %v37
  %v4708 = vmul.f32 %v38, %v38
  %v4709 = vmul.f32 %v39, %v39
  %v4710 = vmul.f32 %v40, %v40
  %v4711 = vmul.f32 %v41, %v41
  %v4712 = vmul.f32 %v42, %v42
  %v4713 = vmul.f32 %v4681, 0.26601171
  %v4714 = vmul.f32 %v4682, 0.26601171
  %v4715 = vmul.f32 %v4683, 0.26601171
  %v4716 = vmul.f32 %v4685, 0.26601171
  %v4717 = vmul.f32 %v4686, 0.26601171
  %v4718 = vmul.f32 %v4687, 0.26601171
  %v4719 = vmul.f32 %v4689, 0.26601171
  %v4720 = vmul.f32 %v4690, 0.26601171
  %v4721 = vmul.f32 %v4691, 0.26601171
  %v4722 = vmul.f32 %v4693, 0.26601171
  %v4723 = vmul.f32 %v4694, 0.26601171
  %v4724 = vmul.f32 %v4695, 0.26601171
  %v4725 = vmul.f32 %v4697, 0.26601171
  %v4726 = vmul.f32 %v4698, 0.26601171
  %v4727 = vmul.f32 %v4699, 0.26601171
  %v4728 = vmul.f32 %v4701, 0.26601171
  %v4729 = vmul.f32 %v4702, 0.26601171
  %v4730 = vmul.f32 %v4703, 0.26601171
  %v4731 = vmul.f32 %v4705, 0.26601171
  %v4732 = vmul.f32 %v4706, 0.26601171
  %v4733 = vmul.f32 %v4707, 0.26601171
  %v4734 = vmul.f32 %v4709, 0.26601171
  %v4735 = vmul.f32 %v4710, 0.26601171
  %v4736 = vmul.f32 %v4711, 0.26601171
  %v4761 = vrot.slane %v4682, 2
  %v4762 = vrot.slane %v4683, 2
  %v4763 = vsel %vm123, %v4761, %v4762
  %v4764 = vrot.slane %v4684, 2
  %v4765 = vsel %vm123, %v4762, %v4764
  %v4766 = vrot.slane %v4686, 2
  %v4767 = vrot.slane %v4687, 2
  %v4768 = vsel %vm123, %v4766, %v4767
  %v4769 = vrot.slane %v4688, 2
  %v4770 = vsel %vm123, %v4767, %v4769
  %v4771 = vrot.slane %v4690, 2
  %v4772 = vrot.slane %v4691, 2
  %v4773 = vsel %vm123, %v4771, %v4772
  %v4774 = vrot.slane %v4692, 2
  %v4775 = vsel %vm123, %v4772, %v4774
  %v4776 = vrot.slane %v4694, 2
  %v4777 = vrot.slane %v4695, 2
  %v4778 = vsel %vm123, %v4776, %v4777
  %v4779 = vrot.slane %v4696, 2
  %v4780 = vsel %vm123, %v4777, %v4779
  %v4781 = vrot.slane %v4698, 2
  %v4782 = vrot.slane %v4699, 2
  %v4783 = vsel %vm123, %v4781, %v4782
  %v4784 = vrot.slane %v4700, 2
  %v4785 = vsel %vm123, %v4782, %v4784
  %v4786 = vrot.slane %v4702, 2
  %v4787 = vrot.slane %v4703, 2
  %v4788 = vsel %vm123, %v4786, %v4787
  %v4789 = vrot.slane %v4704, 2
  %v4790 = vsel %vm123, %v4787, %v4789
  %v4791 = vrot.slane %v4706, 2
  %v4792 = vrot.slane %v4707, 2
  %v4793 = vsel %vm123, %v4791, %v4792
  %v4794 = vrot.slane %v4708, 2
  %v4795 = vsel %vm123, %v4792, %v4794
  %v4796 = vrot.slane %v4710, 2
  %v4797 = vrot.slane %v4711, 2
  %v4798 = vsel %vm123, %v4796, %v4797
  %v4799 = vrot.slane %v4712, 2
  %v4800 = vsel %vm123, %v4797, %v4799
  %v4817 = vadd.f32 %v4681, %v4763
  %v4818 = vadd.f32 %v4682, %v4765
  %v4819 = vadd.f32 %v4685, %v4768
  %v4820 = vadd.f32 %v4686, %v4770
  %v4821 = vadd.f32 %v4689, %v4773
  %v4822 = vadd.f32 %v4690, %v4775
  %v4823 = vadd.f32 %v4693, %v4778
  %v4824 = vadd.f32 %v4694, %v4780
  %v4825 = vadd.f32 %v4697, %v4783
  %v4826 = vadd.f32 %v4698, %v4785
  %v4827 = vadd.f32 %v4701, %v4788
  %v4828 = vadd.f32 %v4702, %v4790
  %v4829 = vadd.f32 %v4705, %v4793
  %v4830 = vadd.f32 %v4706, %v4795
  %v4831 = vadd.f32 %v4709, %v4798
  %v4832 = vadd.f32 %v4710, %v4800
  %v4833 = vmul.f32 %v4817, 0.0010283801
  %v4834 = vmul.f32 %v4818, 0.0010283801
  %v4835 = vmul.f32 %v4819, 0.0010283801
  %v4836 = vmul.f32 %v4820, 0.0010283801
  %v4837 = vmul.f32 %v4821, 0.0010283801
  %v4838 = vmul.f32 %v4822, 0.0010283801
  %v4839 = vmul.f32 %v4823, 0.0010283801
  %v4840 = vmul.f32 %v4824, 0.0010283801
  %v4841 = vmul.f32 %v4825, 0.0010283801
  %v4842 = vmul.f32 %v4826, 0.0010283801
  %v4843 = vmul.f32 %v4827, 0.0010283801
  %v4844 = vmul.f32 %v4828, 0.0010283801
  %v4845 = vmul.f32 %v4829, 0.0010283801
  %v4846 = vmul.f32 %v4830, 0.0010283801
  %v4847 = vmul.f32 %v4831, 0.0010283801
  %v4848 = vmul.f32 %v4832, 0.0010283801
  %v4865 = vrot.slane %v4833, 3
  %v4866 = vrot.slane %v4834, 3
  %v4867 = vsel %vm228, %v4865, %v4866
  %v4868 = vrot.slane %v4835, 3
  %v4869 = vrot.slane %v4836, 3
  %v4870 = vsel %vm228, %v4868, %v4869
  %v4871 = vrot.slane %v4837, 3
  %v4872 = vrot.slane %v4838, 3
  %v4873 = vsel %vm228, %v4871, %v4872
  %v4874 = vrot.slane %v4839, 3
  %v4875 = vrot.slane %v4840, 3
  %v4876 = vsel %vm228, %v4874, %v4875
  %v4877 = vrot.slane %v4841, 3
  %v4878 = vrot.slane %v4842, 3
  %v4879 = vsel %vm228, %v4877, %v4878
  %v4880 = vrot.slane %v4843, 3
  %v4881 = vrot.slane %v4844, 3
  %v4882 = vsel %vm228, %v4880, %v4881
  %v4883 = vrot.slane %v4845, 3
  %v4884 = vrot.slane %v4846, 3
  %v4885 = vsel %vm228, %v4883, %v4884
  %v4886 = vrot.slane %v4847, 3
  %v4887 = vrot.slane %v4848, 3
  %v4888 = vsel %vm228, %v4886, %v4887
  %v4913 = vadd.f32 %v4713, %v4865
  %v4914 = vadd.f32 %v4714, %v4867
  %v4915 = vadd.f32 %v4715, %v4866
  %v4916 = vadd.f32 %v4716, %v4868
  %v4917 = vadd.f32 %v4717, %v4870
  %v4918 = vadd.f32 %v4718, %v4869
  %v4919 = vadd.f32 %v4719, %v4871
  %v4920 = vadd.f32 %v4720, %v4873
  %v4921 = vadd.f32 %v4721, %v4872
  %v4922 = vadd.f32 %v4722, %v4874
  %v4923 = vadd.f32 %v4723, %v4876
  %v4924 = vadd.f32 %v4724, %v4875
  %v4925 = vadd.f32 %v4725, %v4877
  %v4926 = vadd.f32 %v4726, %v4879
  %v4927 = vadd.f32 %v4727, %v4878
  %v4928 = vadd.f32 %v4728, %v4880
  %v4929 = vadd.f32 %v4729, %v4882
  %v4930 = vadd.f32 %v4730, %v4881
  %v4931 = vadd.f32 %v4731, %v4883
  %v4932 = vadd.f32 %v4732, %v4885
  %v4933 = vadd.f32 %v4733, %v4884
  %v4934 = vadd.f32 %v4734, %v4886
  %v4935 = vadd.f32 %v4735, %v4888
  %v4936 = vadd.f32 %v4736, %v4887
  %v4937 = vadd.f32 %v4681, %v4682
  %v4938 = vadd.f32 %v4682, %v4683
  %v4939 = vadd.f32 %v4683, %v4684
  %v4940 = vadd.f32 %v4685, %v4686
  %v4941 = vadd.f32 %v4686, %v4687
  %v4942 = vadd.f32 %v4687, %v4688
  %v4943 = vadd.f32 %v4689, %v4690
  %v4944 = vadd.f32 %v4690, %v4691
  %v4945 = vadd.f32 %v4691, %v4692
  %v4946 = vadd.f32 %v4693, %v4694
  %v4947 = vadd.f32 %v4694, %v4695
  %v4948 = vadd.f32 %v4695, %v4696
  %v4949 = vadd.f32 %v4697, %v4698
  %v4950 = vadd.f32 %v4698, %v4699
  %v4951 = vadd.f32 %v4699, %v4700
  %v4952 = vadd.f32 %v4701, %v4702
  %v4953 = vadd.f32 %v4702, %v4703
  %v4954 = vadd.f32 %v4703, %v4704
  %v4955 = vadd.f32 %v4705, %v4706
  %v4956 = vadd.f32 %v4706, %v4707
  %v4957 = vadd.f32 %v4707, %v4708
  %v4958 = vadd.f32 %v4709, %v4710
  %v4959 = vadd.f32 %v4710, %v4711
  %v4960 = vadd.f32 %v4711, %v4712
  %v4961 = vmul.f32 %v4937, 0.007598758
  %v4962 = vmul.f32 %v4938, 0.007598758
  %v4963 = vmul.f32 %v4939, 0.007598758
  %v4964 = vmul.f32 %v4940, 0.007598758
  %v4965 = vmul.f32 %v4941, 0.007598758
  %v4966 = vmul.f32 %v4942, 0.007598758
  %v4967 = vmul.f32 %v4943, 0.007598758
  %v4968 = vmul.f32 %v4944, 0.007598758
  %v4969 = vmul.f32 %v4945, 0.007598758
  %v4970 = vmul.f32 %v4946, 0.007598758
  %v4971 = vmul.f32 %v4947, 0.007598758
  %v4972 = vmul.f32 %v4948, 0.007598758
  %v4973 = vmul.f32 %v4949, 0.007598758
  %v4974 = vmul.f32 %v4950, 0.007598758
  %v4975 = vmul.f32 %v4951, 0.007598758
  %v4976 = vmul.f32 %v4952, 0.007598758
  %v4977 = vmul.f32 %v4953, 0.007598758
  %v4978 = vmul.f32 %v4954, 0.007598758
  %v4979 = vmul.f32 %v4955, 0.007598758
  %v4980 = vmul.f32 %v4956, 0.007598758
  %v4981 = vmul.f32 %v4957, 0.007598758
  %v4982 = vmul.f32 %v4958, 0.007598758
  %v4983 = vmul.f32 %v4959, 0.007598758
  %v4984 = vmul.f32 %v4960, 0.007598758
  %v5009 = vrot.slane %v4961, 4
  %v5010 = vrot.slane %v4962, 4
  %v5011 = vsel %vm373, %v5009, %v5010
  %v5012 = vrot.slane %v4963, 4
  %v5013 = vsel %vm373, %v5010, %v5012
  %v5014 = vrot.slane %v4964, 4
  %v5015 = vrot.slane %v4965, 4
  %v5016 = vsel %vm373, %v5014, %v5015
  %v5017 = vrot.slane %v4966, 4
  %v5018 = vsel %vm373, %v5015, %v5017
  %v5019 = vrot.slane %v4967, 4
  %v5020 = vrot.slane %v4968, 4
  %v5021 = vsel %vm373, %v5019, %v5020
  %v5022 = vrot.slane %v4969, 4
  %v5023 = vsel %vm373, %v5020, %v5022
  %v5024 = vrot.slane %v4970, 4
  %v5025 = vrot.slane %v4971, 4
  %v5026 = vsel %vm373, %v5024, %v5025
  %v5027 = vrot.slane %v4972, 4
  %v5028 = vsel %vm373, %v5025, %v5027
  %v5029 = vrot.slane %v4973, 4
  %v5030 = vrot.slane %v4974, 4
  %v5031 = vsel %vm373, %v5029, %v5030
  %v5032 = vrot.slane %v4975, 4
  %v5033 = vsel %vm373, %v5030, %v5032
  %v5034 = vrot.slane %v4976, 4
  %v5035 = vrot.slane %v4977, 4
  %v5036 = vsel %vm373, %v5034, %v5035
  %v5037 = vrot.slane %v4978, 4
  %v5038 = vsel %vm373, %v5035, %v5037
  %v5039 = vrot.slane %v4979, 4
  %v5040 = vrot.slane %v4980, 4
  %v5041 = vsel %vm373, %v5039, %v5040
  %v5042 = vrot.slane %v4981, 4
  %v5043 = vsel %vm373, %v5040, %v5042
  %v5044 = vrot.slane %v4982, 4
  %v5045 = vrot.slane %v4983, 4
  %v5046 = vsel %vm373, %v5044, %v5045
  %v5047 = vrot.slane %v4984, 4
  %v5048 = vsel %vm373, %v5045, %v5047
  %v5073 = vadd.f32 %v4913, %v5009
  %v5074 = vadd.f32 %v4914, %v5011
  %v5075 = vadd.f32 %v4915, %v5013
  %v5076 = vadd.f32 %v4916, %v5014
  %v5077 = vadd.f32 %v4917, %v5016
  %v5078 = vadd.f32 %v4918, %v5018
  %v5079 = vadd.f32 %v4919, %v5019
  %v5080 = vadd.f32 %v4920, %v5021
  %v5081 = vadd.f32 %v4921, %v5023
  %v5082 = vadd.f32 %v4922, %v5024
  %v5083 = vadd.f32 %v4923, %v5026
  %v5084 = vadd.f32 %v4924, %v5028
  %v5085 = vadd.f32 %v4925, %v5029
  %v5086 = vadd.f32 %v4926, %v5031
  %v5087 = vadd.f32 %v4927, %v5033
  %v5088 = vadd.f32 %v4928, %v5034
  %v5089 = vadd.f32 %v4929, %v5036
  %v5090 = vadd.f32 %v4930, %v5038
  %v5091 = vadd.f32 %v4931, %v5039
  %v5092 = vadd.f32 %v4932, %v5041
  %v5093 = vadd.f32 %v4933, %v5043
  %v5094 = vadd.f32 %v4934, %v5044
  %v5095 = vadd.f32 %v4935, %v5046
  %v5096 = vadd.f32 %v4936, %v5048
  %v5097 = vrot.slane %v4682, 6
  %v5098 = vrot.slane %v4683, 6
  %v5099 = vsel %vm462, %v5097, %v5098
  %v5100 = vrot.slane %v4686, 6
  %v5101 = vrot.slane %v4687, 6
  %v5102 = vsel %vm462, %v5100, %v5101
  %v5103 = vrot.slane %v4690, 6
  %v5104 = vrot.slane %v4691, 6
  %v5105 = vsel %vm462, %v5103, %v5104
  %v5106 = vrot.slane %v4694, 6
  %v5107 = vrot.slane %v4695, 6
  %v5108 = vsel %vm462, %v5106, %v5107
  %v5109 = vrot.slane %v4698, 6
  %v5110 = vrot.slane %v4699, 6
  %v5111 = vsel %vm462, %v5109, %v5110
  %v5112 = vrot.slane %v4702, 6
  %v5113 = vrot.slane %v4703, 6
  %v5114 = vsel %vm462, %v5112, %v5113
  %v5115 = vrot.slane %v4706, 6
  %v5116 = vrot.slane %v4707, 6
  %v5117 = vsel %vm462, %v5115, %v5116
  %v5118 = vrot.slane %v4710, 6
  %v5119 = vrot.slane %v4711, 6
  %v5120 = vsel %vm462, %v5118, %v5119
  %v5145 = vadd.f32 %v4681, %v5097
  %v5146 = vadd.f32 %v4682, %v5099
  %v5147 = vadd.f32 %v4683, %v5098
  %v5148 = vadd.f32 %v4685, %v5100
  %v5149 = vadd.f32 %v4686, %v5102
  %v5150 = vadd.f32 %v4687, %v5101
  %v5151 = vadd.f32 %v4689, %v5103
  %v5152 = vadd.f32 %v4690, %v5105
  %v5153 = vadd.f32 %v4691, %v5104
  %v5154 = vadd.f32 %v4693, %v5106
  %v5155 = vadd.f32 %v4694, %v5108
  %v5156 = vadd.f32 %v4695, %v5107
  %v5157 = vadd.f32 %v4697, %v5109
  %v5158 = vadd.f32 %v4698, %v5111
  %v5159 = vadd.f32 %v4699, %v5110
  %v5160 = vadd.f32 %v4701, %v5112
  %v5161 = vadd.f32 %v4702, %v5114
  %v5162 = vadd.f32 %v4703, %v5113
  %v5163 = vadd.f32 %v4705, %v5115
  %v5164 = vadd.f32 %v4706, %v5117
  %v5165 = vadd.f32 %v4707, %v5116
  %v5166 = vadd.f32 %v4709, %v5118
  %v5167 = vadd.f32 %v4710, %v5120
  %v5168 = vadd.f32 %v4711, %v5119
  %v5169 = vmul.f32 %v5145, 0.036000773
  %v5170 = vmul.f32 %v5146, 0.036000773
  %v5171 = vmul.f32 %v5147, 0.036000773
  %v5172 = vmul.f32 %v5148, 0.036000773
  %v5173 = vmul.f32 %v5149, 0.036000773
  %v5174 = vmul.f32 %v5150, 0.036000773
  %v5175 = vmul.f32 %v5151, 0.036000773
  %v5176 = vmul.f32 %v5152, 0.036000773
  %v5177 = vmul.f32 %v5153, 0.036000773
  %v5178 = vmul.f32 %v5154, 0.036000773
  %v5179 = vmul.f32 %v5155, 0.036000773
  %v5180 = vmul.f32 %v5156, 0.036000773
  %v5181 = vmul.f32 %v5157, 0.036000773
  %v5182 = vmul.f32 %v5158, 0.036000773
  %v5183 = vmul.f32 %v5159, 0.036000773
  %v5184 = vmul.f32 %v5160, 0.036000773
  %v5185 = vmul.f32 %v5161, 0.036000773
  %v5186 = vmul.f32 %v5162, 0.036000773
  %v5187 = vmul.f32 %v5163, 0.036000773
  %v5188 = vmul.f32 %v5164, 0.036000773
  %v5189 = vmul.f32 %v5165, 0.036000773
  %v5190 = vmul.f32 %v5166, 0.036000773
  %v5191 = vmul.f32 %v5167, 0.036000773
  %v5192 = vmul.f32 %v5168, 0.036000773
  %v5217 = vrot.slane %v5169, 5
  %v5218 = vrot.slane %v5170, 5
  %v5219 = vsel %vm583, %v5217, %v5218
  %v5220 = vrot.slane %v5171, 5
  %v5221 = vsel %vm583, %v5218, %v5220
  %v5222 = vrot.slane %v5172, 5
  %v5223 = vrot.slane %v5173, 5
  %v5224 = vsel %vm583, %v5222, %v5223
  %v5225 = vrot.slane %v5174, 5
  %v5226 = vsel %vm583, %v5223, %v5225
  %v5227 = vrot.slane %v5175, 5
  %v5228 = vrot.slane %v5176, 5
  %v5229 = vsel %vm583, %v5227, %v5228
  %v5230 = vrot.slane %v5177, 5
  %v5231 = vsel %vm583, %v5228, %v5230
  %v5232 = vrot.slane %v5178, 5
  %v5233 = vrot.slane %v5179, 5
  %v5234 = vsel %vm583, %v5232, %v5233
  %v5235 = vrot.slane %v5180, 5
  %v5236 = vsel %vm583, %v5233, %v5235
  %v5237 = vrot.slane %v5181, 5
  %v5238 = vrot.slane %v5182, 5
  %v5239 = vsel %vm583, %v5237, %v5238
  %v5240 = vrot.slane %v5183, 5
  %v5241 = vsel %vm583, %v5238, %v5240
  %v5242 = vrot.slane %v5184, 5
  %v5243 = vrot.slane %v5185, 5
  %v5244 = vsel %vm583, %v5242, %v5243
  %v5245 = vrot.slane %v5186, 5
  %v5246 = vsel %vm583, %v5243, %v5245
  %v5247 = vrot.slane %v5187, 5
  %v5248 = vrot.slane %v5188, 5
  %v5249 = vsel %vm583, %v5247, %v5248
  %v5250 = vrot.slane %v5189, 5
  %v5251 = vsel %vm583, %v5248, %v5250
  %v5252 = vrot.slane %v5190, 5
  %v5253 = vrot.slane %v5191, 5
  %v5254 = vsel %vm583, %v5252, %v5253
  %v5255 = vrot.slane %v5192, 5
  %v5256 = vsel %vm583, %v5253, %v5255
  %v5281 = vadd.f32 %v5073, %v5217
  %v5282 = vadd.f32 %v5074, %v5219
  %v5283 = vadd.f32 %v5075, %v5221
  %v5284 = vadd.f32 %v5076, %v5222
  %v5285 = vadd.f32 %v5077, %v5224
  %v5286 = vadd.f32 %v5078, %v5226
  %v5287 = vadd.f32 %v5079, %v5227
  %v5288 = vadd.f32 %v5080, %v5229
  %v5289 = vadd.f32 %v5081, %v5231
  %v5290 = vadd.f32 %v5082, %v5232
  %v5291 = vadd.f32 %v5083, %v5234
  %v5292 = vadd.f32 %v5084, %v5236
  %v5293 = vadd.f32 %v5085, %v5237
  %v5294 = vadd.f32 %v5086, %v5239
  %v5295 = vadd.f32 %v5087, %v5241
  %v5296 = vadd.f32 %v5088, %v5242
  %v5297 = vadd.f32 %v5089, %v5244
  %v5298 = vadd.f32 %v5090, %v5246
  %v5299 = vadd.f32 %v5091, %v5247
  %v5300 = vadd.f32 %v5092, %v5249
  %v5301 = vadd.f32 %v5093, %v5251
  %v5302 = vadd.f32 %v5094, %v5252
  %v5303 = vadd.f32 %v5095, %v5254
  %v5304 = vadd.f32 %v5096, %v5256
  %v5313 = vrot.slane %v4681, 4
  %v5314 = vrot.slane %v4682, 4
  %v5315 = vsel %vm373, %v5313, %v5314
  %v5316 = vrot.slane %v4683, 4
  %v5317 = vsel %vm373, %v5314, %v5316
  %v5318 = vrot.slane %v4685, 4
  %v5319 = vrot.slane %v4686, 4
  %v5320 = vsel %vm373, %v5318, %v5319
  %v5321 = vrot.slane %v4687, 4
  %v5322 = vsel %vm373, %v5319, %v5321
  %v5323 = vrot.slane %v4689, 4
  %v5324 = vrot.slane %v4690, 4
  %v5325 = vsel %vm373, %v5323, %v5324
  %v5326 = vrot.slane %v4691, 4
  %v5327 = vsel %vm373, %v5324, %v5326
  %v5328 = vrot.slane %v4693, 4
  %v5329 = vrot.slane %v4694, 4
  %v5330 = vsel %vm373, %v5328, %v5329
  %v5331 = vrot.slane %v4695, 4
  %v5332 = vsel %vm373, %v5329, %v5331
  %v5333 = vrot.slane %v4697, 4
  %v5334 = vrot.slane %v4698, 4
  %v5335 = vsel %vm373, %v5333, %v5334
  %v5336 = vrot.slane %v4699, 4
  %v5337 = vsel %vm373, %v5334, %v5336
  %v5338 = vrot.slane %v4701, 4
  %v5339 = vrot.slane %v4702, 4
  %v5340 = vsel %vm373, %v5338, %v5339
  %v5341 = vrot.slane %v4703, 4
  %v5342 = vsel %vm373, %v5339, %v5341
  %v5343 = vrot.slane %v4705, 4
  %v5344 = vrot.slane %v4706, 4
  %v5345 = vsel %vm373, %v5343, %v5344
  %v5346 = vrot.slane %v4707, 4
  %v5347 = vsel %vm373, %v5344, %v5346
  %v5348 = vrot.slane %v4709, 4
  %v5349 = vrot.slane %v4710, 4
  %v5350 = vsel %vm373, %v5348, %v5349
  %v5351 = vrot.slane %v4711, 4
  %v5352 = vsel %vm373, %v5349, %v5351
  %v5377 = vadd.f32 %v4681, %v5315
  %v5378 = vadd.f32 %v4682, %v5317
  %v5379 = vadd.f32 %v4683, %v5316
  %v5380 = vadd.f32 %v4685, %v5320
  %v5381 = vadd.f32 %v4686, %v5322
  %v5382 = vadd.f32 %v4687, %v5321
  %v5383 = vadd.f32 %v4689, %v5325
  %v5384 = vadd.f32 %v4690, %v5327
  %v5385 = vadd.f32 %v4691, %v5326
  %v5386 = vadd.f32 %v4693, %v5330
  %v5387 = vadd.f32 %v4694, %v5332
  %v5388 = vadd.f32 %v4695, %v5331
  %v5389 = vadd.f32 %v4697, %v5335
  %v5390 = vadd.f32 %v4698, %v5337
  %v5391 = vadd.f32 %v4699, %v5336
  %v5392 = vadd.f32 %v4701, %v5340
  %v5393 = vadd.f32 %v4702, %v5342
  %v5394 = vadd.f32 %v4703, %v5341
  %v5395 = vadd.f32 %v4705, %v5345
  %v5396 = vadd.f32 %v4706, %v5347
  %v5397 = vadd.f32 %v4707, %v5346
  %v5398 = vadd.f32 %v4709, %v5350
  %v5399 = vadd.f32 %v4710, %v5352
  %v5400 = vadd.f32 %v4711, %v5351
  %v5401 = vmul.f32 %v5377, 0.10936069
  %v5402 = vmul.f32 %v5378, 0.10936069
  %v5403 = vmul.f32 %v5379, 0.10936069
  %v5404 = vmul.f32 %v5380, 0.10936069
  %v5405 = vmul.f32 %v5381, 0.10936069
  %v5406 = vmul.f32 %v5382, 0.10936069
  %v5407 = vmul.f32 %v5383, 0.10936069
  %v5408 = vmul.f32 %v5384, 0.10936069
  %v5409 = vmul.f32 %v5385, 0.10936069
  %v5410 = vmul.f32 %v5386, 0.10936069
  %v5411 = vmul.f32 %v5387, 0.10936069
  %v5412 = vmul.f32 %v5388, 0.10936069
  %v5413 = vmul.f32 %v5389, 0.10936069
  %v5414 = vmul.f32 %v5390, 0.10936069
  %v5415 = vmul.f32 %v5391, 0.10936069
  %v5416 = vmul.f32 %v5392, 0.10936069
  %v5417 = vmul.f32 %v5393, 0.10936069
  %v5418 = vmul.f32 %v5394, 0.10936069
  %v5419 = vmul.f32 %v5395, 0.10936069
  %v5420 = vmul.f32 %v5396, 0.10936069
  %v5421 = vmul.f32 %v5397, 0.10936069
  %v5422 = vmul.f32 %v5398, 0.10936069
  %v5423 = vmul.f32 %v5399, 0.10936069
  %v5424 = vmul.f32 %v5400, 0.10936069
  %v5449 = vrot.slane %v5401, 6
  %v5450 = vrot.slane %v5402, 6
  %v5451 = vsel %vm462, %v5449, %v5450
  %v5452 = vrot.slane %v5403, 6
  %v5453 = vsel %vm462, %v5450, %v5452
  %v5454 = vrot.slane %v5404, 6
  %v5455 = vrot.slane %v5405, 6
  %v5456 = vsel %vm462, %v5454, %v5455
  %v5457 = vrot.slane %v5406, 6
  %v5458 = vsel %vm462, %v5455, %v5457
  %v5459 = vrot.slane %v5407, 6
  %v5460 = vrot.slane %v5408, 6
  %v5461 = vsel %vm462, %v5459, %v5460
  %v5462 = vrot.slane %v5409, 6
  %v5463 = vsel %vm462, %v5460, %v5462
  %v5464 = vrot.slane %v5410, 6
  %v5465 = vrot.slane %v5411, 6
  %v5466 = vsel %vm462, %v5464, %v5465
  %v5467 = vrot.slane %v5412, 6
  %v5468 = vsel %vm462, %v5465, %v5467
  %v5469 = vrot.slane %v5413, 6
  %v5470 = vrot.slane %v5414, 6
  %v5471 = vsel %vm462, %v5469, %v5470
  %v5472 = vrot.slane %v5415, 6
  %v5473 = vsel %vm462, %v5470, %v5472
  %v5474 = vrot.slane %v5416, 6
  %v5475 = vrot.slane %v5417, 6
  %v5476 = vsel %vm462, %v5474, %v5475
  %v5477 = vrot.slane %v5418, 6
  %v5478 = vsel %vm462, %v5475, %v5477
  %v5479 = vrot.slane %v5419, 6
  %v5480 = vrot.slane %v5420, 6
  %v5481 = vsel %vm462, %v5479, %v5480
  %v5482 = vrot.slane %v5421, 6
  %v5483 = vsel %vm462, %v5480, %v5482
  %v5484 = vrot.slane %v5422, 6
  %v5485 = vrot.slane %v5423, 6
  %v5486 = vsel %vm462, %v5484, %v5485
  %v5487 = vrot.slane %v5424, 6
  %v5488 = vsel %vm462, %v5485, %v5487
  %v5513 = vadd.f32 %v5281, %v5449
  %v5514 = vadd.f32 %v5282, %v5451
  %v5515 = vadd.f32 %v5283, %v5453
  %v5516 = vadd.f32 %v5284, %v5454
  %v5517 = vadd.f32 %v5285, %v5456
  %v5518 = vadd.f32 %v5286, %v5458
  %v5519 = vadd.f32 %v5287, %v5459
  %v5520 = vadd.f32 %v5288, %v5461
  %v5521 = vadd.f32 %v5289, %v5463
  %v5522 = vadd.f32 %v5290, %v5464
  %v5523 = vadd.f32 %v5291, %v5466
  %v5524 = vadd.f32 %v5292, %v5468
  %v5525 = vadd.f32 %v5293, %v5469
  %v5526 = vadd.f32 %v5294, %v5471
  %v5527 = vadd.f32 %v5295, %v5473
  %v5528 = vadd.f32 %v5296, %v5474
  %v5529 = vadd.f32 %v5297, %v5476
  %v5530 = vadd.f32 %v5298, %v5478
  %v5531 = vadd.f32 %v5299, %v5479
  %v5532 = vadd.f32 %v5300, %v5481
  %v5533 = vadd.f32 %v5301, %v5483
  %v5534 = vadd.f32 %v5302, %v5484
  %v5535 = vadd.f32 %v5303, %v5486
  %v5536 = vadd.f32 %v5304, %v5488
  %v5537 = vrot.slane %v4681, 2
  %v5538 = vsel %vm123, %v5537, %v4761
  %v5539 = vrot.slane %v4685, 2
  %v5540 = vsel %vm123, %v5539, %v4766
  %v5541 = vrot.slane %v4689, 2
  %v5542 = vsel %vm123, %v5541, %v4771
  %v5543 = vrot.slane %v4693, 2
  %v5544 = vsel %vm123, %v5543, %v4776
  %v5545 = vrot.slane %v4697, 2
  %v5546 = vsel %vm123, %v5545, %v4781
  %v5547 = vrot.slane %v4701, 2
  %v5548 = vsel %vm123, %v5547, %v4786
  %v5549 = vrot.slane %v4705, 2
  %v5550 = vsel %vm123, %v5549, %v4791
  %v5551 = vrot.slane %v4709, 2
  %v5552 = vsel %vm123, %v5551, %v4796
  %v5569 = vadd.f32 %v4681, %v5538
  %v5570 = vadd.f32 %v4682, %v4763
  %v5571 = vadd.f32 %v4683, %v4762
  %v5572 = vadd.f32 %v4685, %v5540
  %v5573 = vadd.f32 %v4686, %v4768
  %v5574 = vadd.f32 %v4687, %v4767
  %v5575 = vadd.f32 %v4689, %v5542
  %v5576 = vadd.f32 %v4690, %v4773
  %v5577 = vadd.f32 %v4691, %v4772
  %v5578 = vadd.f32 %v4693, %v5544
  %v5579 = vadd.f32 %v4694, %v4778
  %v5580 = vadd.f32 %v4695, %v4777
  %v5581 = vadd.f32 %v4697, %v5546
  %v5582 = vadd.f32 %v4698, %v4783
  %v5583 = vadd.f32 %v4699, %v4782
  %v5584 = vadd.f32 %v4701, %v5548
  %v5585 = vadd.f32 %v4702, %v4788
  %v5586 = vadd.f32 %v4703, %v4787
  %v5587 = vadd.f32 %v4705, %v5550
  %v5588 = vadd.f32 %v4706, %v4793
  %v5589 = vadd.f32 %v4707, %v4792
  %v5590 = vadd.f32 %v4709, %v5552
  %v5591 = vadd.f32 %v4710, %v4798
  %v5592 = vadd.f32 %v4711, %v4797
  %v5593 = vmul.f32 %v5569, 0.21300554
  %v5594 = vmul.f32 %v5570, 0.21300554
  %v5595 = vmul.f32 %v5571, 0.21300554
  %v5596 = vmul.f32 %v5572, 0.21300554
  %v5597 = vmul.f32 %v5573, 0.21300554
  %v5598 = vmul.f32 %v5574, 0.21300554
  %v5599 = vmul.f32 %v5575, 0.21300554
  %v5600 = vmul.f32 %v5576, 0.21300554
  %v5601 = vmul.f32 %v5577, 0.21300554
  %v5602 = vmul.f32 %v5578, 0.21300554
  %v5603 = vmul.f32 %v5579, 0.21300554
  %v5604 = vmul.f32 %v5580, 0.21300554
  %v5605 = vmul.f32 %v5581, 0.21300554
  %v5606 = vmul.f32 %v5582, 0.21300554
  %v5607 = vmul.f32 %v5583, 0.21300554
  %v5608 = vmul.f32 %v5584, 0.21300554
  %v5609 = vmul.f32 %v5585, 0.21300554
  %v5610 = vmul.f32 %v5586, 0.21300554
  %v5611 = vmul.f32 %v5587, 0.21300554
  %v5612 = vmul.f32 %v5588, 0.21300554
  %v5613 = vmul.f32 %v5589, 0.21300554
  %v5614 = vmul.f32 %v5590, 0.21300554
  %v5615 = vmul.f32 %v5591, 0.21300554
  %v5616 = vmul.f32 %v5592, 0.21300554
  %v5641 = vrot.slane %v5593, 7
  %v5642 = vrot.slane %v5594, 7
  %v5643 = vsel %vm1008, %v5641, %v5642
  %v5644 = vrot.slane %v5595, 7
  %v5645 = vsel %vm1008, %v5642, %v5644
  %v5646 = vrot.slane %v5596, 7
  %v5647 = vrot.slane %v5597, 7
  %v5648 = vsel %vm1008, %v5646, %v5647
  %v5649 = vrot.slane %v5598, 7
  %v5650 = vsel %vm1008, %v5647, %v5649
  %v5651 = vrot.slane %v5599, 7
  %v5652 = vrot.slane %v5600, 7
  %v5653 = vsel %vm1008, %v5651, %v5652
  %v5654 = vrot.slane %v5601, 7
  %v5655 = vsel %vm1008, %v5652, %v5654
  %v5656 = vrot.slane %v5602, 7
  %v5657 = vrot.slane %v5603, 7
  %v5658 = vsel %vm1008, %v5656, %v5657
  %v5659 = vrot.slane %v5604, 7
  %v5660 = vsel %vm1008, %v5657, %v5659
  %v5661 = vrot.slane %v5605, 7
  %v5662 = vrot.slane %v5606, 7
  %v5663 = vsel %vm1008, %v5661, %v5662
  %v5664 = vrot.slane %v5607, 7
  %v5665 = vsel %vm1008, %v5662, %v5664
  %v5666 = vrot.slane %v5608, 7
  %v5667 = vrot.slane %v5609, 7
  %v5668 = vsel %vm1008, %v5666, %v5667
  %v5669 = vrot.slane %v5610, 7
  %v5670 = vsel %vm1008, %v5667, %v5669
  %v5671 = vrot.slane %v5611, 7
  %v5672 = vrot.slane %v5612, 7
  %v5673 = vsel %vm1008, %v5671, %v5672
  %v5674 = vrot.slane %v5613, 7
  %v5675 = vsel %vm1008, %v5672, %v5674
  %v5676 = vrot.slane %v5614, 7
  %v5677 = vrot.slane %v5615, 7
  %v5678 = vsel %vm1008, %v5676, %v5677
  %v5679 = vrot.slane %v5616, 7
  %v5680 = vsel %vm1008, %v5677, %v5679
  %v5705 = vadd.f32 %v5513, %v5641
  %v5706 = vadd.f32 %v5514, %v5643
  %v5707 = vadd.f32 %v5515, %v5645
  %v5708 = vadd.f32 %v5516, %v5646
  %v5709 = vadd.f32 %v5517, %v5648
  %v5710 = vadd.f32 %v5518, %v5650
  %v5711 = vadd.f32 %v5519, %v5651
  %v5712 = vadd.f32 %v5520, %v5653
  %v5713 = vadd.f32 %v5521, %v5655
  %v5714 = vadd.f32 %v5522, %v5656
  %v5715 = vadd.f32 %v5523, %v5658
  %v5716 = vadd.f32 %v5524, %v5660
  %v5717 = vadd.f32 %v5525, %v5661
  %v5718 = vadd.f32 %v5526, %v5663
  %v5719 = vadd.f32 %v5527, %v5665
  %v5720 = vadd.f32 %v5528, %v5666
  %v5721 = vadd.f32 %v5529, %v5668
  %v5722 = vadd.f32 %v5530, %v5670
  %v5723 = vadd.f32 %v5531, %v5671
  %v5724 = vadd.f32 %v5532, %v5673
  %v5725 = vadd.f32 %v5533, %v5675
  %v5726 = vadd.f32 %v5534, %v5676
  %v5727 = vadd.f32 %v5535, %v5678
  %v5728 = vadd.f32 %v5536, %v5680
  %v5729 = vmul.f32 %v5705, 0.26601171
  %v5730 = vmul.f32 %v5706, 0.26601171
  %v5731 = vmul.f32 %v5707, 0.26601171
  %v5732 = vmul.f32 %v5708, 0.26601171
  %v5733 = vmul.f32 %v5709, 0.26601171
  %v5734 = vmul.f32 %v5710, 0.26601171
  %v5735 = vmul.f32 %v5711, 0.26601171
  %v5736 = vmul.f32 %v5712, 0.26601171
  %v5737 = vmul.f32 %v5713, 0.26601171
  %v5738 = vmul.f32 %v5714, 0.26601171
  %v5739 = vmul.f32 %v5715, 0.26601171
  %v5740 = vmul.f32 %v5716, 0.26601171
  %v5741 = vmul.f32 %v5717, 0.26601171
  %v5742 = vmul.f32 %v5718, 0.26601171
  %v5743 = vmul.f32 %v5719, 0.26601171
  %v5744 = vmul.f32 %v5720, 0.26601171
  %v5745 = vmul.f32 %v5721, 0.26601171
  %v5746 = vmul.f32 %v5722, 0.26601171
  %v5747 = vmul.f32 %v5723, 0.26601171
  %v5748 = vmul.f32 %v5724, 0.26601171
  %v5749 = vmul.f32 %v5725, 0.26601171
  %v5750 = vmul.f32 %v5726, 0.26601171
  %v5751 = vmul.f32 %v5727, 0.26601171
  %v5752 = vmul.f32 %v5728, 0.26601171
  %5777 = vrot.lane.b32.xlu0 %v5705, 118
  %v5778 = vpop.permute.xlu0 %5777
  %5779 = vrot.lane.b32.xlu0 %v5706, 118
  %v5780 = vpop.permute.xlu0 %5779
  %5781 = vrot.lane.b32.xlu0 %v5707, 118
  %v5782 = vpop.permute.xlu0 %5781
  %5783 = vrot.lane.b32.xlu0 %v5708, 118
  %v5784 = vpop.permute.xlu0 %5783
  %5785 = vrot.lane.b32.xlu0 %v5709, 118
  %v5786 = vpop.permute.xlu0 %5785
  %5787 = vrot.lane.b32.xlu0 %v5710, 118
  %v5788 = vpop.permute.xlu0 %5787
  %5789 = vrot.lane.b32.xlu0 %v5711, 118
  %v5790 = vpop.permute.xlu0 %5789
  %5791 = vrot.lane.b32.xlu0 %v5712, 118
  %v5792 = vpop.permute.xlu0 %5791
  %5793 = vrot.lane.b32.xlu0 %v5713, 118
  %v5794 = vpop.permute.xlu0 %5793
  %5795 = vrot.lane.b32.xlu0 %v5714, 118
  %v5796 = vpop.permute.xlu0 %5795
  %5797 = vrot.lane.b32.xlu0 %v5715, 118
  %v5798 = vpop.permute.xlu0 %5797
  %5799 = vrot.lane.b32.xlu0 %v5716, 118
  %v5800 = vpop.permute.xlu0 %5799
  %5801 = vrot.lane.b32.xlu0 %v5717, 118
  %v5802 = vpop.permute.xlu0 %5801
  %5803 = vrot.lane.b32.xlu0 %v5718, 118
  %v5804 = vpop.permute.xlu0 %5803
  %5805 = vrot.lane.b32.xlu0 %v5719, 118
  %v5806 = vpop.permute.xlu0 %5805
  %5807 = vrot.lane.b32.xlu0 %v5720, 118
  %v5808 = vpop.permute.xlu0 %5807
  %5809 = vrot.lane.b32.xlu0 %v5721, 118
  %v5810 = vpop.permute.xlu0 %5809
  %5811 = vrot.lane.b32.xlu0 %v5722, 118
  %v5812 = vpop.permute.xlu0 %5811
  %5813 = vrot.lane.b32.xlu0 %v5723, 118
  %v5814 = vpop.permute.xlu0 %5813
  %5815 = vrot.lane.b32.xlu0 %v5724, 118
  %v5816 = vpop.permute.xlu0 %5815
  %5817 = vrot.lane.b32.xlu0 %v5725, 118
  %v5818 = vpop.permute.xlu0 %5817
  %5819 = vrot.lane.b32.xlu0 %v5726, 118
  %v5820 = vpop.permute.xlu0 %5819
  %5821 = vrot.lane.b32.xlu0 %v5727, 118
  %v5822 = vpop.permute.xlu0 %5821
  %5823 = vrot.lane.b32.xlu0 %v5728, 118
  %v5824 = vpop.permute.xlu0 %5823
  %v5849 = vadd.f32 %v5705, %v5778
  %v5850 = vadd.f32 %v5706, %v5780
  %v5851 = vadd.f32 %v5707, %v5782
  %v5852 = vadd.f32 %v5708, %v5784
  %v5853 = vadd.f32 %v5709, %v5786
  %v5854 = vadd.f32 %v5710, %v5788
  %v5855 = vadd.f32 %v5711, %v5790
  %v5856 = vadd.f32 %v5712, %v5792
  %v5857 = vadd.f32 %v5713, %v5794
  %v5858 = vadd.f32 %v5714, %v5796
  %v5859 = vadd.f32 %v5715, %v5798
  %v5860 = vadd.f32 %v5716, %v5800
  %v5861 = vadd.f32 %v5717, %v5802
  %v5862 = vadd.f32 %v5718, %v5804
  %v5863 = vadd.f32 %v5719, %v5806
  %v5864 = vadd.f32 %v5720, %v5808
  %v5865 = vadd.f32 %v5721, %v5810
  %v5866 = vadd.f32 %v5722, %v5812
  %v5867 = vadd.f32 %v5723, %v5814
  %v5868 = vadd.f32 %v5724, %v5816
  %v5869 = vadd.f32 %v5725, %v5818
  %v5870 = vadd.f32 %v5726, %v5820
  %v5871 = vadd.f32 %v5727, %v5822
  %v5872 = vadd.f32 %v5728, %v5824
  %v5873 = vmul.f32 %v5849, 0.0010283801
  %v5874 = vmul.f32 %v5850, 0.0010283801
  %v5875 = vmul.f32 %v5851, 0.0010283801
  %v5876 = vmul.f32 %v5852, 0.0010283801
  %v5877 = vmul.f32 %v5853, 0.0010283801
  %v5878 = vmul.f32 %v5854, 0.0010283801
  %v5879 = vmul.f32 %v5855, 0.0010283801
  %v5880 = vmul.f32 %v5856, 0.0010283801
  %v5881 = vmul.f32 %v5857, 0.0010283801
  %v5882 = vmul.f32 %v5858, 0.0010283801
  %v5883 = vmul.f32 %v5859, 0.0010283801
  %v5884 = vmul.f32 %v5860, 0.0010283801
  %v5885 = vmul.f32 %v5861, 0.0010283801
  %v5886 = vmul.f32 %v5862, 0.0010283801
  %v5887 = vmul.f32 %v5863, 0.0010283801
  %v5888 = vmul.f32 %v5864, 0.0010283801
  %v5889 = vmul.f32 %v5865, 0.0010283801
  %v5890 = vmul.f32 %v5866, 0.0010283801
  %v5891 = vmul.f32 %v5867, 0.0010283801
  %v5892 = vmul.f32 %v5868, 0.0010283801
  %v5893 = vmul.f32 %v5869, 0.0010283801
  %v5894 = vmul.f32 %v5870, 0.0010283801
  %v5895 = vmul.f32 %v5871, 0.0010283801
  %v5896 = vmul.f32 %v5872, 0.0010283801
  %5921 = vrot.lane.b32.xlu0 %v5873, 5
  %v5922 = vpop.permute.xlu0 %5921
  %5923 = vrot.lane.b32.xlu0 %v5874, 5
  %v5924 = vpop.permute.xlu0 %5923
  %5925 = vrot.lane.b32.xlu0 %v5875, 5
  %v5926 = vpop.permute.xlu0 %5925
  %5927 = vrot.lane.b32.xlu0 %v5876, 5
  %v5928 = vpop.permute.xlu0 %5927
  %5929 = vrot.lane.b32.xlu0 %v5877, 5
  %v5930 = vpop.permute.xlu0 %5929
  %5931 = vrot.lane.b32.xlu0 %v5878, 5
  %v5932 = vpop.permute.xlu0 %5931
  %5933 = vrot.lane.b32.xlu0 %v5879, 5
  %v5934 = vpop.permute.xlu0 %5933
  %5935 = vrot.lane.b32.xlu0 %v5880, 5
  %v5936 = vpop.permute.xlu0 %5935
  %5937 = vrot.lane.b32.xlu0 %v5881, 5
  %v5938 = vpop.permute.xlu0 %5937
  %5939 = vrot.lane.b32.xlu0 %v5882, 5
  %v5940 = vpop.permute.xlu0 %5939
  %5941 = vrot.lane.b32.xlu0 %v5883, 5
  %v5942 = vpop.permute.xlu0 %5941
  %5943 = vrot.lane.b32.xlu0 %v5884, 5
  %v5944 = vpop.permute.xlu0 %5943
  %5945 = vrot.lane.b32.xlu0 %v5885, 5
  %v5946 = vpop.permute.xlu0 %5945
  %5947 = vrot.lane.b32.xlu0 %v5886, 5
  %v5948 = vpop.permute.xlu0 %5947
  %5949 = vrot.lane.b32.xlu0 %v5887, 5
  %v5950 = vpop.permute.xlu0 %5949
  %5951 = vrot.lane.b32.xlu0 %v5888, 5
  %v5952 = vpop.permute.xlu0 %5951
  %5953 = vrot.lane.b32.xlu0 %v5889, 5
  %v5954 = vpop.permute.xlu0 %5953
  %5955 = vrot.lane.b32.xlu0 %v5890, 5
  %v5956 = vpop.permute.xlu0 %5955
  %5957 = vrot.lane.b32.xlu0 %v5891, 5
  %v5958 = vpop.permute.xlu0 %5957
  %5959 = vrot.lane.b32.xlu0 %v5892, 5
  %v5960 = vpop.permute.xlu0 %5959
  %5961 = vrot.lane.b32.xlu0 %v5893, 5
  %v5962 = vpop.permute.xlu0 %5961
  %5963 = vrot.lane.b32.xlu0 %v5894, 5
  %v5964 = vpop.permute.xlu0 %5963
  %5965 = vrot.lane.b32.xlu0 %v5895, 5
  %v5966 = vpop.permute.xlu0 %5965
  %5967 = vrot.lane.b32.xlu0 %v5896, 5
  %v5968 = vpop.permute.xlu0 %5967
  %v5993 = vadd.f32 %v5729, %v5922
  %v5994 = vadd.f32 %v5730, %v5924
  %v5995 = vadd.f32 %v5731, %v5926
  %v5996 = vadd.f32 %v5732, %v5928
  %v5997 = vadd.f32 %v5733, %v5930
  %v5998 = vadd.f32 %v5734, %v5932
  %v5999 = vadd.f32 %v5735, %v5934
  %v6000 = vadd.f32 %v5736, %v5936
  %v6001 = vadd.f32 %v5737, %v5938
  %v6002 = vadd.f32 %v5738, %v5940
  %v6003 = vadd.f32 %v5739, %v5942
  %v6004 = vadd.f32 %v5740, %v5944
  %v6005 = vadd.f32 %v5741, %v5946
  %v6006 = vadd.f32 %v5742, %v5948
  %v6007 = vadd.f32 %v5743, %v5950
  %v6008 = vadd.f32 %v5744, %v5952
  %v6009 = vadd.f32 %v5745, %v5954
  %v6010 = vadd.f32 %v5746, %v5956
  %v6011 = vadd.f32 %v5747, %v5958
  %v6012 = vadd.f32 %v5748, %v5960
  %v6013 = vadd.f32 %v5749, %v5962
  %v6014 = vadd.f32 %v5750, %v5964
  %v6015 = vadd.f32 %v5751, %v5966
  %v6016 = vadd.f32 %v5752, %v5968
  %6017 = vrot.lane.b32.xlu0 %v5705, 120
  %v6018 = vpop.permute.xlu0 %6017
  %6019 = vrot.lane.b32.xlu0 %v5706, 120
  %v6020 = vpop.permute.xlu0 %6019
  %6021 = vrot.lane.b32.xlu0 %v5707, 120
  %v6022 = vpop.permute.xlu0 %6021
  %6023 = vrot.lane.b32.xlu0 %v5708, 120
  %v6024 = vpop.permute.xlu0 %6023
  %6025 = vrot.lane.b32.xlu0 %v5709, 120
  %v6026 = vpop.permute.xlu0 %6025
  %6027 = vrot.lane.b32.xlu0 %v5710, 120
  %v6028 = vpop.permute.xlu0 %6027
  %6029 = vrot.lane.b32.xlu0 %v5711, 120
  %v6030 = vpop.permute.xlu0 %6029
  %6031 = vrot.lane.b32.xlu0 %v5712, 120
  %v6032 = vpop.permute.xlu0 %6031
  %6033 = vrot.lane.b32.xlu0 %v5713, 120
  %v6034 = vpop.permute.xlu0 %6033
  %6035 = vrot.lane.b32.xlu0 %v5714, 120
  %v6036 = vpop.permute.xlu0 %6035
  %6037 = vrot.lane.b32.xlu0 %v5715, 120
  %v6038 = vpop.permute.xlu0 %6037
  %6039 = vrot.lane.b32.xlu0 %v5716, 120
  %v6040 = vpop.permute.xlu0 %6039
  %6041 = vrot.lane.b32.xlu0 %v5717, 120
  %v6042 = vpop.permute.xlu0 %6041
  %6043 = vrot.lane.b32.xlu0 %v5718, 120
  %v6044 = vpop.permute.xlu0 %6043
  %6045 = vrot.lane.b32.xlu0 %v5719, 120
  %v6046 = vpop.permute.xlu0 %6045
  %6047 = vrot.lane.b32.xlu0 %v5720, 120
  %v6048 = vpop.permute.xlu0 %6047
  %6049 = vrot.lane.b32.xlu0 %v5721, 120
  %v6050 = vpop.permute.xlu0 %6049
  %6051 = vrot.lane.b32.xlu0 %v5722, 120
  %v6052 = vpop.permute.xlu0 %6051
  %6053 = vrot.lane.b32.xlu0 %v5723, 120
  %v6054 = vpop.permute.xlu0 %6053
  %6055 = vrot.lane.b32.xlu0 %v5724, 120
  %v6056 = vpop.permute.xlu0 %6055
  %6057 = vrot.lane.b32.xlu0 %v5725, 120
  %v6058 = vpop.permute.xlu0 %6057
  %6059 = vrot.lane.b32.xlu0 %v5726, 120
  %v6060 = vpop.permute.xlu0 %6059
  %6061 = vrot.lane.b32.xlu0 %v5727, 120
  %v6062 = vpop.permute.xlu0 %6061
  %6063 = vrot.lane.b32.xlu0 %v5728, 120
  %v6064 = vpop.permute.xlu0 %6063
  %v6089 = vadd.f32 %v5705, %v6018
  %v6090 = vadd.f32 %v5706, %v6020
  %v6091 = vadd.f32 %v5707, %v6022
  %v6092 = vadd.f32 %v5708, %v6024
  %v6093 = vadd.f32 %v5709, %v6026
  %v6094 = vadd.f32 %v5710, %v6028
  %v6095 = vadd.f32 %v5711, %v6030
  %v6096 = vadd.f32 %v5712, %v6032
  %v6097 = vadd.f32 %v5713, %v6034
  %v6098 = vadd.f32 %v5714, %v6036
  %v6099 = vadd.f32 %v5715, %v6038
  %v6100 = vadd.f32 %v5716, %v6040
  %v6101 = vadd.f32 %v5717, %v6042
  %v6102 = vadd.f32 %v5718, %v6044
  %v6103 = vadd.f32 %v5719, %v6046
  %v6104 = vadd.f32 %v5720, %v6048
  %v6105 = vadd.f32 %v5721, %v6050
  %v6106 = vadd.f32 %v5722, %v6052
  %v6107 = vadd.f32 %v5723, %v6054
  %v6108 = vadd.f32 %v5724, %v6056
  %v6109 = vadd.f32 %v5725, %v6058
  %v6110 = vadd.f32 %v5726, %v6060
  %v6111 = vadd.f32 %v5727, %v6062
  %v6112 = vadd.f32 %v5728, %v6064
  %v6113 = vmul.f32 %v6089, 0.007598758
  %v6114 = vmul.f32 %v6090, 0.007598758
  %v6115 = vmul.f32 %v6091, 0.007598758
  %v6116 = vmul.f32 %v6092, 0.007598758
  %v6117 = vmul.f32 %v6093, 0.007598758
  %v6118 = vmul.f32 %v6094, 0.007598758
  %v6119 = vmul.f32 %v6095, 0.007598758
  %v6120 = vmul.f32 %v6096, 0.007598758
  %v6121 = vmul.f32 %v6097, 0.007598758
  %v6122 = vmul.f32 %v6098, 0.007598758
  %v6123 = vmul.f32 %v6099, 0.007598758
  %v6124 = vmul.f32 %v6100, 0.007598758
  %v6125 = vmul.f32 %v6101, 0.007598758
  %v6126 = vmul.f32 %v6102, 0.007598758
  %v6127 = vmul.f32 %v6103, 0.007598758
  %v6128 = vmul.f32 %v6104, 0.007598758
  %v6129 = vmul.f32 %v6105, 0.007598758
  %v6130 = vmul.f32 %v6106, 0.007598758
  %v6131 = vmul.f32 %v6107, 0.007598758
  %v6132 = vmul.f32 %v6108, 0.007598758
  %v6133 = vmul.f32 %v6109, 0.007598758
  %v6134 = vmul.f32 %v6110, 0.007598758
  %v6135 = vmul.f32 %v6111, 0.007598758
  %v6136 = vmul.f32 %v6112, 0.007598758
  %6161 = vrot.lane.b32.xlu0 %v6113, 4
  %v6162 = vpop.permute.xlu0 %6161
  %6163 = vrot.lane.b32.xlu0 %v6114, 4
  %v6164 = vpop.permute.xlu0 %6163
  %6165 = vrot.lane.b32.xlu0 %v6115, 4
  %v6166 = vpop.permute.xlu0 %6165
  %6167 = vrot.lane.b32.xlu0 %v6116, 4
  %v6168 = vpop.permute.xlu0 %6167
  %6169 = vrot.lane.b32.xlu0 %v6117, 4
  %v6170 = vpop.permute.xlu0 %6169
  %6171 = vrot.lane.b32.xlu0 %v6118, 4
  %v6172 = vpop.permute.xlu0 %6171
  %6173 = vrot.lane.b32.xlu0 %v6119, 4
  %v6174 = vpop.permute.xlu0 %6173
  %6175 = vrot.lane.b32.xlu0 %v6120, 4
  %v6176 = vpop.permute.xlu0 %6175
  %6177 = vrot.lane.b32.xlu0 %v6121, 4
  %v6178 = vpop.permute.xlu0 %6177
  %6179 = vrot.lane.b32.xlu0 %v6122, 4
  %v6180 = vpop.permute.xlu0 %6179
  %6181 = vrot.lane.b32.xlu0 %v6123, 4
  %v6182 = vpop.permute.xlu0 %6181
  %6183 = vrot.lane.b32.xlu0 %v6124, 4
  %v6184 = vpop.permute.xlu0 %6183
  %6185 = vrot.lane.b32.xlu0 %v6125, 4
  %v6186 = vpop.permute.xlu0 %6185
  %6187 = vrot.lane.b32.xlu0 %v6126, 4
  %v6188 = vpop.permute.xlu0 %6187
  %6189 = vrot.lane.b32.xlu0 %v6127, 4
  %v6190 = vpop.permute.xlu0 %6189
  %6191 = vrot.lane.b32.xlu0 %v6128, 4
  %v6192 = vpop.permute.xlu0 %6191
  %6193 = vrot.lane.b32.xlu0 %v6129, 4
  %v6194 = vpop.permute.xlu0 %6193
  %6195 = vrot.lane.b32.xlu0 %v6130, 4
  %v6196 = vpop.permute.xlu0 %6195
  %6197 = vrot.lane.b32.xlu0 %v6131, 4
  %v6198 = vpop.permute.xlu0 %6197
  %6199 = vrot.lane.b32.xlu0 %v6132, 4
  %v6200 = vpop.permute.xlu0 %6199
  %6201 = vrot.lane.b32.xlu0 %v6133, 4
  %v6202 = vpop.permute.xlu0 %6201
  %6203 = vrot.lane.b32.xlu0 %v6134, 4
  %v6204 = vpop.permute.xlu0 %6203
  %6205 = vrot.lane.b32.xlu0 %v6135, 4
  %v6206 = vpop.permute.xlu0 %6205
  %6207 = vrot.lane.b32.xlu0 %v6136, 4
  %v6208 = vpop.permute.xlu0 %6207
  %v6233 = vadd.f32 %v5993, %v6162
  %v6234 = vadd.f32 %v5994, %v6164
  %v6235 = vadd.f32 %v5995, %v6166
  %v6236 = vadd.f32 %v5996, %v6168
  %v6237 = vadd.f32 %v5997, %v6170
  %v6238 = vadd.f32 %v5998, %v6172
  %v6239 = vadd.f32 %v5999, %v6174
  %v6240 = vadd.f32 %v6000, %v6176
  %v6241 = vadd.f32 %v6001, %v6178
  %v6242 = vadd.f32 %v6002, %v6180
  %v6243 = vadd.f32 %v6003, %v6182
  %v6244 = vadd.f32 %v6004, %v6184
  %v6245 = vadd.f32 %v6005, %v6186
  %v6246 = vadd.f32 %v6006, %v6188
  %v6247 = vadd.f32 %v6007, %v6190
  %v6248 = vadd.f32 %v6008, %v6192
  %v6249 = vadd.f32 %v6009, %v6194
  %v6250 = vadd.f32 %v6010, %v6196
  %v6251 = vadd.f32 %v6011, %v6198
  %v6252 = vadd.f32 %v6012, %v6200
  %v6253 = vadd.f32 %v6013, %v6202
  %v6254 = vadd.f32 %v6014, %v6204
  %v6255 = vadd.f32 %v6015, %v6206
  %v6256 = vadd.f32 %v6016, %v6208
  %6257 = vrot.lane.b32.xlu0 %v5705, 122
  %v6258 = vpop.permute.xlu0 %6257
  %6259 = vrot.lane.b32.xlu0 %v5706, 122
  %v6260 = vpop.permute.xlu0 %6259
  %6261 = vrot.lane.b32.xlu0 %v5707, 122
  %v6262 = vpop.permute.xlu0 %6261
  %6263 = vrot.lane.b32.xlu0 %v5708, 122
  %v6264 = vpop.permute.xlu0 %6263
  %6265 = vrot.lane.b32.xlu0 %v5709, 122
  %v6266 = vpop.permute.xlu0 %6265
  %6267 = vrot.lane.b32.xlu0 %v5710, 122
  %v6268 = vpop.permute.xlu0 %6267
  %6269 = vrot.lane.b32.xlu0 %v5711, 122
  %v6270 = vpop.permute.xlu0 %6269
  %6271 = vrot.lane.b32.xlu0 %v5712, 122
  %v6272 = vpop.permute.xlu0 %6271
  %6273 = vrot.lane.b32.xlu0 %v5713, 122
  %v6274 = vpop.permute.xlu0 %6273
  %6275 = vrot.lane.b32.xlu0 %v5714, 122
  %v6276 = vpop.permute.xlu0 %6275
  %6277 = vrot.lane.b32.xlu0 %v5715, 122
  %v6278 = vpop.permute.xlu0 %6277
  %6279 = vrot.lane.b32.xlu0 %v5716, 122
  %v6280 = vpop.permute.xlu0 %6279
  %6281 = vrot.lane.b32.xlu0 %v5717, 122
  %v6282 = vpop.permute.xlu0 %6281
  %6283 = vrot.lane.b32.xlu0 %v5718, 122
  %v6284 = vpop.permute.xlu0 %6283
  %6285 = vrot.lane.b32.xlu0 %v5719, 122
  %v6286 = vpop.permute.xlu0 %6285
  %6287 = vrot.lane.b32.xlu0 %v5720, 122
  %v6288 = vpop.permute.xlu0 %6287
  %6289 = vrot.lane.b32.xlu0 %v5721, 122
  %v6290 = vpop.permute.xlu0 %6289
  %6291 = vrot.lane.b32.xlu0 %v5722, 122
  %v6292 = vpop.permute.xlu0 %6291
  %6293 = vrot.lane.b32.xlu0 %v5723, 122
  %v6294 = vpop.permute.xlu0 %6293
  %6295 = vrot.lane.b32.xlu0 %v5724, 122
  %v6296 = vpop.permute.xlu0 %6295
  %6297 = vrot.lane.b32.xlu0 %v5725, 122
  %v6298 = vpop.permute.xlu0 %6297
  %6299 = vrot.lane.b32.xlu0 %v5726, 122
  %v6300 = vpop.permute.xlu0 %6299
  %6301 = vrot.lane.b32.xlu0 %v5727, 122
  %v6302 = vpop.permute.xlu0 %6301
  %6303 = vrot.lane.b32.xlu0 %v5728, 122
  %v6304 = vpop.permute.xlu0 %6303
  %v6329 = vadd.f32 %v5705, %v6258
  %v6330 = vadd.f32 %v5706, %v6260
  %v6331 = vadd.f32 %v5707, %v6262
  %v6332 = vadd.f32 %v5708, %v6264
  %v6333 = vadd.f32 %v5709, %v6266
  %v6334 = vadd.f32 %v5710, %v6268
  %v6335 = vadd.f32 %v5711, %v6270
  %v6336 = vadd.f32 %v5712, %v6272
  %v6337 = vadd.f32 %v5713, %v6274
  %v6338 = vadd.f32 %v5714, %v6276
  %v6339 = vadd.f32 %v5715, %v6278
  %v6340 = vadd.f32 %v5716, %v6280
  %v6341 = vadd.f32 %v5717, %v6282
  %v6342 = vadd.f32 %v5718, %v6284
  %v6343 = vadd.f32 %v5719, %v6286
  %v6344 = vadd.f32 %v5720, %v6288
  %v6345 = vadd.f32 %v5721, %v6290
  %v6346 = vadd.f32 %v5722, %v6292
  %v6347 = vadd.f32 %v5723, %v6294
  %v6348 = vadd.f32 %v5724, %v6296
  %v6349 = vadd.f32 %v5725, %v6298
  %v6350 = vadd.f32 %v5726, %v6300
  %v6351 = vadd.f32 %v5727, %v6302
  %v6352 = vadd.f32 %v5728, %v6304
  %v6353 = vmul.f32 %v6329, 0.036000773
  %v6354 = vmul.f32 %v6330, 0.036000773
  %v6355 = vmul.f32 %v6331, 0.036000773
  %v6356 = vmul.f32 %v6332, 0.036000773
  %v6357 = vmul.f32 %v6333, 0.036000773
  %v6358 = vmul.f32 %v6334, 0.036000773
  %v6359 = vmul.f32 %v6335, 0.036000773
  %v6360 = vmul.f32 %v6336, 0.036000773
  %v6361 = vmul.f32 %v6337, 0.036000773
  %v6362 = vmul.f32 %v6338, 0.036000773
  %v6363 = vmul.f32 %v6339, 0.036000773
  %v6364 = vmul.f32 %v6340, 0.036000773
  %v6365 = vmul.f32 %v6341, 0.036000773
  %v6366 = vmul.f32 %v6342, 0.036000773
  %v6367 = vmul.f32 %v6343, 0.036000773
  %v6368 = vmul.f32 %v6344, 0.036000773
  %v6369 = vmul.f32 %v6345, 0.036000773
  %v6370 = vmul.f32 %v6346, 0.036000773
  %v6371 = vmul.f32 %v6347, 0.036000773
  %v6372 = vmul.f32 %v6348, 0.036000773
  %v6373 = vmul.f32 %v6349, 0.036000773
  %v6374 = vmul.f32 %v6350, 0.036000773
  %v6375 = vmul.f32 %v6351, 0.036000773
  %v6376 = vmul.f32 %v6352, 0.036000773
  %6401 = vrot.lane.b32.xlu0 %v6353, 3
  %v6402 = vpop.permute.xlu0 %6401
  %6403 = vrot.lane.b32.xlu0 %v6354, 3
  %v6404 = vpop.permute.xlu0 %6403
  %6405 = vrot.lane.b32.xlu0 %v6355, 3
  %v6406 = vpop.permute.xlu0 %6405
  %6407 = vrot.lane.b32.xlu0 %v6356, 3
  %v6408 = vpop.permute.xlu0 %6407
  %6409 = vrot.lane.b32.xlu0 %v6357, 3
  %v6410 = vpop.permute.xlu0 %6409
  %6411 = vrot.lane.b32.xlu0 %v6358, 3
  %v6412 = vpop.permute.xlu0 %6411
  %6413 = vrot.lane.b32.xlu0 %v6359, 3
  %v6414 = vpop.permute.xlu0 %6413
  %6415 = vrot.lane.b32.xlu0 %v6360, 3
  %v6416 = vpop.permute.xlu0 %6415
  %6417 = vrot.lane.b32.xlu0 %v6361, 3
  %v6418 = vpop.permute.xlu0 %6417
  %6419 = vrot.lane.b32.xlu0 %v6362, 3
  %v6420 = vpop.permute.xlu0 %6419
  %6421 = vrot.lane.b32.xlu0 %v6363, 3
  %v6422 = vpop.permute.xlu0 %6421
  %6423 = vrot.lane.b32.xlu0 %v6364, 3
  %v6424 = vpop.permute.xlu0 %6423
  %6425 = vrot.lane.b32.xlu0 %v6365, 3
  %v6426 = vpop.permute.xlu0 %6425
  %6427 = vrot.lane.b32.xlu0 %v6366, 3
  %v6428 = vpop.permute.xlu0 %6427
  %6429 = vrot.lane.b32.xlu0 %v6367, 3
  %v6430 = vpop.permute.xlu0 %6429
  %6431 = vrot.lane.b32.xlu0 %v6368, 3
  %v6432 = vpop.permute.xlu0 %6431
  %6433 = vrot.lane.b32.xlu0 %v6369, 3
  %v6434 = vpop.permute.xlu0 %6433
  %6435 = vrot.lane.b32.xlu0 %v6370, 3
  %v6436 = vpop.permute.xlu0 %6435
  %6437 = vrot.lane.b32.xlu0 %v6371, 3
  %v6438 = vpop.permute.xlu0 %6437
  %6439 = vrot.lane.b32.xlu0 %v6372, 3
  %v6440 = vpop.permute.xlu0 %6439
  %6441 = vrot.lane.b32.xlu0 %v6373, 3
  %v6442 = vpop.permute.xlu0 %6441
  %6443 = vrot.lane.b32.xlu0 %v6374, 3
  %v6444 = vpop.permute.xlu0 %6443
  %6445 = vrot.lane.b32.xlu0 %v6375, 3
  %v6446 = vpop.permute.xlu0 %6445
  %6447 = vrot.lane.b32.xlu0 %v6376, 3
  %v6448 = vpop.permute.xlu0 %6447
  %v6473 = vadd.f32 %v6233, %v6402
  %v6474 = vadd.f32 %v6234, %v6404
  %v6475 = vadd.f32 %v6235, %v6406
  %v6476 = vadd.f32 %v6236, %v6408
  %v6477 = vadd.f32 %v6237, %v6410
  %v6478 = vadd.f32 %v6238, %v6412
  %v6479 = vadd.f32 %v6239, %v6414
  %v6480 = vadd.f32 %v6240, %v6416
  %v6481 = vadd.f32 %v6241, %v6418
  %v6482 = vadd.f32 %v6242, %v6420
  %v6483 = vadd.f32 %v6243, %v6422
  %v6484 = vadd.f32 %v6244, %v6424
  %v6485 = vadd.f32 %v6245, %v6426
  %v6486 = vadd.f32 %v6246, %v6428
  %v6487 = vadd.f32 %v6247, %v6430
  %v6488 = vadd.f32 %v6248, %v6432
  %v6489 = vadd.f32 %v6249, %v6434
  %v6490 = vadd.f32 %v6250, %v6436
  %v6491 = vadd.f32 %v6251, %v6438
  %v6492 = vadd.f32 %v6252, %v6440
  %v6493 = vadd.f32 %v6253, %v6442
  %v6494 = vadd.f32 %v6254, %v6444
  %v6495 = vadd.f32 %v6255, %v6446
  %v6496 = vadd.f32 %v6256, %v6448
  %6497 = vrot.lane.b32.xlu0 %v5705, 124
  %v6498 = vpop.permute.xlu0 %6497
  %6499 = vrot.lane.b32.xlu0 %v5706, 124
  %v6500 = vpop.permute.xlu0 %6499
  %6501 = vrot.lane.b32.xlu0 %v5707, 124
  %v6502 = vpop.permute.xlu0 %6501
  %6503 = vrot.lane.b32.xlu0 %v5708, 124
  %v6504 = vpop.permute.xlu0 %6503
  %6505 = vrot.lane.b32.xlu0 %v5709, 124
  %v6506 = vpop.permute.xlu0 %6505
  %6507 = vrot.lane.b32.xlu0 %v5710, 124
  %v6508 = vpop.permute.xlu0 %6507
  %6509 = vrot.lane.b32.xlu0 %v5711, 124
  %v6510 = vpop.permute.xlu0 %6509
  %6511 = vrot.lane.b32.xlu0 %v5712, 124
  %v6512 = vpop.permute.xlu0 %6511
  %6513 = vrot.lane.b32.xlu0 %v5713, 124
  %v6514 = vpop.permute.xlu0 %6513
  %6515 = vrot.lane.b32.xlu0 %v5714, 124
  %v6516 = vpop.permute.xlu0 %6515
  %6517 = vrot.lane.b32.xlu0 %v5715, 124
  %v6518 = vpop.permute.xlu0 %6517
  %6519 = vrot.lane.b32.xlu0 %v5716, 124
  %v6520 = vpop.permute.xlu0 %6519
  %6521 = vrot.lane.b32.xlu0 %v5717, 124
  %v6522 = vpop.permute.xlu0 %6521
  %6523 = vrot.lane.b32.xlu0 %v5718, 124
  %v6524 = vpop.permute.xlu0 %6523
  %6525 = vrot.lane.b32.xlu0 %v5719, 124
  %v6526 = vpop.permute.xlu0 %6525
  %6527 = vrot.lane.b32.xlu0 %v5720, 124
  %v6528 = vpop.permute.xlu0 %6527
  %6529 = vrot.lane.b32.xlu0 %v5721, 124
  %v6530 = vpop.permute.xlu0 %6529
  %6531 = vrot.lane.b32.xlu0 %v5722, 124
  %v6532 = vpop.permute.xlu0 %6531
  %6533 = vrot.lane.b32.xlu0 %v5723, 124
  %v6534 = vpop.permute.xlu0 %6533
  %6535 = vrot.lane.b32.xlu0 %v5724, 124
  %v6536 = vpop.permute.xlu0 %6535
  %6537 = vrot.lane.b32.xlu0 %v5725, 124
  %v6538 = vpop.permute.xlu0 %6537
  %6539 = vrot.lane.b32.xlu0 %v5726, 124
  %v6540 = vpop.permute.xlu0 %6539
  %6541 = vrot.lane.b32.xlu0 %v5727, 124
  %v6542 = vpop.permute.xlu0 %6541
  %6543 = vrot.lane.b32.xlu0 %v5728, 124
  %v6544 = vpop.permute.xlu0 %6543
  %v6569 = vadd.f32 %v5705, %v6498
  %v6570 = vadd.f32 %v5706, %v6500
  %v6571 = vadd.f32 %v5707, %v6502
  %v6572 = vadd.f32 %v5708, %v6504
  %v6573 = vadd.f32 %v5709, %v6506
  %v6574 = vadd.f32 %v5710, %v6508
  %v6575 = vadd.f32 %v5711, %v6510
  %v6576 = vadd.f32 %v5712, %v6512
  %v6577 = vadd.f32 %v5713, %v6514
  %v6578 = vadd.f32 %v5714, %v6516
  %v6579 = vadd.f32 %v5715, %v6518
  %v6580 = vadd.f32 %v5716, %v6520
  %v6581 = vadd.f32 %v5717, %v6522
  %v6582 = vadd.f32 %v5718, %v6524
  %v6583 = vadd.f32 %v5719, %v6526
  %v6584 = vadd.f32 %v5720, %v6528
  %v6585 = vadd.f32 %v5721, %v6530
  %v6586 = vadd.f32 %v5722, %v6532
  %v6587 = vadd.f32 %v5723, %v6534
  %v6588 = vadd.f32 %v5724, %v6536
  %v6589 = vadd.f32 %v5725, %v6538
  %v6590 = vadd.f32 %v5726, %v6540
  %v6591 = vadd.f32 %v5727, %v6542
  %v6592 = vadd.f32 %v5728, %v6544
  %v6593 = vmul.f32 %v6569, 0.10936069
  %v6594 = vmul.f32 %v6570, 0.10936069
  %v6595 = vmul.f32 %v6571, 0.10936069
  %v6596 = vmul.f32 %v6572, 0.10936069
  %v6597 = vmul.f32 %v6573, 0.10936069
  %v6598 = vmul.f32 %v6574, 0.10936069
  %v6599 = vmul.f32 %v6575, 0.10936069
  %v6600 = vmul.f32 %v6576, 0.10936069
  %v6601 = vmul.f32 %v6577, 0.10936069
  %v6602 = vmul.f32 %v6578, 0.10936069
  %v6603 = vmul.f32 %v6579, 0.10936069
  %v6604 = vmul.f32 %v6580, 0.10936069
  %v6605 = vmul.f32 %v6581, 0.10936069
  %v6606 = vmul.f32 %v6582, 0.10936069
  %v6607 = vmul.f32 %v6583, 0.10936069
  %v6608 = vmul.f32 %v6584, 0.10936069
  %v6609 = vmul.f32 %v6585, 0.10936069
  %v6610 = vmul.f32 %v6586, 0.10936069
  %v6611 = vmul.f32 %v6587, 0.10936069
  %v6612 = vmul.f32 %v6588, 0.10936069
  %v6613 = vmul.f32 %v6589, 0.10936069
  %v6614 = vmul.f32 %v6590, 0.10936069
  %v6615 = vmul.f32 %v6591, 0.10936069
  %v6616 = vmul.f32 %v6592, 0.10936069
  %6641 = vrot.lane.b32.xlu0 %v6593, 2
  %v6642 = vpop.permute.xlu0 %6641
  %6643 = vrot.lane.b32.xlu0 %v6594, 2
  %v6644 = vpop.permute.xlu0 %6643
  %6645 = vrot.lane.b32.xlu0 %v6595, 2
  %v6646 = vpop.permute.xlu0 %6645
  %6647 = vrot.lane.b32.xlu0 %v6596, 2
  %v6648 = vpop.permute.xlu0 %6647
  %6649 = vrot.lane.b32.xlu0 %v6597, 2
  %v6650 = vpop.permute.xlu0 %6649
  %6651 = vrot.lane.b32.xlu0 %v6598, 2
  %v6652 = vpop.permute.xlu0 %6651
  %6653 = vrot.lane.b32.xlu0 %v6599, 2
  %v6654 = vpop.permute.xlu0 %6653
  %6655 = vrot.lane.b32.xlu0 %v6600, 2
  %v6656 = vpop.permute.xlu0 %6655
  %6657 = vrot.lane.b32.xlu0 %v6601, 2
  %v6658 = vpop.permute.xlu0 %6657
  %6659 = vrot.lane.b32.xlu0 %v6602, 2
  %v6660 = vpop.permute.xlu0 %6659
  %6661 = vrot.lane.b32.xlu0 %v6603, 2
  %v6662 = vpop.permute.xlu0 %6661
  %6663 = vrot.lane.b32.xlu0 %v6604, 2
  %v6664 = vpop.permute.xlu0 %6663
  %6665 = vrot.lane.b32.xlu0 %v6605, 2
  %v6666 = vpop.permute.xlu0 %6665
  %6667 = vrot.lane.b32.xlu0 %v6606, 2
  %v6668 = vpop.permute.xlu0 %6667
  %6669 = vrot.lane.b32.xlu0 %v6607, 2
  %v6670 = vpop.permute.xlu0 %6669
  %6671 = vrot.lane.b32.xlu0 %v6608, 2
  %v6672 = vpop.permute.xlu0 %6671
  %6673 = vrot.lane.b32.xlu0 %v6609, 2
  %v6674 = vpop.permute.xlu0 %6673
  %6675 = vrot.lane.b32.xlu0 %v6610, 2
  %v6676 = vpop.permute.xlu0 %6675
  %6677 = vrot.lane.b32.xlu0 %v6611, 2
  %v6678 = vpop.permute.xlu0 %6677
  %6679 = vrot.lane.b32.xlu0 %v6612, 2
  %v6680 = vpop.permute.xlu0 %6679
  %6681 = vrot.lane.b32.xlu0 %v6613, 2
  %v6682 = vpop.permute.xlu0 %6681
  %6683 = vrot.lane.b32.xlu0 %v6614, 2
  %v6684 = vpop.permute.xlu0 %6683
  %6685 = vrot.lane.b32.xlu0 %v6615, 2
  %v6686 = vpop.permute.xlu0 %6685
  %6687 = vrot.lane.b32.xlu0 %v6616, 2
  %v6688 = vpop.permute.xlu0 %6687
  %v6713 = vadd.f32 %v6473, %v6642
  %v6714 = vadd.f32 %v6474, %v6644
  %v6715 = vadd.f32 %v6475, %v6646
  %v6716 = vadd.f32 %v6476, %v6648
  %v6717 = vadd.f32 %v6477, %v6650
  %v6718 = vadd.f32 %v6478, %v6652
  %v6719 = vadd.f32 %v6479, %v6654
  %v6720 = vadd.f32 %v6480, %v6656
  %v6721 = vadd.f32 %v6481, %v6658
  %v6722 = vadd.f32 %v6482, %v6660
  %v6723 = vadd.f32 %v6483, %v6662
  %v6724 = vadd.f32 %v6484, %v6664
  %v6725 = vadd.f32 %v6485, %v6666
  %v6726 = vadd.f32 %v6486, %v6668
  %v6727 = vadd.f32 %v6487, %v6670
  %v6728 = vadd.f32 %v6488, %v6672
  %v6729 = vadd.f32 %v6489, %v6674
  %v6730 = vadd.f32 %v6490, %v6676
  %v6731 = vadd.f32 %v6491, %v6678
  %v6732 = vadd.f32 %v6492, %v6680
  %v6733 = vadd.f32 %v6493, %v6682
  %v6734 = vadd.f32 %v6494, %v6684
  %v6735 = vadd.f32 %v6495, %v6686
  %v6736 = vadd.f32 %v6496, %v6688
  %6737 = vrot.lane.b32.xlu0 %v5705, 126
  %v6738 = vpop.permute.xlu0 %6737
  %6739 = vrot.lane.b32.xlu0 %v5706, 126
  %v6740 = vpop.permute.xlu0 %6739
  %6741 = vrot.lane.b32.xlu0 %v5707, 126
  %v6742 = vpop.permute.xlu0 %6741
  %6743 = vrot.lane.b32.xlu0 %v5708, 126
  %v6744 = vpop.permute.xlu0 %6743
  %6745 = vrot.lane.b32.xlu0 %v5709, 126
  %v6746 = vpop.permute.xlu0 %6745
  %6747 = vrot.lane.b32.xlu0 %v5710, 126
  %v6748 = vpop.permute.xlu0 %6747
  %6749 = vrot.lane.b32.xlu0 %v5711, 126
  %v6750 = vpop.permute.xlu0 %6749
  %6751 = vrot.lane.b32.xlu0 %v5712, 126
  %v6752 = vpop.permute.xlu0 %6751
  %6753 = vrot.lane.b32.xlu0 %v5713, 126
  %v6754 = vpop.permute.xlu0 %6753
  %6755 = vrot.lane.b32.xlu0 %v5714, 126
  %v6756 = vpop.permute.xlu0 %6755
  %6757 = vrot.lane.b32.xlu0 %v5715, 126
  %v6758 = vpop.permute.xlu0 %6757
  %6759 = vrot.lane.b32.xlu0 %v5716, 126
  %v6760 = vpop.permute.xlu0 %6759
  %6761 = vrot.lane.b32.xlu0 %v5717, 126
  %v6762 = vpop.permute.xlu0 %6761
  %6763 = vrot.lane.b32.xlu0 %v5718, 126
  %v6764 = vpop.permute.xlu0 %6763
  %6765 = vrot.lane.b32.xlu0 %v5719, 126
  %v6766 = vpop.permute.xlu0 %6765
  %6767 = vrot.lane.b32.xlu0 %v5720, 126
  %v6768 = vpop.permute.xlu0 %6767
  %6769 = vrot.lane.b32.xlu0 %v5721, 126
  %v6770 = vpop.permute.xlu0 %6769
  %6771 = vrot.lane.b32.xlu0 %v5722, 126
  %v6772 = vpop.permute.xlu0 %6771
  %6773 = vrot.lane.b32.xlu0 %v5723, 126
  %v6774 = vpop.permute.xlu0 %6773
  %6775 = vrot.lane.b32.xlu0 %v5724, 126
  %v6776 = vpop.permute.xlu0 %6775
  %6777 = vrot.lane.b32.xlu0 %v5725, 126
  %v6778 = vpop.permute.xlu0 %6777
  %6779 = vrot.lane.b32.xlu0 %v5726, 126
  %v6780 = vpop.permute.xlu0 %6779
  %6781 = vrot.lane.b32.xlu0 %v5727, 126
  %v6782 = vpop.permute.xlu0 %6781
  %6783 = vrot.lane.b32.xlu0 %v5728, 126
  %v6784 = vpop.permute.xlu0 %6783
  %v6809 = vadd.f32 %v5705, %v6738
  %v6810 = vadd.f32 %v5706, %v6740
  %v6811 = vadd.f32 %v5707, %v6742
  %v6812 = vadd.f32 %v5708, %v6744
  %v6813 = vadd.f32 %v5709, %v6746
  %v6814 = vadd.f32 %v5710, %v6748
  %v6815 = vadd.f32 %v5711, %v6750
  %v6816 = vadd.f32 %v5712, %v6752
  %v6817 = vadd.f32 %v5713, %v6754
  %v6818 = vadd.f32 %v5714, %v6756
  %v6819 = vadd.f32 %v5715, %v6758
  %v6820 = vadd.f32 %v5716, %v6760
  %v6821 = vadd.f32 %v5717, %v6762
  %v6822 = vadd.f32 %v5718, %v6764
  %v6823 = vadd.f32 %v5719, %v6766
  %v6824 = vadd.f32 %v5720, %v6768
  %v6825 = vadd.f32 %v5721, %v6770
  %v6826 = vadd.f32 %v5722, %v6772
  %v6827 = vadd.f32 %v5723, %v6774
  %v6828 = vadd.f32 %v5724, %v6776
  %v6829 = vadd.f32 %v5725, %v6778
  %v6830 = vadd.f32 %v5726, %v6780
  %v6831 = vadd.f32 %v5727, %v6782
  %v6832 = vadd.f32 %v5728, %v6784
  %v6833 = vmul.f32 %v6809, 0.21300554
  %v6834 = vmul.f32 %v6810, 0.21300554
  %v6835 = vmul.f32 %v6811, 0.21300554
  %v6836 = vmul.f32 %v6812, 0.21300554
  %v6837 = vmul.f32 %v6813, 0.21300554
  %v6838 = vmul.f32 %v6814, 0.21300554
  %v6839 = vmul.f32 %v6815, 0.21300554
  %v6840 = vmul.f32 %v6816, 0.21300554
  %v6841 = vmul.f32 %v6817, 0.21300554
  %v6842 = vmul.f32 %v6818, 0.21300554
  %v6843 = vmul.f32 %v6819, 0.21300554
  %v6844 = vmul.f32 %v6820, 0.21300554
  %v6845 = vmul.f32 %v6821, 0.21300554
  %v6846 = vmul.f32 %v6822, 0.21300554
  %v6847 = vmul.f32 %v6823, 0.21300554
  %v6848 = vmul.f32 %v6824, 0.21300554
  %v6849 = vmul.f32 %v6825, 0.21300554
  %v6850 = vmul.f32 %v6826, 0.21300554
  %v6851 = vmul.f32 %v6827, 0.21300554
  %v6852 = vmul.f32 %v6828, 0.21300554
  %v6853 = vmul.f32 %v6829, 0.21300554
  %v6854 = vmul.f32 %v6830, 0.21300554
  %v6855 = vmul.f32 %v6831, 0.21300554
  %v6856 = vmul.f32 %v6832, 0.21300554
  %6881 = vrot.lane.b32.xlu0 %v6833, 1
  %v6882 = vpop.permute.xlu0 %6881
  %6883 = vrot.lane.b32.xlu0 %v6834, 1
  %v6884 = vpop.permute.xlu0 %6883
  %6885 = vrot.lane.b32.xlu0 %v6835, 1
  %v6886 = vpop.permute.xlu0 %6885
  %6887 = vrot.lane.b32.xlu0 %v6836, 1
  %v6888 = vpop.permute.xlu0 %6887
  %6889 = vrot.lane.b32.xlu0 %v6837, 1
  %v6890 = vpop.permute.xlu0 %6889
  %6891 = vrot.lane.b32.xlu0 %v6838, 1
  %v6892 = vpop.permute.xlu0 %6891
  %6893 = vrot.lane.b32.xlu0 %v6839, 1
  %v6894 = vpop.permute.xlu0 %6893
  %6895 = vrot.lane.b32.xlu0 %v6840, 1
  %v6896 = vpop.permute.xlu0 %6895
  %6897 = vrot.lane.b32.xlu0 %v6841, 1
  %v6898 = vpop.permute.xlu0 %6897
  %6899 = vrot.lane.b32.xlu0 %v6842, 1
  %v6900 = vpop.permute.xlu0 %6899
  %6901 = vrot.lane.b32.xlu0 %v6843, 1
  %v6902 = vpop.permute.xlu0 %6901
  %6903 = vrot.lane.b32.xlu0 %v6844, 1
  %v6904 = vpop.permute.xlu0 %6903
  %6905 = vrot.lane.b32.xlu0 %v6845, 1
  %v6906 = vpop.permute.xlu0 %6905
  %6907 = vrot.lane.b32.xlu0 %v6846, 1
  %v6908 = vpop.permute.xlu0 %6907
  %6909 = vrot.lane.b32.xlu0 %v6847, 1
  %v6910 = vpop.permute.xlu0 %6909
  %6911 = vrot.lane.b32.xlu0 %v6848, 1
  %v6912 = vpop.permute.xlu0 %6911
  %6913 = vrot.lane.b32.xlu0 %v6849, 1
  %v6914 = vpop.permute.xlu0 %6913
  %6915 = vrot.lane.b32.xlu0 %v6850, 1
  %v6916 = vpop.permute.xlu0 %6915
  %6917 = vrot.lane.b32.xlu0 %v6851, 1
  %v6918 = vpop.permute.xlu0 %6917
  %6919 = vrot.lane.b32.xlu0 %v6852, 1
  %v6920 = vpop.permute.xlu0 %6919
  %6921 = vrot.lane.b32.xlu0 %v6853, 1
  %v6922 = vpop.permute.xlu0 %6921
  %6923 = vrot.lane.b32.xlu0 %v6854, 1
  %v6924 = vpop.permute.xlu0 %6923
  %6925 = vrot.lane.b32.xlu0 %v6855, 1
  %v6926 = vpop.permute.xlu0 %6925
  %6927 = vrot.lane.b32.xlu0 %v6856, 1
  %v6928 = vpop.permute.xlu0 %6927
  %v6953 = vadd.f32 %v6713, %v6882
  %v6954 = vadd.f32 %v6714, %v6884
  %v6955 = vadd.f32 %v6715, %v6886
  %v6956 = vadd.f32 %v6716, %v6888
  %v6957 = vadd.f32 %v6717, %v6890
  %v6958 = vadd.f32 %v6718, %v6892
  %v6959 = vadd.f32 %v6719, %v6894
  %v6960 = vadd.f32 %v6720, %v6896
  %v6961 = vadd.f32 %v6721, %v6898
  %v6962 = vadd.f32 %v6722, %v6900
  %v6963 = vadd.f32 %v6723, %v6902
  %v6964 = vadd.f32 %v6724, %v6904
  %v6965 = vadd.f32 %v6725, %v6906
  %v6966 = vadd.f32 %v6726, %v6908
  %v6967 = vadd.f32 %v6727, %v6910
  %v6968 = vadd.f32 %v6728, %v6912
  %v6969 = vadd.f32 %v6729, %v6914
  %v6970 = vadd.f32 %v6730, %v6916
  %v6971 = vadd.f32 %v6731, %v6918
  %v6972 = vadd.f32 %v6732, %v6920
  %v6973 = vadd.f32 %v6733, %v6922
  %v6974 = vadd.f32 %v6734, %v6924
  %v6975 = vadd.f32 %v6735, %v6926
  %v6976 = vadd.f32 %v6736, %v6928
  %v6977 = vsub.f32 %v6953, %v4609
  %v6978 = vsub.f32 %v6954, %v4610
  %v6979 = vsub.f32 %v6955, %v4611
  %v6980 = vsub.f32 %v6956, %v4612
  %v6981 = vsub.f32 %v6957, %v4613
  %v6982 = vsub.f32 %v6958, %v4614
  %v6983 = vsub.f32 %v6959, %v4615
  %v6984 = vsub.f32 %v6960, %v4616
  %v6985 = vsub.f32 %v6961, %v4617
  %v6986 = vsub.f32 %v6962, %v4618
  %v6987 = vsub.f32 %v6963, %v4619
  %v6988 = vsub.f32 %v6964, %v4620
  %v6989 = vsub.f32 %v6965, %v4621
  %v6990 = vsub.f32 %v6966, %v4622
  %v6991 = vsub.f32 %v6967, %v4623
  %v6992 = vsub.f32 %v6968, %v4624
  %v6993 = vsub.f32 %v6969, %v4625
  %v6994 = vsub.f32 %v6970, %v4626
  %v6995 = vsub.f32 %v6971, %v4627
  %v6996 = vsub.f32 %v6972, %v4628
  %v6997 = vsub.f32 %v6973, %v4629
  %v6998 = vsub.f32 %v6974, %v4630
  %v6999 = vsub.f32 %v6975, %v4631
  %v7000 = vsub.f32 %v6976, %v4632
  %v7001 = vmul.f32 %v43, %v43
  %v7002 = vmul.f32 %v44, %v44
  %v7003 = vmul.f32 %v45, %v45
  %v7004 = vmul.f32 %v46, %v46
  %v7005 = vmul.f32 %v47, %v47
  %v7006 = vmul.f32 %v48, %v48
  %v7007 = vmul.f32 %v49, %v49
  %v7008 = vmul.f32 %v50, %v50
  %v7009 = vmul.f32 %v51, %v51
  %v7010 = vmul.f32 %v52, %v52
  %v7011 = vmul.f32 %v53, %v53
  %v7012 = vmul.f32 %v54, %v54
  %v7013 = vmul.f32 %v55, %v55
  %v7014 = vmul.f32 %v56, %v56
  %v7015 = vmul.f32 %v57, %v57
  %v7016 = vmul.f32 %v58, %v58
  %v7017 = vmul.f32 %v59, %v59
  %v7018 = vmul.f32 %v60, %v60
  %v7019 = vmul.f32 %v61, %v61
  %v7020 = vmul.f32 %v62, %v62
  %v7021 = vmul.f32 %v63, %v63
  %v7022 = vmul.f32 %v64, %v64
  %v7023 = vmul.f32 %v65, %v65
  %v7024 = vmul.f32 %v66, %v66
  %v7025 = vmul.f32 %v67, %v67
  %v7026 = vmul.f32 %v68, %v68
  %v7027 = vmul.f32 %v69, %v69
  %v7028 = vmul.f32 %v70, %v70
  %v7029 = vmul.f32 %v71, %v71
  %v7030 = vmul.f32 %v72, %v72
  %v7031 = vmul.f32 %v73, %v73
  %v7032 = vmul.f32 %v74, %v74
  %v7033 = vmul.f32 %v7001, 0.26601171
  %v7034 = vmul.f32 %v7002, 0.26601171
  %v7035 = vmul.f32 %v7003, 0.26601171
  %v7036 = vmul.f32 %v7005, 0.26601171
  %v7037 = vmul.f32 %v7006, 0.26601171
  %v7038 = vmul.f32 %v7007, 0.26601171
  %v7039 = vmul.f32 %v7009, 0.26601171
  %v7040 = vmul.f32 %v7010, 0.26601171
  %v7041 = vmul.f32 %v7011, 0.26601171
  %v7042 = vmul.f32 %v7013, 0.26601171
  %v7043 = vmul.f32 %v7014, 0.26601171
  %v7044 = vmul.f32 %v7015, 0.26601171
  %v7045 = vmul.f32 %v7017, 0.26601171
  %v7046 = vmul.f32 %v7018, 0.26601171
  %v7047 = vmul.f32 %v7019, 0.26601171
  %v7048 = vmul.f32 %v7021, 0.26601171
  %v7049 = vmul.f32 %v7022, 0.26601171
  %v7050 = vmul.f32 %v7023, 0.26601171
  %v7051 = vmul.f32 %v7025, 0.26601171
  %v7052 = vmul.f32 %v7026, 0.26601171
  %v7053 = vmul.f32 %v7027, 0.26601171
  %v7054 = vmul.f32 %v7029, 0.26601171
  %v7055 = vmul.f32 %v7030, 0.26601171
  %v7056 = vmul.f32 %v7031, 0.26601171
  %v7081 = vrot.slane %v7002, 2
  %v7082 = vrot.slane %v7003, 2
  %v7083 = vsel %vm123, %v7081, %v7082
  %v7084 = vrot.slane %v7004, 2
  %v7085 = vsel %vm123, %v7082, %v7084
  %v7086 = vrot.slane %v7006, 2
  %v7087 = vrot.slane %v7007, 2
  %v7088 = vsel %vm123, %v7086, %v7087
  %v7089 = vrot.slane %v7008, 2
  %v7090 = vsel %vm123, %v7087, %v7089
  %v7091 = vrot.slane %v7010, 2
  %v7092 = vrot.slane %v7011, 2
  %v7093 = vsel %vm123, %v7091, %v7092
  %v7094 = vrot.slane %v7012, 2
  %v7095 = vsel %vm123, %v7092, %v7094
  %v7096 = vrot.slane %v7014, 2
  %v7097 = vrot.slane %v7015, 2
  %v7098 = vsel %vm123, %v7096, %v7097
  %v7099 = vrot.slane %v7016, 2
  %v7100 = vsel %vm123, %v7097, %v7099
  %v7101 = vrot.slane %v7018, 2
  %v7102 = vrot.slane %v7019, 2
  %v7103 = vsel %vm123, %v7101, %v7102
  %v7104 = vrot.slane %v7020, 2
  %v7105 = vsel %vm123, %v7102, %v7104
  %v7106 = vrot.slane %v7022, 2
  %v7107 = vrot.slane %v7023, 2
  %v7108 = vsel %vm123, %v7106, %v7107
  %v7109 = vrot.slane %v7024, 2
  %v7110 = vsel %vm123, %v7107, %v7109
  %v7111 = vrot.slane %v7026, 2
  %v7112 = vrot.slane %v7027, 2
  %v7113 = vsel %vm123, %v7111, %v7112
  %v7114 = vrot.slane %v7028, 2
  %v7115 = vsel %vm123, %v7112, %v7114
  %v7116 = vrot.slane %v7030, 2
  %v7117 = vrot.slane %v7031, 2
  %v7118 = vsel %vm123, %v7116, %v7117
  %v7119 = vrot.slane %v7032, 2
  %v7120 = vsel %vm123, %v7117, %v7119
  %v7137 = vadd.f32 %v7001, %v7083
  %v7138 = vadd.f32 %v7002, %v7085
  %v7139 = vadd.f32 %v7005, %v7088
  %v7140 = vadd.f32 %v7006, %v7090
  %v7141 = vadd.f32 %v7009, %v7093
  %v7142 = vadd.f32 %v7010, %v7095
  %v7143 = vadd.f32 %v7013, %v7098
  %v7144 = vadd.f32 %v7014, %v7100
  %v7145 = vadd.f32 %v7017, %v7103
  %v7146 = vadd.f32 %v7018, %v7105
  %v7147 = vadd.f32 %v7021, %v7108
  %v7148 = vadd.f32 %v7022, %v7110
  %v7149 = vadd.f32 %v7025, %v7113
  %v7150 = vadd.f32 %v7026, %v7115
  %v7151 = vadd.f32 %v7029, %v7118
  %v7152 = vadd.f32 %v7030, %v7120
  %v7153 = vmul.f32 %v7137, 0.0010283801
  %v7154 = vmul.f32 %v7138, 0.0010283801
  %v7155 = vmul.f32 %v7139, 0.0010283801
  %v7156 = vmul.f32 %v7140, 0.0010283801
  %v7157 = vmul.f32 %v7141, 0.0010283801
  %v7158 = vmul.f32 %v7142, 0.0010283801
  %v7159 = vmul.f32 %v7143, 0.0010283801
  %v7160 = vmul.f32 %v7144, 0.0010283801
  %v7161 = vmul.f32 %v7145, 0.0010283801
  %v7162 = vmul.f32 %v7146, 0.0010283801
  %v7163 = vmul.f32 %v7147, 0.0010283801
  %v7164 = vmul.f32 %v7148, 0.0010283801
  %v7165 = vmul.f32 %v7149, 0.0010283801
  %v7166 = vmul.f32 %v7150, 0.0010283801
  %v7167 = vmul.f32 %v7151, 0.0010283801
  %v7168 = vmul.f32 %v7152, 0.0010283801
  %v7185 = vrot.slane %v7153, 3
  %v7186 = vrot.slane %v7154, 3
  %v7187 = vsel %vm228, %v7185, %v7186
  %v7188 = vrot.slane %v7155, 3
  %v7189 = vrot.slane %v7156, 3
  %v7190 = vsel %vm228, %v7188, %v7189
  %v7191 = vrot.slane %v7157, 3
  %v7192 = vrot.slane %v7158, 3
  %v7193 = vsel %vm228, %v7191, %v7192
  %v7194 = vrot.slane %v7159, 3
  %v7195 = vrot.slane %v7160, 3
  %v7196 = vsel %vm228, %v7194, %v7195
  %v7197 = vrot.slane %v7161, 3
  %v7198 = vrot.slane %v7162, 3
  %v7199 = vsel %vm228, %v7197, %v7198
  %v7200 = vrot.slane %v7163, 3
  %v7201 = vrot.slane %v7164, 3
  %v7202 = vsel %vm228, %v7200, %v7201
  %v7203 = vrot.slane %v7165, 3
  %v7204 = vrot.slane %v7166, 3
  %v7205 = vsel %vm228, %v7203, %v7204
  %v7206 = vrot.slane %v7167, 3
  %v7207 = vrot.slane %v7168, 3
  %v7208 = vsel %vm228, %v7206, %v7207
  %v7233 = vadd.f32 %v7033, %v7185
  %v7234 = vadd.f32 %v7034, %v7187
  %v7235 = vadd.f32 %v7035, %v7186
  %v7236 = vadd.f32 %v7036, %v7188
  %v7237 = vadd.f32 %v7037, %v7190
  %v7238 = vadd.f32 %v7038, %v7189
  %v7239 = vadd.f32 %v7039, %v7191
  %v7240 = vadd.f32 %v7040, %v7193
  %v7241 = vadd.f32 %v7041, %v7192
  %v7242 = vadd.f32 %v7042, %v7194
  %v7243 = vadd.f32 %v7043, %v7196
  %v7244 = vadd.f32 %v7044, %v7195
  %v7245 = vadd.f32 %v7045, %v7197
  %v7246 = vadd.f32 %v7046, %v7199
  %v7247 = vadd.f32 %v7047, %v7198
  %v7248 = vadd.f32 %v7048, %v7200
  %v7249 = vadd.f32 %v7049, %v7202
  %v7250 = vadd.f32 %v7050, %v7201
  %v7251 = vadd.f32 %v7051, %v7203
  %v7252 = vadd.f32 %v7052, %v7205
  %v7253 = vadd.f32 %v7053, %v7204
  %v7254 = vadd.f32 %v7054, %v7206
  %v7255 = vadd.f32 %v7055, %v7208
  %v7256 = vadd.f32 %v7056, %v7207
  %v7257 = vadd.f32 %v7001, %v7002
  %v7258 = vadd.f32 %v7002, %v7003
  %v7259 = vadd.f32 %v7003, %v7004
  %v7260 = vadd.f32 %v7005, %v7006
  %v7261 = vadd.f32 %v7006, %v7007
  %v7262 = vadd.f32 %v7007, %v7008
  %v7263 = vadd.f32 %v7009, %v7010
  %v7264 = vadd.f32 %v7010, %v7011
  %v7265 = vadd.f32 %v7011, %v7012
  %v7266 = vadd.f32 %v7013, %v7014
  %v7267 = vadd.f32 %v7014, %v7015
  %v7268 = vadd.f32 %v7015, %v7016
  %v7269 = vadd.f32 %v7017, %v7018
  %v7270 = vadd.f32 %v7018, %v7019
  %v7271 = vadd.f32 %v7019, %v7020
  %v7272 = vadd.f32 %v7021, %v7022
  %v7273 = vadd.f32 %v7022, %v7023
  %v7274 = vadd.f32 %v7023, %v7024
  %v7275 = vadd.f32 %v7025, %v7026
  %v7276 = vadd.f32 %v7026, %v7027
  %v7277 = vadd.f32 %v7027, %v7028
  %v7278 = vadd.f32 %v7029, %v7030
  %v7279 = vadd.f32 %v7030, %v7031
  %v7280 = vadd.f32 %v7031, %v7032
  %v7281 = vmul.f32 %v7257, 0.007598758
  %v7282 = vmul.f32 %v7258, 0.007598758
  %v7283 = vmul.f32 %v7259, 0.007598758
  %v7284 = vmul.f32 %v7260, 0.007598758
  %v7285 = vmul.f32 %v7261, 0.007598758
  %v7286 = vmul.f32 %v7262, 0.007598758
  %v7287 = vmul.f32 %v7263, 0.007598758
  %v7288 = vmul.f32 %v7264, 0.007598758
  %v7289 = vmul.f32 %v7265, 0.007598758
  %v7290 = vmul.f32 %v7266, 0.007598758
  %v7291 = vmul.f32 %v7267, 0.007598758
  %v7292 = vmul.f32 %v7268, 0.007598758
  %v7293 = vmul.f32 %v7269, 0.007598758
  %v7294 = vmul.f32 %v7270, 0.007598758
  %v7295 = vmul.f32 %v7271, 0.007598758
  %v7296 = vmul.f32 %v7272, 0.007598758
  %v7297 = vmul.f32 %v7273, 0.007598758
  %v7298 = vmul.f32 %v7274, 0.007598758
  %v7299 = vmul.f32 %v7275, 0.007598758
  %v7300 = vmul.f32 %v7276, 0.007598758
  %v7301 = vmul.f32 %v7277, 0.007598758
  %v7302 = vmul.f32 %v7278, 0.007598758
  %v7303 = vmul.f32 %v7279, 0.007598758
  %v7304 = vmul.f32 %v7280, 0.007598758
  %v7329 = vrot.slane %v7281, 4
  %v7330 = vrot.slane %v7282, 4
  %v7331 = vsel %vm373, %v7329, %v7330
  %v7332 = vrot.slane %v7283, 4
  %v7333 = vsel %vm373, %v7330, %v7332
  %v7334 = vrot.slane %v7284, 4
  %v7335 = vrot.slane %v7285, 4
  %v7336 = vsel %vm373, %v7334, %v7335
  %v7337 = vrot.slane %v7286, 4
  %v7338 = vsel %vm373, %v7335, %v7337
  %v7339 = vrot.slane %v7287, 4
  %v7340 = vrot.slane %v7288, 4
  %v7341 = vsel %vm373, %v7339, %v7340
  %v7342 = vrot.slane %v7289, 4
  %v7343 = vsel %vm373, %v7340, %v7342
  %v7344 = vrot.slane %v7290, 4
  %v7345 = vrot.slane %v7291, 4
  %v7346 = vsel %vm373, %v7344, %v7345
  %v7347 = vrot.slane %v7292, 4
  %v7348 = vsel %vm373, %v7345, %v7347
  %v7349 = vrot.slane %v7293, 4
  %v7350 = vrot.slane %v7294, 4
  %v7351 = vsel %vm373, %v7349, %v7350
  %v7352 = vrot.slane %v7295, 4
  %v7353 = vsel %vm373, %v7350, %v7352
  %v7354 = vrot.slane %v7296, 4
  %v7355 = vrot.slane %v7297, 4
  %v7356 = vsel %vm373, %v7354, %v7355
  %v7357 = vrot.slane %v7298, 4
  %v7358 = vsel %vm373, %v7355, %v7357
  %v7359 = vrot.slane %v7299, 4
  %v7360 = vrot.slane %v7300, 4
  %v7361 = vsel %vm373, %v7359, %v7360
  %v7362 = vrot.slane %v7301, 4
  %v7363 = vsel %vm373, %v7360, %v7362
  %v7364 = vrot.slane %v7302, 4
  %v7365 = vrot.slane %v7303, 4
  %v7366 = vsel %vm373, %v7364, %v7365
  %v7367 = vrot.slane %v7304, 4
  %v7368 = vsel %vm373, %v7365, %v7367
  %v7393 = vadd.f32 %v7233, %v7329
  %v7394 = vadd.f32 %v7234, %v7331
  %v7395 = vadd.f32 %v7235, %v7333
  %v7396 = vadd.f32 %v7236, %v7334
  %v7397 = vadd.f32 %v7237, %v7336
  %v7398 = vadd.f32 %v7238, %v7338
  %v7399 = vadd.f32 %v7239, %v7339
  %v7400 = vadd.f32 %v7240, %v7341
  %v7401 = vadd.f32 %v7241, %v7343
  %v7402 = vadd.f32 %v7242, %v7344
  %v7403 = vadd.f32 %v7243, %v7346
  %v7404 = vadd.f32 %v7244, %v7348
  %v7405 = vadd.f32 %v7245, %v7349
  %v7406 = vadd.f32 %v7246, %v7351
  %v7407 = vadd.f32 %v7247, %v7353
  %v7408 = vadd.f32 %v7248, %v7354
  %v7409 = vadd.f32 %v7249, %v7356
  %v7410 = vadd.f32 %v7250, %v7358
  %v7411 = vadd.f32 %v7251, %v7359
  %v7412 = vadd.f32 %v7252, %v7361
  %v7413 = vadd.f32 %v7253, %v7363
  %v7414 = vadd.f32 %v7254, %v7364
  %v7415 = vadd.f32 %v7255, %v7366
  %v7416 = vadd.f32 %v7256, %v7368
  %v7417 = vrot.slane %v7002, 6
  %v7418 = vrot.slane %v7003, 6
  %v7419 = vsel %vm462, %v7417, %v7418
  %v7420 = vrot.slane %v7006, 6
  %v7421 = vrot.slane %v7007, 6
  %v7422 = vsel %vm462, %v7420, %v7421
  %v7423 = vrot.slane %v7010, 6
  %v7424 = vrot.slane %v7011, 6
  %v7425 = vsel %vm462, %v7423, %v7424
  %v7426 = vrot.slane %v7014, 6
  %v7427 = vrot.slane %v7015, 6
  %v7428 = vsel %vm462, %v7426, %v7427
  %v7429 = vrot.slane %v7018, 6
  %v7430 = vrot.slane %v7019, 6
  %v7431 = vsel %vm462, %v7429, %v7430
  %v7432 = vrot.slane %v7022, 6
  %v7433 = vrot.slane %v7023, 6
  %v7434 = vsel %vm462, %v7432, %v7433
  %v7435 = vrot.slane %v7026, 6
  %v7436 = vrot.slane %v7027, 6
  %v7437 = vsel %vm462, %v7435, %v7436
  %v7438 = vrot.slane %v7030, 6
  %v7439 = vrot.slane %v7031, 6
  %v7440 = vsel %vm462, %v7438, %v7439
  %v7465 = vadd.f32 %v7001, %v7417
  %v7466 = vadd.f32 %v7002, %v7419
  %v7467 = vadd.f32 %v7003, %v7418
  %v7468 = vadd.f32 %v7005, %v7420
  %v7469 = vadd.f32 %v7006, %v7422
  %v7470 = vadd.f32 %v7007, %v7421
  %v7471 = vadd.f32 %v7009, %v7423
  %v7472 = vadd.f32 %v7010, %v7425
  %v7473 = vadd.f32 %v7011, %v7424
  %v7474 = vadd.f32 %v7013, %v7426
  %v7475 = vadd.f32 %v7014, %v7428
  %v7476 = vadd.f32 %v7015, %v7427
  %v7477 = vadd.f32 %v7017, %v7429
  %v7478 = vadd.f32 %v7018, %v7431
  %v7479 = vadd.f32 %v7019, %v7430
  %v7480 = vadd.f32 %v7021, %v7432
  %v7481 = vadd.f32 %v7022, %v7434
  %v7482 = vadd.f32 %v7023, %v7433
  %v7483 = vadd.f32 %v7025, %v7435
  %v7484 = vadd.f32 %v7026, %v7437
  %v7485 = vadd.f32 %v7027, %v7436
  %v7486 = vadd.f32 %v7029, %v7438
  %v7487 = vadd.f32 %v7030, %v7440
  %v7488 = vadd.f32 %v7031, %v7439
  %v7489 = vmul.f32 %v7465, 0.036000773
  %v7490 = vmul.f32 %v7466, 0.036000773
  %v7491 = vmul.f32 %v7467, 0.036000773
  %v7492 = vmul.f32 %v7468, 0.036000773
  %v7493 = vmul.f32 %v7469, 0.036000773
  %v7494 = vmul.f32 %v7470, 0.036000773
  %v7495 = vmul.f32 %v7471, 0.036000773
  %v7496 = vmul.f32 %v7472, 0.036000773
  %v7497 = vmul.f32 %v7473, 0.036000773
  %v7498 = vmul.f32 %v7474, 0.036000773
  %v7499 = vmul.f32 %v7475, 0.036000773
  %v7500 = vmul.f32 %v7476, 0.036000773
  %v7501 = vmul.f32 %v7477, 0.036000773
  %v7502 = vmul.f32 %v7478, 0.036000773
  %v7503 = vmul.f32 %v7479, 0.036000773
  %v7504 = vmul.f32 %v7480, 0.036000773
  %v7505 = vmul.f32 %v7481, 0.036000773
  %v7506 = vmul.f32 %v7482, 0.036000773
  %v7507 = vmul.f32 %v7483, 0.036000773
  %v7508 = vmul.f32 %v7484, 0.036000773
  %v7509 = vmul.f32 %v7485, 0.036000773
  %v7510 = vmul.f32 %v7486, 0.036000773
  %v7511 = vmul.f32 %v7487, 0.036000773
  %v7512 = vmul.f32 %v7488, 0.036000773
  %v7537 = vrot.slane %v7489, 5
  %v7538 = vrot.slane %v7490, 5
  %v7539 = vsel %vm583, %v7537, %v7538
  %v7540 = vrot.slane %v7491, 5
  %v7541 = vsel %vm583, %v7538, %v7540
  %v7542 = vrot.slane %v7492, 5
  %v7543 = vrot.slane %v7493, 5
  %v7544 = vsel %vm583, %v7542, %v7543
  %v7545 = vrot.slane %v7494, 5
  %v7546 = vsel %vm583, %v7543, %v7545
  %v7547 = vrot.slane %v7495, 5
  %v7548 = vrot.slane %v7496, 5
  %v7549 = vsel %vm583, %v7547, %v7548
  %v7550 = vrot.slane %v7497, 5
  %v7551 = vsel %vm583, %v7548, %v7550
  %v7552 = vrot.slane %v7498, 5
  %v7553 = vrot.slane %v7499, 5
  %v7554 = vsel %vm583, %v7552, %v7553
  %v7555 = vrot.slane %v7500, 5
  %v7556 = vsel %vm583, %v7553, %v7555
  %v7557 = vrot.slane %v7501, 5
  %v7558 = vrot.slane %v7502, 5
  %v7559 = vsel %vm583, %v7557, %v7558
  %v7560 = vrot.slane %v7503, 5
  %v7561 = vsel %vm583, %v7558, %v7560
  %v7562 = vrot.slane %v7504, 5
  %v7563 = vrot.slane %v7505, 5
  %v7564 = vsel %vm583, %v7562, %v7563
  %v7565 = vrot.slane %v7506, 5
  %v7566 = vsel %vm583, %v7563, %v7565
  %v7567 = vrot.slane %v7507, 5
  %v7568 = vrot.slane %v7508, 5
  %v7569 = vsel %vm583, %v7567, %v7568
  %v7570 = vrot.slane %v7509, 5
  %v7571 = vsel %vm583, %v7568, %v7570
  %v7572 = vrot.slane %v7510, 5
  %v7573 = vrot.slane %v7511, 5
  %v7574 = vsel %vm583, %v7572, %v7573
  %v7575 = vrot.slane %v7512, 5
  %v7576 = vsel %vm583, %v7573, %v7575
  %v7601 = vadd.f32 %v7393, %v7537
  %v7602 = vadd.f32 %v7394, %v7539
  %v7603 = vadd.f32 %v7395, %v7541
  %v7604 = vadd.f32 %v7396, %v7542
  %v7605 = vadd.f32 %v7397, %v7544
  %v7606 = vadd.f32 %v7398, %v7546
  %v7607 = vadd.f32 %v7399, %v7547
  %v7608 = vadd.f32 %v7400, %v7549
  %v7609 = vadd.f32 %v7401, %v7551
  %v7610 = vadd.f32 %v7402, %v7552
  %v7611 = vadd.f32 %v7403, %v7554
  %v7612 = vadd.f32 %v7404, %v7556
  %v7613 = vadd.f32 %v7405, %v7557
  %v7614 = vadd.f32 %v7406, %v7559
  %v7615 = vadd.f32 %v7407, %v7561
  %v7616 = vadd.f32 %v7408, %v7562
  %v7617 = vadd.f32 %v7409, %v7564
  %v7618 = vadd.f32 %v7410, %v7566
  %v7619 = vadd.f32 %v7411, %v7567
  %v7620 = vadd.f32 %v7412, %v7569
  %v7621 = vadd.f32 %v7413, %v7571
  %v7622 = vadd.f32 %v7414, %v7572
  %v7623 = vadd.f32 %v7415, %v7574
  %v7624 = vadd.f32 %v7416, %v7576
  %v7633 = vrot.slane %v7001, 4
  %v7634 = vrot.slane %v7002, 4
  %v7635 = vsel %vm373, %v7633, %v7634
  %v7636 = vrot.slane %v7003, 4
  %v7637 = vsel %vm373, %v7634, %v7636
  %v7638 = vrot.slane %v7005, 4
  %v7639 = vrot.slane %v7006, 4
  %v7640 = vsel %vm373, %v7638, %v7639
  %v7641 = vrot.slane %v7007, 4
  %v7642 = vsel %vm373, %v7639, %v7641
  %v7643 = vrot.slane %v7009, 4
  %v7644 = vrot.slane %v7010, 4
  %v7645 = vsel %vm373, %v7643, %v7644
  %v7646 = vrot.slane %v7011, 4
  %v7647 = vsel %vm373, %v7644, %v7646
  %v7648 = vrot.slane %v7013, 4
  %v7649 = vrot.slane %v7014, 4
  %v7650 = vsel %vm373, %v7648, %v7649
  %v7651 = vrot.slane %v7015, 4
  %v7652 = vsel %vm373, %v7649, %v7651
  %v7653 = vrot.slane %v7017, 4
  %v7654 = vrot.slane %v7018, 4
  %v7655 = vsel %vm373, %v7653, %v7654
  %v7656 = vrot.slane %v7019, 4
  %v7657 = vsel %vm373, %v7654, %v7656
  %v7658 = vrot.slane %v7021, 4
  %v7659 = vrot.slane %v7022, 4
  %v7660 = vsel %vm373, %v7658, %v7659
  %v7661 = vrot.slane %v7023, 4
  %v7662 = vsel %vm373, %v7659, %v7661
  %v7663 = vrot.slane %v7025, 4
  %v7664 = vrot.slane %v7026, 4
  %v7665 = vsel %vm373, %v7663, %v7664
  %v7666 = vrot.slane %v7027, 4
  %v7667 = vsel %vm373, %v7664, %v7666
  %v7668 = vrot.slane %v7029, 4
  %v7669 = vrot.slane %v7030, 4
  %v7670 = vsel %vm373, %v7668, %v7669
  %v7671 = vrot.slane %v7031, 4
  %v7672 = vsel %vm373, %v7669, %v7671
  %v7697 = vadd.f32 %v7001, %v7635
  %v7698 = vadd.f32 %v7002, %v7637
  %v7699 = vadd.f32 %v7003, %v7636
  %v7700 = vadd.f32 %v7005, %v7640
  %v7701 = vadd.f32 %v7006, %v7642
  %v7702 = vadd.f32 %v7007, %v7641
  %v7703 = vadd.f32 %v7009, %v7645
  %v7704 = vadd.f32 %v7010, %v7647
  %v7705 = vadd.f32 %v7011, %v7646
  %v7706 = vadd.f32 %v7013, %v7650
  %v7707 = vadd.f32 %v7014, %v7652
  %v7708 = vadd.f32 %v7015, %v7651
  %v7709 = vadd.f32 %v7017, %v7655
  %v7710 = vadd.f32 %v7018, %v7657
  %v7711 = vadd.f32 %v7019, %v7656
  %v7712 = vadd.f32 %v7021, %v7660
  %v7713 = vadd.f32 %v7022, %v7662
  %v7714 = vadd.f32 %v7023, %v7661
  %v7715 = vadd.f32 %v7025, %v7665
  %v7716 = vadd.f32 %v7026, %v7667
  %v7717 = vadd.f32 %v7027, %v7666
  %v7718 = vadd.f32 %v7029, %v7670
  %v7719 = vadd.f32 %v7030, %v7672
  %v7720 = vadd.f32 %v7031, %v7671
  %v7721 = vmul.f32 %v7697, 0.10936069
  %v7722 = vmul.f32 %v7698, 0.10936069
  %v7723 = vmul.f32 %v7699, 0.10936069
  %v7724 = vmul.f32 %v7700, 0.10936069
  %v7725 = vmul.f32 %v7701, 0.10936069
  %v7726 = vmul.f32 %v7702, 0.10936069
  %v7727 = vmul.f32 %v7703, 0.10936069
  %v7728 = vmul.f32 %v7704, 0.10936069
  %v7729 = vmul.f32 %v7705, 0.10936069
  %v7730 = vmul.f32 %v7706, 0.10936069
  %v7731 = vmul.f32 %v7707, 0.10936069
  %v7732 = vmul.f32 %v7708, 0.10936069
  %v7733 = vmul.f32 %v7709, 0.10936069
  %v7734 = vmul.f32 %v7710, 0.10936069
  %v7735 = vmul.f32 %v7711, 0.10936069
  %v7736 = vmul.f32 %v7712, 0.10936069
  %v7737 = vmul.f32 %v7713, 0.10936069
  %v7738 = vmul.f32 %v7714, 0.10936069
  %v7739 = vmul.f32 %v7715, 0.10936069
  %v7740 = vmul.f32 %v7716, 0.10936069
  %v7741 = vmul.f32 %v7717, 0.10936069
  %v7742 = vmul.f32 %v7718, 0.10936069
  %v7743 = vmul.f32 %v7719, 0.10936069
  %v7744 = vmul.f32 %v7720, 0.10936069
  %v7769 = vrot.slane %v7721, 6
  %v7770 = vrot.slane %v7722, 6
  %v7771 = vsel %vm462, %v7769, %v7770
  %v7772 = vrot.slane %v7723, 6
  %v7773 = vsel %vm462, %v7770, %v7772
  %v7774 = vrot.slane %v7724, 6
  %v7775 = vrot.slane %v7725, 6
  %v7776 = vsel %vm462, %v7774, %v7775
  %v7777 = vrot.slane %v7726, 6
  %v7778 = vsel %vm462, %v7775, %v7777
  %v7779 = vrot.slane %v7727, 6
  %v7780 = vrot.slane %v7728, 6
  %v7781 = vsel %vm462, %v7779, %v7780
  %v7782 = vrot.slane %v7729, 6
  %v7783 = vsel %vm462, %v7780, %v7782
  %v7784 = vrot.slane %v7730, 6
  %v7785 = vrot.slane %v7731, 6
  %v7786 = vsel %vm462, %v7784, %v7785
  %v7787 = vrot.slane %v7732, 6
  %v7788 = vsel %vm462, %v7785, %v7787
  %v7789 = vrot.slane %v7733, 6
  %v7790 = vrot.slane %v7734, 6
  %v7791 = vsel %vm462, %v7789, %v7790
  %v7792 = vrot.slane %v7735, 6
  %v7793 = vsel %vm462, %v7790, %v7792
  %v7794 = vrot.slane %v7736, 6
  %v7795 = vrot.slane %v7737, 6
  %v7796 = vsel %vm462, %v7794, %v7795
  %v7797 = vrot.slane %v7738, 6
  %v7798 = vsel %vm462, %v7795, %v7797
  %v7799 = vrot.slane %v7739, 6
  %v7800 = vrot.slane %v7740, 6
  %v7801 = vsel %vm462, %v7799, %v7800
  %v7802 = vrot.slane %v7741, 6
  %v7803 = vsel %vm462, %v7800, %v7802
  %v7804 = vrot.slane %v7742, 6
  %v7805 = vrot.slane %v7743, 6
  %v7806 = vsel %vm462, %v7804, %v7805
  %v7807 = vrot.slane %v7744, 6
  %v7808 = vsel %vm462, %v7805, %v7807
  %v7833 = vadd.f32 %v7601, %v7769
  %v7834 = vadd.f32 %v7602, %v7771
  %v7835 = vadd.f32 %v7603, %v7773
  %v7836 = vadd.f32 %v7604, %v7774
  %v7837 = vadd.f32 %v7605, %v7776
  %v7838 = vadd.f32 %v7606, %v7778
  %v7839 = vadd.f32 %v7607, %v7779
  %v7840 = vadd.f32 %v7608, %v7781
  %v7841 = vadd.f32 %v7609, %v7783
  %v7842 = vadd.f32 %v7610, %v7784
  %v7843 = vadd.f32 %v7611, %v7786
  %v7844 = vadd.f32 %v7612, %v7788
  %v7845 = vadd.f32 %v7613, %v7789
  %v7846 = vadd.f32 %v7614, %v7791
  %v7847 = vadd.f32 %v7615, %v7793
  %v7848 = vadd.f32 %v7616, %v7794
  %v7849 = vadd.f32 %v7617, %v7796
  %v7850 = vadd.f32 %v7618, %v7798
  %v7851 = vadd.f32 %v7619, %v7799
  %v7852 = vadd.f32 %v7620, %v7801
  %v7853 = vadd.f32 %v7621, %v7803
  %v7854 = vadd.f32 %v7622, %v7804
  %v7855 = vadd.f32 %v7623, %v7806
  %v7856 = vadd.f32 %v7624, %v7808
  %v7857 = vrot.slane %v7001, 2
  %v7858 = vsel %vm123, %v7857, %v7081
  %v7859 = vrot.slane %v7005, 2
  %v7860 = vsel %vm123, %v7859, %v7086
  %v7861 = vrot.slane %v7009, 2
  %v7862 = vsel %vm123, %v7861, %v7091
  %v7863 = vrot.slane %v7013, 2
  %v7864 = vsel %vm123, %v7863, %v7096
  %v7865 = vrot.slane %v7017, 2
  %v7866 = vsel %vm123, %v7865, %v7101
  %v7867 = vrot.slane %v7021, 2
  %v7868 = vsel %vm123, %v7867, %v7106
  %v7869 = vrot.slane %v7025, 2
  %v7870 = vsel %vm123, %v7869, %v7111
  %v7871 = vrot.slane %v7029, 2
  %v7872 = vsel %vm123, %v7871, %v7116
  %v7889 = vadd.f32 %v7001, %v7858
  %v7890 = vadd.f32 %v7002, %v7083
  %v7891 = vadd.f32 %v7003, %v7082
  %v7892 = vadd.f32 %v7005, %v7860
  %v7893 = vadd.f32 %v7006, %v7088
  %v7894 = vadd.f32 %v7007, %v7087
  %v7895 = vadd.f32 %v7009, %v7862
  %v7896 = vadd.f32 %v7010, %v7093
  %v7897 = vadd.f32 %v7011, %v7092
  %v7898 = vadd.f32 %v7013, %v7864
  %v7899 = vadd.f32 %v7014, %v7098
  %v7900 = vadd.f32 %v7015, %v7097
  %v7901 = vadd.f32 %v7017, %v7866
  %v7902 = vadd.f32 %v7018, %v7103
  %v7903 = vadd.f32 %v7019, %v7102
  %v7904 = vadd.f32 %v7021, %v7868
  %v7905 = vadd.f32 %v7022, %v7108
  %v7906 = vadd.f32 %v7023, %v7107
  %v7907 = vadd.f32 %v7025, %v7870
  %v7908 = vadd.f32 %v7026, %v7113
  %v7909 = vadd.f32 %v7027, %v7112
  %v7910 = vadd.f32 %v7029, %v7872
  %v7911 = vadd.f32 %v7030, %v7118
  %v7912 = vadd.f32 %v7031, %v7117
  %v7913 = vmul.f32 %v7889, 0.21300554
  %v7914 = vmul.f32 %v7890, 0.21300554
  %v7915 = vmul.f32 %v7891, 0.21300554
  %v7916 = vmul.f32 %v7892, 0.21300554
  %v7917 = vmul.f32 %v7893, 0.21300554
  %v7918 = vmul.f32 %v7894, 0.21300554
  %v7919 = vmul.f32 %v7895, 0.21300554
  %v7920 = vmul.f32 %v7896, 0.21300554
  %v7921 = vmul.f32 %v7897, 0.21300554
  %v7922 = vmul.f32 %v7898, 0.21300554
  %v7923 = vmul.f32 %v7899, 0.21300554
  %v7924 = vmul.f32 %v7900, 0.21300554
  %v7925 = vmul.f32 %v7901, 0.21300554
  %v7926 = vmul.f32 %v7902, 0.21300554
  %v7927 = vmul.f32 %v7903, 0.21300554
  %v7928 = vmul.f32 %v7904, 0.21300554
  %v7929 = vmul.f32 %v7905, 0.21300554
  %v7930 = vmul.f32 %v7906, 0.21300554
  %v7931 = vmul.f32 %v7907, 0.21300554
  %v7932 = vmul.f32 %v7908, 0.21300554
  %v7933 = vmul.f32 %v7909, 0.21300554
  %v7934 = vmul.f32 %v7910, 0.21300554
  %v7935 = vmul.f32 %v7911, 0.21300554
  %v7936 = vmul.f32 %v7912, 0.21300554
  %v7961 = vrot.slane %v7913, 7
  %v7962 = vrot.slane %v7914, 7
  %v7963 = vsel %vm1008, %v7961, %v7962
  %v7964 = vrot.slane %v7915, 7
  %v7965 = vsel %vm1008, %v7962, %v7964
  %v7966 = vrot.slane %v7916, 7
  %v7967 = vrot.slane %v7917, 7
  %v7968 = vsel %vm1008, %v7966, %v7967
  %v7969 = vrot.slane %v7918, 7
  %v7970 = vsel %vm1008, %v7967, %v7969
  %v7971 = vrot.slane %v7919, 7
  %v7972 = vrot.slane %v7920, 7
  %v7973 = vsel %vm1008, %v7971, %v7972
  %v7974 = vrot.slane %v7921, 7
  %v7975 = vsel %vm1008, %v7972, %v7974
  %v7976 = vrot.slane %v7922, 7
  %v7977 = vrot.slane %v7923, 7
  %v7978 = vsel %vm1008, %v7976, %v7977
  %v7979 = vrot.slane %v7924, 7
  %v7980 = vsel %vm1008, %v7977, %v7979
  %v7981 = vrot.slane %v7925, 7
  %v7982 = vrot.slane %v7926, 7
  %v7983 = vsel %vm1008, %v7981, %v7982
  %v7984 = vrot.slane %v7927, 7
  %v7985 = vsel %vm1008, %v7982, %v7984
  %v7986 = vrot.slane %v7928, 7
  %v7987 = vrot.slane %v7929, 7
  %v7988 = vsel %vm1008, %v7986, %v7987
  %v7989 = vrot.slane %v7930, 7
  %v7990 = vsel %vm1008, %v7987, %v7989
  %v7991 = vrot.slane %v7931, 7
  %v7992 = vrot.slane %v7932, 7
  %v7993 = vsel %vm1008, %v7991, %v7992
  %v7994 = vrot.slane %v7933, 7
  %v7995 = vsel %vm1008, %v7992, %v7994
  %v7996 = vrot.slane %v7934, 7
  %v7997 = vrot.slane %v7935, 7
  %v7998 = vsel %vm1008, %v7996, %v7997
  %v7999 = vrot.slane %v7936, 7
  %v8000 = vsel %vm1008, %v7997, %v7999
  %v8025 = vadd.f32 %v7833, %v7961
  %v8026 = vadd.f32 %v7834, %v7963
  %v8027 = vadd.f32 %v7835, %v7965
  %v8028 = vadd.f32 %v7836, %v7966
  %v8029 = vadd.f32 %v7837, %v7968
  %v8030 = vadd.f32 %v7838, %v7970
  %v8031 = vadd.f32 %v7839, %v7971
  %v8032 = vadd.f32 %v7840, %v7973
  %v8033 = vadd.f32 %v7841, %v7975
  %v8034 = vadd.f32 %v7842, %v7976
  %v8035 = vadd.f32 %v7843, %v7978
  %v8036 = vadd.f32 %v7844, %v7980
  %v8037 = vadd.f32 %v7845, %v7981
  %v8038 = vadd.f32 %v7846, %v7983
  %v8039 = vadd.f32 %v7847, %v7985
  %v8040 = vadd.f32 %v7848, %v7986
  %v8041 = vadd.f32 %v7849, %v7988
  %v8042 = vadd.f32 %v7850, %v7990
  %v8043 = vadd.f32 %v7851, %v7991
  %v8044 = vadd.f32 %v7852, %v7993
  %v8045 = vadd.f32 %v7853, %v7995
  %v8046 = vadd.f32 %v7854, %v7996
  %v8047 = vadd.f32 %v7855, %v7998
  %v8048 = vadd.f32 %v7856, %v8000
  %v8049 = vmul.f32 %v8025, 0.26601171
  %v8050 = vmul.f32 %v8026, 0.26601171
  %v8051 = vmul.f32 %v8027, 0.26601171
  %v8052 = vmul.f32 %v8028, 0.26601171
  %v8053 = vmul.f32 %v8029, 0.26601171
  %v8054 = vmul.f32 %v8030, 0.26601171
  %v8055 = vmul.f32 %v8031, 0.26601171
  %v8056 = vmul.f32 %v8032, 0.26601171
  %v8057 = vmul.f32 %v8033, 0.26601171
  %v8058 = vmul.f32 %v8034, 0.26601171
  %v8059 = vmul.f32 %v8035, 0.26601171
  %v8060 = vmul.f32 %v8036, 0.26601171
  %v8061 = vmul.f32 %v8037, 0.26601171
  %v8062 = vmul.f32 %v8038, 0.26601171
  %v8063 = vmul.f32 %v8039, 0.26601171
  %v8064 = vmul.f32 %v8040, 0.26601171
  %v8065 = vmul.f32 %v8041, 0.26601171
  %v8066 = vmul.f32 %v8042, 0.26601171
  %v8067 = vmul.f32 %v8043, 0.26601171
  %v8068 = vmul.f32 %v8044, 0.26601171
  %v8069 = vmul.f32 %v8045, 0.26601171
  %v8070 = vmul.f32 %v8046, 0.26601171
  %v8071 = vmul.f32 %v8047, 0.26601171
  %v8072 = vmul.f32 %v8048, 0.26601171
  %8097 = vrot.lane.b32.xlu0 %v8025, 118
  %v8098 = vpop.permute.xlu0 %8097
  %8099 = vrot.lane.b32.xlu0 %v8026, 118
  %v8100 = vpop.permute.xlu0 %8099
  %8101 = vrot.lane.b32.xlu0 %v8027, 118
  %v8102 = vpop.permute.xlu0 %8101
  %8103 = vrot.lane.b32.xlu0 %v8028, 118
  %v8104 = vpop.permute.xlu0 %8103
  %8105 = vrot.lane.b32.xlu0 %v8029, 118
  %v8106 = vpop.permute.xlu0 %8105
  %8107 = vrot.lane.b32.xlu0 %v8030, 118
  %v8108 = vpop.permute.xlu0 %8107
  %8109 = vrot.lane.b32.xlu0 %v8031, 118
  %v8110 = vpop.permute.xlu0 %8109
  %8111 = vrot.lane.b32.xlu0 %v8032, 118
  %v8112 = vpop.permute.xlu0 %8111
  %8113 = vrot.lane.b32.xlu0 %v8033, 118
  %v8114 = vpop.permute.xlu0 %8113
  %8115 = vrot.lane.b32.xlu0 %v8034, 118
  %v8116 = vpop.permute.xlu0 %8115
  %8117 = vrot.lane.b32.xlu0 %v8035, 118
  %v8118 = vpop.permute.xlu0 %8117
  %8119 = vrot.lane.b32.xlu0 %v8036, 118
  %v8120 = vpop.permute.xlu0 %8119
  %8121 = vrot.lane.b32.xlu0 %v8037, 118
  %v8122 = vpop.permute.xlu0 %8121
  %8123 = vrot.lane.b32.xlu0 %v8038, 118
  %v8124 = vpop.permute.xlu0 %8123
  %8125 = vrot.lane.b32.xlu0 %v8039, 118
  %v8126 = vpop.permute.xlu0 %8125
  %8127 = vrot.lane.b32.xlu0 %v8040, 118
  %v8128 = vpop.permute.xlu0 %8127
  %8129 = vrot.lane.b32.xlu0 %v8041, 118
  %v8130 = vpop.permute.xlu0 %8129
  %8131 = vrot.lane.b32.xlu0 %v8042, 118
  %v8132 = vpop.permute.xlu0 %8131
  %8133 = vrot.lane.b32.xlu0 %v8043, 118
  %v8134 = vpop.permute.xlu0 %8133
  %8135 = vrot.lane.b32.xlu0 %v8044, 118
  %v8136 = vpop.permute.xlu0 %8135
  %8137 = vrot.lane.b32.xlu0 %v8045, 118
  %v8138 = vpop.permute.xlu0 %8137
  %8139 = vrot.lane.b32.xlu0 %v8046, 118
  %v8140 = vpop.permute.xlu0 %8139
  %8141 = vrot.lane.b32.xlu0 %v8047, 118
  %v8142 = vpop.permute.xlu0 %8141
  %8143 = vrot.lane.b32.xlu0 %v8048, 118
  %v8144 = vpop.permute.xlu0 %8143
  %v8169 = vadd.f32 %v8025, %v8098
  %v8170 = vadd.f32 %v8026, %v8100
  %v8171 = vadd.f32 %v8027, %v8102
  %v8172 = vadd.f32 %v8028, %v8104
  %v8173 = vadd.f32 %v8029, %v8106
  %v8174 = vadd.f32 %v8030, %v8108
  %v8175 = vadd.f32 %v8031, %v8110
  %v8176 = vadd.f32 %v8032, %v8112
  %v8177 = vadd.f32 %v8033, %v8114
  %v8178 = vadd.f32 %v8034, %v8116
  %v8179 = vadd.f32 %v8035, %v8118
  %v8180 = vadd.f32 %v8036, %v8120
  %v8181 = vadd.f32 %v8037, %v8122
  %v8182 = vadd.f32 %v8038, %v8124
  %v8183 = vadd.f32 %v8039, %v8126
  %v8184 = vadd.f32 %v8040, %v8128
  %v8185 = vadd.f32 %v8041, %v8130
  %v8186 = vadd.f32 %v8042, %v8132
  %v8187 = vadd.f32 %v8043, %v8134
  %v8188 = vadd.f32 %v8044, %v8136
  %v8189 = vadd.f32 %v8045, %v8138
  %v8190 = vadd.f32 %v8046, %v8140
  %v8191 = vadd.f32 %v8047, %v8142
  %v8192 = vadd.f32 %v8048, %v8144
  %v8193 = vmul.f32 %v8169, 0.0010283801
  %v8194 = vmul.f32 %v8170, 0.0010283801
  %v8195 = vmul.f32 %v8171, 0.0010283801
  %v8196 = vmul.f32 %v8172, 0.0010283801
  %v8197 = vmul.f32 %v8173, 0.0010283801
  %v8198 = vmul.f32 %v8174, 0.0010283801
  %v8199 = vmul.f32 %v8175, 0.0010283801
  %v8200 = vmul.f32 %v8176, 0.0010283801
  %v8201 = vmul.f32 %v8177, 0.0010283801
  %v8202 = vmul.f32 %v8178, 0.0010283801
  %v8203 = vmul.f32 %v8179, 0.0010283801
  %v8204 = vmul.f32 %v8180, 0.0010283801
  %v8205 = vmul.f32 %v8181, 0.0010283801
  %v8206 = vmul.f32 %v8182, 0.0010283801
  %v8207 = vmul.f32 %v8183, 0.0010283801
  %v8208 = vmul.f32 %v8184, 0.0010283801
  %v8209 = vmul.f32 %v8185, 0.0010283801
  %v8210 = vmul.f32 %v8186, 0.0010283801
  %v8211 = vmul.f32 %v8187, 0.0010283801
  %v8212 = vmul.f32 %v8188, 0.0010283801
  %v8213 = vmul.f32 %v8189, 0.0010283801
  %v8214 = vmul.f32 %v8190, 0.0010283801
  %v8215 = vmul.f32 %v8191, 0.0010283801
  %v8216 = vmul.f32 %v8192, 0.0010283801
  %8241 = vrot.lane.b32.xlu0 %v8193, 5
  %v8242 = vpop.permute.xlu0 %8241
  %8243 = vrot.lane.b32.xlu0 %v8194, 5
  %v8244 = vpop.permute.xlu0 %8243
  %8245 = vrot.lane.b32.xlu0 %v8195, 5
  %v8246 = vpop.permute.xlu0 %8245
  %8247 = vrot.lane.b32.xlu0 %v8196, 5
  %v8248 = vpop.permute.xlu0 %8247
  %8249 = vrot.lane.b32.xlu0 %v8197, 5
  %v8250 = vpop.permute.xlu0 %8249
  %8251 = vrot.lane.b32.xlu0 %v8198, 5
  %v8252 = vpop.permute.xlu0 %8251
  %8253 = vrot.lane.b32.xlu0 %v8199, 5
  %v8254 = vpop.permute.xlu0 %8253
  %8255 = vrot.lane.b32.xlu0 %v8200, 5
  %v8256 = vpop.permute.xlu0 %8255
  %8257 = vrot.lane.b32.xlu0 %v8201, 5
  %v8258 = vpop.permute.xlu0 %8257
  %8259 = vrot.lane.b32.xlu0 %v8202, 5
  %v8260 = vpop.permute.xlu0 %8259
  %8261 = vrot.lane.b32.xlu0 %v8203, 5
  %v8262 = vpop.permute.xlu0 %8261
  %8263 = vrot.lane.b32.xlu0 %v8204, 5
  %v8264 = vpop.permute.xlu0 %8263
  %8265 = vrot.lane.b32.xlu0 %v8205, 5
  %v8266 = vpop.permute.xlu0 %8265
  %8267 = vrot.lane.b32.xlu0 %v8206, 5
  %v8268 = vpop.permute.xlu0 %8267
  %8269 = vrot.lane.b32.xlu0 %v8207, 5
  %v8270 = vpop.permute.xlu0 %8269
  %8271 = vrot.lane.b32.xlu0 %v8208, 5
  %v8272 = vpop.permute.xlu0 %8271
  %8273 = vrot.lane.b32.xlu0 %v8209, 5
  %v8274 = vpop.permute.xlu0 %8273
  %8275 = vrot.lane.b32.xlu0 %v8210, 5
  %v8276 = vpop.permute.xlu0 %8275
  %8277 = vrot.lane.b32.xlu0 %v8211, 5
  %v8278 = vpop.permute.xlu0 %8277
  %8279 = vrot.lane.b32.xlu0 %v8212, 5
  %v8280 = vpop.permute.xlu0 %8279
  %8281 = vrot.lane.b32.xlu0 %v8213, 5
  %v8282 = vpop.permute.xlu0 %8281
  %8283 = vrot.lane.b32.xlu0 %v8214, 5
  %v8284 = vpop.permute.xlu0 %8283
  %8285 = vrot.lane.b32.xlu0 %v8215, 5
  %v8286 = vpop.permute.xlu0 %8285
  %8287 = vrot.lane.b32.xlu0 %v8216, 5
  %v8288 = vpop.permute.xlu0 %8287
  %v8313 = vadd.f32 %v8049, %v8242
  %v8314 = vadd.f32 %v8050, %v8244
  %v8315 = vadd.f32 %v8051, %v8246
  %v8316 = vadd.f32 %v8052, %v8248
  %v8317 = vadd.f32 %v8053, %v8250
  %v8318 = vadd.f32 %v8054, %v8252
  %v8319 = vadd.f32 %v8055, %v8254
  %v8320 = vadd.f32 %v8056, %v8256
  %v8321 = vadd.f32 %v8057, %v8258
  %v8322 = vadd.f32 %v8058, %v8260
  %v8323 = vadd.f32 %v8059, %v8262
  %v8324 = vadd.f32 %v8060, %v8264
  %v8325 = vadd.f32 %v8061, %v8266
  %v8326 = vadd.f32 %v8062, %v8268
  %v8327 = vadd.f32 %v8063, %v8270
  %v8328 = vadd.f32 %v8064, %v8272
  %v8329 = vadd.f32 %v8065, %v8274
  %v8330 = vadd.f32 %v8066, %v8276
  %v8331 = vadd.f32 %v8067, %v8278
  %v8332 = vadd.f32 %v8068, %v8280
  %v8333 = vadd.f32 %v8069, %v8282
  %v8334 = vadd.f32 %v8070, %v8284
  %v8335 = vadd.f32 %v8071, %v8286
  %v8336 = vadd.f32 %v8072, %v8288
  %8337 = vrot.lane.b32.xlu0 %v8025, 120
  %v8338 = vpop.permute.xlu0 %8337
  %8339 = vrot.lane.b32.xlu0 %v8026, 120
  %v8340 = vpop.permute.xlu0 %8339
  %8341 = vrot.lane.b32.xlu0 %v8027, 120
  %v8342 = vpop.permute.xlu0 %8341
  %8343 = vrot.lane.b32.xlu0 %v8028, 120
  %v8344 = vpop.permute.xlu0 %8343
  %8345 = vrot.lane.b32.xlu0 %v8029, 120
  %v8346 = vpop.permute.xlu0 %8345
  %8347 = vrot.lane.b32.xlu0 %v8030, 120
  %v8348 = vpop.permute.xlu0 %8347
  %8349 = vrot.lane.b32.xlu0 %v8031, 120
  %v8350 = vpop.permute.xlu0 %8349
  %8351 = vrot.lane.b32.xlu0 %v8032, 120
  %v8352 = vpop.permute.xlu0 %8351
  %8353 = vrot.lane.b32.xlu0 %v8033, 120
  %v8354 = vpop.permute.xlu0 %8353
  %8355 = vrot.lane.b32.xlu0 %v8034, 120
  %v8356 = vpop.permute.xlu0 %8355
  %8357 = vrot.lane.b32.xlu0 %v8035, 120
  %v8358 = vpop.permute.xlu0 %8357
  %8359 = vrot.lane.b32.xlu0 %v8036, 120
  %v8360 = vpop.permute.xlu0 %8359
  %8361 = vrot.lane.b32.xlu0 %v8037, 120
  %v8362 = vpop.permute.xlu0 %8361
  %8363 = vrot.lane.b32.xlu0 %v8038, 120
  %v8364 = vpop.permute.xlu0 %8363
  %8365 = vrot.lane.b32.xlu0 %v8039, 120
  %v8366 = vpop.permute.xlu0 %8365
  %8367 = vrot.lane.b32.xlu0 %v8040, 120
  %v8368 = vpop.permute.xlu0 %8367
  %8369 = vrot.lane.b32.xlu0 %v8041, 120
  %v8370 = vpop.permute.xlu0 %8369
  %8371 = vrot.lane.b32.xlu0 %v8042, 120
  %v8372 = vpop.permute.xlu0 %8371
  %8373 = vrot.lane.b32.xlu0 %v8043, 120
  %v8374 = vpop.permute.xlu0 %8373
  %8375 = vrot.lane.b32.xlu0 %v8044, 120
  %v8376 = vpop.permute.xlu0 %8375
  %8377 = vrot.lane.b32.xlu0 %v8045, 120
  %v8378 = vpop.permute.xlu0 %8377
  %8379 = vrot.lane.b32.xlu0 %v8046, 120
  %v8380 = vpop.permute.xlu0 %8379
  %8381 = vrot.lane.b32.xlu0 %v8047, 120
  %v8382 = vpop.permute.xlu0 %8381
  %8383 = vrot.lane.b32.xlu0 %v8048, 120
  %v8384 = vpop.permute.xlu0 %8383
  %v8409 = vadd.f32 %v8025, %v8338
  %v8410 = vadd.f32 %v8026, %v8340
  %v8411 = vadd.f32 %v8027, %v8342
  %v8412 = vadd.f32 %v8028, %v8344
  %v8413 = vadd.f32 %v8029, %v8346
  %v8414 = vadd.f32 %v8030, %v8348
  %v8415 = vadd.f32 %v8031, %v8350
  %v8416 = vadd.f32 %v8032, %v8352
  %v8417 = vadd.f32 %v8033, %v8354
  %v8418 = vadd.f32 %v8034, %v8356
  %v8419 = vadd.f32 %v8035, %v8358
  %v8420 = vadd.f32 %v8036, %v8360
  %v8421 = vadd.f32 %v8037, %v8362
  %v8422 = vadd.f32 %v8038, %v8364
  %v8423 = vadd.f32 %v8039, %v8366
  %v8424 = vadd.f32 %v8040, %v8368
  %v8425 = vadd.f32 %v8041, %v8370
  %v8426 = vadd.f32 %v8042, %v8372
  %v8427 = vadd.f32 %v8043, %v8374
  %v8428 = vadd.f32 %v8044, %v8376
  %v8429 = vadd.f32 %v8045, %v8378
  %v8430 = vadd.f32 %v8046, %v8380
  %v8431 = vadd.f32 %v8047, %v8382
  %v8432 = vadd.f32 %v8048, %v8384
  %v8433 = vmul.f32 %v8409, 0.007598758
  %v8434 = vmul.f32 %v8410, 0.007598758
  %v8435 = vmul.f32 %v8411, 0.007598758
  %v8436 = vmul.f32 %v8412, 0.007598758
  %v8437 = vmul.f32 %v8413, 0.007598758
  %v8438 = vmul.f32 %v8414, 0.007598758
  %v8439 = vmul.f32 %v8415, 0.007598758
  %v8440 = vmul.f32 %v8416, 0.007598758
  %v8441 = vmul.f32 %v8417, 0.007598758
  %v8442 = vmul.f32 %v8418, 0.007598758
  %v8443 = vmul.f32 %v8419, 0.007598758
  %v8444 = vmul.f32 %v8420, 0.007598758
  %v8445 = vmul.f32 %v8421, 0.007598758
  %v8446 = vmul.f32 %v8422, 0.007598758
  %v8447 = vmul.f32 %v8423, 0.007598758
  %v8448 = vmul.f32 %v8424, 0.007598758
  %v8449 = vmul.f32 %v8425, 0.007598758
  %v8450 = vmul.f32 %v8426, 0.007598758
  %v8451 = vmul.f32 %v8427, 0.007598758
  %v8452 = vmul.f32 %v8428, 0.007598758
  %v8453 = vmul.f32 %v8429, 0.007598758
  %v8454 = vmul.f32 %v8430, 0.007598758
  %v8455 = vmul.f32 %v8431, 0.007598758
  %v8456 = vmul.f32 %v8432, 0.007598758
  %8481 = vrot.lane.b32.xlu0 %v8433, 4
  %v8482 = vpop.permute.xlu0 %8481
  %8483 = vrot.lane.b32.xlu0 %v8434, 4
  %v8484 = vpop.permute.xlu0 %8483
  %8485 = vrot.lane.b32.xlu0 %v8435, 4
  %v8486 = vpop.permute.xlu0 %8485
  %8487 = vrot.lane.b32.xlu0 %v8436, 4
  %v8488 = vpop.permute.xlu0 %8487
  %8489 = vrot.lane.b32.xlu0 %v8437, 4
  %v8490 = vpop.permute.xlu0 %8489
  %8491 = vrot.lane.b32.xlu0 %v8438, 4
  %v8492 = vpop.permute.xlu0 %8491
  %8493 = vrot.lane.b32.xlu0 %v8439, 4
  %v8494 = vpop.permute.xlu0 %8493
  %8495 = vrot.lane.b32.xlu0 %v8440, 4
  %v8496 = vpop.permute.xlu0 %8495
  %8497 = vrot.lane.b32.xlu0 %v8441, 4
  %v8498 = vpop.permute.xlu0 %8497
  %8499 = vrot.lane.b32.xlu0 %v8442, 4
  %v8500 = vpop.permute.xlu0 %8499
  %8501 = vrot.lane.b32.xlu0 %v8443, 4
  %v8502 = vpop.permute.xlu0 %8501
  %8503 = vrot.lane.b32.xlu0 %v8444, 4
  %v8504 = vpop.permute.xlu0 %8503
  %8505 = vrot.lane.b32.xlu0 %v8445, 4
  %v8506 = vpop.permute.xlu0 %8505
  %8507 = vrot.lane.b32.xlu0 %v8446, 4
  %v8508 = vpop.permute.xlu0 %8507
  %8509 = vrot.lane.b32.xlu0 %v8447, 4
  %v8510 = vpop.permute.xlu0 %8509
  %8511 = vrot.lane.b32.xlu0 %v8448, 4
  %v8512 = vpop.permute.xlu0 %8511
  %8513 = vrot.lane.b32.xlu0 %v8449, 4
  %v8514 = vpop.permute.xlu0 %8513
  %8515 = vrot.lane.b32.xlu0 %v8450, 4
  %v8516 = vpop.permute.xlu0 %8515
  %8517 = vrot.lane.b32.xlu0 %v8451, 4
  %v8518 = vpop.permute.xlu0 %8517
  %8519 = vrot.lane.b32.xlu0 %v8452, 4
  %v8520 = vpop.permute.xlu0 %8519
  %8521 = vrot.lane.b32.xlu0 %v8453, 4
  %v8522 = vpop.permute.xlu0 %8521
  %8523 = vrot.lane.b32.xlu0 %v8454, 4
  %v8524 = vpop.permute.xlu0 %8523
  %8525 = vrot.lane.b32.xlu0 %v8455, 4
  %v8526 = vpop.permute.xlu0 %8525
  %8527 = vrot.lane.b32.xlu0 %v8456, 4
  %v8528 = vpop.permute.xlu0 %8527
  %v8553 = vadd.f32 %v8313, %v8482
  %v8554 = vadd.f32 %v8314, %v8484
  %v8555 = vadd.f32 %v8315, %v8486
  %v8556 = vadd.f32 %v8316, %v8488
  %v8557 = vadd.f32 %v8317, %v8490
  %v8558 = vadd.f32 %v8318, %v8492
  %v8559 = vadd.f32 %v8319, %v8494
  %v8560 = vadd.f32 %v8320, %v8496
  %v8561 = vadd.f32 %v8321, %v8498
  %v8562 = vadd.f32 %v8322, %v8500
  %v8563 = vadd.f32 %v8323, %v8502
  %v8564 = vadd.f32 %v8324, %v8504
  %v8565 = vadd.f32 %v8325, %v8506
  %v8566 = vadd.f32 %v8326, %v8508
  %v8567 = vadd.f32 %v8327, %v8510
  %v8568 = vadd.f32 %v8328, %v8512
  %v8569 = vadd.f32 %v8329, %v8514
  %v8570 = vadd.f32 %v8330, %v8516
  %v8571 = vadd.f32 %v8331, %v8518
  %v8572 = vadd.f32 %v8332, %v8520
  %v8573 = vadd.f32 %v8333, %v8522
  %v8574 = vadd.f32 %v8334, %v8524
  %v8575 = vadd.f32 %v8335, %v8526
  %v8576 = vadd.f32 %v8336, %v8528
  %8577 = vrot.lane.b32.xlu0 %v8025, 122
  %v8578 = vpop.permute.xlu0 %8577
  %8579 = vrot.lane.b32.xlu0 %v8026, 122
  %v8580 = vpop.permute.xlu0 %8579
  %8581 = vrot.lane.b32.xlu0 %v8027, 122
  %v8582 = vpop.permute.xlu0 %8581
  %8583 = vrot.lane.b32.xlu0 %v8028, 122
  %v8584 = vpop.permute.xlu0 %8583
  %8585 = vrot.lane.b32.xlu0 %v8029, 122
  %v8586 = vpop.permute.xlu0 %8585
  %8587 = vrot.lane.b32.xlu0 %v8030, 122
  %v8588 = vpop.permute.xlu0 %8587
  %8589 = vrot.lane.b32.xlu0 %v8031, 122
  %v8590 = vpop.permute.xlu0 %8589
  %8591 = vrot.lane.b32.xlu0 %v8032, 122
  %v8592 = vpop.permute.xlu0 %8591
  %8593 = vrot.lane.b32.xlu0 %v8033, 122
  %v8594 = vpop.permute.xlu0 %8593
  %8595 = vrot.lane.b32.xlu0 %v8034, 122
  %v8596 = vpop.permute.xlu0 %8595
  %8597 = vrot.lane.b32.xlu0 %v8035, 122
  %v8598 = vpop.permute.xlu0 %8597
  %8599 = vrot.lane.b32.xlu0 %v8036, 122
  %v8600 = vpop.permute.xlu0 %8599
  %8601 = vrot.lane.b32.xlu0 %v8037, 122
  %v8602 = vpop.permute.xlu0 %8601
  %8603 = vrot.lane.b32.xlu0 %v8038, 122
  %v8604 = vpop.permute.xlu0 %8603
  %8605 = vrot.lane.b32.xlu0 %v8039, 122
  %v8606 = vpop.permute.xlu0 %8605
  %8607 = vrot.lane.b32.xlu0 %v8040, 122
  %v8608 = vpop.permute.xlu0 %8607
  %8609 = vrot.lane.b32.xlu0 %v8041, 122
  %v8610 = vpop.permute.xlu0 %8609
  %8611 = vrot.lane.b32.xlu0 %v8042, 122
  %v8612 = vpop.permute.xlu0 %8611
  %8613 = vrot.lane.b32.xlu0 %v8043, 122
  %v8614 = vpop.permute.xlu0 %8613
  %8615 = vrot.lane.b32.xlu0 %v8044, 122
  %v8616 = vpop.permute.xlu0 %8615
  %8617 = vrot.lane.b32.xlu0 %v8045, 122
  %v8618 = vpop.permute.xlu0 %8617
  %8619 = vrot.lane.b32.xlu0 %v8046, 122
  %v8620 = vpop.permute.xlu0 %8619
  %8621 = vrot.lane.b32.xlu0 %v8047, 122
  %v8622 = vpop.permute.xlu0 %8621
  %8623 = vrot.lane.b32.xlu0 %v8048, 122
  %v8624 = vpop.permute.xlu0 %8623
  %v8649 = vadd.f32 %v8025, %v8578
  %v8650 = vadd.f32 %v8026, %v8580
  %v8651 = vadd.f32 %v8027, %v8582
  %v8652 = vadd.f32 %v8028, %v8584
  %v8653 = vadd.f32 %v8029, %v8586
  %v8654 = vadd.f32 %v8030, %v8588
  %v8655 = vadd.f32 %v8031, %v8590
  %v8656 = vadd.f32 %v8032, %v8592
  %v8657 = vadd.f32 %v8033, %v8594
  %v8658 = vadd.f32 %v8034, %v8596
  %v8659 = vadd.f32 %v8035, %v8598
  %v8660 = vadd.f32 %v8036, %v8600
  %v8661 = vadd.f32 %v8037, %v8602
  %v8662 = vadd.f32 %v8038, %v8604
  %v8663 = vadd.f32 %v8039, %v8606
  %v8664 = vadd.f32 %v8040, %v8608
  %v8665 = vadd.f32 %v8041, %v8610
  %v8666 = vadd.f32 %v8042, %v8612
  %v8667 = vadd.f32 %v8043, %v8614
  %v8668 = vadd.f32 %v8044, %v8616
  %v8669 = vadd.f32 %v8045, %v8618
  %v8670 = vadd.f32 %v8046, %v8620
  %v8671 = vadd.f32 %v8047, %v8622
  %v8672 = vadd.f32 %v8048, %v8624
  %v8673 = vmul.f32 %v8649, 0.036000773
  %v8674 = vmul.f32 %v8650, 0.036000773
  %v8675 = vmul.f32 %v8651, 0.036000773
  %v8676 = vmul.f32 %v8652, 0.036000773
  %v8677 = vmul.f32 %v8653, 0.036000773
  %v8678 = vmul.f32 %v8654, 0.036000773
  %v8679 = vmul.f32 %v8655, 0.036000773
  %v8680 = vmul.f32 %v8656, 0.036000773
  %v8681 = vmul.f32 %v8657, 0.036000773
  %v8682 = vmul.f32 %v8658, 0.036000773
  %v8683 = vmul.f32 %v8659, 0.036000773
  %v8684 = vmul.f32 %v8660, 0.036000773
  %v8685 = vmul.f32 %v8661, 0.036000773
  %v8686 = vmul.f32 %v8662, 0.036000773
  %v8687 = vmul.f32 %v8663, 0.036000773
  %v8688 = vmul.f32 %v8664, 0.036000773
  %v8689 = vmul.f32 %v8665, 0.036000773
  %v8690 = vmul.f32 %v8666, 0.036000773
  %v8691 = vmul.f32 %v8667, 0.036000773
  %v8692 = vmul.f32 %v8668, 0.036000773
  %v8693 = vmul.f32 %v8669, 0.036000773
  %v8694 = vmul.f32 %v8670, 0.036000773
  %v8695 = vmul.f32 %v8671, 0.036000773
  %v8696 = vmul.f32 %v8672, 0.036000773
  %8721 = vrot.lane.b32.xlu0 %v8673, 3
  %v8722 = vpop.permute.xlu0 %8721
  %8723 = vrot.lane.b32.xlu0 %v8674, 3
  %v8724 = vpop.permute.xlu0 %8723
  %8725 = vrot.lane.b32.xlu0 %v8675, 3
  %v8726 = vpop.permute.xlu0 %8725
  %8727 = vrot.lane.b32.xlu0 %v8676, 3
  %v8728 = vpop.permute.xlu0 %8727
  %8729 = vrot.lane.b32.xlu0 %v8677, 3
  %v8730 = vpop.permute.xlu0 %8729
  %8731 = vrot.lane.b32.xlu0 %v8678, 3
  %v8732 = vpop.permute.xlu0 %8731
  %8733 = vrot.lane.b32.xlu0 %v8679, 3
  %v8734 = vpop.permute.xlu0 %8733
  %8735 = vrot.lane.b32.xlu0 %v8680, 3
  %v8736 = vpop.permute.xlu0 %8735
  %8737 = vrot.lane.b32.xlu0 %v8681, 3
  %v8738 = vpop.permute.xlu0 %8737
  %8739 = vrot.lane.b32.xlu0 %v8682, 3
  %v8740 = vpop.permute.xlu0 %8739
  %8741 = vrot.lane.b32.xlu0 %v8683, 3
  %v8742 = vpop.permute.xlu0 %8741
  %8743 = vrot.lane.b32.xlu0 %v8684, 3
  %v8744 = vpop.permute.xlu0 %8743
  %8745 = vrot.lane.b32.xlu0 %v8685, 3
  %v8746 = vpop.permute.xlu0 %8745
  %8747 = vrot.lane.b32.xlu0 %v8686, 3
  %v8748 = vpop.permute.xlu0 %8747
  %8749 = vrot.lane.b32.xlu0 %v8687, 3
  %v8750 = vpop.permute.xlu0 %8749
  %8751 = vrot.lane.b32.xlu0 %v8688, 3
  %v8752 = vpop.permute.xlu0 %8751
  %8753 = vrot.lane.b32.xlu0 %v8689, 3
  %v8754 = vpop.permute.xlu0 %8753
  %8755 = vrot.lane.b32.xlu0 %v8690, 3
  %v8756 = vpop.permute.xlu0 %8755
  %8757 = vrot.lane.b32.xlu0 %v8691, 3
  %v8758 = vpop.permute.xlu0 %8757
  %8759 = vrot.lane.b32.xlu0 %v8692, 3
  %v8760 = vpop.permute.xlu0 %8759
  %8761 = vrot.lane.b32.xlu0 %v8693, 3
  %v8762 = vpop.permute.xlu0 %8761
  %8763 = vrot.lane.b32.xlu0 %v8694, 3
  %v8764 = vpop.permute.xlu0 %8763
  %8765 = vrot.lane.b32.xlu0 %v8695, 3
  %v8766 = vpop.permute.xlu0 %8765
  %8767 = vrot.lane.b32.xlu0 %v8696, 3
  %v8768 = vpop.permute.xlu0 %8767
  %v8793 = vadd.f32 %v8553, %v8722
  %v8794 = vadd.f32 %v8554, %v8724
  %v8795 = vadd.f32 %v8555, %v8726
  %v8796 = vadd.f32 %v8556, %v8728
  %v8797 = vadd.f32 %v8557, %v8730
  %v8798 = vadd.f32 %v8558, %v8732
  %v8799 = vadd.f32 %v8559, %v8734
  %v8800 = vadd.f32 %v8560, %v8736
  %v8801 = vadd.f32 %v8561, %v8738
  %v8802 = vadd.f32 %v8562, %v8740
  %v8803 = vadd.f32 %v8563, %v8742
  %v8804 = vadd.f32 %v8564, %v8744
  %v8805 = vadd.f32 %v8565, %v8746
  %v8806 = vadd.f32 %v8566, %v8748
  %v8807 = vadd.f32 %v8567, %v8750
  %v8808 = vadd.f32 %v8568, %v8752
  %v8809 = vadd.f32 %v8569, %v8754
  %v8810 = vadd.f32 %v8570, %v8756
  %v8811 = vadd.f32 %v8571, %v8758
  %v8812 = vadd.f32 %v8572, %v8760
  %v8813 = vadd.f32 %v8573, %v8762
  %v8814 = vadd.f32 %v8574, %v8764
  %v8815 = vadd.f32 %v8575, %v8766
  %v8816 = vadd.f32 %v8576, %v8768
  %8817 = vrot.lane.b32.xlu0 %v8025, 124
  %v8818 = vpop.permute.xlu0 %8817
  %8819 = vrot.lane.b32.xlu0 %v8026, 124
  %v8820 = vpop.permute.xlu0 %8819
  %8821 = vrot.lane.b32.xlu0 %v8027, 124
  %v8822 = vpop.permute.xlu0 %8821
  %8823 = vrot.lane.b32.xlu0 %v8028, 124
  %v8824 = vpop.permute.xlu0 %8823
  %8825 = vrot.lane.b32.xlu0 %v8029, 124
  %v8826 = vpop.permute.xlu0 %8825
  %8827 = vrot.lane.b32.xlu0 %v8030, 124
  %v8828 = vpop.permute.xlu0 %8827
  %8829 = vrot.lane.b32.xlu0 %v8031, 124
  %v8830 = vpop.permute.xlu0 %8829
  %8831 = vrot.lane.b32.xlu0 %v8032, 124
  %v8832 = vpop.permute.xlu0 %8831
  %8833 = vrot.lane.b32.xlu0 %v8033, 124
  %v8834 = vpop.permute.xlu0 %8833
  %8835 = vrot.lane.b32.xlu0 %v8034, 124
  %v8836 = vpop.permute.xlu0 %8835
  %8837 = vrot.lane.b32.xlu0 %v8035, 124
  %v8838 = vpop.permute.xlu0 %8837
  %8839 = vrot.lane.b32.xlu0 %v8036, 124
  %v8840 = vpop.permute.xlu0 %8839
  %8841 = vrot.lane.b32.xlu0 %v8037, 124
  %v8842 = vpop.permute.xlu0 %8841
  %8843 = vrot.lane.b32.xlu0 %v8038, 124
  %v8844 = vpop.permute.xlu0 %8843
  %8845 = vrot.lane.b32.xlu0 %v8039, 124
  %v8846 = vpop.permute.xlu0 %8845
  %8847 = vrot.lane.b32.xlu0 %v8040, 124
  %v8848 = vpop.permute.xlu0 %8847
  %8849 = vrot.lane.b32.xlu0 %v8041, 124
  %v8850 = vpop.permute.xlu0 %8849
  %8851 = vrot.lane.b32.xlu0 %v8042, 124
  %v8852 = vpop.permute.xlu0 %8851
  %8853 = vrot.lane.b32.xlu0 %v8043, 124
  %v8854 = vpop.permute.xlu0 %8853
  %8855 = vrot.lane.b32.xlu0 %v8044, 124
  %v8856 = vpop.permute.xlu0 %8855
  %8857 = vrot.lane.b32.xlu0 %v8045, 124
  %v8858 = vpop.permute.xlu0 %8857
  %8859 = vrot.lane.b32.xlu0 %v8046, 124
  %v8860 = vpop.permute.xlu0 %8859
  %8861 = vrot.lane.b32.xlu0 %v8047, 124
  %v8862 = vpop.permute.xlu0 %8861
  %8863 = vrot.lane.b32.xlu0 %v8048, 124
  %v8864 = vpop.permute.xlu0 %8863
  %v8889 = vadd.f32 %v8025, %v8818
  %v8890 = vadd.f32 %v8026, %v8820
  %v8891 = vadd.f32 %v8027, %v8822
  %v8892 = vadd.f32 %v8028, %v8824
  %v8893 = vadd.f32 %v8029, %v8826
  %v8894 = vadd.f32 %v8030, %v8828
  %v8895 = vadd.f32 %v8031, %v8830
  %v8896 = vadd.f32 %v8032, %v8832
  %v8897 = vadd.f32 %v8033, %v8834
  %v8898 = vadd.f32 %v8034, %v8836
  %v8899 = vadd.f32 %v8035, %v8838
  %v8900 = vadd.f32 %v8036, %v8840
  %v8901 = vadd.f32 %v8037, %v8842
  %v8902 = vadd.f32 %v8038, %v8844
  %v8903 = vadd.f32 %v8039, %v8846
  %v8904 = vadd.f32 %v8040, %v8848
  %v8905 = vadd.f32 %v8041, %v8850
  %v8906 = vadd.f32 %v8042, %v8852
  %v8907 = vadd.f32 %v8043, %v8854
  %v8908 = vadd.f32 %v8044, %v8856
  %v8909 = vadd.f32 %v8045, %v8858
  %v8910 = vadd.f32 %v8046, %v8860
  %v8911 = vadd.f32 %v8047, %v8862
  %v8912 = vadd.f32 %v8048, %v8864
  %v8913 = vmul.f32 %v8889, 0.10936069
  %v8914 = vmul.f32 %v8890, 0.10936069
  %v8915 = vmul.f32 %v8891, 0.10936069
  %v8916 = vmul.f32 %v8892, 0.10936069
  %v8917 = vmul.f32 %v8893, 0.10936069
  %v8918 = vmul.f32 %v8894, 0.10936069
  %v8919 = vmul.f32 %v8895, 0.10936069
  %v8920 = vmul.f32 %v8896, 0.10936069
  %v8921 = vmul.f32 %v8897, 0.10936069
  %v8922 = vmul.f32 %v8898, 0.10936069
  %v8923 = vmul.f32 %v8899, 0.10936069
  %v8924 = vmul.f32 %v8900, 0.10936069
  %v8925 = vmul.f32 %v8901, 0.10936069
  %v8926 = vmul.f32 %v8902, 0.10936069
  %v8927 = vmul.f32 %v8903, 0.10936069
  %v8928 = vmul.f32 %v8904, 0.10936069
  %v8929 = vmul.f32 %v8905, 0.10936069
  %v8930 = vmul.f32 %v8906, 0.10936069
  %v8931 = vmul.f32 %v8907, 0.10936069
  %v8932 = vmul.f32 %v8908, 0.10936069
  %v8933 = vmul.f32 %v8909, 0.10936069
  %v8934 = vmul.f32 %v8910, 0.10936069
  %v8935 = vmul.f32 %v8911, 0.10936069
  %v8936 = vmul.f32 %v8912, 0.10936069
  %8961 = vrot.lane.b32.xlu0 %v8913, 2
  %v8962 = vpop.permute.xlu0 %8961
  %8963 = vrot.lane.b32.xlu0 %v8914, 2
  %v8964 = vpop.permute.xlu0 %8963
  %8965 = vrot.lane.b32.xlu0 %v8915, 2
  %v8966 = vpop.permute.xlu0 %8965
  %8967 = vrot.lane.b32.xlu0 %v8916, 2
  %v8968 = vpop.permute.xlu0 %8967
  %8969 = vrot.lane.b32.xlu0 %v8917, 2
  %v8970 = vpop.permute.xlu0 %8969
  %8971 = vrot.lane.b32.xlu0 %v8918, 2
  %v8972 = vpop.permute.xlu0 %8971
  %8973 = vrot.lane.b32.xlu0 %v8919, 2
  %v8974 = vpop.permute.xlu0 %8973
  %8975 = vrot.lane.b32.xlu0 %v8920, 2
  %v8976 = vpop.permute.xlu0 %8975
  %8977 = vrot.lane.b32.xlu0 %v8921, 2
  %v8978 = vpop.permute.xlu0 %8977
  %8979 = vrot.lane.b32.xlu0 %v8922, 2
  %v8980 = vpop.permute.xlu0 %8979
  %8981 = vrot.lane.b32.xlu0 %v8923, 2
  %v8982 = vpop.permute.xlu0 %8981
  %8983 = vrot.lane.b32.xlu0 %v8924, 2
  %v8984 = vpop.permute.xlu0 %8983
  %8985 = vrot.lane.b32.xlu0 %v8925, 2
  %v8986 = vpop.permute.xlu0 %8985
  %8987 = vrot.lane.b32.xlu0 %v8926, 2
  %v8988 = vpop.permute.xlu0 %8987
  %8989 = vrot.lane.b32.xlu0 %v8927, 2
  %v8990 = vpop.permute.xlu0 %8989
  %8991 = vrot.lane.b32.xlu0 %v8928, 2
  %v8992 = vpop.permute.xlu0 %8991
  %8993 = vrot.lane.b32.xlu0 %v8929, 2
  %v8994 = vpop.permute.xlu0 %8993
  %8995 = vrot.lane.b32.xlu0 %v8930, 2
  %v8996 = vpop.permute.xlu0 %8995
  %8997 = vrot.lane.b32.xlu0 %v8931, 2
  %v8998 = vpop.permute.xlu0 %8997
  %8999 = vrot.lane.b32.xlu0 %v8932, 2
  %v9000 = vpop.permute.xlu0 %8999
  %9001 = vrot.lane.b32.xlu0 %v8933, 2
  %v9002 = vpop.permute.xlu0 %9001
  %9003 = vrot.lane.b32.xlu0 %v8934, 2
  %v9004 = vpop.permute.xlu0 %9003
  %9005 = vrot.lane.b32.xlu0 %v8935, 2
  %v9006 = vpop.permute.xlu0 %9005
  %9007 = vrot.lane.b32.xlu0 %v8936, 2
  %v9008 = vpop.permute.xlu0 %9007
  %v9033 = vadd.f32 %v8793, %v8962
  %v9034 = vadd.f32 %v8794, %v8964
  %v9035 = vadd.f32 %v8795, %v8966
  %v9036 = vadd.f32 %v8796, %v8968
  %v9037 = vadd.f32 %v8797, %v8970
  %v9038 = vadd.f32 %v8798, %v8972
  %v9039 = vadd.f32 %v8799, %v8974
  %v9040 = vadd.f32 %v8800, %v8976
  %v9041 = vadd.f32 %v8801, %v8978
  %v9042 = vadd.f32 %v8802, %v8980
  %v9043 = vadd.f32 %v8803, %v8982
  %v9044 = vadd.f32 %v8804, %v8984
  %v9045 = vadd.f32 %v8805, %v8986
  %v9046 = vadd.f32 %v8806, %v8988
  %v9047 = vadd.f32 %v8807, %v8990
  %v9048 = vadd.f32 %v8808, %v8992
  %v9049 = vadd.f32 %v8809, %v8994
  %v9050 = vadd.f32 %v8810, %v8996
  %v9051 = vadd.f32 %v8811, %v8998
  %v9052 = vadd.f32 %v8812, %v9000
  %v9053 = vadd.f32 %v8813, %v9002
  %v9054 = vadd.f32 %v8814, %v9004
  %v9055 = vadd.f32 %v8815, %v9006
  %v9056 = vadd.f32 %v8816, %v9008
  %9057 = vrot.lane.b32.xlu0 %v8025, 126
  %v9058 = vpop.permute.xlu0 %9057
  %9059 = vrot.lane.b32.xlu0 %v8026, 126
  %v9060 = vpop.permute.xlu0 %9059
  %9061 = vrot.lane.b32.xlu0 %v8027, 126
  %v9062 = vpop.permute.xlu0 %9061
  %9063 = vrot.lane.b32.xlu0 %v8028, 126
  %v9064 = vpop.permute.xlu0 %9063
  %9065 = vrot.lane.b32.xlu0 %v8029, 126
  %v9066 = vpop.permute.xlu0 %9065
  %9067 = vrot.lane.b32.xlu0 %v8030, 126
  %v9068 = vpop.permute.xlu0 %9067
  %9069 = vrot.lane.b32.xlu0 %v8031, 126
  %v9070 = vpop.permute.xlu0 %9069
  %9071 = vrot.lane.b32.xlu0 %v8032, 126
  %v9072 = vpop.permute.xlu0 %9071
  %9073 = vrot.lane.b32.xlu0 %v8033, 126
  %v9074 = vpop.permute.xlu0 %9073
  %9075 = vrot.lane.b32.xlu0 %v8034, 126
  %v9076 = vpop.permute.xlu0 %9075
  %9077 = vrot.lane.b32.xlu0 %v8035, 126
  %v9078 = vpop.permute.xlu0 %9077
  %9079 = vrot.lane.b32.xlu0 %v8036, 126
  %v9080 = vpop.permute.xlu0 %9079
  %9081 = vrot.lane.b32.xlu0 %v8037, 126
  %v9082 = vpop.permute.xlu0 %9081
  %9083 = vrot.lane.b32.xlu0 %v8038, 126
  %v9084 = vpop.permute.xlu0 %9083
  %9085 = vrot.lane.b32.xlu0 %v8039, 126
  %v9086 = vpop.permute.xlu0 %9085
  %9087 = vrot.lane.b32.xlu0 %v8040, 126
  %v9088 = vpop.permute.xlu0 %9087
  %9089 = vrot.lane.b32.xlu0 %v8041, 126
  %v9090 = vpop.permute.xlu0 %9089
  %9091 = vrot.lane.b32.xlu0 %v8042, 126
  %v9092 = vpop.permute.xlu0 %9091
  %9093 = vrot.lane.b32.xlu0 %v8043, 126
  %v9094 = vpop.permute.xlu0 %9093
  %9095 = vrot.lane.b32.xlu0 %v8044, 126
  %v9096 = vpop.permute.xlu0 %9095
  %9097 = vrot.lane.b32.xlu0 %v8045, 126
  %v9098 = vpop.permute.xlu0 %9097
  %9099 = vrot.lane.b32.xlu0 %v8046, 126
  %v9100 = vpop.permute.xlu0 %9099
  %9101 = vrot.lane.b32.xlu0 %v8047, 126
  %v9102 = vpop.permute.xlu0 %9101
  %9103 = vrot.lane.b32.xlu0 %v8048, 126
  %v9104 = vpop.permute.xlu0 %9103
  %v9129 = vadd.f32 %v8025, %v9058
  %v9130 = vadd.f32 %v8026, %v9060
  %v9131 = vadd.f32 %v8027, %v9062
  %v9132 = vadd.f32 %v8028, %v9064
  %v9133 = vadd.f32 %v8029, %v9066
  %v9134 = vadd.f32 %v8030, %v9068
  %v9135 = vadd.f32 %v8031, %v9070
  %v9136 = vadd.f32 %v8032, %v9072
  %v9137 = vadd.f32 %v8033, %v9074
  %v9138 = vadd.f32 %v8034, %v9076
  %v9139 = vadd.f32 %v8035, %v9078
  %v9140 = vadd.f32 %v8036, %v9080
  %v9141 = vadd.f32 %v8037, %v9082
  %v9142 = vadd.f32 %v8038, %v9084
  %v9143 = vadd.f32 %v8039, %v9086
  %v9144 = vadd.f32 %v8040, %v9088
  %v9145 = vadd.f32 %v8041, %v9090
  %v9146 = vadd.f32 %v8042, %v9092
  %v9147 = vadd.f32 %v8043, %v9094
  %v9148 = vadd.f32 %v8044, %v9096
  %v9149 = vadd.f32 %v8045, %v9098
  %v9150 = vadd.f32 %v8046, %v9100
  %v9151 = vadd.f32 %v8047, %v9102
  %v9152 = vadd.f32 %v8048, %v9104
  %v9153 = vmul.f32 %v9129, 0.21300554
  %v9154 = vmul.f32 %v9130, 0.21300554
  %v9155 = vmul.f32 %v9131, 0.21300554
  %v9156 = vmul.f32 %v9132, 0.21300554
  %v9157 = vmul.f32 %v9133, 0.21300554
  %v9158 = vmul.f32 %v9134, 0.21300554
  %v9159 = vmul.f32 %v9135, 0.21300554
  %v9160 = vmul.f32 %v9136, 0.21300554
  %v9161 = vmul.f32 %v9137, 0.21300554
  %v9162 = vmul.f32 %v9138, 0.21300554
  %v9163 = vmul.f32 %v9139, 0.21300554
  %v9164 = vmul.f32 %v9140, 0.21300554
  %v9165 = vmul.f32 %v9141, 0.21300554
  %v9166 = vmul.f32 %v9142, 0.21300554
  %v9167 = vmul.f32 %v9143, 0.21300554
  %v9168 = vmul.f32 %v9144, 0.21300554
  %v9169 = vmul.f32 %v9145, 0.21300554
  %v9170 = vmul.f32 %v9146, 0.21300554
  %v9171 = vmul.f32 %v9147, 0.21300554
  %v9172 = vmul.f32 %v9148, 0.21300554
  %v9173 = vmul.f32 %v9149, 0.21300554
  %v9174 = vmul.f32 %v9150, 0.21300554
  %v9175 = vmul.f32 %v9151, 0.21300554
  %v9176 = vmul.f32 %v9152, 0.21300554
  %9201 = vrot.lane.b32.xlu0 %v9153, 1
  %v9202 = vpop.permute.xlu0 %9201
  %9203 = vrot.lane.b32.xlu0 %v9154, 1
  %v9204 = vpop.permute.xlu0 %9203
  %9205 = vrot.lane.b32.xlu0 %v9155, 1
  %v9206 = vpop.permute.xlu0 %9205
  %9207 = vrot.lane.b32.xlu0 %v9156, 1
  %v9208 = vpop.permute.xlu0 %9207
  %9209 = vrot.lane.b32.xlu0 %v9157, 1
  %v9210 = vpop.permute.xlu0 %9209
  %9211 = vrot.lane.b32.xlu0 %v9158, 1
  %v9212 = vpop.permute.xlu0 %9211
  %9213 = vrot.lane.b32.xlu0 %v9159, 1
  %v9214 = vpop.permute.xlu0 %9213
  %9215 = vrot.lane.b32.xlu0 %v9160, 1
  %v9216 = vpop.permute.xlu0 %9215
  %9217 = vrot.lane.b32.xlu0 %v9161, 1
  %v9218 = vpop.permute.xlu0 %9217
  %9219 = vrot.lane.b32.xlu0 %v9162, 1
  %v9220 = vpop.permute.xlu0 %9219
  %9221 = vrot.lane.b32.xlu0 %v9163, 1
  %v9222 = vpop.permute.xlu0 %9221
  %9223 = vrot.lane.b32.xlu0 %v9164, 1
  %v9224 = vpop.permute.xlu0 %9223
  %9225 = vrot.lane.b32.xlu0 %v9165, 1
  %v9226 = vpop.permute.xlu0 %9225
  %9227 = vrot.lane.b32.xlu0 %v9166, 1
  %v9228 = vpop.permute.xlu0 %9227
  %9229 = vrot.lane.b32.xlu0 %v9167, 1
  %v9230 = vpop.permute.xlu0 %9229
  %9231 = vrot.lane.b32.xlu0 %v9168, 1
  %v9232 = vpop.permute.xlu0 %9231
  %9233 = vrot.lane.b32.xlu0 %v9169, 1
  %v9234 = vpop.permute.xlu0 %9233
  %9235 = vrot.lane.b32.xlu0 %v9170, 1
  %v9236 = vpop.permute.xlu0 %9235
  %9237 = vrot.lane.b32.xlu0 %v9171, 1
  %v9238 = vpop.permute.xlu0 %9237
  %9239 = vrot.lane.b32.xlu0 %v9172, 1
  %v9240 = vpop.permute.xlu0 %9239
  %9241 = vrot.lane.b32.xlu0 %v9173, 1
  %v9242 = vpop.permute.xlu0 %9241
  %9243 = vrot.lane.b32.xlu0 %v9174, 1
  %v9244 = vpop.permute.xlu0 %9243
  %9245 = vrot.lane.b32.xlu0 %v9175, 1
  %v9246 = vpop.permute.xlu0 %9245
  %9247 = vrot.lane.b32.xlu0 %v9176, 1
  %v9248 = vpop.permute.xlu0 %9247
  %v9273 = vadd.f32 %v9033, %v9202
  %v9274 = vadd.f32 %v9034, %v9204
  %v9275 = vadd.f32 %v9035, %v9206
  %v9276 = vadd.f32 %v9036, %v9208
  %v9277 = vadd.f32 %v9037, %v9210
  %v9278 = vadd.f32 %v9038, %v9212
  %v9279 = vadd.f32 %v9039, %v9214
  %v9280 = vadd.f32 %v9040, %v9216
  %v9281 = vadd.f32 %v9041, %v9218
  %v9282 = vadd.f32 %v9042, %v9220
  %v9283 = vadd.f32 %v9043, %v9222
  %v9284 = vadd.f32 %v9044, %v9224
  %v9285 = vadd.f32 %v9045, %v9226
  %v9286 = vadd.f32 %v9046, %v9228
  %v9287 = vadd.f32 %v9047, %v9230
  %v9288 = vadd.f32 %v9048, %v9232
  %v9289 = vadd.f32 %v9049, %v9234
  %v9290 = vadd.f32 %v9050, %v9236
  %v9291 = vadd.f32 %v9051, %v9238
  %v9292 = vadd.f32 %v9052, %v9240
  %v9293 = vadd.f32 %v9053, %v9242
  %v9294 = vadd.f32 %v9054, %v9244
  %v9295 = vadd.f32 %v9055, %v9246
  %v9296 = vadd.f32 %v9056, %v9248
  %v9297 = vsub.f32 %v9273, %v4633
  %v9298 = vsub.f32 %v9274, %v4634
  %v9299 = vsub.f32 %v9275, %v4635
  %v9300 = vsub.f32 %v9276, %v4636
  %v9301 = vsub.f32 %v9277, %v4637
  %v9302 = vsub.f32 %v9278, %v4638
  %v9303 = vsub.f32 %v9279, %v4639
  %v9304 = vsub.f32 %v9280, %v4640
  %v9305 = vsub.f32 %v9281, %v4641
  %v9306 = vsub.f32 %v9282, %v4642
  %v9307 = vsub.f32 %v9283, %v4643
  %v9308 = vsub.f32 %v9284, %v4644
  %v9309 = vsub.f32 %v9285, %v4645
  %v9310 = vsub.f32 %v9286, %v4646
  %v9311 = vsub.f32 %v9287, %v4647
  %v9312 = vsub.f32 %v9288, %v4648
  %v9313 = vsub.f32 %v9289, %v4649
  %v9314 = vsub.f32 %v9290, %v4650
  %v9315 = vsub.f32 %v9291, %v4651
  %v9316 = vsub.f32 %v9292, %v4652
  %v9317 = vsub.f32 %v9293, %v4653
  %v9318 = vsub.f32 %v9294, %v4654
  %v9319 = vsub.f32 %v9295, %v4655
  %v9320 = vsub.f32 %v9296, %v4656
  %v9321 = vmul.f32 %v11, %v43
  %v9322 = vmul.f32 %v12, %v44
  %v9323 = vmul.f32 %v13, %v45
  %v9324 = vmul.f32 %v14, %v46
  %v9325 = vmul.f32 %v15, %v47
  %v9326 = vmul.f32 %v16, %v48
  %v9327 = vmul.f32 %v17, %v49
  %v9328 = vmul.f32 %v18, %v50
  %v9329 = vmul.f32 %v19, %v51
  %v9330 = vmul.f32 %v20, %v52
  %v9331 = vmul.f32 %v21, %v53
  %v9332 = vmul.f32 %v22, %v54
  %v9333 = vmul.f32 %v23, %v55
  %v9334 = vmul.f32 %v24, %v56
  %v9335 = vmul.f32 %v25, %v57
  %v9336 = vmul.f32 %v26, %v58
  %v9337 = vmul.f32 %v27, %v59
  %v9338 = vmul.f32 %v28, %v60
  %v9339 = vmul.f32 %v29, %v61
  %v9340 = vmul.f32 %v30, %v62
  %v9341 = vmul.f32 %v31, %v63
  %v9342 = vmul.f32 %v32, %v64
  %v9343 = vmul.f32 %v33, %v65
  %v9344 = vmul.f32 %v34, %v66
  %v9345 = vmul.f32 %v35, %v67
  %v9346 = vmul.f32 %v36, %v68
  %v9347 = vmul.f32 %v37, %v69
  %v9348 = vmul.f32 %v38, %v70
  %v9349 = vmul.f32 %v39, %v71
  %v9350 = vmul.f32 %v40, %v72
  %v9351 = vmul.f32 %v41, %v73
  %v9352 = vmul.f32 %v42, %v74
  %v9353 = vmul.f32 %v9321, 0.26601171
  %v9354 = vmul.f32 %v9322, 0.26601171
  %v9355 = vmul.f32 %v9323, 0.26601171
  %v9356 = vmul.f32 %v9325, 0.26601171
  %v9357 = vmul.f32 %v9326, 0.26601171
  %v9358 = vmul.f32 %v9327, 0.26601171
  %v9359 = vmul.f32 %v9329, 0.26601171
  %v9360 = vmul.f32 %v9330, 0.26601171
  %v9361 = vmul.f32 %v9331, 0.26601171
  %v9362 = vmul.f32 %v9333, 0.26601171
  %v9363 = vmul.f32 %v9334, 0.26601171
  %v9364 = vmul.f32 %v9335, 0.26601171
  %v9365 = vmul.f32 %v9337, 0.26601171
  %v9366 = vmul.f32 %v9338, 0.26601171
  %v9367 = vmul.f32 %v9339, 0.26601171
  %v9368 = vmul.f32 %v9341, 0.26601171
  %v9369 = vmul.f32 %v9342, 0.26601171
  %v9370 = vmul.f32 %v9343, 0.26601171
  %v9371 = vmul.f32 %v9345, 0.26601171
  %v9372 = vmul.f32 %v9346, 0.26601171
  %v9373 = vmul.f32 %v9347, 0.26601171
  %v9374 = vmul.f32 %v9349, 0.26601171
  %v9375 = vmul.f32 %v9350, 0.26601171
  %v9376 = vmul.f32 %v9351, 0.26601171
  %v9401 = vrot.slane %v9322, 2
  %v9402 = vrot.slane %v9323, 2
  %v9403 = vsel %vm123, %v9401, %v9402
  %v9404 = vrot.slane %v9324, 2
  %v9405 = vsel %vm123, %v9402, %v9404
  %v9406 = vrot.slane %v9326, 2
  %v9407 = vrot.slane %v9327, 2
  %v9408 = vsel %vm123, %v9406, %v9407
  %v9409 = vrot.slane %v9328, 2
  %v9410 = vsel %vm123, %v9407, %v9409
  %v9411 = vrot.slane %v9330, 2
  %v9412 = vrot.slane %v9331, 2
  %v9413 = vsel %vm123, %v9411, %v9412
  %v9414 = vrot.slane %v9332, 2
  %v9415 = vsel %vm123, %v9412, %v9414
  %v9416 = vrot.slane %v9334, 2
  %v9417 = vrot.slane %v9335, 2
  %v9418 = vsel %vm123, %v9416, %v9417
  %v9419 = vrot.slane %v9336, 2
  %v9420 = vsel %vm123, %v9417, %v9419
  %v9421 = vrot.slane %v9338, 2
  %v9422 = vrot.slane %v9339, 2
  %v9423 = vsel %vm123, %v9421, %v9422
  %v9424 = vrot.slane %v9340, 2
  %v9425 = vsel %vm123, %v9422, %v9424
  %v9426 = vrot.slane %v9342, 2
  %v9427 = vrot.slane %v9343, 2
  %v9428 = vsel %vm123, %v9426, %v9427
  %v9429 = vrot.slane %v9344, 2
  %v9430 = vsel %vm123, %v9427, %v9429
  %v9431 = vrot.slane %v9346, 2
  %v9432 = vrot.slane %v9347, 2
  %v9433 = vsel %vm123, %v9431, %v9432
  %v9434 = vrot.slane %v9348, 2
  %v9435 = vsel %vm123, %v9432, %v9434
  %v9436 = vrot.slane %v9350, 2
  %v9437 = vrot.slane %v9351, 2
  %v9438 = vsel %vm123, %v9436, %v9437
  %v9439 = vrot.slane %v9352, 2
  %v9440 = vsel %vm123, %v9437, %v9439
  %v9457 = vadd.f32 %v9321, %v9403
  %v9458 = vadd.f32 %v9322, %v9405
  %v9459 = vadd.f32 %v9325, %v9408
  %v9460 = vadd.f32 %v9326, %v9410
  %v9461 = vadd.f32 %v9329, %v9413
  %v9462 = vadd.f32 %v9330, %v9415
  %v9463 = vadd.f32 %v9333, %v9418
  %v9464 = vadd.f32 %v9334, %v9420
  %v9465 = vadd.f32 %v9337, %v9423
  %v9466 = vadd.f32 %v9338, %v9425
  %v9467 = vadd.f32 %v9341, %v9428
  %v9468 = vadd.f32 %v9342, %v9430
  %v9469 = vadd.f32 %v9345, %v9433
  %v9470 = vadd.f32 %v9346, %v9435
  %v9471 = vadd.f32 %v9349, %v9438
  %v9472 = vadd.f32 %v9350, %v9440
  %v9473 = vmul.f32 %v9457, 0.0010283801
  %v9474 = vmul.f32 %v9458, 0.0010283801
  %v9475 = vmul.f32 %v9459, 0.0010283801
  %v9476 = vmul.f32 %v9460, 0.0010283801
  %v9477 = vmul.f32 %v9461, 0.0010283801
  %v9478 = vmul.f32 %v9462, 0.0010283801
  %v9479 = vmul.f32 %v9463, 0.0010283801
  %v9480 = vmul.f32 %v9464, 0.0010283801
  %v9481 = vmul.f32 %v9465, 0.0010283801
  %v9482 = vmul.f32 %v9466, 0.0010283801
  %v9483 = vmul.f32 %v9467, 0.0010283801
  %v9484 = vmul.f32 %v9468, 0.0010283801
  %v9485 = vmul.f32 %v9469, 0.0010283801
  %v9486 = vmul.f32 %v9470, 0.0010283801
  %v9487 = vmul.f32 %v9471, 0.0010283801
  %v9488 = vmul.f32 %v9472, 0.0010283801
  %v9505 = vrot.slane %v9473, 3
  %v9506 = vrot.slane %v9474, 3
  %v9507 = vsel %vm228, %v9505, %v9506
  %v9508 = vrot.slane %v9475, 3
  %v9509 = vrot.slane %v9476, 3
  %v9510 = vsel %vm228, %v9508, %v9509
  %v9511 = vrot.slane %v9477, 3
  %v9512 = vrot.slane %v9478, 3
  %v9513 = vsel %vm228, %v9511, %v9512
  %v9514 = vrot.slane %v9479, 3
  %v9515 = vrot.slane %v9480, 3
  %v9516 = vsel %vm228, %v9514, %v9515
  %v9517 = vrot.slane %v9481, 3
  %v9518 = vrot.slane %v9482, 3
  %v9519 = vsel %vm228, %v9517, %v9518
  %v9520 = vrot.slane %v9483, 3
  %v9521 = vrot.slane %v9484, 3
  %v9522 = vsel %vm228, %v9520, %v9521
  %v9523 = vrot.slane %v9485, 3
  %v9524 = vrot.slane %v9486, 3
  %v9525 = vsel %vm228, %v9523, %v9524
  %v9526 = vrot.slane %v9487, 3
  %v9527 = vrot.slane %v9488, 3
  %v9528 = vsel %vm228, %v9526, %v9527
  %v9553 = vadd.f32 %v9353, %v9505
  %v9554 = vadd.f32 %v9354, %v9507
  %v9555 = vadd.f32 %v9355, %v9506
  %v9556 = vadd.f32 %v9356, %v9508
  %v9557 = vadd.f32 %v9357, %v9510
  %v9558 = vadd.f32 %v9358, %v9509
  %v9559 = vadd.f32 %v9359, %v9511
  %v9560 = vadd.f32 %v9360, %v9513
  %v9561 = vadd.f32 %v9361, %v9512
  %v9562 = vadd.f32 %v9362, %v9514
  %v9563 = vadd.f32 %v9363, %v9516
  %v9564 = vadd.f32 %v9364, %v9515
  %v9565 = vadd.f32 %v9365, %v9517
  %v9566 = vadd.f32 %v9366, %v9519
  %v9567 = vadd.f32 %v9367, %v9518
  %v9568 = vadd.f32 %v9368, %v9520
  %v9569 = vadd.f32 %v9369, %v9522
  %v9570 = vadd.f32 %v9370, %v9521
  %v9571 = vadd.f32 %v9371, %v9523
  %v9572 = vadd.f32 %v9372, %v9525
  %v9573 = vadd.f32 %v9373, %v9524
  %v9574 = vadd.f32 %v9374, %v9526
  %v9575 = vadd.f32 %v9375, %v9528
  %v9576 = vadd.f32 %v9376, %v9527
  %v9577 = vadd.f32 %v9321, %v9322
  %v9578 = vadd.f32 %v9322, %v9323
  %v9579 = vadd.f32 %v9323, %v9324
  %v9580 = vadd.f32 %v9325, %v9326
  %v9581 = vadd.f32 %v9326, %v9327
  %v9582 = vadd.f32 %v9327, %v9328
  %v9583 = vadd.f32 %v9329, %v9330
  %v9584 = vadd.f32 %v9330, %v9331
  %v9585 = vadd.f32 %v9331, %v9332
  %v9586 = vadd.f32 %v9333, %v9334
  %v9587 = vadd.f32 %v9334, %v9335
  %v9588 = vadd.f32 %v9335, %v9336
  %v9589 = vadd.f32 %v9337, %v9338
  %v9590 = vadd.f32 %v9338, %v9339
  %v9591 = vadd.f32 %v9339, %v9340
  %v9592 = vadd.f32 %v9341, %v9342
  %v9593 = vadd.f32 %v9342, %v9343
  %v9594 = vadd.f32 %v9343, %v9344
  %v9595 = vadd.f32 %v9345, %v9346
  %v9596 = vadd.f32 %v9346, %v9347
  %v9597 = vadd.f32 %v9347, %v9348
  %v9598 = vadd.f32 %v9349, %v9350
  %v9599 = vadd.f32 %v9350, %v9351
  %v9600 = vadd.f32 %v9351, %v9352
  %v9601 = vmul.f32 %v9577, 0.007598758
  %v9602 = vmul.f32 %v9578, 0.007598758
  %v9603 = vmul.f32 %v9579, 0.007598758
  %v9604 = vmul.f32 %v9580, 0.007598758
  %v9605 = vmul.f32 %v9581, 0.007598758
  %v9606 = vmul.f32 %v9582, 0.007598758
  %v9607 = vmul.f32 %v9583, 0.007598758
  %v9608 = vmul.f32 %v9584, 0.007598758
  %v9609 = vmul.f32 %v9585, 0.007598758
  %v9610 = vmul.f32 %v9586, 0.007598758
  %v9611 = vmul.f32 %v9587, 0.007598758
  %v9612 = vmul.f32 %v9588, 0.007598758
  %v9613 = vmul.f32 %v9589, 0.007598758
  %v9614 = vmul.f32 %v9590, 0.007598758
  %v9615 = vmul.f32 %v9591, 0.007598758
  %v9616 = vmul.f32 %v9592, 0.007598758
  %v9617 = vmul.f32 %v9593, 0.007598758
  %v9618 = vmul.f32 %v9594, 0.007598758
  %v9619 = vmul.f32 %v9595, 0.007598758
  %v9620 = vmul.f32 %v9596, 0.007598758
  %v9621 = vmul.f32 %v9597, 0.007598758
  %v9622 = vmul.f32 %v9598, 0.007598758
  %v9623 = vmul.f32 %v9599, 0.007598758
  %v9624 = vmul.f32 %v9600, 0.007598758
  %v9649 = vrot.slane %v9601, 4
  %v9650 = vrot.slane %v9602, 4
  %v9651 = vsel %vm373, %v9649, %v9650
  %v9652 = vrot.slane %v9603, 4
  %v9653 = vsel %vm373, %v9650, %v9652
  %v9654 = vrot.slane %v9604, 4
  %v9655 = vrot.slane %v9605, 4
  %v9656 = vsel %vm373, %v9654, %v9655
  %v9657 = vrot.slane %v9606, 4
  %v9658 = vsel %vm373, %v9655, %v9657
  %v9659 = vrot.slane %v9607, 4
  %v9660 = vrot.slane %v9608, 4
  %v9661 = vsel %vm373, %v9659, %v9660
  %v9662 = vrot.slane %v9609, 4
  %v9663 = vsel %vm373, %v9660, %v9662
  %v9664 = vrot.slane %v9610, 4
  %v9665 = vrot.slane %v9611, 4
  %v9666 = vsel %vm373, %v9664, %v9665
  %v9667 = vrot.slane %v9612, 4
  %v9668 = vsel %vm373, %v9665, %v9667
  %v9669 = vrot.slane %v9613, 4
  %v9670 = vrot.slane %v9614, 4
  %v9671 = vsel %vm373, %v9669, %v9670
  %v9672 = vrot.slane %v9615, 4
  %v9673 = vsel %vm373, %v9670, %v9672
  %v9674 = vrot.slane %v9616, 4
  %v9675 = vrot.slane %v9617, 4
  %v9676 = vsel %vm373, %v9674, %v9675
  %v9677 = vrot.slane %v9618, 4
  %v9678 = vsel %vm373, %v9675, %v9677
  %v9679 = vrot.slane %v9619, 4
  %v9680 = vrot.slane %v9620, 4
  %v9681 = vsel %vm373, %v9679, %v9680
  %v9682 = vrot.slane %v9621, 4
  %v9683 = vsel %vm373, %v9680, %v9682
  %v9684 = vrot.slane %v9622, 4
  %v9685 = vrot.slane %v9623, 4
  %v9686 = vsel %vm373, %v9684, %v9685
  %v9687 = vrot.slane %v9624, 4
  %v9688 = vsel %vm373, %v9685, %v9687
  %v9713 = vadd.f32 %v9553, %v9649
  %v9714 = vadd.f32 %v9554, %v9651
  %v9715 = vadd.f32 %v9555, %v9653
  %v9716 = vadd.f32 %v9556, %v9654
  %v9717 = vadd.f32 %v9557, %v9656
  %v9718 = vadd.f32 %v9558, %v9658
  %v9719 = vadd.f32 %v9559, %v9659
  %v9720 = vadd.f32 %v9560, %v9661
  %v9721 = vadd.f32 %v9561, %v9663
  %v9722 = vadd.f32 %v9562, %v9664
  %v9723 = vadd.f32 %v9563, %v9666
  %v9724 = vadd.f32 %v9564, %v9668
  %v9725 = vadd.f32 %v9565, %v9669
  %v9726 = vadd.f32 %v9566, %v9671
  %v9727 = vadd.f32 %v9567, %v9673
  %v9728 = vadd.f32 %v9568, %v9674
  %v9729 = vadd.f32 %v9569, %v9676
  %v9730 = vadd.f32 %v9570, %v9678
  %v9731 = vadd.f32 %v9571, %v9679
  %v9732 = vadd.f32 %v9572, %v9681
  %v9733 = vadd.f32 %v9573, %v9683
  %v9734 = vadd.f32 %v9574, %v9684
  %v9735 = vadd.f32 %v9575, %v9686
  %v9736 = vadd.f32 %v9576, %v9688
  %v9737 = vrot.slane %v9322, 6
  %v9738 = vrot.slane %v9323, 6
  %v9739 = vsel %vm462, %v9737, %v9738
  %v9740 = vrot.slane %v9326, 6
  %v9741 = vrot.slane %v9327, 6
  %v9742 = vsel %vm462, %v9740, %v9741
  %v9743 = vrot.slane %v9330, 6
  %v9744 = vrot.slane %v9331, 6
  %v9745 = vsel %vm462, %v9743, %v9744
  %v9746 = vrot.slane %v9334, 6
  %v9747 = vrot.slane %v9335, 6
  %v9748 = vsel %vm462, %v9746, %v9747
  %v9749 = vrot.slane %v9338, 6
  %v9750 = vrot.slane %v9339, 6
  %v9751 = vsel %vm462, %v9749, %v9750
  %v9752 = vrot.slane %v9342, 6
  %v9753 = vrot.slane %v9343, 6
  %v9754 = vsel %vm462, %v9752, %v9753
  %v9755 = vrot.slane %v9346, 6
  %v9756 = vrot.slane %v9347, 6
  %v9757 = vsel %vm462, %v9755, %v9756
  %v9758 = vrot.slane %v9350, 6
  %v9759 = vrot.slane %v9351, 6
  %v9760 = vsel %vm462, %v9758, %v9759
  %v9785 = vadd.f32 %v9321, %v9737
  %v9786 = vadd.f32 %v9322, %v9739
  %v9787 = vadd.f32 %v9323, %v9738
  %v9788 = vadd.f32 %v9325, %v9740
  %v9789 = vadd.f32 %v9326, %v9742
  %v9790 = vadd.f32 %v9327, %v9741
  %v9791 = vadd.f32 %v9329, %v9743
  %v9792 = vadd.f32 %v9330, %v9745
  %v9793 = vadd.f32 %v9331, %v9744
  %v9794 = vadd.f32 %v9333, %v9746
  %v9795 = vadd.f32 %v9334, %v9748
  %v9796 = vadd.f32 %v9335, %v9747
  %v9797 = vadd.f32 %v9337, %v9749
  %v9798 = vadd.f32 %v9338, %v9751
  %v9799 = vadd.f32 %v9339, %v9750
  %v9800 = vadd.f32 %v9341, %v9752
  %v9801 = vadd.f32 %v9342, %v9754
  %v9802 = vadd.f32 %v9343, %v9753
  %v9803 = vadd.f32 %v9345, %v9755
  %v9804 = vadd.f32 %v9346, %v9757
  %v9805 = vadd.f32 %v9347, %v9756
  %v9806 = vadd.f32 %v9349, %v9758
  %v9807 = vadd.f32 %v9350, %v9760
  %v9808 = vadd.f32 %v9351, %v9759
  %v9809 = vmul.f32 %v9785, 0.036000773
  %v9810 = vmul.f32 %v9786, 0.036000773
  %v9811 = vmul.f32 %v9787, 0.036000773
  %v9812 = vmul.f32 %v9788, 0.036000773
  %v9813 = vmul.f32 %v9789, 0.036000773
  %v9814 = vmul.f32 %v9790, 0.036000773
  %v9815 = vmul.f32 %v9791, 0.036000773
  %v9816 = vmul.f32 %v9792, 0.036000773
  %v9817 = vmul.f32 %v9793, 0.036000773
  %v9818 = vmul.f32 %v9794, 0.036000773
  %v9819 = vmul.f32 %v9795, 0.036000773
  %v9820 = vmul.f32 %v9796, 0.036000773
  %v9821 = vmul.f32 %v9797, 0.036000773
  %v9822 = vmul.f32 %v9798, 0.036000773
  %v9823 = vmul.f32 %v9799, 0.036000773
  %v9824 = vmul.f32 %v9800, 0.036000773
  %v9825 = vmul.f32 %v9801, 0.036000773
  %v9826 = vmul.f32 %v9802, 0.036000773
  %v9827 = vmul.f32 %v9803, 0.036000773
  %v9828 = vmul.f32 %v9804, 0.036000773
  %v9829 = vmul.f32 %v9805, 0.036000773
  %v9830 = vmul.f32 %v9806, 0.036000773
  %v9831 = vmul.f32 %v9807, 0.036000773
  %v9832 = vmul.f32 %v9808, 0.036000773
  %v9857 = vrot.slane %v9809, 5
  %v9858 = vrot.slane %v9810, 5
  %v9859 = vsel %vm583, %v9857, %v9858
  %v9860 = vrot.slane %v9811, 5
  %v9861 = vsel %vm583, %v9858, %v9860
  %v9862 = vrot.slane %v9812, 5
  %v9863 = vrot.slane %v9813, 5
  %v9864 = vsel %vm583, %v9862, %v9863
  %v9865 = vrot.slane %v9814, 5
  %v9866 = vsel %vm583, %v9863, %v9865
  %v9867 = vrot.slane %v9815, 5
  %v9868 = vrot.slane %v9816, 5
  %v9869 = vsel %vm583, %v9867, %v9868
  %v9870 = vrot.slane %v9817, 5
  %v9871 = vsel %vm583, %v9868, %v9870
  %v9872 = vrot.slane %v9818, 5
  %v9873 = vrot.slane %v9819, 5
  %v9874 = vsel %vm583, %v9872, %v9873
  %v9875 = vrot.slane %v9820, 5
  %v9876 = vsel %vm583, %v9873, %v9875
  %v9877 = vrot.slane %v9821, 5
  %v9878 = vrot.slane %v9822, 5
  %v9879 = vsel %vm583, %v9877, %v9878
  %v9880 = vrot.slane %v9823, 5
  %v9881 = vsel %vm583, %v9878, %v9880
  %v9882 = vrot.slane %v9824, 5
  %v9883 = vrot.slane %v9825, 5
  %v9884 = vsel %vm583, %v9882, %v9883
  %v9885 = vrot.slane %v9826, 5
  %v9886 = vsel %vm583, %v9883, %v9885
  %v9887 = vrot.slane %v9827, 5
  %v9888 = vrot.slane %v9828, 5
  %v9889 = vsel %vm583, %v9887, %v9888
  %v9890 = vrot.slane %v9829, 5
  %v9891 = vsel %vm583, %v9888, %v9890
  %v9892 = vrot.slane %v9830, 5
  %v9893 = vrot.slane %v9831, 5
  %v9894 = vsel %vm583, %v9892, %v9893
  %v9895 = vrot.slane %v9832, 5
  %v9896 = vsel %vm583, %v9893, %v9895
  %v9921 = vadd.f32 %v9713, %v9857
  %v9922 = vadd.f32 %v9714, %v9859
  %v9923 = vadd.f32 %v9715, %v9861
  %v9924 = vadd.f32 %v9716, %v9862
  %v9925 = vadd.f32 %v9717, %v9864
  %v9926 = vadd.f32 %v9718, %v9866
  %v9927 = vadd.f32 %v9719, %v9867
  %v9928 = vadd.f32 %v9720, %v9869
  %v9929 = vadd.f32 %v9721, %v9871
  %v9930 = vadd.f32 %v9722, %v9872
  %v9931 = vadd.f32 %v9723, %v9874
  %v9932 = vadd.f32 %v9724, %v9876
  %v9933 = vadd.f32 %v9725, %v9877
  %v9934 = vadd.f32 %v9726, %v9879
  %v9935 = vadd.f32 %v9727, %v9881
  %v9936 = vadd.f32 %v9728, %v9882
  %v9937 = vadd.f32 %v9729, %v9884
  %v9938 = vadd.f32 %v9730, %v9886
  %v9939 = vadd.f32 %v9731, %v9887
  %v9940 = vadd.f32 %v9732, %v9889
  %v9941 = vadd.f32 %v9733, %v9891
  %v9942 = vadd.f32 %v9734, %v9892
  %v9943 = vadd.f32 %v9735, %v9894
  %v9944 = vadd.f32 %v9736, %v9896
  %v9953 = vrot.slane %v9321, 4
  %v9954 = vrot.slane %v9322, 4
  %v9955 = vsel %vm373, %v9953, %v9954
  %v9956 = vrot.slane %v9323, 4
  %v9957 = vsel %vm373, %v9954, %v9956
  %v9958 = vrot.slane %v9325, 4
  %v9959 = vrot.slane %v9326, 4
  %v9960 = vsel %vm373, %v9958, %v9959
  %v9961 = vrot.slane %v9327, 4
  %v9962 = vsel %vm373, %v9959, %v9961
  %v9963 = vrot.slane %v9329, 4
  %v9964 = vrot.slane %v9330, 4
  %v9965 = vsel %vm373, %v9963, %v9964
  %v9966 = vrot.slane %v9331, 4
  %v9967 = vsel %vm373, %v9964, %v9966
  %v9968 = vrot.slane %v9333, 4
  %v9969 = vrot.slane %v9334, 4
  %v9970 = vsel %vm373, %v9968, %v9969
  %v9971 = vrot.slane %v9335, 4
  %v9972 = vsel %vm373, %v9969, %v9971
  %v9973 = vrot.slane %v9337, 4
  %v9974 = vrot.slane %v9338, 4
  %v9975 = vsel %vm373, %v9973, %v9974
  %v9976 = vrot.slane %v9339, 4
  %v9977 = vsel %vm373, %v9974, %v9976
  %v9978 = vrot.slane %v9341, 4
  %v9979 = vrot.slane %v9342, 4
  %v9980 = vsel %vm373, %v9978, %v9979
  %v9981 = vrot.slane %v9343, 4
  %v9982 = vsel %vm373, %v9979, %v9981
  %v9983 = vrot.slane %v9345, 4
  %v9984 = vrot.slane %v9346, 4
  %v9985 = vsel %vm373, %v9983, %v9984
  %v9986 = vrot.slane %v9347, 4
  %v9987 = vsel %vm373, %v9984, %v9986
  %v9988 = vrot.slane %v9349, 4
  %v9989 = vrot.slane %v9350, 4
  %v9990 = vsel %vm373, %v9988, %v9989
  %v9991 = vrot.slane %v9351, 4
  %v9992 = vsel %vm373, %v9989, %v9991
  %v10017 = vadd.f32 %v9321, %v9955
  %v10018 = vadd.f32 %v9322, %v9957
  %v10019 = vadd.f32 %v9323, %v9956
  %v10020 = vadd.f32 %v9325, %v9960
  %v10021 = vadd.f32 %v9326, %v9962
  %v10022 = vadd.f32 %v9327, %v9961
  %v10023 = vadd.f32 %v9329, %v9965
  %v10024 = vadd.f32 %v9330, %v9967
  %v10025 = vadd.f32 %v9331, %v9966
  %v10026 = vadd.f32 %v9333, %v9970
  %v10027 = vadd.f32 %v9334, %v9972
  %v10028 = vadd.f32 %v9335, %v9971
  %v10029 = vadd.f32 %v9337, %v9975
  %v10030 = vadd.f32 %v9338, %v9977
  %v10031 = vadd.f32 %v9339, %v9976
  %v10032 = vadd.f32 %v9341, %v9980
  %v10033 = vadd.f32 %v9342, %v9982
  %v10034 = vadd.f32 %v9343, %v9981
  %v10035 = vadd.f32 %v9345, %v9985
  %v10036 = vadd.f32 %v9346, %v9987
  %v10037 = vadd.f32 %v9347, %v9986
  %v10038 = vadd.f32 %v9349, %v9990
  %v10039 = vadd.f32 %v9350, %v9992
  %v10040 = vadd.f32 %v9351, %v9991
  %v10041 = vmul.f32 %v10017, 0.10936069
  %v10042 = vmul.f32 %v10018, 0.10936069
  %v10043 = vmul.f32 %v10019, 0.10936069
  %v10044 = vmul.f32 %v10020, 0.10936069
  %v10045 = vmul.f32 %v10021, 0.10936069
  %v10046 = vmul.f32 %v10022, 0.10936069
  %v10047 = vmul.f32 %v10023, 0.10936069
  %v10048 = vmul.f32 %v10024, 0.10936069
  %v10049 = vmul.f32 %v10025, 0.10936069
  %v10050 = vmul.f32 %v10026, 0.10936069
  %v10051 = vmul.f32 %v10027, 0.10936069
  %v10052 = vmul.f32 %v10028, 0.10936069
  %v10053 = vmul.f32 %v10029, 0.10936069
  %v10054 = vmul.f32 %v10030, 0.10936069
  %v10055 = vmul.f32 %v10031, 0.10936069
  %v10056 = vmul.f32 %v10032, 0.10936069
  %v10057 = vmul.f32 %v10033, 0.10936069
  %v10058 = vmul.f32 %v10034, 0.10936069
  %v10059 = vmul.f32 %v10035, 0.10936069
  %v10060 = vmul.f32 %v10036, 0.10936069
  %v10061 = vmul.f32 %v10037, 0.10936069
  %v10062 = vmul.f32 %v10038, 0.10936069
  %v10063 = vmul.f32 %v10039, 0.10936069
  %v10064 = vmul.f32 %v10040, 0.10936069
  %v10089 = vrot.slane %v10041, 6
  %v10090 = vrot.slane %v10042, 6
  %v10091 = vsel %vm462, %v10089, %v10090
  %v10092 = vrot.slane %v10043, 6
  %v10093 = vsel %vm462, %v10090, %v10092
  %v10094 = vrot.slane %v10044, 6
  %v10095 = vrot.slane %v10045, 6
  %v10096 = vsel %vm462, %v10094, %v10095
  %v10097 = vrot.slane %v10046, 6
  %v10098 = vsel %vm462, %v10095, %v10097
  %v10099 = vrot.slane %v10047, 6
  %v10100 = vrot.slane %v10048, 6
  %v10101 = vsel %vm462, %v10099, %v10100
  %v10102 = vrot.slane %v10049, 6
  %v10103 = vsel %vm462, %v10100, %v10102
  %v10104 = vrot.slane %v10050, 6
  %v10105 = vrot.slane %v10051, 6
  %v10106 = vsel %vm462, %v10104, %v10105
  %v10107 = vrot.slane %v10052, 6
  %v10108 = vsel %vm462, %v10105, %v10107
  %v10109 = vrot.slane %v10053, 6
  %v10110 = vrot.slane %v10054, 6
  %v10111 = vsel %vm462, %v10109, %v10110
  %v10112 = vrot.slane %v10055, 6
  %v10113 = vsel %vm462, %v10110, %v10112
  %v10114 = vrot.slane %v10056, 6
  %v10115 = vrot.slane %v10057, 6
  %v10116 = vsel %vm462, %v10114, %v10115
  %v10117 = vrot.slane %v10058, 6
  %v10118 = vsel %vm462, %v10115, %v10117
  %v10119 = vrot.slane %v10059, 6
  %v10120 = vrot.slane %v10060, 6
  %v10121 = vsel %vm462, %v10119, %v10120
  %v10122 = vrot.slane %v10061, 6
  %v10123 = vsel %vm462, %v10120, %v10122
  %v10124 = vrot.slane %v10062, 6
  %v10125 = vrot.slane %v10063, 6
  %v10126 = vsel %vm462, %v10124, %v10125
  %v10127 = vrot.slane %v10064, 6
  %v10128 = vsel %vm462, %v10125, %v10127
  %v10153 = vadd.f32 %v9921, %v10089
  %v10154 = vadd.f32 %v9922, %v10091
  %v10155 = vadd.f32 %v9923, %v10093
  %v10156 = vadd.f32 %v9924, %v10094
  %v10157 = vadd.f32 %v9925, %v10096
  %v10158 = vadd.f32 %v9926, %v10098
  %v10159 = vadd.f32 %v9927, %v10099
  %v10160 = vadd.f32 %v9928, %v10101
  %v10161 = vadd.f32 %v9929, %v10103
  %v10162 = vadd.f32 %v9930, %v10104
  %v10163 = vadd.f32 %v9931, %v10106
  %v10164 = vadd.f32 %v9932, %v10108
  %v10165 = vadd.f32 %v9933, %v10109
  %v10166 = vadd.f32 %v9934, %v10111
  %v10167 = vadd.f32 %v9935, %v10113
  %v10168 = vadd.f32 %v9936, %v10114
  %v10169 = vadd.f32 %v9937, %v10116
  %v10170 = vadd.f32 %v9938, %v10118
  %v10171 = vadd.f32 %v9939, %v10119
  %v10172 = vadd.f32 %v9940, %v10121
  %v10173 = vadd.f32 %v9941, %v10123
  %v10174 = vadd.f32 %v9942, %v10124
  %v10175 = vadd.f32 %v9943, %v10126
  %v10176 = vadd.f32 %v9944, %v10128
  %v10177 = vrot.slane %v9321, 2
  %v10178 = vsel %vm123, %v10177, %v9401
  %v10179 = vrot.slane %v9325, 2
  %v10180 = vsel %vm123, %v10179, %v9406
  %v10181 = vrot.slane %v9329, 2
  %v10182 = vsel %vm123, %v10181, %v9411
  %v10183 = vrot.slane %v9333, 2
  %v10184 = vsel %vm123, %v10183, %v9416
  %v10185 = vrot.slane %v9337, 2
  %v10186 = vsel %vm123, %v10185, %v9421
  %v10187 = vrot.slane %v9341, 2
  %v10188 = vsel %vm123, %v10187, %v9426
  %v10189 = vrot.slane %v9345, 2
  %v10190 = vsel %vm123, %v10189, %v9431
  %v10191 = vrot.slane %v9349, 2
  %v10192 = vsel %vm123, %v10191, %v9436
  %v10209 = vadd.f32 %v9321, %v10178
  %v10210 = vadd.f32 %v9322, %v9403
  %v10211 = vadd.f32 %v9323, %v9402
  %v10212 = vadd.f32 %v9325, %v10180
  %v10213 = vadd.f32 %v9326, %v9408
  %v10214 = vadd.f32 %v9327, %v9407
  %v10215 = vadd.f32 %v9329, %v10182
  %v10216 = vadd.f32 %v9330, %v9413
  %v10217 = vadd.f32 %v9331, %v9412
  %v10218 = vadd.f32 %v9333, %v10184
  %v10219 = vadd.f32 %v9334, %v9418
  %v10220 = vadd.f32 %v9335, %v9417
  %v10221 = vadd.f32 %v9337, %v10186
  %v10222 = vadd.f32 %v9338, %v9423
  %v10223 = vadd.f32 %v9339, %v9422
  %v10224 = vadd.f32 %v9341, %v10188
  %v10225 = vadd.f32 %v9342, %v9428
  %v10226 = vadd.f32 %v9343, %v9427
  %v10227 = vadd.f32 %v9345, %v10190
  %v10228 = vadd.f32 %v9346, %v9433
  %v10229 = vadd.f32 %v9347, %v9432
  %v10230 = vadd.f32 %v9349, %v10192
  %v10231 = vadd.f32 %v9350, %v9438
  %v10232 = vadd.f32 %v9351, %v9437
  %v10233 = vmul.f32 %v10209, 0.21300554
  %v10234 = vmul.f32 %v10210, 0.21300554
  %v10235 = vmul.f32 %v10211, 0.21300554
  %v10236 = vmul.f32 %v10212, 0.21300554
  %v10237 = vmul.f32 %v10213, 0.21300554
  %v10238 = vmul.f32 %v10214, 0.21300554
  %v10239 = vmul.f32 %v10215, 0.21300554
  %v10240 = vmul.f32 %v10216, 0.21300554
  %v10241 = vmul.f32 %v10217, 0.21300554
  %v10242 = vmul.f32 %v10218, 0.21300554
  %v10243 = vmul.f32 %v10219, 0.21300554
  %v10244 = vmul.f32 %v10220, 0.21300554
  %v10245 = vmul.f32 %v10221, 0.21300554
  %v10246 = vmul.f32 %v10222, 0.21300554
  %v10247 = vmul.f32 %v10223, 0.21300554
  %v10248 = vmul.f32 %v10224, 0.21300554
  %v10249 = vmul.f32 %v10225, 0.21300554
  %v10250 = vmul.f32 %v10226, 0.21300554
  %v10251 = vmul.f32 %v10227, 0.21300554
  %v10252 = vmul.f32 %v10228, 0.21300554
  %v10253 = vmul.f32 %v10229, 0.21300554
  %v10254 = vmul.f32 %v10230, 0.21300554
  %v10255 = vmul.f32 %v10231, 0.21300554
  %v10256 = vmul.f32 %v10232, 0.21300554
  %v10281 = vrot.slane %v10233, 7
  %v10282 = vrot.slane %v10234, 7
  %v10283 = vsel %vm1008, %v10281, %v10282
  %v10284 = vrot.slane %v10235, 7
  %v10285 = vsel %vm1008, %v10282, %v10284
  %v10286 = vrot.slane %v10236, 7
  %v10287 = vrot.slane %v10237, 7
  %v10288 = vsel %vm1008, %v10286, %v10287
  %v10289 = vrot.slane %v10238, 7
  %v10290 = vsel %vm1008, %v10287, %v10289
  %v10291 = vrot.slane %v10239, 7
  %v10292 = vrot.slane %v10240, 7
  %v10293 = vsel %vm1008, %v10291, %v10292
  %v10294 = vrot.slane %v10241, 7
  %v10295 = vsel %vm1008, %v10292, %v10294
  %v10296 = vrot.slane %v10242, 7
  %v10297 = vrot.slane %v10243, 7
  %v10298 = vsel %vm1008, %v10296, %v10297
  %v10299 = vrot.slane %v10244, 7
  %v10300 = vsel %vm1008, %v10297, %v10299
  %v10301 = vrot.slane %v10245, 7
  %v10302 = vrot.slane %v10246, 7
  %v10303 = vsel %vm1008, %v10301, %v10302
  %v10304 = vrot.slane %v10247, 7
  %v10305 = vsel %vm1008, %v10302, %v10304
  %v10306 = vrot.slane %v10248, 7
  %v10307 = vrot.slane %v10249, 7
  %v10308 = vsel %vm1008, %v10306, %v10307
  %v10309 = vrot.slane %v10250, 7
  %v10310 = vsel %vm1008, %v10307, %v10309
  %v10311 = vrot.slane %v10251, 7
  %v10312 = vrot.slane %v10252, 7
  %v10313 = vsel %vm1008, %v10311, %v10312
  %v10314 = vrot.slane %v10253, 7
  %v10315 = vsel %vm1008, %v10312, %v10314
  %v10316 = vrot.slane %v10254, 7
  %v10317 = vrot.slane %v10255, 7
  %v10318 = vsel %vm1008, %v10316, %v10317
  %v10319 = vrot.slane %v10256, 7
  %v10320 = vsel %vm1008, %v10317, %v10319
  %v10345 = vadd.f32 %v10153, %v10281
  %v10346 = vadd.f32 %v10154, %v10283
  %v10347 = vadd.f32 %v10155, %v10285
  %v10348 = vadd.f32 %v10156, %v10286
  %v10349 = vadd.f32 %v10157, %v10288
  %v10350 = vadd.f32 %v10158, %v10290
  %v10351 = vadd.f32 %v10159, %v10291
  %v10352 = vadd.f32 %v10160, %v10293
  %v10353 = vadd.f32 %v10161, %v10295
  %v10354 = vadd.f32 %v10162, %v10296
  %v10355 = vadd.f32 %v10163, %v10298
  %v10356 = vadd.f32 %v10164, %v10300
  %v10357 = vadd.f32 %v10165, %v10301
  %v10358 = vadd.f32 %v10166, %v10303
  %v10359 = vadd.f32 %v10167, %v10305
  %v10360 = vadd.f32 %v10168, %v10306
  %v10361 = vadd.f32 %v10169, %v10308
  %v10362 = vadd.f32 %v10170, %v10310
  %v10363 = vadd.f32 %v10171, %v10311
  %v10364 = vadd.f32 %v10172, %v10313
  %v10365 = vadd.f32 %v10173, %v10315
  %v10366 = vadd.f32 %v10174, %v10316
  %v10367 = vadd.f32 %v10175, %v10318
  %v10368 = vadd.f32 %v10176, %v10320
  %v10369 = vmul.f32 %v10345, 0.26601171
  %v10370 = vmul.f32 %v10346, 0.26601171
  %v10371 = vmul.f32 %v10347, 0.26601171
  %v10372 = vmul.f32 %v10348, 0.26601171
  %v10373 = vmul.f32 %v10349, 0.26601171
  %v10374 = vmul.f32 %v10350, 0.26601171
  %v10375 = vmul.f32 %v10351, 0.26601171
  %v10376 = vmul.f32 %v10352, 0.26601171
  %v10377 = vmul.f32 %v10353, 0.26601171
  %v10378 = vmul.f32 %v10354, 0.26601171
  %v10379 = vmul.f32 %v10355, 0.26601171
  %v10380 = vmul.f32 %v10356, 0.26601171
  %v10381 = vmul.f32 %v10357, 0.26601171
  %v10382 = vmul.f32 %v10358, 0.26601171
  %v10383 = vmul.f32 %v10359, 0.26601171
  %v10384 = vmul.f32 %v10360, 0.26601171
  %v10385 = vmul.f32 %v10361, 0.26601171
  %v10386 = vmul.f32 %v10362, 0.26601171
  %v10387 = vmul.f32 %v10363, 0.26601171
  %v10388 = vmul.f32 %v10364, 0.26601171
  %v10389 = vmul.f32 %v10365, 0.26601171
  %v10390 = vmul.f32 %v10366, 0.26601171
  %v10391 = vmul.f32 %v10367, 0.26601171
  %v10392 = vmul.f32 %v10368, 0.26601171
  %10417 = vrot.lane.b32.xlu0 %v10345, 118
  %v10418 = vpop.permute.xlu0 %10417
  %10419 = vrot.lane.b32.xlu0 %v10346, 118
  %v10420 = vpop.permute.xlu0 %10419
  %10421 = vrot.lane.b32.xlu0 %v10347, 118
  %v10422 = vpop.permute.xlu0 %10421
  %10423 = vrot.lane.b32.xlu0 %v10348, 118
  %v10424 = vpop.permute.xlu0 %10423
  %10425 = vrot.lane.b32.xlu0 %v10349, 118
  %v10426 = vpop.permute.xlu0 %10425
  %10427 = vrot.lane.b32.xlu0 %v10350, 118
  %v10428 = vpop.permute.xlu0 %10427
  %10429 = vrot.lane.b32.xlu0 %v10351, 118
  %v10430 = vpop.permute.xlu0 %10429
  %10431 = vrot.lane.b32.xlu0 %v10352, 118
  %v10432 = vpop.permute.xlu0 %10431
  %10433 = vrot.lane.b32.xlu0 %v10353, 118
  %v10434 = vpop.permute.xlu0 %10433
  %10435 = vrot.lane.b32.xlu0 %v10354, 118
  %v10436 = vpop.permute.xlu0 %10435
  %10437 = vrot.lane.b32.xlu0 %v10355, 118
  %v10438 = vpop.permute.xlu0 %10437
  %10439 = vrot.lane.b32.xlu0 %v10356, 118
  %v10440 = vpop.permute.xlu0 %10439
  %10441 = vrot.lane.b32.xlu0 %v10357, 118
  %v10442 = vpop.permute.xlu0 %10441
  %10443 = vrot.lane.b32.xlu0 %v10358, 118
  %v10444 = vpop.permute.xlu0 %10443
  %10445 = vrot.lane.b32.xlu0 %v10359, 118
  %v10446 = vpop.permute.xlu0 %10445
  %10447 = vrot.lane.b32.xlu0 %v10360, 118
  %v10448 = vpop.permute.xlu0 %10447
  %10449 = vrot.lane.b32.xlu0 %v10361, 118
  %v10450 = vpop.permute.xlu0 %10449
  %10451 = vrot.lane.b32.xlu0 %v10362, 118
  %v10452 = vpop.permute.xlu0 %10451
  %10453 = vrot.lane.b32.xlu0 %v10363, 118
  %v10454 = vpop.permute.xlu0 %10453
  %10455 = vrot.lane.b32.xlu0 %v10364, 118
  %v10456 = vpop.permute.xlu0 %10455
  %10457 = vrot.lane.b32.xlu0 %v10365, 118
  %v10458 = vpop.permute.xlu0 %10457
  %10459 = vrot.lane.b32.xlu0 %v10366, 118
  %v10460 = vpop.permute.xlu0 %10459
  %10461 = vrot.lane.b32.xlu0 %v10367, 118
  %v10462 = vpop.permute.xlu0 %10461
  %10463 = vrot.lane.b32.xlu0 %v10368, 118
  %v10464 = vpop.permute.xlu0 %10463
  %v10489 = vadd.f32 %v10345, %v10418
  %v10490 = vadd.f32 %v10346, %v10420
  %v10491 = vadd.f32 %v10347, %v10422
  %v10492 = vadd.f32 %v10348, %v10424
  %v10493 = vadd.f32 %v10349, %v10426
  %v10494 = vadd.f32 %v10350, %v10428
  %v10495 = vadd.f32 %v10351, %v10430
  %v10496 = vadd.f32 %v10352, %v10432
  %v10497 = vadd.f32 %v10353, %v10434
  %v10498 = vadd.f32 %v10354, %v10436
  %v10499 = vadd.f32 %v10355, %v10438
  %v10500 = vadd.f32 %v10356, %v10440
  %v10501 = vadd.f32 %v10357, %v10442
  %v10502 = vadd.f32 %v10358, %v10444
  %v10503 = vadd.f32 %v10359, %v10446
  %v10504 = vadd.f32 %v10360, %v10448
  %v10505 = vadd.f32 %v10361, %v10450
  %v10506 = vadd.f32 %v10362, %v10452
  %v10507 = vadd.f32 %v10363, %v10454
  %v10508 = vadd.f32 %v10364, %v10456
  %v10509 = vadd.f32 %v10365, %v10458
  %v10510 = vadd.f32 %v10366, %v10460
  %v10511 = vadd.f32 %v10367, %v10462
  %v10512 = vadd.f32 %v10368, %v10464
  %v10513 = vmul.f32 %v10489, 0.0010283801
  %v10514 = vmul.f32 %v10490, 0.0010283801
  %v10515 = vmul.f32 %v10491, 0.0010283801
  %v10516 = vmul.f32 %v10492, 0.0010283801
  %v10517 = vmul.f32 %v10493, 0.0010283801
  %v10518 = vmul.f32 %v10494, 0.0010283801
  %v10519 = vmul.f32 %v10495, 0.0010283801
  %v10520 = vmul.f32 %v10496, 0.0010283801
  %v10521 = vmul.f32 %v10497, 0.0010283801
  %v10522 = vmul.f32 %v10498, 0.0010283801
  %v10523 = vmul.f32 %v10499, 0.0010283801
  %v10524 = vmul.f32 %v10500, 0.0010283801
  %v10525 = vmul.f32 %v10501, 0.0010283801
  %v10526 = vmul.f32 %v10502, 0.0010283801
  %v10527 = vmul.f32 %v10503, 0.0010283801
  %v10528 = vmul.f32 %v10504, 0.0010283801
  %v10529 = vmul.f32 %v10505, 0.0010283801
  %v10530 = vmul.f32 %v10506, 0.0010283801
  %v10531 = vmul.f32 %v10507, 0.0010283801
  %v10532 = vmul.f32 %v10508, 0.0010283801
  %v10533 = vmul.f32 %v10509, 0.0010283801
  %v10534 = vmul.f32 %v10510, 0.0010283801
  %v10535 = vmul.f32 %v10511, 0.0010283801
  %v10536 = vmul.f32 %v10512, 0.0010283801
  %10561 = vrot.lane.b32.xlu0 %v10513, 5
  %v10562 = vpop.permute.xlu0 %10561
  %10563 = vrot.lane.b32.xlu0 %v10514, 5
  %v10564 = vpop.permute.xlu0 %10563
  %10565 = vrot.lane.b32.xlu0 %v10515, 5
  %v10566 = vpop.permute.xlu0 %10565
  %10567 = vrot.lane.b32.xlu0 %v10516, 5
  %v10568 = vpop.permute.xlu0 %10567
  %10569 = vrot.lane.b32.xlu0 %v10517, 5
  %v10570 = vpop.permute.xlu0 %10569
  %10571 = vrot.lane.b32.xlu0 %v10518, 5
  %v10572 = vpop.permute.xlu0 %10571
  %10573 = vrot.lane.b32.xlu0 %v10519, 5
  %v10574 = vpop.permute.xlu0 %10573
  %10575 = vrot.lane.b32.xlu0 %v10520, 5
  %v10576 = vpop.permute.xlu0 %10575
  %10577 = vrot.lane.b32.xlu0 %v10521, 5
  %v10578 = vpop.permute.xlu0 %10577
  %10579 = vrot.lane.b32.xlu0 %v10522, 5
  %v10580 = vpop.permute.xlu0 %10579
  %10581 = vrot.lane.b32.xlu0 %v10523, 5
  %v10582 = vpop.permute.xlu0 %10581
  %10583 = vrot.lane.b32.xlu0 %v10524, 5
  %v10584 = vpop.permute.xlu0 %10583
  %10585 = vrot.lane.b32.xlu0 %v10525, 5
  %v10586 = vpop.permute.xlu0 %10585
  %10587 = vrot.lane.b32.xlu0 %v10526, 5
  %v10588 = vpop.permute.xlu0 %10587
  %10589 = vrot.lane.b32.xlu0 %v10527, 5
  %v10590 = vpop.permute.xlu0 %10589
  %10591 = vrot.lane.b32.xlu0 %v10528, 5
  %v10592 = vpop.permute.xlu0 %10591
  %10593 = vrot.lane.b32.xlu0 %v10529, 5
  %v10594 = vpop.permute.xlu0 %10593
  %10595 = vrot.lane.b32.xlu0 %v10530, 5
  %v10596 = vpop.permute.xlu0 %10595
  %10597 = vrot.lane.b32.xlu0 %v10531, 5
  %v10598 = vpop.permute.xlu0 %10597
  %10599 = vrot.lane.b32.xlu0 %v10532, 5
  %v10600 = vpop.permute.xlu0 %10599
  %10601 = vrot.lane.b32.xlu0 %v10533, 5
  %v10602 = vpop.permute.xlu0 %10601
  %10603 = vrot.lane.b32.xlu0 %v10534, 5
  %v10604 = vpop.permute.xlu0 %10603
  %10605 = vrot.lane.b32.xlu0 %v10535, 5
  %v10606 = vpop.permute.xlu0 %10605
  %10607 = vrot.lane.b32.xlu0 %v10536, 5
  %v10608 = vpop.permute.xlu0 %10607
  %v10633 = vadd.f32 %v10369, %v10562
  %v10634 = vadd.f32 %v10370, %v10564
  %v10635 = vadd.f32 %v10371, %v10566
  %v10636 = vadd.f32 %v10372, %v10568
  %v10637 = vadd.f32 %v10373, %v10570
  %v10638 = vadd.f32 %v10374, %v10572
  %v10639 = vadd.f32 %v10375, %v10574
  %v10640 = vadd.f32 %v10376, %v10576
  %v10641 = vadd.f32 %v10377, %v10578
  %v10642 = vadd.f32 %v10378, %v10580
  %v10643 = vadd.f32 %v10379, %v10582
  %v10644 = vadd.f32 %v10380, %v10584
  %v10645 = vadd.f32 %v10381, %v10586
  %v10646 = vadd.f32 %v10382, %v10588
  %v10647 = vadd.f32 %v10383, %v10590
  %v10648 = vadd.f32 %v10384, %v10592
  %v10649 = vadd.f32 %v10385, %v10594
  %v10650 = vadd.f32 %v10386, %v10596
  %v10651 = vadd.f32 %v10387, %v10598
  %v10652 = vadd.f32 %v10388, %v10600
  %v10653 = vadd.f32 %v10389, %v10602
  %v10654 = vadd.f32 %v10390, %v10604
  %v10655 = vadd.f32 %v10391, %v10606
  %v10656 = vadd.f32 %v10392, %v10608
  %10657 = vrot.lane.b32.xlu0 %v10345, 120
  %v10658 = vpop.permute.xlu0 %10657
  %10659 = vrot.lane.b32.xlu0 %v10346, 120
  %v10660 = vpop.permute.xlu0 %10659
  %10661 = vrot.lane.b32.xlu0 %v10347, 120
  %v10662 = vpop.permute.xlu0 %10661
  %10663 = vrot.lane.b32.xlu0 %v10348, 120
  %v10664 = vpop.permute.xlu0 %10663
  %10665 = vrot.lane.b32.xlu0 %v10349, 120
  %v10666 = vpop.permute.xlu0 %10665
  %10667 = vrot.lane.b32.xlu0 %v10350, 120
  %v10668 = vpop.permute.xlu0 %10667
  %10669 = vrot.lane.b32.xlu0 %v10351, 120
  %v10670 = vpop.permute.xlu0 %10669
  %10671 = vrot.lane.b32.xlu0 %v10352, 120
  %v10672 = vpop.permute.xlu0 %10671
  %10673 = vrot.lane.b32.xlu0 %v10353, 120
  %v10674 = vpop.permute.xlu0 %10673
  %10675 = vrot.lane.b32.xlu0 %v10354, 120
  %v10676 = vpop.permute.xlu0 %10675
  %10677 = vrot.lane.b32.xlu0 %v10355, 120
  %v10678 = vpop.permute.xlu0 %10677
  %10679 = vrot.lane.b32.xlu0 %v10356, 120
  %v10680 = vpop.permute.xlu0 %10679
  %10681 = vrot.lane.b32.xlu0 %v10357, 120
  %v10682 = vpop.permute.xlu0 %10681
  %10683 = vrot.lane.b32.xlu0 %v10358, 120
  %v10684 = vpop.permute.xlu0 %10683
  %10685 = vrot.lane.b32.xlu0 %v10359, 120
  %v10686 = vpop.permute.xlu0 %10685
  %10687 = vrot.lane.b32.xlu0 %v10360, 120
  %v10688 = vpop.permute.xlu0 %10687
  %10689 = vrot.lane.b32.xlu0 %v10361, 120
  %v10690 = vpop.permute.xlu0 %10689
  %10691 = vrot.lane.b32.xlu0 %v10362, 120
  %v10692 = vpop.permute.xlu0 %10691
  %10693 = vrot.lane.b32.xlu0 %v10363, 120
  %v10694 = vpop.permute.xlu0 %10693
  %10695 = vrot.lane.b32.xlu0 %v10364, 120
  %v10696 = vpop.permute.xlu0 %10695
  %10697 = vrot.lane.b32.xlu0 %v10365, 120
  %v10698 = vpop.permute.xlu0 %10697
  %10699 = vrot.lane.b32.xlu0 %v10366, 120
  %v10700 = vpop.permute.xlu0 %10699
  %10701 = vrot.lane.b32.xlu0 %v10367, 120
  %v10702 = vpop.permute.xlu0 %10701
  %10703 = vrot.lane.b32.xlu0 %v10368, 120
  %v10704 = vpop.permute.xlu0 %10703
  %v10729 = vadd.f32 %v10345, %v10658
  %v10730 = vadd.f32 %v10346, %v10660
  %v10731 = vadd.f32 %v10347, %v10662
  %v10732 = vadd.f32 %v10348, %v10664
  %v10733 = vadd.f32 %v10349, %v10666
  %v10734 = vadd.f32 %v10350, %v10668
  %v10735 = vadd.f32 %v10351, %v10670
  %v10736 = vadd.f32 %v10352, %v10672
  %v10737 = vadd.f32 %v10353, %v10674
  %v10738 = vadd.f32 %v10354, %v10676
  %v10739 = vadd.f32 %v10355, %v10678
  %v10740 = vadd.f32 %v10356, %v10680
  %v10741 = vadd.f32 %v10357, %v10682
  %v10742 = vadd.f32 %v10358, %v10684
  %v10743 = vadd.f32 %v10359, %v10686
  %v10744 = vadd.f32 %v10360, %v10688
  %v10745 = vadd.f32 %v10361, %v10690
  %v10746 = vadd.f32 %v10362, %v10692
  %v10747 = vadd.f32 %v10363, %v10694
  %v10748 = vadd.f32 %v10364, %v10696
  %v10749 = vadd.f32 %v10365, %v10698
  %v10750 = vadd.f32 %v10366, %v10700
  %v10751 = vadd.f32 %v10367, %v10702
  %v10752 = vadd.f32 %v10368, %v10704
  %v10753 = vmul.f32 %v10729, 0.007598758
  %v10754 = vmul.f32 %v10730, 0.007598758
  %v10755 = vmul.f32 %v10731, 0.007598758
  %v10756 = vmul.f32 %v10732, 0.007598758
  %v10757 = vmul.f32 %v10733, 0.007598758
  %v10758 = vmul.f32 %v10734, 0.007598758
  %v10759 = vmul.f32 %v10735, 0.007598758
  %v10760 = vmul.f32 %v10736, 0.007598758
  %v10761 = vmul.f32 %v10737, 0.007598758
  %v10762 = vmul.f32 %v10738, 0.007598758
  %v10763 = vmul.f32 %v10739, 0.007598758
  %v10764 = vmul.f32 %v10740, 0.007598758
  %v10765 = vmul.f32 %v10741, 0.007598758
  %v10766 = vmul.f32 %v10742, 0.007598758
  %v10767 = vmul.f32 %v10743, 0.007598758
  %v10768 = vmul.f32 %v10744, 0.007598758
  %v10769 = vmul.f32 %v10745, 0.007598758
  %v10770 = vmul.f32 %v10746, 0.007598758
  %v10771 = vmul.f32 %v10747, 0.007598758
  %v10772 = vmul.f32 %v10748, 0.007598758
  %v10773 = vmul.f32 %v10749, 0.007598758
  %v10774 = vmul.f32 %v10750, 0.007598758
  %v10775 = vmul.f32 %v10751, 0.007598758
  %v10776 = vmul.f32 %v10752, 0.007598758
  %10801 = vrot.lane.b32.xlu0 %v10753, 4
  %v10802 = vpop.permute.xlu0 %10801
  %10803 = vrot.lane.b32.xlu0 %v10754, 4
  %v10804 = vpop.permute.xlu0 %10803
  %10805 = vrot.lane.b32.xlu0 %v10755, 4
  %v10806 = vpop.permute.xlu0 %10805
  %10807 = vrot.lane.b32.xlu0 %v10756, 4
  %v10808 = vpop.permute.xlu0 %10807
  %10809 = vrot.lane.b32.xlu0 %v10757, 4
  %v10810 = vpop.permute.xlu0 %10809
  %10811 = vrot.lane.b32.xlu0 %v10758, 4
  %v10812 = vpop.permute.xlu0 %10811
  %10813 = vrot.lane.b32.xlu0 %v10759, 4
  %v10814 = vpop.permute.xlu0 %10813
  %10815 = vrot.lane.b32.xlu0 %v10760, 4
  %v10816 = vpop.permute.xlu0 %10815
  %10817 = vrot.lane.b32.xlu0 %v10761, 4
  %v10818 = vpop.permute.xlu0 %10817
  %10819 = vrot.lane.b32.xlu0 %v10762, 4
  %v10820 = vpop.permute.xlu0 %10819
  %10821 = vrot.lane.b32.xlu0 %v10763, 4
  %v10822 = vpop.permute.xlu0 %10821
  %10823 = vrot.lane.b32.xlu0 %v10764, 4
  %v10824 = vpop.permute.xlu0 %10823
  %10825 = vrot.lane.b32.xlu0 %v10765, 4
  %v10826 = vpop.permute.xlu0 %10825
  %10827 = vrot.lane.b32.xlu0 %v10766, 4
  %v10828 = vpop.permute.xlu0 %10827
  %10829 = vrot.lane.b32.xlu0 %v10767, 4
  %v10830 = vpop.permute.xlu0 %10829
  %10831 = vrot.lane.b32.xlu0 %v10768, 4
  %v10832 = vpop.permute.xlu0 %10831
  %10833 = vrot.lane.b32.xlu0 %v10769, 4
  %v10834 = vpop.permute.xlu0 %10833
  %10835 = vrot.lane.b32.xlu0 %v10770, 4
  %v10836 = vpop.permute.xlu0 %10835
  %10837 = vrot.lane.b32.xlu0 %v10771, 4
  %v10838 = vpop.permute.xlu0 %10837
  %10839 = vrot.lane.b32.xlu0 %v10772, 4
  %v10840 = vpop.permute.xlu0 %10839
  %10841 = vrot.lane.b32.xlu0 %v10773, 4
  %v10842 = vpop.permute.xlu0 %10841
  %10843 = vrot.lane.b32.xlu0 %v10774, 4
  %v10844 = vpop.permute.xlu0 %10843
  %10845 = vrot.lane.b32.xlu0 %v10775, 4
  %v10846 = vpop.permute.xlu0 %10845
  %10847 = vrot.lane.b32.xlu0 %v10776, 4
  %v10848 = vpop.permute.xlu0 %10847
  %v10873 = vadd.f32 %v10633, %v10802
  %v10874 = vadd.f32 %v10634, %v10804
  %v10875 = vadd.f32 %v10635, %v10806
  %v10876 = vadd.f32 %v10636, %v10808
  %v10877 = vadd.f32 %v10637, %v10810
  %v10878 = vadd.f32 %v10638, %v10812
  %v10879 = vadd.f32 %v10639, %v10814
  %v10880 = vadd.f32 %v10640, %v10816
  %v10881 = vadd.f32 %v10641, %v10818
  %v10882 = vadd.f32 %v10642, %v10820
  %v10883 = vadd.f32 %v10643, %v10822
  %v10884 = vadd.f32 %v10644, %v10824
  %v10885 = vadd.f32 %v10645, %v10826
  %v10886 = vadd.f32 %v10646, %v10828
  %v10887 = vadd.f32 %v10647, %v10830
  %v10888 = vadd.f32 %v10648, %v10832
  %v10889 = vadd.f32 %v10649, %v10834
  %v10890 = vadd.f32 %v10650, %v10836
  %v10891 = vadd.f32 %v10651, %v10838
  %v10892 = vadd.f32 %v10652, %v10840
  %v10893 = vadd.f32 %v10653, %v10842
  %v10894 = vadd.f32 %v10654, %v10844
  %v10895 = vadd.f32 %v10655, %v10846
  %v10896 = vadd.f32 %v10656, %v10848
  %10897 = vrot.lane.b32.xlu0 %v10345, 122
  %v10898 = vpop.permute.xlu0 %10897
  %10899 = vrot.lane.b32.xlu0 %v10346, 122
  %v10900 = vpop.permute.xlu0 %10899
  %10901 = vrot.lane.b32.xlu0 %v10347, 122
  %v10902 = vpop.permute.xlu0 %10901
  %10903 = vrot.lane.b32.xlu0 %v10348, 122
  %v10904 = vpop.permute.xlu0 %10903
  %10905 = vrot.lane.b32.xlu0 %v10349, 122
  %v10906 = vpop.permute.xlu0 %10905
  %10907 = vrot.lane.b32.xlu0 %v10350, 122
  %v10908 = vpop.permute.xlu0 %10907
  %10909 = vrot.lane.b32.xlu0 %v10351, 122
  %v10910 = vpop.permute.xlu0 %10909
  %10911 = vrot.lane.b32.xlu0 %v10352, 122
  %v10912 = vpop.permute.xlu0 %10911
  %10913 = vrot.lane.b32.xlu0 %v10353, 122
  %v10914 = vpop.permute.xlu0 %10913
  %10915 = vrot.lane.b32.xlu0 %v10354, 122
  %v10916 = vpop.permute.xlu0 %10915
  %10917 = vrot.lane.b32.xlu0 %v10355, 122
  %v10918 = vpop.permute.xlu0 %10917
  %10919 = vrot.lane.b32.xlu0 %v10356, 122
  %v10920 = vpop.permute.xlu0 %10919
  %10921 = vrot.lane.b32.xlu0 %v10357, 122
  %v10922 = vpop.permute.xlu0 %10921
  %10923 = vrot.lane.b32.xlu0 %v10358, 122
  %v10924 = vpop.permute.xlu0 %10923
  %10925 = vrot.lane.b32.xlu0 %v10359, 122
  %v10926 = vpop.permute.xlu0 %10925
  %10927 = vrot.lane.b32.xlu0 %v10360, 122
  %v10928 = vpop.permute.xlu0 %10927
  %10929 = vrot.lane.b32.xlu0 %v10361, 122
  %v10930 = vpop.permute.xlu0 %10929
  %10931 = vrot.lane.b32.xlu0 %v10362, 122
  %v10932 = vpop.permute.xlu0 %10931
  %10933 = vrot.lane.b32.xlu0 %v10363, 122
  %v10934 = vpop.permute.xlu0 %10933
  %10935 = vrot.lane.b32.xlu0 %v10364, 122
  %v10936 = vpop.permute.xlu0 %10935
  %10937 = vrot.lane.b32.xlu0 %v10365, 122
  %v10938 = vpop.permute.xlu0 %10937
  %10939 = vrot.lane.b32.xlu0 %v10366, 122
  %v10940 = vpop.permute.xlu0 %10939
  %10941 = vrot.lane.b32.xlu0 %v10367, 122
  %v10942 = vpop.permute.xlu0 %10941
  %10943 = vrot.lane.b32.xlu0 %v10368, 122
  %v10944 = vpop.permute.xlu0 %10943
  %v10969 = vadd.f32 %v10345, %v10898
  %v10970 = vadd.f32 %v10346, %v10900
  %v10971 = vadd.f32 %v10347, %v10902
  %v10972 = vadd.f32 %v10348, %v10904
  %v10973 = vadd.f32 %v10349, %v10906
  %v10974 = vadd.f32 %v10350, %v10908
  %v10975 = vadd.f32 %v10351, %v10910
  %v10976 = vadd.f32 %v10352, %v10912
  %v10977 = vadd.f32 %v10353, %v10914
  %v10978 = vadd.f32 %v10354, %v10916
  %v10979 = vadd.f32 %v10355, %v10918
  %v10980 = vadd.f32 %v10356, %v10920
  %v10981 = vadd.f32 %v10357, %v10922
  %v10982 = vadd.f32 %v10358, %v10924
  %v10983 = vadd.f32 %v10359, %v10926
  %v10984 = vadd.f32 %v10360, %v10928
  %v10985 = vadd.f32 %v10361, %v10930
  %v10986 = vadd.f32 %v10362, %v10932
  %v10987 = vadd.f32 %v10363, %v10934
  %v10988 = vadd.f32 %v10364, %v10936
  %v10989 = vadd.f32 %v10365, %v10938
  %v10990 = vadd.f32 %v10366, %v10940
  %v10991 = vadd.f32 %v10367, %v10942
  %v10992 = vadd.f32 %v10368, %v10944
  %v10993 = vmul.f32 %v10969, 0.036000773
  %v10994 = vmul.f32 %v10970, 0.036000773
  %v10995 = vmul.f32 %v10971, 0.036000773
  %v10996 = vmul.f32 %v10972, 0.036000773
  %v10997 = vmul.f32 %v10973, 0.036000773
  %v10998 = vmul.f32 %v10974, 0.036000773
  %v10999 = vmul.f32 %v10975, 0.036000773
  %v11000 = vmul.f32 %v10976, 0.036000773
  %v11001 = vmul.f32 %v10977, 0.036000773
  %v11002 = vmul.f32 %v10978, 0.036000773
  %v11003 = vmul.f32 %v10979, 0.036000773
  %v11004 = vmul.f32 %v10980, 0.036000773
  %v11005 = vmul.f32 %v10981, 0.036000773
  %v11006 = vmul.f32 %v10982, 0.036000773
  %v11007 = vmul.f32 %v10983, 0.036000773
  %v11008 = vmul.f32 %v10984, 0.036000773
  %v11009 = vmul.f32 %v10985, 0.036000773
  %v11010 = vmul.f32 %v10986, 0.036000773
  %v11011 = vmul.f32 %v10987, 0.036000773
  %v11012 = vmul.f32 %v10988, 0.036000773
  %v11013 = vmul.f32 %v10989, 0.036000773
  %v11014 = vmul.f32 %v10990, 0.036000773
  %v11015 = vmul.f32 %v10991, 0.036000773
  %v11016 = vmul.f32 %v10992, 0.036000773
  %11041 = vrot.lane.b32.xlu0 %v10993, 3
  %v11042 = vpop.permute.xlu0 %11041
  %11043 = vrot.lane.b32.xlu0 %v10994, 3
  %v11044 = vpop.permute.xlu0 %11043
  %11045 = vrot.lane.b32.xlu0 %v10995, 3
  %v11046 = vpop.permute.xlu0 %11045
  %11047 = vrot.lane.b32.xlu0 %v10996, 3
  %v11048 = vpop.permute.xlu0 %11047
  %11049 = vrot.lane.b32.xlu0 %v10997, 3
  %v11050 = vpop.permute.xlu0 %11049
  %11051 = vrot.lane.b32.xlu0 %v10998, 3
  %v11052 = vpop.permute.xlu0 %11051
  %11053 = vrot.lane.b32.xlu0 %v10999, 3
  %v11054 = vpop.permute.xlu0 %11053
  %11055 = vrot.lane.b32.xlu0 %v11000, 3
  %v11056 = vpop.permute.xlu0 %11055
  %11057 = vrot.lane.b32.xlu0 %v11001, 3
  %v11058 = vpop.permute.xlu0 %11057
  %11059 = vrot.lane.b32.xlu0 %v11002, 3
  %v11060 = vpop.permute.xlu0 %11059
  %11061 = vrot.lane.b32.xlu0 %v11003, 3
  %v11062 = vpop.permute.xlu0 %11061
  %11063 = vrot.lane.b32.xlu0 %v11004, 3
  %v11064 = vpop.permute.xlu0 %11063
  %11065 = vrot.lane.b32.xlu0 %v11005, 3
  %v11066 = vpop.permute.xlu0 %11065
  %11067 = vrot.lane.b32.xlu0 %v11006, 3
  %v11068 = vpop.permute.xlu0 %11067
  %11069 = vrot.lane.b32.xlu0 %v11007, 3
  %v11070 = vpop.permute.xlu0 %11069
  %11071 = vrot.lane.b32.xlu0 %v11008, 3
  %v11072 = vpop.permute.xlu0 %11071
  %11073 = vrot.lane.b32.xlu0 %v11009, 3
  %v11074 = vpop.permute.xlu0 %11073
  %11075 = vrot.lane.b32.xlu0 %v11010, 3
  %v11076 = vpop.permute.xlu0 %11075
  %11077 = vrot.lane.b32.xlu0 %v11011, 3
  %v11078 = vpop.permute.xlu0 %11077
  %11079 = vrot.lane.b32.xlu0 %v11012, 3
  %v11080 = vpop.permute.xlu0 %11079
  %11081 = vrot.lane.b32.xlu0 %v11013, 3
  %v11082 = vpop.permute.xlu0 %11081
  %11083 = vrot.lane.b32.xlu0 %v11014, 3
  %v11084 = vpop.permute.xlu0 %11083
  %11085 = vrot.lane.b32.xlu0 %v11015, 3
  %v11086 = vpop.permute.xlu0 %11085
  %11087 = vrot.lane.b32.xlu0 %v11016, 3
  %v11088 = vpop.permute.xlu0 %11087
  %v11113 = vadd.f32 %v10873, %v11042
  %v11114 = vadd.f32 %v10874, %v11044
  %v11115 = vadd.f32 %v10875, %v11046
  %v11116 = vadd.f32 %v10876, %v11048
  %v11117 = vadd.f32 %v10877, %v11050
  %v11118 = vadd.f32 %v10878, %v11052
  %v11119 = vadd.f32 %v10879, %v11054
  %v11120 = vadd.f32 %v10880, %v11056
  %v11121 = vadd.f32 %v10881, %v11058
  %v11122 = vadd.f32 %v10882, %v11060
  %v11123 = vadd.f32 %v10883, %v11062
  %v11124 = vadd.f32 %v10884, %v11064
  %v11125 = vadd.f32 %v10885, %v11066
  %v11126 = vadd.f32 %v10886, %v11068
  %v11127 = vadd.f32 %v10887, %v11070
  %v11128 = vadd.f32 %v10888, %v11072
  %v11129 = vadd.f32 %v10889, %v11074
  %v11130 = vadd.f32 %v10890, %v11076
  %v11131 = vadd.f32 %v10891, %v11078
  %v11132 = vadd.f32 %v10892, %v11080
  %v11133 = vadd.f32 %v10893, %v11082
  %v11134 = vadd.f32 %v10894, %v11084
  %v11135 = vadd.f32 %v10895, %v11086
  %v11136 = vadd.f32 %v10896, %v11088
  %11137 = vrot.lane.b32.xlu0 %v10345, 124
  %v11138 = vpop.permute.xlu0 %11137
  %11139 = vrot.lane.b32.xlu0 %v10346, 124
  %v11140 = vpop.permute.xlu0 %11139
  %11141 = vrot.lane.b32.xlu0 %v10347, 124
  %v11142 = vpop.permute.xlu0 %11141
  %11143 = vrot.lane.b32.xlu0 %v10348, 124
  %v11144 = vpop.permute.xlu0 %11143
  %11145 = vrot.lane.b32.xlu0 %v10349, 124
  %v11146 = vpop.permute.xlu0 %11145
  %11147 = vrot.lane.b32.xlu0 %v10350, 124
  %v11148 = vpop.permute.xlu0 %11147
  %11149 = vrot.lane.b32.xlu0 %v10351, 124
  %v11150 = vpop.permute.xlu0 %11149
  %11151 = vrot.lane.b32.xlu0 %v10352, 124
  %v11152 = vpop.permute.xlu0 %11151
  %11153 = vrot.lane.b32.xlu0 %v10353, 124
  %v11154 = vpop.permute.xlu0 %11153
  %11155 = vrot.lane.b32.xlu0 %v10354, 124
  %v11156 = vpop.permute.xlu0 %11155
  %11157 = vrot.lane.b32.xlu0 %v10355, 124
  %v11158 = vpop.permute.xlu0 %11157
  %11159 = vrot.lane.b32.xlu0 %v10356, 124
  %v11160 = vpop.permute.xlu0 %11159
  %11161 = vrot.lane.b32.xlu0 %v10357, 124
  %v11162 = vpop.permute.xlu0 %11161
  %11163 = vrot.lane.b32.xlu0 %v10358, 124
  %v11164 = vpop.permute.xlu0 %11163
  %11165 = vrot.lane.b32.xlu0 %v10359, 124
  %v11166 = vpop.permute.xlu0 %11165
  %11167 = vrot.lane.b32.xlu0 %v10360, 124
  %v11168 = vpop.permute.xlu0 %11167
  %11169 = vrot.lane.b32.xlu0 %v10361, 124
  %v11170 = vpop.permute.xlu0 %11169
  %11171 = vrot.lane.b32.xlu0 %v10362, 124
  %v11172 = vpop.permute.xlu0 %11171
  %11173 = vrot.lane.b32.xlu0 %v10363, 124
  %v11174 = vpop.permute.xlu0 %11173
  %11175 = vrot.lane.b32.xlu0 %v10364, 124
  %v11176 = vpop.permute.xlu0 %11175
  %11177 = vrot.lane.b32.xlu0 %v10365, 124
  %v11178 = vpop.permute.xlu0 %11177
  %11179 = vrot.lane.b32.xlu0 %v10366, 124
  %v11180 = vpop.permute.xlu0 %11179
  %11181 = vrot.lane.b32.xlu0 %v10367, 124
  %v11182 = vpop.permute.xlu0 %11181
  %11183 = vrot.lane.b32.xlu0 %v10368, 124
  %v11184 = vpop.permute.xlu0 %11183
  %v11209 = vadd.f32 %v10345, %v11138
  %v11210 = vadd.f32 %v10346, %v11140
  %v11211 = vadd.f32 %v10347, %v11142
  %v11212 = vadd.f32 %v10348, %v11144
  %v11213 = vadd.f32 %v10349, %v11146
  %v11214 = vadd.f32 %v10350, %v11148
  %v11215 = vadd.f32 %v10351, %v11150
  %v11216 = vadd.f32 %v10352, %v11152
  %v11217 = vadd.f32 %v10353, %v11154
  %v11218 = vadd.f32 %v10354, %v11156
  %v11219 = vadd.f32 %v10355, %v11158
  %v11220 = vadd.f32 %v10356, %v11160
  %v11221 = vadd.f32 %v10357, %v11162
  %v11222 = vadd.f32 %v10358, %v11164
  %v11223 = vadd.f32 %v10359, %v11166
  %v11224 = vadd.f32 %v10360, %v11168
  %v11225 = vadd.f32 %v10361, %v11170
  %v11226 = vadd.f32 %v10362, %v11172
  %v11227 = vadd.f32 %v10363, %v11174
  %v11228 = vadd.f32 %v10364, %v11176
  %v11229 = vadd.f32 %v10365, %v11178
  %v11230 = vadd.f32 %v10366, %v11180
  %v11231 = vadd.f32 %v10367, %v11182
  %v11232 = vadd.f32 %v10368, %v11184
  %v11233 = vmul.f32 %v11209, 0.10936069
  %v11234 = vmul.f32 %v11210, 0.10936069
  %v11235 = vmul.f32 %v11211, 0.10936069
  %v11236 = vmul.f32 %v11212, 0.10936069
  %v11237 = vmul.f32 %v11213, 0.10936069
  %v11238 = vmul.f32 %v11214, 0.10936069
  %v11239 = vmul.f32 %v11215, 0.10936069
  %v11240 = vmul.f32 %v11216, 0.10936069
  %v11241 = vmul.f32 %v11217, 0.10936069
  %v11242 = vmul.f32 %v11218, 0.10936069
  %v11243 = vmul.f32 %v11219, 0.10936069
  %v11244 = vmul.f32 %v11220, 0.10936069
  %v11245 = vmul.f32 %v11221, 0.10936069
  %v11246 = vmul.f32 %v11222, 0.10936069
  %v11247 = vmul.f32 %v11223, 0.10936069
  %v11248 = vmul.f32 %v11224, 0.10936069
  %v11249 = vmul.f32 %v11225, 0.10936069
  %v11250 = vmul.f32 %v11226, 0.10936069
  %v11251 = vmul.f32 %v11227, 0.10936069
  %v11252 = vmul.f32 %v11228, 0.10936069
  %v11253 = vmul.f32 %v11229, 0.10936069
  %v11254 = vmul.f32 %v11230, 0.10936069
  %v11255 = vmul.f32 %v11231, 0.10936069
  %v11256 = vmul.f32 %v11232, 0.10936069
  %11281 = vrot.lane.b32.xlu0 %v11233, 2
  %v11282 = vpop.permute.xlu0 %11281
  %11283 = vrot.lane.b32.xlu0 %v11234, 2
  %v11284 = vpop.permute.xlu0 %11283
  %11285 = vrot.lane.b32.xlu0 %v11235, 2
  %v11286 = vpop.permute.xlu0 %11285
  %11287 = vrot.lane.b32.xlu0 %v11236, 2
  %v11288 = vpop.permute.xlu0 %11287
  %11289 = vrot.lane.b32.xlu0 %v11237, 2
  %v11290 = vpop.permute.xlu0 %11289
  %11291 = vrot.lane.b32.xlu0 %v11238, 2
  %v11292 = vpop.permute.xlu0 %11291
  %11293 = vrot.lane.b32.xlu0 %v11239, 2
  %v11294 = vpop.permute.xlu0 %11293
  %11295 = vrot.lane.b32.xlu0 %v11240, 2
  %v11296 = vpop.permute.xlu0 %11295
  %11297 = vrot.lane.b32.xlu0 %v11241, 2
  %v11298 = vpop.permute.xlu0 %11297
  %11299 = vrot.lane.b32.xlu0 %v11242, 2
  %v11300 = vpop.permute.xlu0 %11299
  %11301 = vrot.lane.b32.xlu0 %v11243, 2
  %v11302 = vpop.permute.xlu0 %11301
  %11303 = vrot.lane.b32.xlu0 %v11244, 2
  %v11304 = vpop.permute.xlu0 %11303
  %11305 = vrot.lane.b32.xlu0 %v11245, 2
  %v11306 = vpop.permute.xlu0 %11305
  %11307 = vrot.lane.b32.xlu0 %v11246, 2
  %v11308 = vpop.permute.xlu0 %11307
  %11309 = vrot.lane.b32.xlu0 %v11247, 2
  %v11310 = vpop.permute.xlu0 %11309
  %11311 = vrot.lane.b32.xlu0 %v11248, 2
  %v11312 = vpop.permute.xlu0 %11311
  %11313 = vrot.lane.b32.xlu0 %v11249, 2
  %v11314 = vpop.permute.xlu0 %11313
  %11315 = vrot.lane.b32.xlu0 %v11250, 2
  %v11316 = vpop.permute.xlu0 %11315
  %11317 = vrot.lane.b32.xlu0 %v11251, 2
  %v11318 = vpop.permute.xlu0 %11317
  %11319 = vrot.lane.b32.xlu0 %v11252, 2
  %v11320 = vpop.permute.xlu0 %11319
  %11321 = vrot.lane.b32.xlu0 %v11253, 2
  %v11322 = vpop.permute.xlu0 %11321
  %11323 = vrot.lane.b32.xlu0 %v11254, 2
  %v11324 = vpop.permute.xlu0 %11323
  %11325 = vrot.lane.b32.xlu0 %v11255, 2
  %v11326 = vpop.permute.xlu0 %11325
  %11327 = vrot.lane.b32.xlu0 %v11256, 2
  %v11328 = vpop.permute.xlu0 %11327
  %v11353 = vadd.f32 %v11113, %v11282
  %v11354 = vadd.f32 %v11114, %v11284
  %v11355 = vadd.f32 %v11115, %v11286
  %v11356 = vadd.f32 %v11116, %v11288
  %v11357 = vadd.f32 %v11117, %v11290
  %v11358 = vadd.f32 %v11118, %v11292
  %v11359 = vadd.f32 %v11119, %v11294
  %v11360 = vadd.f32 %v11120, %v11296
  %v11361 = vadd.f32 %v11121, %v11298
  %v11362 = vadd.f32 %v11122, %v11300
  %v11363 = vadd.f32 %v11123, %v11302
  %v11364 = vadd.f32 %v11124, %v11304
  %v11365 = vadd.f32 %v11125, %v11306
  %v11366 = vadd.f32 %v11126, %v11308
  %v11367 = vadd.f32 %v11127, %v11310
  %v11368 = vadd.f32 %v11128, %v11312
  %v11369 = vadd.f32 %v11129, %v11314
  %v11370 = vadd.f32 %v11130, %v11316
  %v11371 = vadd.f32 %v11131, %v11318
  %v11372 = vadd.f32 %v11132, %v11320
  %v11373 = vadd.f32 %v11133, %v11322
  %v11374 = vadd.f32 %v11134, %v11324
  %v11375 = vadd.f32 %v11135, %v11326
  %v11376 = vadd.f32 %v11136, %v11328
  %11377 = vrot.lane.b32.xlu0 %v10345, 126
  %v11378 = vpop.permute.xlu0 %11377
  %11379 = vrot.lane.b32.xlu0 %v10346, 126
  %v11380 = vpop.permute.xlu0 %11379
  %11381 = vrot.lane.b32.xlu0 %v10347, 126
  %v11382 = vpop.permute.xlu0 %11381
  %11383 = vrot.lane.b32.xlu0 %v10348, 126
  %v11384 = vpop.permute.xlu0 %11383
  %11385 = vrot.lane.b32.xlu0 %v10349, 126
  %v11386 = vpop.permute.xlu0 %11385
  %11387 = vrot.lane.b32.xlu0 %v10350, 126
  %v11388 = vpop.permute.xlu0 %11387
  %11389 = vrot.lane.b32.xlu0 %v10351, 126
  %v11390 = vpop.permute.xlu0 %11389
  %11391 = vrot.lane.b32.xlu0 %v10352, 126
  %v11392 = vpop.permute.xlu0 %11391
  %11393 = vrot.lane.b32.xlu0 %v10353, 126
  %v11394 = vpop.permute.xlu0 %11393
  %11395 = vrot.lane.b32.xlu0 %v10354, 126
  %v11396 = vpop.permute.xlu0 %11395
  %11397 = vrot.lane.b32.xlu0 %v10355, 126
  %v11398 = vpop.permute.xlu0 %11397
  %11399 = vrot.lane.b32.xlu0 %v10356, 126
  %v11400 = vpop.permute.xlu0 %11399
  %11401 = vrot.lane.b32.xlu0 %v10357, 126
  %v11402 = vpop.permute.xlu0 %11401
  %11403 = vrot.lane.b32.xlu0 %v10358, 126
  %v11404 = vpop.permute.xlu0 %11403
  %11405 = vrot.lane.b32.xlu0 %v10359, 126
  %v11406 = vpop.permute.xlu0 %11405
  %11407 = vrot.lane.b32.xlu0 %v10360, 126
  %v11408 = vpop.permute.xlu0 %11407
  %11409 = vrot.lane.b32.xlu0 %v10361, 126
  %v11410 = vpop.permute.xlu0 %11409
  %11411 = vrot.lane.b32.xlu0 %v10362, 126
  %v11412 = vpop.permute.xlu0 %11411
  %11413 = vrot.lane.b32.xlu0 %v10363, 126
  %v11414 = vpop.permute.xlu0 %11413
  %11415 = vrot.lane.b32.xlu0 %v10364, 126
  %v11416 = vpop.permute.xlu0 %11415
  %11417 = vrot.lane.b32.xlu0 %v10365, 126
  %v11418 = vpop.permute.xlu0 %11417
  %11419 = vrot.lane.b32.xlu0 %v10366, 126
  %v11420 = vpop.permute.xlu0 %11419
  %11421 = vrot.lane.b32.xlu0 %v10367, 126
  %v11422 = vpop.permute.xlu0 %11421
  %11423 = vrot.lane.b32.xlu0 %v10368, 126
  %v11424 = vpop.permute.xlu0 %11423
  %v11449 = vadd.f32 %v10345, %v11378
  %v11450 = vadd.f32 %v10346, %v11380
  %v11451 = vadd.f32 %v10347, %v11382
  %v11452 = vadd.f32 %v10348, %v11384
  %v11453 = vadd.f32 %v10349, %v11386
  %v11454 = vadd.f32 %v10350, %v11388
  %v11455 = vadd.f32 %v10351, %v11390
  %v11456 = vadd.f32 %v10352, %v11392
  %v11457 = vadd.f32 %v10353, %v11394
  %v11458 = vadd.f32 %v10354, %v11396
  %v11459 = vadd.f32 %v10355, %v11398
  %v11460 = vadd.f32 %v10356, %v11400
  %v11461 = vadd.f32 %v10357, %v11402
  %v11462 = vadd.f32 %v10358, %v11404
  %v11463 = vadd.f32 %v10359, %v11406
  %v11464 = vadd.f32 %v10360, %v11408
  %v11465 = vadd.f32 %v10361, %v11410
  %v11466 = vadd.f32 %v10362, %v11412
  %v11467 = vadd.f32 %v10363, %v11414
  %v11468 = vadd.f32 %v10364, %v11416
  %v11469 = vadd.f32 %v10365, %v11418
  %v11470 = vadd.f32 %v10366, %v11420
  %v11471 = vadd.f32 %v10367, %v11422
  %v11472 = vadd.f32 %v10368, %v11424
  %v11473 = vmul.f32 %v11449, 0.21300554
  %v11474 = vmul.f32 %v11450, 0.21300554
  %v11475 = vmul.f32 %v11451, 0.21300554
  %v11476 = vmul.f32 %v11452, 0.21300554
  %v11477 = vmul.f32 %v11453, 0.21300554
  %v11478 = vmul.f32 %v11454, 0.21300554
  %v11479 = vmul.f32 %v11455, 0.21300554
  %v11480 = vmul.f32 %v11456, 0.21300554
  %v11481 = vmul.f32 %v11457, 0.21300554
  %v11482 = vmul.f32 %v11458, 0.21300554
  %v11483 = vmul.f32 %v11459, 0.21300554
  %v11484 = vmul.f32 %v11460, 0.21300554
  %v11485 = vmul.f32 %v11461, 0.21300554
  %v11486 = vmul.f32 %v11462, 0.21300554
  %v11487 = vmul.f32 %v11463, 0.21300554
  %v11488 = vmul.f32 %v11464, 0.21300554
  %v11489 = vmul.f32 %v11465, 0.21300554
  %v11490 = vmul.f32 %v11466, 0.21300554
  %v11491 = vmul.f32 %v11467, 0.21300554
  %v11492 = vmul.f32 %v11468, 0.21300554
  %v11493 = vmul.f32 %v11469, 0.21300554
  %v11494 = vmul.f32 %v11470, 0.21300554
  %v11495 = vmul.f32 %v11471, 0.21300554
  %v11496 = vmul.f32 %v11472, 0.21300554
  %11521 = vrot.lane.b32.xlu0 %v11473, 1
  %v11522 = vpop.permute.xlu0 %11521
  %11523 = vrot.lane.b32.xlu0 %v11474, 1
  %v11524 = vpop.permute.xlu0 %11523
  %11525 = vrot.lane.b32.xlu0 %v11475, 1
  %v11526 = vpop.permute.xlu0 %11525
  %11527 = vrot.lane.b32.xlu0 %v11476, 1
  %v11528 = vpop.permute.xlu0 %11527
  %11529 = vrot.lane.b32.xlu0 %v11477, 1
  %v11530 = vpop.permute.xlu0 %11529
  %11531 = vrot.lane.b32.xlu0 %v11478, 1
  %v11532 = vpop.permute.xlu0 %11531
  %11533 = vrot.lane.b32.xlu0 %v11479, 1
  %v11534 = vpop.permute.xlu0 %11533
  %11535 = vrot.lane.b32.xlu0 %v11480, 1
  %v11536 = vpop.permute.xlu0 %11535
  %11537 = vrot.lane.b32.xlu0 %v11481, 1
  %v11538 = vpop.permute.xlu0 %11537
  %11539 = vrot.lane.b32.xlu0 %v11482, 1
  %v11540 = vpop.permute.xlu0 %11539
  %11541 = vrot.lane.b32.xlu0 %v11483, 1
  %v11542 = vpop.permute.xlu0 %11541
  %11543 = vrot.lane.b32.xlu0 %v11484, 1
  %v11544 = vpop.permute.xlu0 %11543
  %11545 = vrot.lane.b32.xlu0 %v11485, 1
  %v11546 = vpop.permute.xlu0 %11545
  %11547 = vrot.lane.b32.xlu0 %v11486, 1
  %v11548 = vpop.permute.xlu0 %11547
  %11549 = vrot.lane.b32.xlu0 %v11487, 1
  %v11550 = vpop.permute.xlu0 %11549
  %11551 = vrot.lane.b32.xlu0 %v11488, 1
  %v11552 = vpop.permute.xlu0 %11551
  %11553 = vrot.lane.b32.xlu0 %v11489, 1
  %v11554 = vpop.permute.xlu0 %11553
  %11555 = vrot.lane.b32.xlu0 %v11490, 1
  %v11556 = vpop.permute.xlu0 %11555
  %11557 = vrot.lane.b32.xlu0 %v11491, 1
  %v11558 = vpop.permute.xlu0 %11557
  %11559 = vrot.lane.b32.xlu0 %v11492, 1
  %v11560 = vpop.permute.xlu0 %11559
  %11561 = vrot.lane.b32.xlu0 %v11493, 1
  %v11562 = vpop.permute.xlu0 %11561
  %11563 = vrot.lane.b32.xlu0 %v11494, 1
  %v11564 = vpop.permute.xlu0 %11563
  %11565 = vrot.lane.b32.xlu0 %v11495, 1
  %v11566 = vpop.permute.xlu0 %11565
  %11567 = vrot.lane.b32.xlu0 %v11496, 1
  %v11568 = vpop.permute.xlu0 %11567
  %v11593 = vadd.f32 %v11353, %v11522
  %v11594 = vadd.f32 %v11354, %v11524
  %v11595 = vadd.f32 %v11355, %v11526
  %v11596 = vadd.f32 %v11356, %v11528
  %v11597 = vadd.f32 %v11357, %v11530
  %v11598 = vadd.f32 %v11358, %v11532
  %v11599 = vadd.f32 %v11359, %v11534
  %v11600 = vadd.f32 %v11360, %v11536
  %v11601 = vadd.f32 %v11361, %v11538
  %v11602 = vadd.f32 %v11362, %v11540
  %v11603 = vadd.f32 %v11363, %v11542
  %v11604 = vadd.f32 %v11364, %v11544
  %v11605 = vadd.f32 %v11365, %v11546
  %v11606 = vadd.f32 %v11366, %v11548
  %v11607 = vadd.f32 %v11367, %v11550
  %v11608 = vadd.f32 %v11368, %v11552
  %v11609 = vadd.f32 %v11369, %v11554
  %v11610 = vadd.f32 %v11370, %v11556
  %v11611 = vadd.f32 %v11371, %v11558
  %v11612 = vadd.f32 %v11372, %v11560
  %v11613 = vadd.f32 %v11373, %v11562
  %v11614 = vadd.f32 %v11374, %v11564
  %v11615 = vadd.f32 %v11375, %v11566
  %v11616 = vadd.f32 %v11376, %v11568
  %v11617 = vsub.f32 %v11593, %v4657
  %v11618 = vsub.f32 %v11594, %v4658
  %v11619 = vsub.f32 %v11595, %v4659
  %v11620 = vsub.f32 %v11596, %v4660
  %v11621 = vsub.f32 %v11597, %v4661
  %v11622 = vsub.f32 %v11598, %v4662
  %v11623 = vsub.f32 %v11599, %v4663
  %v11624 = vsub.f32 %v11600, %v4664
  %v11625 = vsub.f32 %v11601, %v4665
  %v11626 = vsub.f32 %v11602, %v4666
  %v11627 = vsub.f32 %v11603, %v4667
  %v11628 = vsub.f32 %v11604, %v4668
  %v11629 = vsub.f32 %v11605, %v4669
  %v11630 = vsub.f32 %v11606, %v4670
  %v11631 = vsub.f32 %v11607, %v4671
  %v11632 = vsub.f32 %v11608, %v4672
  %v11633 = vsub.f32 %v11609, %v4673
  %v11634 = vsub.f32 %v11610, %v4674
  %v11635 = vsub.f32 %v11611, %v4675
  %v11636 = vsub.f32 %v11612, %v4676
  %v11637 = vsub.f32 %v11613, %v4677
  %v11638 = vsub.f32 %v11614, %v4678
  %v11639 = vsub.f32 %v11615, %v4679
  %v11640 = vsub.f32 %v11616, %v4680
  %v11641 = vmul.f32 %v4657, 2.0
  %v11642 = vmul.f32 %v4658, 2.0
  %v11643 = vmul.f32 %v4659, 2.0
  %v11644 = vmul.f32 %v4660, 2.0
  %v11645 = vmul.f32 %v4661, 2.0
  %v11646 = vmul.f32 %v4662, 2.0
  %v11647 = vmul.f32 %v4663, 2.0
  %v11648 = vmul.f32 %v4664, 2.0
  %v11649 = vmul.f32 %v4665, 2.0
  %v11650 = vmul.f32 %v4666, 2.0
  %v11651 = vmul.f32 %v4667, 2.0
  %v11652 = vmul.f32 %v4668, 2.0
  %v11653 = vmul.f32 %v4669, 2.0
  %v11654 = vmul.f32 %v4670, 2.0
  %v11655 = vmul.f32 %v4671, 2.0
  %v11656 = vmul.f32 %v4672, 2.0
  %v11657 = vmul.f32 %v4673, 2.0
  %v11658 = vmul.f32 %v4674, 2.0
  %v11659 = vmul.f32 %v4675, 2.0
  %v11660 = vmul.f32 %v4676, 2.0
  %v11661 = vmul.f32 %v4677, 2.0
  %v11662 = vmul.f32 %v4678, 2.0
  %v11663 = vmul.f32 %v4679, 2.0
  %v11664 = vmul.f32 %v4680, 2.0
  %v11665 = vadd.f32 %v11641, 0.0001
  %v11666 = vadd.f32 %v11642, 0.0001
  %v11667 = vadd.f32 %v11643, 0.0001
  %v11668 = vadd.f32 %v11644, 0.0001
  %v11669 = vadd.f32 %v11645, 0.0001
  %v11670 = vadd.f32 %v11646, 0.0001
  %v11671 = vadd.f32 %v11647, 0.0001
  %v11672 = vadd.f32 %v11648, 0.0001
  %v11673 = vadd.f32 %v11649, 0.0001
  %v11674 = vadd.f32 %v11650, 0.0001
  %v11675 = vadd.f32 %v11651, 0.0001
  %v11676 = vadd.f32 %v11652, 0.0001
  %v11677 = vadd.f32 %v11653, 0.0001
  %v11678 = vadd.f32 %v11654, 0.0001
  %v11679 = vadd.f32 %v11655, 0.0001
  %v11680 = vadd.f32 %v11656, 0.0001
  %v11681 = vadd.f32 %v11657, 0.0001
  %v11682 = vadd.f32 %v11658, 0.0001
  %v11683 = vadd.f32 %v11659, 0.0001
  %v11684 = vadd.f32 %v11660, 0.0001
  %v11685 = vadd.f32 %v11661, 0.0001
  %v11686 = vadd.f32 %v11662, 0.0001
  %v11687 = vadd.f32 %v11663, 0.0001
  %v11688 = vadd.f32 %v11664, 0.0001
  %v11689 = vmul.f32 %v11617, 2.0
  %v11690 = vmul.f32 %v11618, 2.0
  %v11691 = vmul.f32 %v11619, 2.0
  %v11692 = vmul.f32 %v11620, 2.0
  %v11693 = vmul.f32 %v11621, 2.0
  %v11694 = vmul.f32 %v11622, 2.0
  %v11695 = vmul.f32 %v11623, 2.0
  %v11696 = vmul.f32 %v11624, 2.0
  %v11697 = vmul.f32 %v11625, 2.0
  %v11698 = vmul.f32 %v11626, 2.0
  %v11699 = vmul.f32 %v11627, 2.0
  %v11700 = vmul.f32 %v11628, 2.0
  %v11701 = vmul.f32 %v11629, 2.0
  %v11702 = vmul.f32 %v11630, 2.0
  %v11703 = vmul.f32 %v11631, 2.0
  %v11704 = vmul.f32 %v11632, 2.0
  %v11705 = vmul.f32 %v11633, 2.0
  %v11706 = vmul.f32 %v11634, 2.0
  %v11707 = vmul.f32 %v11635, 2.0
  %v11708 = vmul.f32 %v11636, 2.0
  %v11709 = vmul.f32 %v11637, 2.0
  %v11710 = vmul.f32 %v11638, 2.0
  %v11711 = vmul.f32 %v11639, 2.0
  %v11712 = vmul.f32 %v11640, 2.0
  %v11713 = vadd.f32 %v11689, 0.0009
  %v11714 = vadd.f32 %v11690, 0.0009
  %v11715 = vadd.f32 %v11691, 0.0009
  %v11716 = vadd.f32 %v11692, 0.0009
  %v11717 = vadd.f32 %v11693, 0.0009
  %v11718 = vadd.f32 %v11694, 0.0009
  %v11719 = vadd.f32 %v11695, 0.0009
  %v11720 = vadd.f32 %v11696, 0.0009
  %v11721 = vadd.f32 %v11697, 0.0009
  %v11722 = vadd.f32 %v11698, 0.0009
  %v11723 = vadd.f32 %v11699, 0.0009
  %v11724 = vadd.f32 %v11700, 0.0009
  %v11725 = vadd.f32 %v11701, 0.0009
  %v11726 = vadd.f32 %v11702, 0.0009
  %v11727 = vadd.f32 %v11703, 0.0009
  %v11728 = vadd.f32 %v11704, 0.0009
  %v11729 = vadd.f32 %v11705, 0.0009
  %v11730 = vadd.f32 %v11706, 0.0009
  %v11731 = vadd.f32 %v11707, 0.0009
  %v11732 = vadd.f32 %v11708, 0.0009
  %v11733 = vadd.f32 %v11709, 0.0009
  %v11734 = vadd.f32 %v11710, 0.0009
  %v11735 = vadd.f32 %v11711, 0.0009
  %v11736 = vadd.f32 %v11712, 0.0009
  %v11737 = vmul.f32 %v11665, %v11713
  %v11738 = vmul.f32 %v11666, %v11714
  %v11739 = vmul.f32 %v11667, %v11715
  %v11740 = vmul.f32 %v11668, %v11716
  %v11741 = vmul.f32 %v11669, %v11717
  %v11742 = vmul.f32 %v11670, %v11718
  %v11743 = vmul.f32 %v11671, %v11719
  %v11744 = vmul.f32 %v11672, %v11720
  %v11745 = vmul.f32 %v11673, %v11721
  %v11746 = vmul.f32 %v11674, %v11722
  %v11747 = vmul.f32 %v11675, %v11723
  %v11748 = vmul.f32 %v11676, %v11724
  %v11749 = vmul.f32 %v11677, %v11725
  %v11750 = vmul.f32 %v11678, %v11726
  %v11751 = vmul.f32 %v11679, %v11727
  %v11752 = vmul.f32 %v11680, %v11728
  %v11753 = vmul.f32 %v11681, %v11729
  %v11754 = vmul.f32 %v11682, %v11730
  %v11755 = vmul.f32 %v11683, %v11731
  %v11756 = vmul.f32 %v11684, %v11732
  %v11757 = vmul.f32 %v11685, %v11733
  %v11758 = vmul.f32 %v11686, %v11734
  %v11759 = vmul.f32 %v11687, %v11735
  %v11760 = vmul.f32 %v11688, %v11736
  %v11761 = vadd.f32 %v4609, %v4633
  %v11762 = vadd.f32 %v4610, %v4634
  %v11763 = vadd.f32 %v4611, %v4635
  %v11764 = vadd.f32 %v4612, %v4636
  %v11765 = vadd.f32 %v4613, %v4637
  %v11766 = vadd.f32 %v4614, %v4638
  %v11767 = vadd.f32 %v4615, %v4639
  %v11768 = vadd.f32 %v4616, %v4640
  %v11769 = vadd.f32 %v4617, %v4641
  %v11770 = vadd.f32 %v4618, %v4642
  %v11771 = vadd.f32 %v4619, %v4643
  %v11772 = vadd.f32 %v4620, %v4644
  %v11773 = vadd.f32 %v4621, %v4645
  %v11774 = vadd.f32 %v4622, %v4646
  %v11775 = vadd.f32 %v4623, %v4647
  %v11776 = vadd.f32 %v4624, %v4648
  %v11777 = vadd.f32 %v4625, %v4649
  %v11778 = vadd.f32 %v4626, %v4650
  %v11779 = vadd.f32 %v4627, %v4651
  %v11780 = vadd.f32 %v4628, %v4652
  %v11781 = vadd.f32 %v4629, %v4653
  %v11782 = vadd.f32 %v4630, %v4654
  %v11783 = vadd.f32 %v4631, %v4655
  %v11784 = vadd.f32 %v4632, %v4656
  %v11785 = vadd.f32 %v11761, 0.0001
  %v11786 = vadd.f32 %v11762, 0.0001
  %v11787 = vadd.f32 %v11763, 0.0001
  %v11788 = vadd.f32 %v11764, 0.0001
  %v11789 = vadd.f32 %v11765, 0.0001
  %v11790 = vadd.f32 %v11766, 0.0001
  %v11791 = vadd.f32 %v11767, 0.0001
  %v11792 = vadd.f32 %v11768, 0.0001
  %v11793 = vadd.f32 %v11769, 0.0001
  %v11794 = vadd.f32 %v11770, 0.0001
  %v11795 = vadd.f32 %v11771, 0.0001
  %v11796 = vadd.f32 %v11772, 0.0001
  %v11797 = vadd.f32 %v11773, 0.0001
  %v11798 = vadd.f32 %v11774, 0.0001
  %v11799 = vadd.f32 %v11775, 0.0001
  %v11800 = vadd.f32 %v11776, 0.0001
  %v11801 = vadd.f32 %v11777, 0.0001
  %v11802 = vadd.f32 %v11778, 0.0001
  %v11803 = vadd.f32 %v11779, 0.0001
  %v11804 = vadd.f32 %v11780, 0.0001
  %v11805 = vadd.f32 %v11781, 0.0001
  %v11806 = vadd.f32 %v11782, 0.0001
  %v11807 = vadd.f32 %v11783, 0.0001
  %v11808 = vadd.f32 %v11784, 0.0001
  %v11809 = vadd.f32 %v6977, %v9297
  %v11810 = vadd.f32 %v6978, %v9298
  %v11811 = vadd.f32 %v6979, %v9299
  %v11812 = vadd.f32 %v6980, %v9300
  %v11813 = vadd.f32 %v6981, %v9301
  %v11814 = vadd.f32 %v6982, %v9302
  %v11815 = vadd.f32 %v6983, %v9303
  %v11816 = vadd.f32 %v6984, %v9304
  %v11817 = vadd.f32 %v6985, %v9305
  %v11818 = vadd.f32 %v6986, %v9306
  %v11819 = vadd.f32 %v6987, %v9307
  %v11820 = vadd.f32 %v6988, %v9308
  %v11821 = vadd.f32 %v6989, %v9309
  %v11822 = vadd.f32 %v6990, %v9310
  %v11823 = vadd.f32 %v6991, %v9311
  %v11824 = vadd.f32 %v6992, %v9312
  %v11825 = vadd.f32 %v6993, %v9313
  %v11826 = vadd.f32 %v6994, %v9314
  %v11827 = vadd.f32 %v6995, %v9315
  %v11828 = vadd.f32 %v6996, %v9316
  %v11829 = vadd.f32 %v6997, %v9317
  %v11830 = vadd.f32 %v6998, %v9318
  %v11831 = vadd.f32 %v6999, %v9319
  %v11832 = vadd.f32 %v7000, %v9320
  %v11833 = vadd.f32 %v11809, 0.0009
  %v11834 = vadd.f32 %v11810, 0.0009
  %v11835 = vadd.f32 %v11811, 0.0009
  %v11836 = vadd.f32 %v11812, 0.0009
  %v11837 = vadd.f32 %v11813, 0.0009
  %v11838 = vadd.f32 %v11814, 0.0009
  %v11839 = vadd.f32 %v11815, 0.0009
  %v11840 = vadd.f32 %v11816, 0.0009
  %v11841 = vadd.f32 %v11817, 0.0009
  %v11842 = vadd.f32 %v11818, 0.0009
  %v11843 = vadd.f32 %v11819, 0.0009
  %v11844 = vadd.f32 %v11820, 0.0009
  %v11845 = vadd.f32 %v11821, 0.0009
  %v11846 = vadd.f32 %v11822, 0.0009
  %v11847 = vadd.f32 %v11823, 0.0009
  %v11848 = vadd.f32 %v11824, 0.0009
  %v11849 = vadd.f32 %v11825, 0.0009
  %v11850 = vadd.f32 %v11826, 0.0009
  %v11851 = vadd.f32 %v11827, 0.0009
  %v11852 = vadd.f32 %v11828, 0.0009
  %v11853 = vadd.f32 %v11829, 0.0009
  %v11854 = vadd.f32 %v11830, 0.0009
  %v11855 = vadd.f32 %v11831, 0.0009
  %v11856 = vadd.f32 %v11832, 0.0009
  %v11857 = vmul.f32 %v11785, %v11833
  %v11858 = vmul.f32 %v11786, %v11834
  %v11859 = vmul.f32 %v11787, %v11835
  %v11860 = vmul.f32 %v11788, %v11836
  %v11861 = vmul.f32 %v11789, %v11837
  %v11862 = vmul.f32 %v11790, %v11838
  %v11863 = vmul.f32 %v11791, %v11839
  %v11864 = vmul.f32 %v11792, %v11840
  %v11865 = vmul.f32 %v11793, %v11841
  %v11866 = vmul.f32 %v11794, %v11842
  %v11867 = vmul.f32 %v11795, %v11843
  %v11868 = vmul.f32 %v11796, %v11844
  %v11869 = vmul.f32 %v11797, %v11845
  %v11870 = vmul.f32 %v11798, %v11846
  %v11871 = vmul.f32 %v11799, %v11847
  %v11872 = vmul.f32 %v11800, %v11848
  %v11873 = vmul.f32 %v11801, %v11849
  %v11874 = vmul.f32 %v11802, %v11850
  %v11875 = vmul.f32 %v11803, %v11851
  %v11876 = vmul.f32 %v11804, %v11852
  %v11877 = vmul.f32 %v11805, %v11853
  %v11878 = vmul.f32 %v11806, %v11854
  %v11879 = vmul.f32 %v11807, %v11855
  %v11880 = vmul.f32 %v11808, %v11856
  %v11881 = vrcp.pop %v11857
  %v11882 = vmul.f32 %v11737, %v11881
  %v11883 = vrcp.pop %v11858
  %v11884 = vmul.f32 %v11738, %v11883
  %v11885 = vrcp.pop %v11859
  %v11886 = vmul.f32 %v11739, %v11885
  %v11887 = vrcp.pop %v11860
  %v11888 = vmul.f32 %v11740, %v11887
  %v11889 = vrcp.pop %v11861
  %v11890 = vmul.f32 %v11741, %v11889
  %v11891 = vrcp.pop %v11862
  %v11892 = vmul.f32 %v11742, %v11891
  %v11893 = vrcp.pop %v11863
  %v11894 = vmul.f32 %v11743, %v11893
  %v11895 = vrcp.pop %v11864
  %v11896 = vmul.f32 %v11744, %v11895
  %v11897 = vrcp.pop %v11865
  %v11898 = vmul.f32 %v11745, %v11897
  %v11899 = vrcp.pop %v11866
  %v11900 = vmul.f32 %v11746, %v11899
  %v11901 = vrcp.pop %v11867
  %v11902 = vmul.f32 %v11747, %v11901
  %v11903 = vrcp.pop %v11868
  %v11904 = vmul.f32 %v11748, %v11903
  %v11905 = vrcp.pop %v11869
  %v11906 = vmul.f32 %v11749, %v11905
  %v11907 = vrcp.pop %v11870
  %v11908 = vmul.f32 %v11750, %v11907
  %v11909 = vrcp.pop %v11871
  %v11910 = vmul.f32 %v11751, %v11909
  %v11911 = vrcp.pop %v11872
  %v11912 = vmul.f32 %v11752, %v11911
  %v11913 = vrcp.pop %v11873
  %v11914 = vmul.f32 %v11753, %v11913
  %v11915 = vrcp.pop %v11874
  %v11916 = vmul.f32 %v11754, %v11915
  %v11917 = vrcp.pop %v11875
  %v11918 = vmul.f32 %v11755, %v11917
  %v11919 = vrcp.pop %v11876
  %v11920 = vmul.f32 %v11756, %v11919
  %v11921 = vrcp.pop %v11877
  %v11922 = vmul.f32 %v11757, %v11921
  %v11923 = vrcp.pop %v11878
  %v11924 = vmul.f32 %v11758, %v11923
  %v11925 = vrcp.pop %v11879
  %v11926 = vmul.f32 %v11759, %v11925
  %v11927 = vrcp.pop %v11880
  %v11928 = vmul.f32 %v11760, %v11927
  %11953 = vrot.lane.b32.xlu0 %v11882, 123
  %v11954 = vpop.permute.xlu0 %11953
  %11955 = vrot.lane.b32.xlu0 %v11884, 123
  %v11956 = vpop.permute.xlu0 %11955
  %11957 = vrot.lane.b32.xlu0 %v11886, 123
  %v11958 = vpop.permute.xlu0 %11957
  %11959 = vrot.lane.b32.xlu0 %v11888, 123
  %v11960 = vpop.permute.xlu0 %11959
  %11961 = vrot.lane.b32.xlu0 %v11890, 123
  %v11962 = vpop.permute.xlu0 %11961
  %11963 = vrot.lane.b32.xlu0 %v11892, 123
  %v11964 = vpop.permute.xlu0 %11963
  %11965 = vrot.lane.b32.xlu0 %v11894, 123
  %v11966 = vpop.permute.xlu0 %11965
  %11967 = vrot.lane.b32.xlu0 %v11896, 123
  %v11968 = vpop.permute.xlu0 %11967
  %11969 = vrot.lane.b32.xlu0 %v11898, 123
  %v11970 = vpop.permute.xlu0 %11969
  %11971 = vrot.lane.b32.xlu0 %v11900, 123
  %v11972 = vpop.permute.xlu0 %11971
  %11973 = vrot.lane.b32.xlu0 %v11902, 123
  %v11974 = vpop.permute.xlu0 %11973
  %11975 = vrot.lane.b32.xlu0 %v11904, 123
  %v11976 = vpop.permute.xlu0 %11975
  %11977 = vrot.lane.b32.xlu0 %v11906, 123
  %v11978 = vpop.permute.xlu0 %11977
  %11979 = vrot.lane.b32.xlu0 %v11908, 123
  %v11980 = vpop.permute.xlu0 %11979
  %11981 = vrot.lane.b32.xlu0 %v11910, 123
  %v11982 = vpop.permute.xlu0 %11981
  %11983 = vrot.lane.b32.xlu0 %v11912, 123
  %v11984 = vpop.permute.xlu0 %11983
  %11985 = vrot.lane.b32.xlu0 %v11914, 123
  %v11986 = vpop.permute.xlu0 %11985
  %11987 = vrot.lane.b32.xlu0 %v11916, 123
  %v11988 = vpop.permute.xlu0 %11987
  %11989 = vrot.lane.b32.xlu0 %v11918, 123
  %v11990 = vpop.permute.xlu0 %11989
  %11991 = vrot.lane.b32.xlu0 %v11920, 123
  %v11992 = vpop.permute.xlu0 %11991
  %11993 = vrot.lane.b32.xlu0 %v11922, 123
  %v11994 = vpop.permute.xlu0 %11993
  %11995 = vrot.lane.b32.xlu0 %v11924, 123
  %v11996 = vpop.permute.xlu0 %11995
  %11997 = vrot.lane.b32.xlu0 %v11926, 123
  %v11998 = vpop.permute.xlu0 %11997
  %11999 = vrot.lane.b32.xlu0 %v11928, 123
  %v12000 = vpop.permute.xlu0 %11999
  %vm12025 = vcmask 130053
  %v12026 = vsel %vm12025, %v11954, 0.0
  %12027 = vadd.xlane.f32.xlu0 %v12026
  %v12028 = vpop.xlane.xlu0 %12027
  %vm12029 = vcmask 130048
  %v12030 = vsel %vm12029, %v11956, 0.0
  %12031 = vadd.xlane.f32.xlu0 %v12030
  %v12032 = vpop.xlane.xlu0 %12031
  %vm12033 = vcmask 126976
  %v12034 = vsel %vm12033, %v11958, 0.0
  %12035 = vadd.xlane.f32.xlu0 %v12034
  %v12036 = vpop.xlane.xlu0 %12035
  %v12037 = vsel %vm12025, %v11960, 0.0
  %12038 = vadd.xlane.f32.xlu0 %v12037
  %v12039 = vpop.xlane.xlu0 %12038
  %v12040 = vsel %vm12029, %v11962, 0.0
  %12041 = vadd.xlane.f32.xlu0 %v12040
  %v12042 = vpop.xlane.xlu0 %12041
  %v12043 = vsel %vm12033, %v11964, 0.0
  %12044 = vadd.xlane.f32.xlu0 %v12043
  %v12045 = vpop.xlane.xlu0 %12044
  %v12046 = vsel %vm12025, %v11966, 0.0
  %12047 = vadd.xlane.f32.xlu0 %v12046
  %v12048 = vpop.xlane.xlu0 %12047
  %v12049 = vsel %vm12029, %v11968, 0.0
  %12050 = vadd.xlane.f32.xlu0 %v12049
  %v12051 = vpop.xlane.xlu0 %12050
  %v12052 = vsel %vm12033, %v11970, 0.0
  %12053 = vadd.xlane.f32.xlu0 %v12052
  %v12054 = vpop.xlane.xlu0 %12053
  %v12055 = vsel %vm12025, %v11972, 0.0
  %12056 = vadd.xlane.f32.xlu0 %v12055
  %v12057 = vpop.xlane.xlu0 %12056
  %v12058 = vsel %vm12029, %v11974, 0.0
  %12059 = vadd.xlane.f32.xlu0 %v12058
  %v12060 = vpop.xlane.xlu0 %12059
  %v12061 = vsel %vm12033, %v11976, 0.0
  %12062 = vadd.xlane.f32.xlu0 %v12061
  %v12063 = vpop.xlane.xlu0 %12062
  %v12064 = vsel %vm12025, %v11978, 0.0
  %12065 = vadd.xlane.f32.xlu0 %v12064
  %v12066 = vpop.xlane.xlu0 %12065
  %v12067 = vsel %vm12029, %v11980, 0.0
  %12068 = vadd.xlane.f32.xlu0 %v12067
  %v12069 = vpop.xlane.xlu0 %12068
  %v12070 = vsel %vm12033, %v11982, 0.0
  %12071 = vadd.xlane.f32.xlu0 %v12070
  %v12072 = vpop.xlane.xlu0 %12071
  %v12073 = vsel %vm12025, %v11984, 0.0
  %12074 = vadd.xlane.f32.xlu0 %v12073
  %v12075 = vpop.xlane.xlu0 %12074
  %v12076 = vsel %vm12029, %v11986, 0.0
  %12077 = vadd.xlane.f32.xlu0 %v12076
  %v12078 = vpop.xlane.xlu0 %12077
  %v12079 = vsel %vm12033, %v11988, 0.0
  %12080 = vadd.xlane.f32.xlu0 %v12079
  %v12081 = vpop.xlane.xlu0 %12080
  %v12082 = vsel %vm12025, %v11990, 0.0
  %12083 = vadd.xlane.f32.xlu0 %v12082
  %v12084 = vpop.xlane.xlu0 %12083
  %v12085 = vsel %vm12029, %v11992, 0.0
  %12086 = vadd.xlane.f32.xlu0 %v12085
  %v12087 = vpop.xlane.xlu0 %12086
  %v12088 = vsel %vm12033, %v11994, 0.0
  %12089 = vadd.xlane.f32.xlu0 %v12088
  %v12090 = vpop.xlane.xlu0 %12089
  %v12091 = vsel %vm12025, %v11996, 0.0
  %12092 = vadd.xlane.f32.xlu0 %v12091
  %v12093 = vpop.xlane.xlu0 %12092
  %v12094 = vsel %vm12029, %v11998, 0.0
  %12095 = vadd.xlane.f32.xlu0 %v12094
  %v12096 = vpop.xlane.xlu0 %12095
  %v12097 = vsel %vm12033, %v12000, 0.0
  %12098 = vadd.xlane.f32.xlu0 %v12097
  %v12099 = vpop.xlane.xlu0 %12098
  %v12124 = vrot.slane %v12028, 5
  %v12125 = vrot.slane %v12032, 5
  %v12126 = vsel %vm583, %v12124, %v12125
  %v12127 = vrot.slane %v12036, 5
  %v12128 = vsel %vm583, %v12125, %v12127
  %v12129 = vrot.slane %v12039, 5
  %v12130 = vrot.slane %v12042, 5
  %v12131 = vsel %vm583, %v12129, %v12130
  %v12132 = vrot.slane %v12045, 5
  %v12133 = vsel %vm583, %v12130, %v12132
  %v12134 = vrot.slane %v12048, 5
  %v12135 = vrot.slane %v12051, 5
  %v12136 = vsel %vm583, %v12134, %v12135
  %v12137 = vrot.slane %v12054, 5
  %v12138 = vsel %vm583, %v12135, %v12137
  %v12139 = vrot.slane %v12057, 5
  %v12140 = vrot.slane %v12060, 5
  %v12141 = vsel %vm583, %v12139, %v12140
  %v12142 = vrot.slane %v12063, 5
  %v12143 = vsel %vm583, %v12140, %v12142
  %v12144 = vrot.slane %v12066, 5
  %v12145 = vrot.slane %v12069, 5
  %v12146 = vsel %vm583, %v12144, %v12145
  %v12147 = vrot.slane %v12072, 5
  %v12148 = vsel %vm583, %v12145, %v12147
  %v12149 = vrot.slane %v12075, 5
  %v12150 = vrot.slane %v12078, 5
  %v12151 = vsel %vm583, %v12149, %v12150
  %v12152 = vrot.slane %v12081, 5
  %v12153 = vsel %vm583, %v12150, %v12152
  %v12154 = vrot.slane %v12084, 5
  %v12155 = vrot.slane %v12087, 5
  %v12156 = vsel %vm583, %v12154, %v12155
  %v12157 = vrot.slane %v12090, 5
  %v12158 = vsel %vm583, %v12155, %v12157
  %v12159 = vrot.slane %v12093, 5
  %v12160 = vrot.slane %v12096, 5
  %v12161 = vsel %vm583, %v12159, %v12160
  %v12162 = vrot.slane %v12099, 5
  %v12163 = vsel %vm583, %v12160, %v12162
  %v12180 = vadd.f32 %v12126, %v12128
  %v12181 = vrot.slane %v12180, 4
  %v12182 = vadd.f32 %v12180, %v12181
  %v12183 = vrot.slane %v12182, 2
  %v12184 = vadd.f32 %v12182, %v12183
  %v12185 = vrot.slane %v12184, 1
  %v12186 = vadd.f32 %v12184, %v12185
  %v12187 = vadd.f32 %v12131, %v12133
  %v12188 = vrot.slane %v12187, 4
  %v12189 = vadd.f32 %v12187, %v12188
  %v12190 = vrot.slane %v12189, 2
  %v12191 = vadd.f32 %v12189, %v12190
  %v12192 = vrot.slane %v12191, 1
  %v12193 = vadd.f32 %v12191, %v12192
  %v12194 = vadd.f32 %v12136, %v12138
  %v12195 = vrot.slane %v12194, 4
  %v12196 = vadd.f32 %v12194, %v12195
  %v12197 = vrot.slane %v12196, 2
  %v12198 = vadd.f32 %v12196, %v12197
  %v12199 = vrot.slane %v12198, 1
  %v12200 = vadd.f32 %v12198, %v12199
  %v12201 = vadd.f32 %v12141, %v12143
  %v12202 = vrot.slane %v12201, 4
  %v12203 = vadd.f32 %v12201, %v12202
  %v12204 = vrot.slane %v12203, 2
  %v12205 = vadd.f32 %v12203, %v12204
  %v12206 = vrot.slane %v12205, 1
  %v12207 = vadd.f32 %v12205, %v12206
  %v12208 = vadd.f32 %v12146, %v12148
  %v12209 = vrot.slane %v12208, 4
  %v12210 = vadd.f32 %v12208, %v12209
  %v12211 = vrot.slane %v12210, 2
  %v12212 = vadd.f32 %v12210, %v12211
  %v12213 = vrot.slane %v12212, 1
  %v12214 = vadd.f32 %v12212, %v12213
  %v12215 = vadd.f32 %v12151, %v12153
  %v12216 = vrot.slane %v12215, 4
  %v12217 = vadd.f32 %v12215, %v12216
  %v12218 = vrot.slane %v12217, 2
  %v12219 = vadd.f32 %v12217, %v12218
  %v12220 = vrot.slane %v12219, 1
  %v12221 = vadd.f32 %v12219, %v12220
  %v12222 = vadd.f32 %v12156, %v12158
  %v12223 = vrot.slane %v12222, 4
  %v12224 = vadd.f32 %v12222, %v12223
  %v12225 = vrot.slane %v12224, 2
  %v12226 = vadd.f32 %v12224, %v12225
  %v12227 = vrot.slane %v12226, 1
  %v12228 = vadd.f32 %v12226, %v12227
  %v12229 = vadd.f32 %v12161, %v12163
  %v12230 = vrot.slane %v12229, 4
  %v12231 = vadd.f32 %v12229, %v12230
  %v12232 = vrot.slane %v12231, 2
  %v12233 = vadd.f32 %v12231, %v12232
  %v12234 = vrot.slane %v12233, 1
  %v12235 = vadd.f32 %v12233, %v12234
  %12236 = vst [vmem:[%s2] sm:$0x1] %v12186
  %12237 = vst [vmem:[%s2 + $0x1] sm:$0x1] %v12193
  %12238 = vst [vmem:[%s2 + $0x2] sm:$0x1] %v12200
  %12239 = vst [vmem:[%s2 + $0x3] sm:$0x1] %v12207
  %12240 = vst [vmem:[%s2 + $0x4] sm:$0x1] %v12214
  %12241 = vst [vmem:[%s2 + $0x5] sm:$0x1] %v12221
  %12242 = vst [vmem:[%s2 + $0x6] sm:$0x1] %v12228
  %12243 = vst [vmem:[%s2 + $0x7] sm:$0x1] %v12235
  // Predicated region
  $region10: #{ssim_loss_pallas.1} parent=0 // pred_check
    _
  $region11: #{ssim_loss_pallas.1} parent=0 // pred_check_branch
    %12245 = sbr.rel (0) target = $region13
  $region12: #{ssim_loss_pallas.1} parent=0 // pred_region
    _
  $region13: #{ssim_loss_pallas.1} parent=0 // pred_fallthru
    _
  // Predicated region
  $region14: #{ssim_loss_pallas.1} parent=0 // pred_check
    _
  $region15: #{ssim_loss_pallas.1} parent=0 // pred_check_branch
    %12247 = sbr.rel (0) target = $region17
  $region16: #{ssim_loss_pallas.1} parent=0 // pred_region
    _
  $region17: #{ssim_loss_pallas.1} parent=0 // pred_fallthru
    _

</llo_original>
